<compile_context>
chip_gen: v6e
topology: v6e:2x2x1
jax: 0.10.0
libtpu: 0.0.40
codegen_flags: <defaults>
</compile_context>

<pallas_src>
import functools

import jax
import jax.numpy as jnp
from jax.experimental import pallas as pl
from jax.experimental.pallas import tpu as pltpu

IN_DIM, H1_DIM, H2_DIM, OUT_DIM = 2048, 1024, 512, 2
OUT_PAD = 128  # lane-padded width of the final layer (one full vreg width)


def domain_classifier_kernel(x_ref, w1_ref, b1_ref, w2_ref, b2_ref,
                             w3_ref, b3_ref, o_ref):
    # x tile -> bf16 for the MXU; accumulate in f32.
    x = x_ref[...].astype(jnp.bfloat16)                               # (tm, 2048)

    # fc1 + ReLU  (bias add / ReLU in f32)
    h1 = jnp.dot(x, w1_ref[...], preferred_element_type=jnp.float32)
    h1 = jnp.maximum(h1 + b1_ref[...], 0.0).astype(jnp.bfloat16)      # (tm, 1024)

    # fc2 + ReLU
    h2 = jnp.dot(h1, w2_ref[...], preferred_element_type=jnp.float32)
    h2 = jnp.maximum(h2 + b2_ref[...], 0.0).astype(jnp.bfloat16)      # (tm, 512)

    # fc3 (lane-padded to 128 columns; pad columns carry bias = -1e9)
    logits = jnp.dot(h2, w3_ref[...], preferred_element_type=jnp.float32)
    logits = logits + b3_ref[...]                                     # (tm, 128)

    # log_softmax over the padded axis == log_softmax over the 2 real classes
    # (exp of the -1e9 pad columns underflows to exactly 0).
    m = jnp.max(logits, axis=-1, keepdims=True)
    shifted = logits - m
    lse = jnp.log(jnp.sum(jnp.exp(shifted), axis=-1, keepdims=True))
    o_ref[...] = shifted - lse


def prepare_params(w1, b1, w2, b2, w3, b3):
    """One-time conversion: weights -> bf16, biases -> f32 (1, out),
    final layer lane-padded to OUT_PAD columns (pad weights exactly 0,
    pad biases -1e9 so they vanish in log_softmax)."""
    w1 = w1.astype(jnp.bfloat16)
    w2 = w2.astype(jnp.bfloat16)
    b1 = b1.reshape(1, H1_DIM).astype(jnp.float32)
    b2 = b2.reshape(1, H2_DIM).astype(jnp.float32)
    w3p = jnp.zeros((H2_DIM, OUT_PAD), jnp.bfloat16).at[:, :OUT_DIM].set(
        w3.astype(jnp.bfloat16))
    b3p = jnp.full((1, OUT_PAD), -1e9, jnp.float32).at[:, :OUT_DIM].set(
        b3.reshape(1, OUT_DIM).astype(jnp.float32))
    return w1, b1, w2, b2, w3p, b3p


def _pick_tm(B):
    """Batch tile: multiple of 8, capped at 512 rows, and (when the batch is
    big enough) small enough that the grid has >=2 steps so v7x megacore can
    shard the batch over both TensorCores."""
    if B <= 8:
        return 8
    target = min(512, pl.cdiv(B, 2))
    return max(8, ((target + 7) // 8) * 8)


@functools.partial(jax.jit, static_argnames=("tm",))
def domain_classifier(feature, w1, b1, w2, b2, w3p, b3p, *, tm=None):
    """feature: (B, 2048) f32.  Params must come from prepare_params()."""
    B = feature.shape[0]
    if tm is None:
        tm = _pick_tm(B)
    Bp = pl.cdiv(B, tm) * tm
    if Bp != B:
        feature = jnp.pad(feature, ((0, Bp - B), (0, 0)))
    grid = (Bp // tm,)

    weight_bytes = (w1.size + w2.size + w3p.size) * 2 \
                 + (b1.size + b2.size + b3p.size) * 4
    cost = pl.CostEstimate(
        flops=2 * Bp * (IN_DIM * H1_DIM + H1_DIM * H2_DIM + H2_DIM * OUT_PAD),
        transcendentals=Bp * (OUT_PAD + 1),
        bytes_accessed=weight_bytes + Bp * IN_DIM * 4 + Bp * OUT_PAD * 4,
    )

    # Grid-invariant params: single VMEM copy, no double-buffering.
    const = lambda i: (0, 0)
    resident = pl.Buffered(1)

    # x stream: deepen prefetch only when there are enough grid steps to use it
    # (removes the x-DMA / MXU tie on v6e).
    if grid[0] >= 3:
        x_spec = pl.BlockSpec((tm, IN_DIM), lambda i: (i, 0),
                              pipeline_mode=pl.Buffered(3))
    else:
        x_spec = pl.BlockSpec((tm, IN_DIM), lambda i: (i, 0))

    out_padded = pl.pallas_call(
        domain_classifier_kernel,
        out_shape=jax.ShapeDtypeStruct((Bp, OUT_PAD), jnp.float32),
        grid=grid,
        in_specs=[
            x_spec,                                                        # x tile (f32)
            pl.BlockSpec((IN_DIM, H1_DIM), const, pipeline_mode=resident), # w1 (bf16)
            pl.BlockSpec((1, H1_DIM), const, pipeline_mode=resident),      # b1 (f32)
            pl.BlockSpec((H1_DIM, H2_DIM), const, pipeline_mode=resident), # w2 (bf16)
            pl.BlockSpec((1, H2_DIM), const, pipeline_mode=resident),      # b2 (f32)
            pl.BlockSpec((H2_DIM, OUT_PAD), const, pipeline_mode=resident),# w3 padded (bf16)
            pl.BlockSpec((1, OUT_PAD), const, pipeline_mode=resident),     # b3 padded (f32)
        ],
        out_specs=pl.BlockSpec((tm, OUT_PAD), lambda i: (i, 0)),
        compiler_params=pltpu.CompilerParams(
            dimension_semantics=("parallel",),   # v7x: shard batch over 2 TCs
            vmem_limit_bytes=48 << 20,           # v7x-safe (64 MiB physical/TC);
                                                 # worst-case footprint ~25 MiB
        ),
        cost_estimate=cost,
    )(feature, w1, b1, w2, b2, w3p, b3p)

    return out_padded[:B, :OUT_DIM]


def init_params(key):
    """Deterministic init mimicking nn.Linear defaults: U(-1/sqrt(fan_in), ...)."""
    dims = [(IN_DIM, H1_DIM), (H1_DIM, H2_DIM), (H2_DIM, OUT_DIM)]
    params = []
    for i, (fan_in, fan_out) in enumerate(dims):
        kw, kb = jax.random.split(jax.random.fold_in(key, i))
        bound = 1.0 / (fan_in ** 0.5)
        w = jax.random.uniform(kw, (fan_in, fan_out), jnp.float32, -bound, bound)
        b = jax.random.uniform(kb, (1, fan_out), jnp.float32, -bound, bound)
        params += [w, b]
    return params


def reference(feature, w1, b1, w2, b2, w3, b3):
    """Pure-JAX reference replicating the kernel's bf16 quantization points."""
    x = feature.astype(jnp.bfloat16)
    w1b, w2b, w3b = (w.astype(jnp.bfloat16) for w in (w1, w2, w3))
    h1 = jnp.maximum(jnp.dot(x, w1b, preferred_element_type=jnp.float32) + b1, 0.0)
    h2 = jnp.maximum(jnp.dot(h1.astype(jnp.bfloat16), w2b,
                             preferred_element_type=jnp.float32) + b2, 0.0)
    logits = jnp.dot(h2.astype(jnp.bfloat16), w3b,
                     preferred_element_type=jnp.float32) + b3
    return jax.nn.log_softmax(logits, axis=1)


if __name__ == "__main__":
    key = jax.random.PRNGKey(0)
    k_in, k_par = jax.random.split(key)

    raw_params = init_params(k_par)
    kern_params = prepare_params(*raw_params)

    # Small batch (single grid step, tm rounded to the f32 sublane multiple).
    B = 8
    feature = jax.random.normal(k_in, (B, IN_DIM), jnp.float32)
    out = jax.block_until_ready(domain_classifier(feature, *kern_params))
    ref = reference(feature, *raw_params)
    assert out.shape == (B, OUT_DIM)
    assert jnp.allclose(out, ref, atol=1e-4, rtol=1e-4), "mismatch (B=8)"

    # Non-multiple-of-tile batch: exercises the 2-step grid + padding path.
    B2 = 300
    feature2 = jax.random.normal(jax.random.fold_in(k_in, 1), (B2, IN_DIM),
                                 jnp.float32)
    out2 = jax.block_until_ready(domain_classifier(feature2, *kern_params))
    ref2 = reference(feature2, *raw_params)
    assert out2.shape == (B2, OUT_DIM)
    assert jnp.allclose(out2, ref2, atol=1e-4, rtol=1e-4), "mismatch (B=300)"

    print("KERNEL_OK")
</pallas_src>

<mosaic_0001>
module attributes {stable_mosaic.version = 11 : i64} {
  func.func @domain_classifier_kernel(%arg0: i32, %arg1: memref<8x2048xf32, #tpu.memory_space<vmem>>, %arg2: memref<2048x1024xbf16, #tpu.memory_space<vmem>>, %arg3: memref<1x1024xf32, #tpu.memory_space<vmem>>, %arg4: memref<1024x512xbf16, #tpu.memory_space<vmem>>, %arg5: memref<1x512xf32, #tpu.memory_space<vmem>>, %arg6: memref<512x128xbf16, #tpu.memory_space<vmem>>, %arg7: memref<1x128xf32, #tpu.memory_space<vmem>>, %arg8: memref<8x128xf32, #tpu.memory_space<vmem>>) attributes {dimension_semantics = [#tpu.dimension_semantics<parallel>], iteration_bounds = array<i64: 1>, scalar_prefetch = 0 : i64, scratch_operands = 0 : i64, tpu.core_type = #tpu.core_type<tc>, window_params = [{transform_indices = @transform_0, window_bounds = array<i64: 8, 2048>}, {pipeline_mode = #tpu.pipeline_mode<synchronous>, transform_indices = @transform_1, window_bounds = array<i64: 2048, 1024>}, {pipeline_mode = #tpu.pipeline_mode<synchronous>, transform_indices = @transform_2, window_bounds = array<i64: 1, 1024>}, {pipeline_mode = #tpu.pipeline_mode<synchronous>, transform_indices = @transform_3, window_bounds = array<i64: 1024, 512>}, {pipeline_mode = #tpu.pipeline_mode<synchronous>, transform_indices = @transform_4, window_bounds = array<i64: 1, 512>}, {pipeline_mode = #tpu.pipeline_mode<synchronous>, transform_indices = @transform_5, window_bounds = array<i64: 512, 128>}, {pipeline_mode = #tpu.pipeline_mode<synchronous>, transform_indices = @transform_6, window_bounds = array<i64: 1, 128>}, {transform_indices = @transform_7, window_bounds = array<i64: 8, 128>}]} {
    %c0 = arith.constant 0 : index
    %c0_0 = arith.constant 0 : index
    %0 = vector.load %arg1[%c0, %c0_0] : memref<8x2048xf32, #tpu.memory_space<vmem>>, vector<8x2048xf32>
    %1 = arith.truncf %0 : vector<8x2048xf32> to vector<8x2048xbf16>
    %c0_1 = arith.constant 0 : index
    %c0_2 = arith.constant 0 : index
    %2 = vector.load %arg2[%c0_1, %c0_2] : memref<2048x1024xbf16, #tpu.memory_space<vmem>>, vector<2048x1024xbf16>
    %cst = arith.constant dense<0.000000e+00> : vector<8x1024xf32>
    %3 = tpu.matmul %1, %2, %cst {dimension_numbers = #tpu.dot_dimension_numbers<[1], [0], [0], [1], [0, 0, 1, 1], [], []>} : vector<8x2048xbf16>, vector<2048x1024xbf16>, vector<8x1024xf32> -> vector<8x1024xf32>
    %c0_3 = arith.constant 0 : index
    %c0_4 = arith.constant 0 : index
    %4 = vector.load %arg3[%c0_3, %c0_4] : memref<1x1024xf32, #tpu.memory_space<vmem>>, vector<1x1024xf32>
    %5 = vector.broadcast %4 : vector<1x1024xf32> to vector<8x1024xf32>
    %6 = arith.addf %3, %5 : vector<8x1024xf32>
    %cst_5 = arith.constant 0.000000e+00 : f32
    %7 = vector.broadcast %cst_5 : f32 to vector<8x1024xf32>
    %8 = arith.maximumf %6, %7 : vector<8x1024xf32>
    %9 = arith.truncf %8 : vector<8x1024xf32> to vector<8x1024xbf16>
    %c0_6 = arith.constant 0 : index
    %c0_7 = arith.constant 0 : index
    %10 = vector.load %arg4[%c0_6, %c0_7] : memref<1024x512xbf16, #tpu.memory_space<vmem>>, vector<1024x512xbf16>
    %cst_8 = arith.constant dense<0.000000e+00> : vector<8x512xf32>
    %11 = tpu.matmul %9, %10, %cst_8 {dimension_numbers = #tpu.dot_dimension_numbers<[1], [0], [0], [1], [0, 0, 1, 1], [], []>} : vector<8x1024xbf16>, vector<1024x512xbf16>, vector<8x512xf32> -> vector<8x512xf32>
    %c0_9 = arith.constant 0 : index
    %c0_10 = arith.constant 0 : index
    %12 = vector.load %arg5[%c0_9, %c0_10] : memref<1x512xf32, #tpu.memory_space<vmem>>, vector<1x512xf32>
    %13 = vector.broadcast %12 : vector<1x512xf32> to vector<8x512xf32>
    %14 = arith.addf %11, %13 : vector<8x512xf32>
    %cst_11 = arith.constant 0.000000e+00 : f32
    %15 = vector.broadcast %cst_11 : f32 to vector<8x512xf32>
    %16 = arith.maximumf %14, %15 : vector<8x512xf32>
    %17 = arith.truncf %16 : vector<8x512xf32> to vector<8x512xbf16>
    %c0_12 = arith.constant 0 : index
    %c0_13 = arith.constant 0 : index
    %18 = vector.load %arg6[%c0_12, %c0_13] : memref<512x128xbf16, #tpu.memory_space<vmem>>, vector<512x128xbf16>
    %cst_14 = arith.constant dense<0.000000e+00> : vector<8x128xf32>
    %19 = tpu.matmul %17, %18, %cst_14 {dimension_numbers = #tpu.dot_dimension_numbers<[1], [0], [0], [1], [0, 0, 1, 1], [], []>} : vector<8x512xbf16>, vector<512x128xbf16>, vector<8x128xf32> -> vector<8x128xf32>
    %c0_15 = arith.constant 0 : index
    %c0_16 = arith.constant 0 : index
    %20 = vector.load %arg7[%c0_15, %c0_16] : memref<1x128xf32, #tpu.memory_space<vmem>>, vector<1x128xf32>
    %21 = vector.broadcast %20 : vector<1x128xf32> to vector<8x128xf32>
    %22 = arith.addf %19, %21 : vector<8x128xf32>
    %cst_17 = arith.constant dense<0xFF800000> : vector<8xf32>
    %23 = vector.multi_reduction <maximumf>, %22, %cst_17 [1] : vector<8x128xf32> to vector<8xf32>
    %24 = vector.shape_cast %23 : vector<8xf32> to vector<8x1xf32>
    %25 = vector.broadcast %24 : vector<8x1xf32> to vector<8x128xf32>
    %26 = arith.subf %22, %25 : vector<8x128xf32>
    %27 = math.exp %26 : vector<8x128xf32>
    %cst_18 = arith.constant dense<0.000000e+00> : vector<8xf32>
    %28 = vector.multi_reduction <add>, %27, %cst_18 [1] : vector<8x128xf32> to vector<8xf32>
    %29 = vector.shape_cast %28 : vector<8xf32> to vector<8x1xf32>
    %30 = math.log %29 : vector<8x1xf32>
    %31 = vector.broadcast %30 : vector<8x1xf32> to vector<8x128xf32>
    %32 = arith.subf %26, %31 : vector<8x128xf32>
    %c0_19 = arith.constant 0 : index
    %c0_20 = arith.constant 0 : index
    %33 = vector.load %arg8[%c0_19, %c0_20] : memref<8x128xf32, #tpu.memory_space<vmem>>, vector<8x128xf32>
    tpu.vector_store %arg8[%c0_19, %c0_20], %32 {strides = array<i32>} : memref<8x128xf32, #tpu.memory_space<vmem>>, vector<8x128xf32>,
    return
  }
  func.func @transform_0(%arg0: i32) -> (i32, i32) {
    %c0_i32 = arith.constant 0 : i32
    %c0_i32_0 = arith.constant 0 : i32
    return %arg0, %c0_i32 : i32, i32
  }
  func.func @transform_1(%arg0: i32) -> (i32, i32) {
    %c0_i32 = arith.constant 0 : i32
    %c0_i32_0 = arith.constant 0 : i32
    %c0_i32_1 = arith.constant 0 : i32
    return %c0_i32, %c0_i32_0 : i32, i32
  }
  func.func @transform_2(%arg0: i32) -> (i32, i32) {
    %c0_i32 = arith.constant 0 : i32
    %c0_i32_0 = arith.constant 0 : i32
    %c0_i32_1 = arith.constant 0 : i32
    return %c0_i32, %c0_i32_0 : i32, i32
  }
  func.func @transform_3(%arg0: i32) -> (i32, i32) {
    %c0_i32 = arith.constant 0 : i32
    %c0_i32_0 = arith.constant 0 : i32
    %c0_i32_1 = arith.constant 0 : i32
    return %c0_i32, %c0_i32_0 : i32, i32
  }
  func.func @transform_4(%arg0: i32) -> (i32, i32) {
    %c0_i32 = arith.constant 0 : i32
    %c0_i32_0 = arith.constant 0 : i32
    %c0_i32_1 = arith.constant 0 : i32
    return %c0_i32, %c0_i32_0 : i32, i32
  }
  func.func @transform_5(%arg0: i32) -> (i32, i32) {
    %c0_i32 = arith.constant 0 : i32
    %c0_i32_0 = arith.constant 0 : i32
    %c0_i32_1 = arith.constant 0 : i32
    return %c0_i32, %c0_i32_0 : i32, i32
  }
  func.func @transform_6(%arg0: i32) -> (i32, i32) {
    %c0_i32 = arith.constant 0 : i32
    %c0_i32_0 = arith.constant 0 : i32
    %c0_i32_1 = arith.constant 0 : i32
    return %c0_i32, %c0_i32_0 : i32, i32
  }
  func.func @transform_7(%arg0: i32) -> (i32, i32) {
    %c0_i32 = arith.constant 0 : i32
    %c0_i32_0 = arith.constant 0 : i32
    return %arg0, %c0_i32 : i32, i32
  }
}

</mosaic_0001>

<llo_original>
// kernel: domain_classifier.1
$region0: #{domain_classifier.1}
  #allocation0 [shape = 'u32[]', space=smem, size = 0x4, offset = 0x4, fixed_abs, tag = 'smem constant byte address 0x4 - core index']
  #allocation1 [shape = 'u32[144,128]{1,0:T(1,128)}', space=vmem, size = 0x12000, scoped, tag = 'internal scratch']
  %s0 = inlined_call_operand.hbm [shape: f32[8,2048], index: 0, kind: input, shape index: {}]
  %s1 = inlined_call_operand.hbm [shape: bf16[2048,1024], index: 1, kind: input, shape index: {}]
  %s2 = inlined_call_operand.hbm [shape: f32[1,1024], index: 2, kind: input, shape index: {}]
  %s3 = inlined_call_operand.hbm [shape: bf16[1024,512], index: 3, kind: input, shape index: {}]
  %s4 = inlined_call_operand.hbm [shape: f32[1,512], index: 4, kind: input, shape index: {}]
  %s5 = inlined_call_operand.hbm [shape: bf16[512,128], index: 5, kind: input, shape index: {}]
  %s6 = inlined_call_operand.hbm [shape: f32[1,128], index: 6, kind: input, shape index: {}]
  %s7 = inlined_call_operand.vmem [shape: f32[8,128], index: 7, kind: output, shape index: {}]
  %s8 = sld [smem:[#allocation0]]
  $region66: #{domain_classifier.1} parent=0
    _
  %s10 = ssub.s32 1, %s8
  %s11 = scalar_select 0, %s10, %s8
  $region1: #{domain_classifier.1} parent=0
    #allocation2 [shape = 'u8[65536]{0}', space=vmem, size = 0x10000, scoped, tag = 'input window, operand 0, single buffered']
    #allocation3 [shape = 's32[1]{0}', space=sflag, size = 0x4, scoped, tag = 'scoped memory for domain_classifier.1']
    #allocation4 [shape = 'u8[4194304]{0}', space=vmem, size = 0x400000, scoped, tag = 'input window, operand 1, single buffered']
    #allocation5 [shape = 's32[1]{0}', space=sflag, size = 0x4, scoped, tag = 'scoped memory for domain_classifier.1']
    #allocation6 [shape = 'u8[4096]{0}', space=vmem, size = 0x1000, scoped, tag = 'input window, operand 2, single buffered']
    #allocation7 [shape = 'u8[1048576]{0}', space=vmem, size = 0x100000, scoped, tag = 'input window, operand 3, single buffered']
    #allocation8 [shape = 's32[1]{0}', space=sflag, size = 0x4, scoped, tag = 'scoped memory for domain_classifier.1']
    #allocation9 [shape = 'u8[2048]{0}', space=vmem, size = 0x800, scoped, tag = 'input window, operand 4, single buffered']
    #allocation10 [shape = 'u8[131072]{0}', space=vmem, size = 0x20000, scoped, tag = 'input window, operand 5, single buffered']
    #allocation11 [shape = 's32[1]{0}', space=sflag, size = 0x4, scoped, tag = 'scoped memory for domain_classifier.1']
    #allocation12 [shape = 'u8[512]{0}', space=vmem, size = 0x400, scoped, tag = 'input window, operand 6, single buffered']
    %12 = vsyncpa [#allocation3], 0
    %13 = vsyncpa [#allocation5], 0
    %14 = vsyncpa [#allocation8], 0
    %15 = vsyncpa [#allocation11], 0
    // Predicated region
    $region2: #{domain_classifier.1} parent=1 // pred_check
      _
    $region3: #{domain_classifier.1} parent=1 // pred_check_branch
      %17 = sbr.rel (0) target = $region5
    $region4: #{domain_classifier.1} parent=1 // pred_region
      %s19 = ssub.s32 2048, 2048
      %20 = vsyncadd [#allocation3], %s19
      %s22 = sshll.u32 [#allocation2], 4
      %s23 = int_to_ptr.vmem [resolvable:$true] %s22
      %25 = dma.hbm_to_vmem [thread:$0]  %s0, 2048, %s23, [#allocation3]
    $region5: #{domain_classifier.1} parent=1 // pred_fallthru
      _
    // Predicated region
    $region6: #{domain_classifier.1} parent=1 // pred_check
      _
    $region7: #{domain_classifier.1} parent=1 // pred_check_branch
      %27 = sbr.rel (0) target = $region9
    $region8: #{domain_classifier.1} parent=1 // pred_region
      %s29 = ssub.s32 131072, 131072
      %30 = vsyncadd [#allocation5], %s29
      %s31 = sshll.u32 [#allocation4], 4
      %s32 = int_to_ptr.vmem [resolvable:$true] %s31
      %37 = dma.hbm_to_vmem [thread:$0]  %s1, 131072, %s32, [#allocation5], 512, 512, 32
    $region9: #{domain_classifier.1} parent=1 // pred_fallthru
      _
    // Predicated region
    $region10: #{domain_classifier.1} parent=1 // pred_check
      _
    $region11: #{domain_classifier.1} parent=1 // pred_check_branch
      %39 = sbr.rel (0) target = $region13
    $region12: #{domain_classifier.1} parent=1 // pred_region
      %s41 = ssub.s32 128, 128
      %42 = vsyncadd [#allocation5], %s41
      %s44 = sshll.u32 [#allocation6], 4
      %s45 = int_to_ptr.vmem [resolvable:$true] %s44
      %47 = dma.hbm_to_vmem [thread:$0]  %s2, 128, %s45, [#allocation5]
    $region13: #{domain_classifier.1} parent=1 // pred_fallthru
      _
    // Predicated region
    $region14: #{domain_classifier.1} parent=1 // pred_check
      _
    $region15: #{domain_classifier.1} parent=1 // pred_check_branch
      %49 = sbr.rel (0) target = $region17
    $region16: #{domain_classifier.1} parent=1 // pred_region
      %s51 = ssub.s32 32768, 32768
      %52 = vsyncadd [#allocation8], %s51
      %s53 = sshll.u32 [#allocation7], 4
      %s54 = int_to_ptr.vmem [resolvable:$true] %s53
      %59 = dma.hbm_to_vmem [thread:$0]  %s3, 32768, %s54, [#allocation8], 256, 256, 16
    $region17: #{domain_classifier.1} parent=1 // pred_fallthru
      _
    // Predicated region
    $region18: #{domain_classifier.1} parent=1 // pred_check
      _
    $region19: #{domain_classifier.1} parent=1 // pred_check_branch
      %61 = sbr.rel (0) target = $region21
    $region20: #{domain_classifier.1} parent=1 // pred_region
      %s63 = ssub.s32 64, 64
      %64 = vsyncadd [#allocation8], %s63
      %s66 = sshll.u32 [#allocation9], 4
      %s67 = int_to_ptr.vmem [resolvable:$true] %s66
      %69 = dma.hbm_to_vmem [thread:$0]  %s4, 64, %s67, [#allocation8]
    $region21: #{domain_classifier.1} parent=1 // pred_fallthru
      _
    // Predicated region
    $region22: #{domain_classifier.1} parent=1 // pred_check
      _
    $region23: #{domain_classifier.1} parent=1 // pred_check_branch
      %71 = sbr.rel (0) target = $region25
    $region24: #{domain_classifier.1} parent=1 // pred_region
      %s73 = ssub.s32 4096, 4096
      %74 = vsyncadd [#allocation11], %s73
      %s75 = sshll.u32 [#allocation10], 4
      %s76 = int_to_ptr.vmem [resolvable:$true] %s75
      %81 = dma.hbm_to_vmem [thread:$0]  %s5, 4096, %s76, [#allocation11], 64, 64, 4
    $region25: #{domain_classifier.1} parent=1 // pred_fallthru
      _
    // Predicated region
    $region26: #{domain_classifier.1} parent=1 // pred_check
      _
    $region27: #{domain_classifier.1} parent=1 // pred_check_branch
      %83 = sbr.rel (0) target = $region29
    $region28: #{domain_classifier.1} parent=1 // pred_region
      %s85 = ssub.s32 16, 16
      %86 = vsyncadd [#allocation11], %s85
      %s88 = sshll.u32 [#allocation12], 4
      %s89 = int_to_ptr.vmem [resolvable:$true] %s88
      %91 = dma.hbm_to_vmem [thread:$0]  %s6, 16, %s89, [#allocation11]
    $region29: #{domain_classifier.1} parent=1 // pred_fallthru
      _
    // Predicated region
    $region30: #{domain_classifier.1} parent=1 // pred_check
      _
    $region31: #{domain_classifier.1} parent=1 // pred_check_branch
      %93 = sbr.rel (0) target = $region33
    $region32: #{domain_classifier.1} parent=1 // pred_region
      %94 = dma.done [#allocation3], 2048
    $region33: #{domain_classifier.1} parent=1 // pred_fallthru
      _
    // Predicated region
    $region34: #{domain_classifier.1} parent=1 // pred_check
      _
    $region35: #{domain_classifier.1} parent=1 // pred_check_branch
      %96 = sbr.rel (0) target = $region37
    $region36: #{domain_classifier.1} parent=1 // pred_region
      %97 = dma.done [#allocation5], 131072
    $region37: #{domain_classifier.1} parent=1 // pred_fallthru
      _
    // Predicated region
    $region38: #{domain_classifier.1} parent=1 // pred_check
      _
    $region39: #{domain_classifier.1} parent=1 // pred_check_branch
      %99 = sbr.rel (0) target = $region41
    $region40: #{domain_classifier.1} parent=1 // pred_region
      %100 = dma.done [#allocation5], 128
    $region41: #{domain_classifier.1} parent=1 // pred_fallthru
      _
    // Predicated region
    $region42: #{domain_classifier.1} parent=1 // pred_check
      _
    $region43: #{domain_classifier.1} parent=1 // pred_check_branch
      %102 = sbr.rel (0) target = $region45
    $region44: #{domain_classifier.1} parent=1 // pred_region
      %103 = dma.done [#allocation8], 32768
    $region45: #{domain_classifier.1} parent=1 // pred_fallthru
      _
    // Predicated region
    $region46: #{domain_classifier.1} parent=1 // pred_check
      _
    $region47: #{domain_classifier.1} parent=1 // pred_check_branch
      %105 = sbr.rel (0) target = $region49
    $region48: #{domain_classifier.1} parent=1 // pred_region
      %106 = dma.done [#allocation8], 64
    $region49: #{domain_classifier.1} parent=1 // pred_fallthru
      _
    // Predicated region
    $region50: #{domain_classifier.1} parent=1 // pred_check
      _
    $region51: #{domain_classifier.1} parent=1 // pred_check_branch
      %108 = sbr.rel (0) target = $region53
    $region52: #{domain_classifier.1} parent=1 // pred_region
      %109 = dma.done [#allocation11], 4096
    $region53: #{domain_classifier.1} parent=1 // pred_fallthru
      _
    // Predicated region
    $region54: #{domain_classifier.1} parent=1 // pred_check
      _
    $region55: #{domain_classifier.1} parent=1 // pred_check_branch
      %111 = sbr.rel (0) target = $region57
    $region56: #{domain_classifier.1} parent=1 // pred_region
      %112 = dma.done [#allocation11], 16
    $region57: #{domain_classifier.1} parent=1 // pred_fallthru
      _
    %v114 = vld [vmem:[#allocation2] sm:$0xff]
    %v115 = vld [vmem:[#allocation2 + $0x8] sm:$0xff]
    %v116 = vld [vmem:[#allocation2 + $0x10] sm:$0xff]
    %v117 = vld [vmem:[#allocation2 + $0x18] sm:$0xff]
    %v118 = vld [vmem:[#allocation2 + $0x20] sm:$0xff]
    %v119 = vld [vmem:[#allocation2 + $0x28] sm:$0xff]
    %v120 = vld [vmem:[#allocation2 + $0x30] sm:$0xff]
    %v121 = vld [vmem:[#allocation2 + $0x38] sm:$0xff]
    %v122 = vld [vmem:[#allocation2 + $0x40] sm:$0xff]
    %v123 = vld [vmem:[#allocation2 + $0x48] sm:$0xff]
    %v124 = vld [vmem:[#allocation2 + $0x50] sm:$0xff]
    %v125 = vld [vmem:[#allocation2 + $0x58] sm:$0xff]
    %v126 = vld [vmem:[#allocation2 + $0x60] sm:$0xff]
    %v127 = vld [vmem:[#allocation2 + $0x68] sm:$0xff]
    %v128 = vld [vmem:[#allocation2 + $0x70] sm:$0xff]
    %v129 = vld [vmem:[#allocation2 + $0x78] sm:$0xff]
    %v130 = vpack.c.bf16 %v114, %v114
    %v131 = vpack.c.bf16 %v115, %v115
    %v132 = vpack.c.bf16 %v116, %v116
    %v133 = vpack.c.bf16 %v117, %v117
    %v134 = vpack.c.bf16 %v118, %v118
    %v135 = vpack.c.bf16 %v119, %v119
    %v136 = vpack.c.bf16 %v120, %v120
    %v137 = vpack.c.bf16 %v121, %v121
    %v138 = vpack.c.bf16 %v122, %v122
    %v139 = vpack.c.bf16 %v123, %v123
    %v140 = vpack.c.bf16 %v124, %v124
    %v141 = vpack.c.bf16 %v125, %v125
    %v142 = vpack.c.bf16 %v126, %v126
    %v143 = vpack.c.bf16 %v127, %v127
    %v144 = vpack.c.bf16 %v128, %v128
    %v145 = vpack.c.bf16 %v129, %v129
    %v146 = vld [vmem:[#allocation4] sm:$0xff]
    %v147 = vld [vmem:[#allocation4 + $0x8] sm:$0xff]
    %v148 = vld [vmem:[#allocation4 + $0x10] sm:$0xff]
    %v149 = vld [vmem:[#allocation4 + $0x18] sm:$0xff]
    %v150 = vld [vmem:[#allocation4 + $0x20] sm:$0xff]
    %v151 = vld [vmem:[#allocation4 + $0x28] sm:$0xff]
    %v152 = vld [vmem:[#allocation4 + $0x30] sm:$0xff]
    %v153 = vld [vmem:[#allocation4 + $0x38] sm:$0xff]
    %v154 = vld [vmem:[#allocation4 + $0x40] sm:$0xff]
    %v155 = vld [vmem:[#allocation4 + $0x48] sm:$0xff]
    %v156 = vld [vmem:[#allocation4 + $0x50] sm:$0xff]
    %v157 = vld [vmem:[#allocation4 + $0x58] sm:$0xff]
    %v158 = vld [vmem:[#allocation4 + $0x60] sm:$0xff]
    %v159 = vld [vmem:[#allocation4 + $0x68] sm:$0xff]
    %v160 = vld [vmem:[#allocation4 + $0x70] sm:$0xff]
    %v161 = vld [vmem:[#allocation4 + $0x78] sm:$0xff]
    %v162 = vld [vmem:[#allocation4 + $0x80] sm:$0xff]
    %v163 = vld [vmem:[#allocation4 + $0x88] sm:$0xff]
    %v164 = vld [vmem:[#allocation4 + $0x90] sm:$0xff]
    %v165 = vld [vmem:[#allocation4 + $0x98] sm:$0xff]
    %v166 = vld [vmem:[#allocation4 + $0xa0] sm:$0xff]
    %v167 = vld [vmem:[#allocation4 + $0xa8] sm:$0xff]
    %v168 = vld [vmem:[#allocation4 + $0xb0] sm:$0xff]
    %v169 = vld [vmem:[#allocation4 + $0xb8] sm:$0xff]
    %v170 = vld [vmem:[#allocation4 + $0xc0] sm:$0xff]
    %v171 = vld [vmem:[#allocation4 + $0xc8] sm:$0xff]
    %v172 = vld [vmem:[#allocation4 + $0xd0] sm:$0xff]
    %v173 = vld [vmem:[#allocation4 + $0xd8] sm:$0xff]
    %v174 = vld [vmem:[#allocation4 + $0xe0] sm:$0xff]
    %v175 = vld [vmem:[#allocation4 + $0xe8] sm:$0xff]
    %v176 = vld [vmem:[#allocation4 + $0xf0] sm:$0xff]
    %v177 = vld [vmem:[#allocation4 + $0xf8] sm:$0xff]
    %v178 = vld [vmem:[#allocation4 + $0x100] sm:$0xff]
    %v179 = vld [vmem:[#allocation4 + $0x108] sm:$0xff]
    %v180 = vld [vmem:[#allocation4 + $0x110] sm:$0xff]
    %v181 = vld [vmem:[#allocation4 + $0x118] sm:$0xff]
    %v182 = vld [vmem:[#allocation4 + $0x120] sm:$0xff]
    %v183 = vld [vmem:[#allocation4 + $0x128] sm:$0xff]
    %v184 = vld [vmem:[#allocation4 + $0x130] sm:$0xff]
    %v185 = vld [vmem:[#allocation4 + $0x138] sm:$0xff]
    %v186 = vld [vmem:[#allocation4 + $0x140] sm:$0xff]
    %v187 = vld [vmem:[#allocation4 + $0x148] sm:$0xff]
    %v188 = vld [vmem:[#allocation4 + $0x150] sm:$0xff]
    %v189 = vld [vmem:[#allocation4 + $0x158] sm:$0xff]
    %v190 = vld [vmem:[#allocation4 + $0x160] sm:$0xff]
    %v191 = vld [vmem:[#allocation4 + $0x168] sm:$0xff]
    %v192 = vld [vmem:[#allocation4 + $0x170] sm:$0xff]
    %v193 = vld [vmem:[#allocation4 + $0x178] sm:$0xff]
    %v194 = vld [vmem:[#allocation4 + $0x180] sm:$0xff]
    %v195 = vld [vmem:[#allocation4 + $0x188] sm:$0xff]
    %v196 = vld [vmem:[#allocation4 + $0x190] sm:$0xff]
    %v197 = vld [vmem:[#allocation4 + $0x198] sm:$0xff]
    %v198 = vld [vmem:[#allocation4 + $0x1a0] sm:$0xff]
    %v199 = vld [vmem:[#allocation4 + $0x1a8] sm:$0xff]
    %v200 = vld [vmem:[#allocation4 + $0x1b0] sm:$0xff]
    %v201 = vld [vmem:[#allocation4 + $0x1b8] sm:$0xff]
    %v202 = vld [vmem:[#allocation4 + $0x1c0] sm:$0xff]
    %v203 = vld [vmem:[#allocation4 + $0x1c8] sm:$0xff]
    %v204 = vld [vmem:[#allocation4 + $0x1d0] sm:$0xff]
    %v205 = vld [vmem:[#allocation4 + $0x1d8] sm:$0xff]
    %v206 = vld [vmem:[#allocation4 + $0x1e0] sm:$0xff]
    %v207 = vld [vmem:[#allocation4 + $0x1e8] sm:$0xff]
    %v208 = vld [vmem:[#allocation4 + $0x1f0] sm:$0xff]
    %v209 = vld [vmem:[#allocation4 + $0x1f8] sm:$0xff]
    %v210 = vld [vmem:[#allocation4 + $0x200] sm:$0xff]
    %v211 = vld [vmem:[#allocation4 + $0x208] sm:$0xff]
    %v212 = vld [vmem:[#allocation4 + $0x210] sm:$0xff]
    %v213 = vld [vmem:[#allocation4 + $0x218] sm:$0xff]
    %v214 = vld [vmem:[#allocation4 + $0x220] sm:$0xff]
    %v215 = vld [vmem:[#allocation4 + $0x228] sm:$0xff]
    %v216 = vld [vmem:[#allocation4 + $0x230] sm:$0xff]
    %v217 = vld [vmem:[#allocation4 + $0x238] sm:$0xff]
    %v218 = vld [vmem:[#allocation4 + $0x240] sm:$0xff]
    %v219 = vld [vmem:[#allocation4 + $0x248] sm:$0xff]
    %v220 = vld [vmem:[#allocation4 + $0x250] sm:$0xff]
    %v221 = vld [vmem:[#allocation4 + $0x258] sm:$0xff]
    %v222 = vld [vmem:[#allocation4 + $0x260] sm:$0xff]
    %v223 = vld [vmem:[#allocation4 + $0x268] sm:$0xff]
    %v224 = vld [vmem:[#allocation4 + $0x270] sm:$0xff]
    %v225 = vld [vmem:[#allocation4 + $0x278] sm:$0xff]
    %v226 = vld [vmem:[#allocation4 + $0x280] sm:$0xff]
    %v227 = vld [vmem:[#allocation4 + $0x288] sm:$0xff]
    %v228 = vld [vmem:[#allocation4 + $0x290] sm:$0xff]
    %v229 = vld [vmem:[#allocation4 + $0x298] sm:$0xff]
    %v230 = vld [vmem:[#allocation4 + $0x2a0] sm:$0xff]
    %v231 = vld [vmem:[#allocation4 + $0x2a8] sm:$0xff]
    %v232 = vld [vmem:[#allocation4 + $0x2b0] sm:$0xff]
    %v233 = vld [vmem:[#allocation4 + $0x2b8] sm:$0xff]
    %v234 = vld [vmem:[#allocation4 + $0x2c0] sm:$0xff]
    %v235 = vld [vmem:[#allocation4 + $0x2c8] sm:$0xff]
    %v236 = vld [vmem:[#allocation4 + $0x2d0] sm:$0xff]
    %v237 = vld [vmem:[#allocation4 + $0x2d8] sm:$0xff]
    %v238 = vld [vmem:[#allocation4 + $0x2e0] sm:$0xff]
    %v239 = vld [vmem:[#allocation4 + $0x2e8] sm:$0xff]
    %v240 = vld [vmem:[#allocation4 + $0x2f0] sm:$0xff]
    %v241 = vld [vmem:[#allocation4 + $0x2f8] sm:$0xff]
    %v242 = vld [vmem:[#allocation4 + $0x300] sm:$0xff]
    %v243 = vld [vmem:[#allocation4 + $0x308] sm:$0xff]
    %v244 = vld [vmem:[#allocation4 + $0x310] sm:$0xff]
    %v245 = vld [vmem:[#allocation4 + $0x318] sm:$0xff]
    %v246 = vld [vmem:[#allocation4 + $0x320] sm:$0xff]
    %v247 = vld [vmem:[#allocation4 + $0x328] sm:$0xff]
    %v248 = vld [vmem:[#allocation4 + $0x330] sm:$0xff]
    %v249 = vld [vmem:[#allocation4 + $0x338] sm:$0xff]
    %v250 = vld [vmem:[#allocation4 + $0x340] sm:$0xff]
    %v251 = vld [vmem:[#allocation4 + $0x348] sm:$0xff]
    %v252 = vld [vmem:[#allocation4 + $0x350] sm:$0xff]
    %v253 = vld [vmem:[#allocation4 + $0x358] sm:$0xff]
    %v254 = vld [vmem:[#allocation4 + $0x360] sm:$0xff]
    %v255 = vld [vmem:[#allocation4 + $0x368] sm:$0xff]
    %v256 = vld [vmem:[#allocation4 + $0x370] sm:$0xff]
    %v257 = vld [vmem:[#allocation4 + $0x378] sm:$0xff]
    %v258 = vld [vmem:[#allocation4 + $0x380] sm:$0xff]
    %v259 = vld [vmem:[#allocation4 + $0x388] sm:$0xff]
    %v260 = vld [vmem:[#allocation4 + $0x390] sm:$0xff]
    %v261 = vld [vmem:[#allocation4 + $0x398] sm:$0xff]
    %v262 = vld [vmem:[#allocation4 + $0x3a0] sm:$0xff]
    %v263 = vld [vmem:[#allocation4 + $0x3a8] sm:$0xff]
    %v264 = vld [vmem:[#allocation4 + $0x3b0] sm:$0xff]
    %v265 = vld [vmem:[#allocation4 + $0x3b8] sm:$0xff]
    %v266 = vld [vmem:[#allocation4 + $0x3c0] sm:$0xff]
    %v267 = vld [vmem:[#allocation4 + $0x3c8] sm:$0xff]
    %v268 = vld [vmem:[#allocation4 + $0x3d0] sm:$0xff]
    %v269 = vld [vmem:[#allocation4 + $0x3d8] sm:$0xff]
    %v270 = vld [vmem:[#allocation4 + $0x3e0] sm:$0xff]
    %v271 = vld [vmem:[#allocation4 + $0x3e8] sm:$0xff]
    %v272 = vld [vmem:[#allocation4 + $0x3f0] sm:$0xff]
    %v273 = vld [vmem:[#allocation4 + $0x3f8] sm:$0xff]
    %v274 = vld [vmem:[#allocation4 + $0x400] sm:$0xff]
    %v275 = vld [vmem:[#allocation4 + $0x408] sm:$0xff]
    %v276 = vld [vmem:[#allocation4 + $0x410] sm:$0xff]
    %v277 = vld [vmem:[#allocation4 + $0x418] sm:$0xff]
    %v278 = vld [vmem:[#allocation4 + $0x420] sm:$0xff]
    %v279 = vld [vmem:[#allocation4 + $0x428] sm:$0xff]
    %v280 = vld [vmem:[#allocation4 + $0x430] sm:$0xff]
    %v281 = vld [vmem:[#allocation4 + $0x438] sm:$0xff]
    %v282 = vld [vmem:[#allocation4 + $0x440] sm:$0xff]
    %v283 = vld [vmem:[#allocation4 + $0x448] sm:$0xff]
    %v284 = vld [vmem:[#allocation4 + $0x450] sm:$0xff]
    %v285 = vld [vmem:[#allocation4 + $0x458] sm:$0xff]
    %v286 = vld [vmem:[#allocation4 + $0x460] sm:$0xff]
    %v287 = vld [vmem:[#allocation4 + $0x468] sm:$0xff]
    %v288 = vld [vmem:[#allocation4 + $0x470] sm:$0xff]
    %v289 = vld [vmem:[#allocation4 + $0x478] sm:$0xff]
    %v290 = vld [vmem:[#allocation4 + $0x480] sm:$0xff]
    %v291 = vld [vmem:[#allocation4 + $0x488] sm:$0xff]
    %v292 = vld [vmem:[#allocation4 + $0x490] sm:$0xff]
    %v293 = vld [vmem:[#allocation4 + $0x498] sm:$0xff]
    %v294 = vld [vmem:[#allocation4 + $0x4a0] sm:$0xff]
    %v295 = vld [vmem:[#allocation4 + $0x4a8] sm:$0xff]
    %v296 = vld [vmem:[#allocation4 + $0x4b0] sm:$0xff]
    %v297 = vld [vmem:[#allocation4 + $0x4b8] sm:$0xff]
    %v298 = vld [vmem:[#allocation4 + $0x4c0] sm:$0xff]
    %v299 = vld [vmem:[#allocation4 + $0x4c8] sm:$0xff]
    %v300 = vld [vmem:[#allocation4 + $0x4d0] sm:$0xff]
    %v301 = vld [vmem:[#allocation4 + $0x4d8] sm:$0xff]
    %v302 = vld [vmem:[#allocation4 + $0x4e0] sm:$0xff]
    %v303 = vld [vmem:[#allocation4 + $0x4e8] sm:$0xff]
    %v304 = vld [vmem:[#allocation4 + $0x4f0] sm:$0xff]
    %v305 = vld [vmem:[#allocation4 + $0x4f8] sm:$0xff]
    %v306 = vld [vmem:[#allocation4 + $0x500] sm:$0xff]
    %v307 = vld [vmem:[#allocation4 + $0x508] sm:$0xff]
    %v308 = vld [vmem:[#allocation4 + $0x510] sm:$0xff]
    %v309 = vld [vmem:[#allocation4 + $0x518] sm:$0xff]
    %v310 = vld [vmem:[#allocation4 + $0x520] sm:$0xff]
    %v311 = vld [vmem:[#allocation4 + $0x528] sm:$0xff]
    %v312 = vld [vmem:[#allocation4 + $0x530] sm:$0xff]
    %v313 = vld [vmem:[#allocation4 + $0x538] sm:$0xff]
    %v314 = vld [vmem:[#allocation4 + $0x540] sm:$0xff]
    %v315 = vld [vmem:[#allocation4 + $0x548] sm:$0xff]
    %v316 = vld [vmem:[#allocation4 + $0x550] sm:$0xff]
    %v317 = vld [vmem:[#allocation4 + $0x558] sm:$0xff]
    %v318 = vld [vmem:[#allocation4 + $0x560] sm:$0xff]
    %v319 = vld [vmem:[#allocation4 + $0x568] sm:$0xff]
    %v320 = vld [vmem:[#allocation4 + $0x570] sm:$0xff]
    %v321 = vld [vmem:[#allocation4 + $0x578] sm:$0xff]
    %v322 = vld [vmem:[#allocation4 + $0x580] sm:$0xff]
    %v323 = vld [vmem:[#allocation4 + $0x588] sm:$0xff]
    %v324 = vld [vmem:[#allocation4 + $0x590] sm:$0xff]
    %v325 = vld [vmem:[#allocation4 + $0x598] sm:$0xff]
    %v326 = vld [vmem:[#allocation4 + $0x5a0] sm:$0xff]
    %v327 = vld [vmem:[#allocation4 + $0x5a8] sm:$0xff]
    %v328 = vld [vmem:[#allocation4 + $0x5b0] sm:$0xff]
    %v329 = vld [vmem:[#allocation4 + $0x5b8] sm:$0xff]
    %v330 = vld [vmem:[#allocation4 + $0x5c0] sm:$0xff]
    %v331 = vld [vmem:[#allocation4 + $0x5c8] sm:$0xff]
    %v332 = vld [vmem:[#allocation4 + $0x5d0] sm:$0xff]
    %v333 = vld [vmem:[#allocation4 + $0x5d8] sm:$0xff]
    %v334 = vld [vmem:[#allocation4 + $0x5e0] sm:$0xff]
    %v335 = vld [vmem:[#allocation4 + $0x5e8] sm:$0xff]
    %v336 = vld [vmem:[#allocation4 + $0x5f0] sm:$0xff]
    %v337 = vld [vmem:[#allocation4 + $0x5f8] sm:$0xff]
    %v338 = vld [vmem:[#allocation4 + $0x600] sm:$0xff]
    %v339 = vld [vmem:[#allocation4 + $0x608] sm:$0xff]
    %v340 = vld [vmem:[#allocation4 + $0x610] sm:$0xff]
    %v341 = vld [vmem:[#allocation4 + $0x618] sm:$0xff]
    %v342 = vld [vmem:[#allocation4 + $0x620] sm:$0xff]
    %v343 = vld [vmem:[#allocation4 + $0x628] sm:$0xff]
    %v344 = vld [vmem:[#allocation4 + $0x630] sm:$0xff]
    %v345 = vld [vmem:[#allocation4 + $0x638] sm:$0xff]
    %v346 = vld [vmem:[#allocation4 + $0x640] sm:$0xff]
    %v347 = vld [vmem:[#allocation4 + $0x648] sm:$0xff]
    %v348 = vld [vmem:[#allocation4 + $0x650] sm:$0xff]
    %v349 = vld [vmem:[#allocation4 + $0x658] sm:$0xff]
    %v350 = vld [vmem:[#allocation4 + $0x660] sm:$0xff]
    %v351 = vld [vmem:[#allocation4 + $0x668] sm:$0xff]
    %v352 = vld [vmem:[#allocation4 + $0x670] sm:$0xff]
    %v353 = vld [vmem:[#allocation4 + $0x678] sm:$0xff]
    %v354 = vld [vmem:[#allocation4 + $0x680] sm:$0xff]
    %v355 = vld [vmem:[#allocation4 + $0x688] sm:$0xff]
    %v356 = vld [vmem:[#allocation4 + $0x690] sm:$0xff]
    %v357 = vld [vmem:[#allocation4 + $0x698] sm:$0xff]
    %v358 = vld [vmem:[#allocation4 + $0x6a0] sm:$0xff]
    %v359 = vld [vmem:[#allocation4 + $0x6a8] sm:$0xff]
    %v360 = vld [vmem:[#allocation4 + $0x6b0] sm:$0xff]
    %v361 = vld [vmem:[#allocation4 + $0x6b8] sm:$0xff]
    %v362 = vld [vmem:[#allocation4 + $0x6c0] sm:$0xff]
    %v363 = vld [vmem:[#allocation4 + $0x6c8] sm:$0xff]
    %v364 = vld [vmem:[#allocation4 + $0x6d0] sm:$0xff]
    %v365 = vld [vmem:[#allocation4 + $0x6d8] sm:$0xff]
    %v366 = vld [vmem:[#allocation4 + $0x6e0] sm:$0xff]
    %v367 = vld [vmem:[#allocation4 + $0x6e8] sm:$0xff]
    %v368 = vld [vmem:[#allocation4 + $0x6f0] sm:$0xff]
    %v369 = vld [vmem:[#allocation4 + $0x6f8] sm:$0xff]
    %v370 = vld [vmem:[#allocation4 + $0x700] sm:$0xff]
    %v371 = vld [vmem:[#allocation4 + $0x708] sm:$0xff]
    %v372 = vld [vmem:[#allocation4 + $0x710] sm:$0xff]
    %v373 = vld [vmem:[#allocation4 + $0x718] sm:$0xff]
    %v374 = vld [vmem:[#allocation4 + $0x720] sm:$0xff]
    %v375 = vld [vmem:[#allocation4 + $0x728] sm:$0xff]
    %v376 = vld [vmem:[#allocation4 + $0x730] sm:$0xff]
    %v377 = vld [vmem:[#allocation4 + $0x738] sm:$0xff]
    %v378 = vld [vmem:[#allocation4 + $0x740] sm:$0xff]
    %v379 = vld [vmem:[#allocation4 + $0x748] sm:$0xff]
    %v380 = vld [vmem:[#allocation4 + $0x750] sm:$0xff]
    %v381 = vld [vmem:[#allocation4 + $0x758] sm:$0xff]
    %v382 = vld [vmem:[#allocation4 + $0x760] sm:$0xff]
    %v383 = vld [vmem:[#allocation4 + $0x768] sm:$0xff]
    %v384 = vld [vmem:[#allocation4 + $0x770] sm:$0xff]
    %v385 = vld [vmem:[#allocation4 + $0x778] sm:$0xff]
    %v386 = vld [vmem:[#allocation4 + $0x780] sm:$0xff]
    %v387 = vld [vmem:[#allocation4 + $0x788] sm:$0xff]
    %v388 = vld [vmem:[#allocation4 + $0x790] sm:$0xff]
    %v389 = vld [vmem:[#allocation4 + $0x798] sm:$0xff]
    %v390 = vld [vmem:[#allocation4 + $0x7a0] sm:$0xff]
    %v391 = vld [vmem:[#allocation4 + $0x7a8] sm:$0xff]
    %v392 = vld [vmem:[#allocation4 + $0x7b0] sm:$0xff]
    %v393 = vld [vmem:[#allocation4 + $0x7b8] sm:$0xff]
    %v394 = vld [vmem:[#allocation4 + $0x7c0] sm:$0xff]
    %v395 = vld [vmem:[#allocation4 + $0x7c8] sm:$0xff]
    %v396 = vld [vmem:[#allocation4 + $0x7d0] sm:$0xff]
    %v397 = vld [vmem:[#allocation4 + $0x7d8] sm:$0xff]
    %v398 = vld [vmem:[#allocation4 + $0x7e0] sm:$0xff]
    %v399 = vld [vmem:[#allocation4 + $0x7e8] sm:$0xff]
    %v400 = vld [vmem:[#allocation4 + $0x7f0] sm:$0xff]
    %v401 = vld [vmem:[#allocation4 + $0x7f8] sm:$0xff]
    %v402 = vld [vmem:[#allocation4 + $0x800] sm:$0xff]
    %v403 = vld [vmem:[#allocation4 + $0x808] sm:$0xff]
    %v404 = vld [vmem:[#allocation4 + $0x810] sm:$0xff]
    %v405 = vld [vmem:[#allocation4 + $0x818] sm:$0xff]
    %v406 = vld [vmem:[#allocation4 + $0x820] sm:$0xff]
    %v407 = vld [vmem:[#allocation4 + $0x828] sm:$0xff]
    %v408 = vld [vmem:[#allocation4 + $0x830] sm:$0xff]
    %v409 = vld [vmem:[#allocation4 + $0x838] sm:$0xff]
    %v410 = vld [vmem:[#allocation4 + $0x840] sm:$0xff]
    %v411 = vld [vmem:[#allocation4 + $0x848] sm:$0xff]
    %v412 = vld [vmem:[#allocation4 + $0x850] sm:$0xff]
    %v413 = vld [vmem:[#allocation4 + $0x858] sm:$0xff]
    %v414 = vld [vmem:[#allocation4 + $0x860] sm:$0xff]
    %v415 = vld [vmem:[#allocation4 + $0x868] sm:$0xff]
    %v416 = vld [vmem:[#allocation4 + $0x870] sm:$0xff]
    %v417 = vld [vmem:[#allocation4 + $0x878] sm:$0xff]
    %v418 = vld [vmem:[#allocation4 + $0x880] sm:$0xff]
    %v419 = vld [vmem:[#allocation4 + $0x888] sm:$0xff]
    %v420 = vld [vmem:[#allocation4 + $0x890] sm:$0xff]
    %v421 = vld [vmem:[#allocation4 + $0x898] sm:$0xff]
    %v422 = vld [vmem:[#allocation4 + $0x8a0] sm:$0xff]
    %v423 = vld [vmem:[#allocation4 + $0x8a8] sm:$0xff]
    %v424 = vld [vmem:[#allocation4 + $0x8b0] sm:$0xff]
    %v425 = vld [vmem:[#allocation4 + $0x8b8] sm:$0xff]
    %v426 = vld [vmem:[#allocation4 + $0x8c0] sm:$0xff]
    %v427 = vld [vmem:[#allocation4 + $0x8c8] sm:$0xff]
    %v428 = vld [vmem:[#allocation4 + $0x8d0] sm:$0xff]
    %v429 = vld [vmem:[#allocation4 + $0x8d8] sm:$0xff]
    %v430 = vld [vmem:[#allocation4 + $0x8e0] sm:$0xff]
    %v431 = vld [vmem:[#allocation4 + $0x8e8] sm:$0xff]
    %v432 = vld [vmem:[#allocation4 + $0x8f0] sm:$0xff]
    %v433 = vld [vmem:[#allocation4 + $0x8f8] sm:$0xff]
    %v434 = vld [vmem:[#allocation4 + $0x900] sm:$0xff]
    %v435 = vld [vmem:[#allocation4 + $0x908] sm:$0xff]
    %v436 = vld [vmem:[#allocation4 + $0x910] sm:$0xff]
    %v437 = vld [vmem:[#allocation4 + $0x918] sm:$0xff]
    %v438 = vld [vmem:[#allocation4 + $0x920] sm:$0xff]
    %v439 = vld [vmem:[#allocation4 + $0x928] sm:$0xff]
    %v440 = vld [vmem:[#allocation4 + $0x930] sm:$0xff]
    %v441 = vld [vmem:[#allocation4 + $0x938] sm:$0xff]
    %v442 = vld [vmem:[#allocation4 + $0x940] sm:$0xff]
    %v443 = vld [vmem:[#allocation4 + $0x948] sm:$0xff]
    %v444 = vld [vmem:[#allocation4 + $0x950] sm:$0xff]
    %v445 = vld [vmem:[#allocation4 + $0x958] sm:$0xff]
    %v446 = vld [vmem:[#allocation4 + $0x960] sm:$0xff]
    %v447 = vld [vmem:[#allocation4 + $0x968] sm:$0xff]
    %v448 = vld [vmem:[#allocation4 + $0x970] sm:$0xff]
    %v449 = vld [vmem:[#allocation4 + $0x978] sm:$0xff]
    %v450 = vld [vmem:[#allocation4 + $0x980] sm:$0xff]
    %v451 = vld [vmem:[#allocation4 + $0x988] sm:$0xff]
    %v452 = vld [vmem:[#allocation4 + $0x990] sm:$0xff]
    %v453 = vld [vmem:[#allocation4 + $0x998] sm:$0xff]
    %v454 = vld [vmem:[#allocation4 + $0x9a0] sm:$0xff]
    %v455 = vld [vmem:[#allocation4 + $0x9a8] sm:$0xff]
    %v456 = vld [vmem:[#allocation4 + $0x9b0] sm:$0xff]
    %v457 = vld [vmem:[#allocation4 + $0x9b8] sm:$0xff]
    %v458 = vld [vmem:[#allocation4 + $0x9c0] sm:$0xff]
    %v459 = vld [vmem:[#allocation4 + $0x9c8] sm:$0xff]
    %v460 = vld [vmem:[#allocation4 + $0x9d0] sm:$0xff]
    %v461 = vld [vmem:[#allocation4 + $0x9d8] sm:$0xff]
    %v462 = vld [vmem:[#allocation4 + $0x9e0] sm:$0xff]
    %v463 = vld [vmem:[#allocation4 + $0x9e8] sm:$0xff]
    %v464 = vld [vmem:[#allocation4 + $0x9f0] sm:$0xff]
    %v465 = vld [vmem:[#allocation4 + $0x9f8] sm:$0xff]
    %v466 = vld [vmem:[#allocation4 + $0xa00] sm:$0xff]
    %v467 = vld [vmem:[#allocation4 + $0xa08] sm:$0xff]
    %v468 = vld [vmem:[#allocation4 + $0xa10] sm:$0xff]
    %v469 = vld [vmem:[#allocation4 + $0xa18] sm:$0xff]
    %v470 = vld [vmem:[#allocation4 + $0xa20] sm:$0xff]
    %v471 = vld [vmem:[#allocation4 + $0xa28] sm:$0xff]
    %v472 = vld [vmem:[#allocation4 + $0xa30] sm:$0xff]
    %v473 = vld [vmem:[#allocation4 + $0xa38] sm:$0xff]
    %v474 = vld [vmem:[#allocation4 + $0xa40] sm:$0xff]
    %v475 = vld [vmem:[#allocation4 + $0xa48] sm:$0xff]
    %v476 = vld [vmem:[#allocation4 + $0xa50] sm:$0xff]
    %v477 = vld [vmem:[#allocation4 + $0xa58] sm:$0xff]
    %v478 = vld [vmem:[#allocation4 + $0xa60] sm:$0xff]
    %v479 = vld [vmem:[#allocation4 + $0xa68] sm:$0xff]
    %v480 = vld [vmem:[#allocation4 + $0xa70] sm:$0xff]
    %v481 = vld [vmem:[#allocation4 + $0xa78] sm:$0xff]
    %v482 = vld [vmem:[#allocation4 + $0xa80] sm:$0xff]
    %v483 = vld [vmem:[#allocation4 + $0xa88] sm:$0xff]
    %v484 = vld [vmem:[#allocation4 + $0xa90] sm:$0xff]
    %v485 = vld [vmem:[#allocation4 + $0xa98] sm:$0xff]
    %v486 = vld [vmem:[#allocation4 + $0xaa0] sm:$0xff]
    %v487 = vld [vmem:[#allocation4 + $0xaa8] sm:$0xff]
    %v488 = vld [vmem:[#allocation4 + $0xab0] sm:$0xff]
    %v489 = vld [vmem:[#allocation4 + $0xab8] sm:$0xff]
    %v490 = vld [vmem:[#allocation4 + $0xac0] sm:$0xff]
    %v491 = vld [vmem:[#allocation4 + $0xac8] sm:$0xff]
    %v492 = vld [vmem:[#allocation4 + $0xad0] sm:$0xff]
    %v493 = vld [vmem:[#allocation4 + $0xad8] sm:$0xff]
    %v494 = vld [vmem:[#allocation4 + $0xae0] sm:$0xff]
    %v495 = vld [vmem:[#allocation4 + $0xae8] sm:$0xff]
    %v496 = vld [vmem:[#allocation4 + $0xaf0] sm:$0xff]
    %v497 = vld [vmem:[#allocation4 + $0xaf8] sm:$0xff]
    %v498 = vld [vmem:[#allocation4 + $0xb00] sm:$0xff]
    %v499 = vld [vmem:[#allocation4 + $0xb08] sm:$0xff]
    %v500 = vld [vmem:[#allocation4 + $0xb10] sm:$0xff]
    %v501 = vld [vmem:[#allocation4 + $0xb18] sm:$0xff]
    %v502 = vld [vmem:[#allocation4 + $0xb20] sm:$0xff]
    %v503 = vld [vmem:[#allocation4 + $0xb28] sm:$0xff]
    %v504 = vld [vmem:[#allocation4 + $0xb30] sm:$0xff]
    %v505 = vld [vmem:[#allocation4 + $0xb38] sm:$0xff]
    %v506 = vld [vmem:[#allocation4 + $0xb40] sm:$0xff]
    %v507 = vld [vmem:[#allocation4 + $0xb48] sm:$0xff]
    %v508 = vld [vmem:[#allocation4 + $0xb50] sm:$0xff]
    %v509 = vld [vmem:[#allocation4 + $0xb58] sm:$0xff]
    %v510 = vld [vmem:[#allocation4 + $0xb60] sm:$0xff]
    %v511 = vld [vmem:[#allocation4 + $0xb68] sm:$0xff]
    %v512 = vld [vmem:[#allocation4 + $0xb70] sm:$0xff]
    %v513 = vld [vmem:[#allocation4 + $0xb78] sm:$0xff]
    %v514 = vld [vmem:[#allocation4 + $0xb80] sm:$0xff]
    %v515 = vld [vmem:[#allocation4 + $0xb88] sm:$0xff]
    %v516 = vld [vmem:[#allocation4 + $0xb90] sm:$0xff]
    %v517 = vld [vmem:[#allocation4 + $0xb98] sm:$0xff]
    %v518 = vld [vmem:[#allocation4 + $0xba0] sm:$0xff]
    %v519 = vld [vmem:[#allocation4 + $0xba8] sm:$0xff]
    %v520 = vld [vmem:[#allocation4 + $0xbb0] sm:$0xff]
    %v521 = vld [vmem:[#allocation4 + $0xbb8] sm:$0xff]
    %v522 = vld [vmem:[#allocation4 + $0xbc0] sm:$0xff]
    %v523 = vld [vmem:[#allocation4 + $0xbc8] sm:$0xff]
    %v524 = vld [vmem:[#allocation4 + $0xbd0] sm:$0xff]
    %v525 = vld [vmem:[#allocation4 + $0xbd8] sm:$0xff]
    %v526 = vld [vmem:[#allocation4 + $0xbe0] sm:$0xff]
    %v527 = vld [vmem:[#allocation4 + $0xbe8] sm:$0xff]
    %v528 = vld [vmem:[#allocation4 + $0xbf0] sm:$0xff]
    %v529 = vld [vmem:[#allocation4 + $0xbf8] sm:$0xff]
    %v530 = vld [vmem:[#allocation4 + $0xc00] sm:$0xff]
    %v531 = vld [vmem:[#allocation4 + $0xc08] sm:$0xff]
    %v532 = vld [vmem:[#allocation4 + $0xc10] sm:$0xff]
    %v533 = vld [vmem:[#allocation4 + $0xc18] sm:$0xff]
    %v534 = vld [vmem:[#allocation4 + $0xc20] sm:$0xff]
    %v535 = vld [vmem:[#allocation4 + $0xc28] sm:$0xff]
    %v536 = vld [vmem:[#allocation4 + $0xc30] sm:$0xff]
    %v537 = vld [vmem:[#allocation4 + $0xc38] sm:$0xff]
    %v538 = vld [vmem:[#allocation4 + $0xc40] sm:$0xff]
    %v539 = vld [vmem:[#allocation4 + $0xc48] sm:$0xff]
    %v540 = vld [vmem:[#allocation4 + $0xc50] sm:$0xff]
    %v541 = vld [vmem:[#allocation4 + $0xc58] sm:$0xff]
    %v542 = vld [vmem:[#allocation4 + $0xc60] sm:$0xff]
    %v543 = vld [vmem:[#allocation4 + $0xc68] sm:$0xff]
    %v544 = vld [vmem:[#allocation4 + $0xc70] sm:$0xff]
    %v545 = vld [vmem:[#allocation4 + $0xc78] sm:$0xff]
    %v546 = vld [vmem:[#allocation4 + $0xc80] sm:$0xff]
    %v547 = vld [vmem:[#allocation4 + $0xc88] sm:$0xff]
    %v548 = vld [vmem:[#allocation4 + $0xc90] sm:$0xff]
    %v549 = vld [vmem:[#allocation4 + $0xc98] sm:$0xff]
    %v550 = vld [vmem:[#allocation4 + $0xca0] sm:$0xff]
    %v551 = vld [vmem:[#allocation4 + $0xca8] sm:$0xff]
    %v552 = vld [vmem:[#allocation4 + $0xcb0] sm:$0xff]
    %v553 = vld [vmem:[#allocation4 + $0xcb8] sm:$0xff]
    %v554 = vld [vmem:[#allocation4 + $0xcc0] sm:$0xff]
    %v555 = vld [vmem:[#allocation4 + $0xcc8] sm:$0xff]
    %v556 = vld [vmem:[#allocation4 + $0xcd0] sm:$0xff]
    %v557 = vld [vmem:[#allocation4 + $0xcd8] sm:$0xff]
    %v558 = vld [vmem:[#allocation4 + $0xce0] sm:$0xff]
    %v559 = vld [vmem:[#allocation4 + $0xce8] sm:$0xff]
    %v560 = vld [vmem:[#allocation4 + $0xcf0] sm:$0xff]
    %v561 = vld [vmem:[#allocation4 + $0xcf8] sm:$0xff]
    %v562 = vld [vmem:[#allocation4 + $0xd00] sm:$0xff]
    %v563 = vld [vmem:[#allocation4 + $0xd08] sm:$0xff]
    %v564 = vld [vmem:[#allocation4 + $0xd10] sm:$0xff]
    %v565 = vld [vmem:[#allocation4 + $0xd18] sm:$0xff]
    %v566 = vld [vmem:[#allocation4 + $0xd20] sm:$0xff]
    %v567 = vld [vmem:[#allocation4 + $0xd28] sm:$0xff]
    %v568 = vld [vmem:[#allocation4 + $0xd30] sm:$0xff]
    %v569 = vld [vmem:[#allocation4 + $0xd38] sm:$0xff]
    %v570 = vld [vmem:[#allocation4 + $0xd40] sm:$0xff]
    %v571 = vld [vmem:[#allocation4 + $0xd48] sm:$0xff]
    %v572 = vld [vmem:[#allocation4 + $0xd50] sm:$0xff]
    %v573 = vld [vmem:[#allocation4 + $0xd58] sm:$0xff]
    %v574 = vld [vmem:[#allocation4 + $0xd60] sm:$0xff]
    %v575 = vld [vmem:[#allocation4 + $0xd68] sm:$0xff]
    %v576 = vld [vmem:[#allocation4 + $0xd70] sm:$0xff]
    %v577 = vld [vmem:[#allocation4 + $0xd78] sm:$0xff]
    %v578 = vld [vmem:[#allocation4 + $0xd80] sm:$0xff]
    %v579 = vld [vmem:[#allocation4 + $0xd88] sm:$0xff]
    %v580 = vld [vmem:[#allocation4 + $0xd90] sm:$0xff]
    %v581 = vld [vmem:[#allocation4 + $0xd98] sm:$0xff]
    %v582 = vld [vmem:[#allocation4 + $0xda0] sm:$0xff]
    %v583 = vld [vmem:[#allocation4 + $0xda8] sm:$0xff]
    %v584 = vld [vmem:[#allocation4 + $0xdb0] sm:$0xff]
    %v585 = vld [vmem:[#allocation4 + $0xdb8] sm:$0xff]
    %v586 = vld [vmem:[#allocation4 + $0xdc0] sm:$0xff]
    %v587 = vld [vmem:[#allocation4 + $0xdc8] sm:$0xff]
    %v588 = vld [vmem:[#allocation4 + $0xdd0] sm:$0xff]
    %v589 = vld [vmem:[#allocation4 + $0xdd8] sm:$0xff]
    %v590 = vld [vmem:[#allocation4 + $0xde0] sm:$0xff]
    %v591 = vld [vmem:[#allocation4 + $0xde8] sm:$0xff]
    %v592 = vld [vmem:[#allocation4 + $0xdf0] sm:$0xff]
    %v593 = vld [vmem:[#allocation4 + $0xdf8] sm:$0xff]
    %v594 = vld [vmem:[#allocation4 + $0xe00] sm:$0xff]
    %v595 = vld [vmem:[#allocation4 + $0xe08] sm:$0xff]
    %v596 = vld [vmem:[#allocation4 + $0xe10] sm:$0xff]
    %v597 = vld [vmem:[#allocation4 + $0xe18] sm:$0xff]
    %v598 = vld [vmem:[#allocation4 + $0xe20] sm:$0xff]
    %v599 = vld [vmem:[#allocation4 + $0xe28] sm:$0xff]
    %v600 = vld [vmem:[#allocation4 + $0xe30] sm:$0xff]
    %v601 = vld [vmem:[#allocation4 + $0xe38] sm:$0xff]
    %v602 = vld [vmem:[#allocation4 + $0xe40] sm:$0xff]
    %v603 = vld [vmem:[#allocation4 + $0xe48] sm:$0xff]
    %v604 = vld [vmem:[#allocation4 + $0xe50] sm:$0xff]
    %v605 = vld [vmem:[#allocation4 + $0xe58] sm:$0xff]
    %v606 = vld [vmem:[#allocation4 + $0xe60] sm:$0xff]
    %v607 = vld [vmem:[#allocation4 + $0xe68] sm:$0xff]
    %v608 = vld [vmem:[#allocation4 + $0xe70] sm:$0xff]
    %v609 = vld [vmem:[#allocation4 + $0xe78] sm:$0xff]
    %v610 = vld [vmem:[#allocation4 + $0xe80] sm:$0xff]
    %v611 = vld [vmem:[#allocation4 + $0xe88] sm:$0xff]
    %v612 = vld [vmem:[#allocation4 + $0xe90] sm:$0xff]
    %v613 = vld [vmem:[#allocation4 + $0xe98] sm:$0xff]
    %v614 = vld [vmem:[#allocation4 + $0xea0] sm:$0xff]
    %v615 = vld [vmem:[#allocation4 + $0xea8] sm:$0xff]
    %v616 = vld [vmem:[#allocation4 + $0xeb0] sm:$0xff]
    %v617 = vld [vmem:[#allocation4 + $0xeb8] sm:$0xff]
    %v618 = vld [vmem:[#allocation4 + $0xec0] sm:$0xff]
    %v619 = vld [vmem:[#allocation4 + $0xec8] sm:$0xff]
    %v620 = vld [vmem:[#allocation4 + $0xed0] sm:$0xff]
    %v621 = vld [vmem:[#allocation4 + $0xed8] sm:$0xff]
    %v622 = vld [vmem:[#allocation4 + $0xee0] sm:$0xff]
    %v623 = vld [vmem:[#allocation4 + $0xee8] sm:$0xff]
    %v624 = vld [vmem:[#allocation4 + $0xef0] sm:$0xff]
    %v625 = vld [vmem:[#allocation4 + $0xef8] sm:$0xff]
    %v626 = vld [vmem:[#allocation4 + $0xf00] sm:$0xff]
    %v627 = vld [vmem:[#allocation4 + $0xf08] sm:$0xff]
    %v628 = vld [vmem:[#allocation4 + $0xf10] sm:$0xff]
    %v629 = vld [vmem:[#allocation4 + $0xf18] sm:$0xff]
    %v630 = vld [vmem:[#allocation4 + $0xf20] sm:$0xff]
    %v631 = vld [vmem:[#allocation4 + $0xf28] sm:$0xff]
    %v632 = vld [vmem:[#allocation4 + $0xf30] sm:$0xff]
    %v633 = vld [vmem:[#allocation4 + $0xf38] sm:$0xff]
    %v634 = vld [vmem:[#allocation4 + $0xf40] sm:$0xff]
    %v635 = vld [vmem:[#allocation4 + $0xf48] sm:$0xff]
    %v636 = vld [vmem:[#allocation4 + $0xf50] sm:$0xff]
    %v637 = vld [vmem:[#allocation4 + $0xf58] sm:$0xff]
    %v638 = vld [vmem:[#allocation4 + $0xf60] sm:$0xff]
    %v639 = vld [vmem:[#allocation4 + $0xf68] sm:$0xff]
    %v640 = vld [vmem:[#allocation4 + $0xf70] sm:$0xff]
    %v641 = vld [vmem:[#allocation4 + $0xf78] sm:$0xff]
    %v642 = vld [vmem:[#allocation4 + $0xf80] sm:$0xff]
    %v643 = vld [vmem:[#allocation4 + $0xf88] sm:$0xff]
    %v644 = vld [vmem:[#allocation4 + $0xf90] sm:$0xff]
    %v645 = vld [vmem:[#allocation4 + $0xf98] sm:$0xff]
    %v646 = vld [vmem:[#allocation4 + $0xfa0] sm:$0xff]
    %v647 = vld [vmem:[#allocation4 + $0xfa8] sm:$0xff]
    %v648 = vld [vmem:[#allocation4 + $0xfb0] sm:$0xff]
    %v649 = vld [vmem:[#allocation4 + $0xfb8] sm:$0xff]
    %v650 = vld [vmem:[#allocation4 + $0xfc0] sm:$0xff]
    %v651 = vld [vmem:[#allocation4 + $0xfc8] sm:$0xff]
    %v652 = vld [vmem:[#allocation4 + $0xfd0] sm:$0xff]
    %v653 = vld [vmem:[#allocation4 + $0xfd8] sm:$0xff]
    %v654 = vld [vmem:[#allocation4 + $0xfe0] sm:$0xff]
    %v655 = vld [vmem:[#allocation4 + $0xfe8] sm:$0xff]
    %v656 = vld [vmem:[#allocation4 + $0xff0] sm:$0xff]
    %v657 = vld [vmem:[#allocation4 + $0xff8] sm:$0xff]
    %v658 = vld [vmem:[#allocation4 + $0x1000] sm:$0xff]
    %v659 = vld [vmem:[#allocation4 + $0x1008] sm:$0xff]
    %v660 = vld [vmem:[#allocation4 + $0x1010] sm:$0xff]
    %v661 = vld [vmem:[#allocation4 + $0x1018] sm:$0xff]
    %v662 = vld [vmem:[#allocation4 + $0x1020] sm:$0xff]
    %v663 = vld [vmem:[#allocation4 + $0x1028] sm:$0xff]
    %v664 = vld [vmem:[#allocation4 + $0x1030] sm:$0xff]
    %v665 = vld [vmem:[#allocation4 + $0x1038] sm:$0xff]
    %v666 = vld [vmem:[#allocation4 + $0x1040] sm:$0xff]
    %v667 = vld [vmem:[#allocation4 + $0x1048] sm:$0xff]
    %v668 = vld [vmem:[#allocation4 + $0x1050] sm:$0xff]
    %v669 = vld [vmem:[#allocation4 + $0x1058] sm:$0xff]
    %v670 = vld [vmem:[#allocation4 + $0x1060] sm:$0xff]
    %v671 = vld [vmem:[#allocation4 + $0x1068] sm:$0xff]
    %v672 = vld [vmem:[#allocation4 + $0x1070] sm:$0xff]
    %v673 = vld [vmem:[#allocation4 + $0x1078] sm:$0xff]
    %v674 = vld [vmem:[#allocation4 + $0x1080] sm:$0xff]
    %v675 = vld [vmem:[#allocation4 + $0x1088] sm:$0xff]
    %v676 = vld [vmem:[#allocation4 + $0x1090] sm:$0xff]
    %v677 = vld [vmem:[#allocation4 + $0x1098] sm:$0xff]
    %v678 = vld [vmem:[#allocation4 + $0x10a0] sm:$0xff]
    %v679 = vld [vmem:[#allocation4 + $0x10a8] sm:$0xff]
    %v680 = vld [vmem:[#allocation4 + $0x10b0] sm:$0xff]
    %v681 = vld [vmem:[#allocation4 + $0x10b8] sm:$0xff]
    %v682 = vld [vmem:[#allocation4 + $0x10c0] sm:$0xff]
    %v683 = vld [vmem:[#allocation4 + $0x10c8] sm:$0xff]
    %v684 = vld [vmem:[#allocation4 + $0x10d0] sm:$0xff]
    %v685 = vld [vmem:[#allocation4 + $0x10d8] sm:$0xff]
    %v686 = vld [vmem:[#allocation4 + $0x10e0] sm:$0xff]
    %v687 = vld [vmem:[#allocation4 + $0x10e8] sm:$0xff]
    %v688 = vld [vmem:[#allocation4 + $0x10f0] sm:$0xff]
    %v689 = vld [vmem:[#allocation4 + $0x10f8] sm:$0xff]
    %v690 = vld [vmem:[#allocation4 + $0x1100] sm:$0xff]
    %v691 = vld [vmem:[#allocation4 + $0x1108] sm:$0xff]
    %v692 = vld [vmem:[#allocation4 + $0x1110] sm:$0xff]
    %v693 = vld [vmem:[#allocation4 + $0x1118] sm:$0xff]
    %v694 = vld [vmem:[#allocation4 + $0x1120] sm:$0xff]
    %v695 = vld [vmem:[#allocation4 + $0x1128] sm:$0xff]
    %v696 = vld [vmem:[#allocation4 + $0x1130] sm:$0xff]
    %v697 = vld [vmem:[#allocation4 + $0x1138] sm:$0xff]
    %v698 = vld [vmem:[#allocation4 + $0x1140] sm:$0xff]
    %v699 = vld [vmem:[#allocation4 + $0x1148] sm:$0xff]
    %v700 = vld [vmem:[#allocation4 + $0x1150] sm:$0xff]
    %v701 = vld [vmem:[#allocation4 + $0x1158] sm:$0xff]
    %v702 = vld [vmem:[#allocation4 + $0x1160] sm:$0xff]
    %v703 = vld [vmem:[#allocation4 + $0x1168] sm:$0xff]
    %v704 = vld [vmem:[#allocation4 + $0x1170] sm:$0xff]
    %v705 = vld [vmem:[#allocation4 + $0x1178] sm:$0xff]
    %v706 = vld [vmem:[#allocation4 + $0x1180] sm:$0xff]
    %v707 = vld [vmem:[#allocation4 + $0x1188] sm:$0xff]
    %v708 = vld [vmem:[#allocation4 + $0x1190] sm:$0xff]
    %v709 = vld [vmem:[#allocation4 + $0x1198] sm:$0xff]
    %v710 = vld [vmem:[#allocation4 + $0x11a0] sm:$0xff]
    %v711 = vld [vmem:[#allocation4 + $0x11a8] sm:$0xff]
    %v712 = vld [vmem:[#allocation4 + $0x11b0] sm:$0xff]
    %v713 = vld [vmem:[#allocation4 + $0x11b8] sm:$0xff]
    %v714 = vld [vmem:[#allocation4 + $0x11c0] sm:$0xff]
    %v715 = vld [vmem:[#allocation4 + $0x11c8] sm:$0xff]
    %v716 = vld [vmem:[#allocation4 + $0x11d0] sm:$0xff]
    %v717 = vld [vmem:[#allocation4 + $0x11d8] sm:$0xff]
    %v718 = vld [vmem:[#allocation4 + $0x11e0] sm:$0xff]
    %v719 = vld [vmem:[#allocation4 + $0x11e8] sm:$0xff]
    %v720 = vld [vmem:[#allocation4 + $0x11f0] sm:$0xff]
    %v721 = vld [vmem:[#allocation4 + $0x11f8] sm:$0xff]
    %v722 = vld [vmem:[#allocation4 + $0x1200] sm:$0xff]
    %v723 = vld [vmem:[#allocation4 + $0x1208] sm:$0xff]
    %v724 = vld [vmem:[#allocation4 + $0x1210] sm:$0xff]
    %v725 = vld [vmem:[#allocation4 + $0x1218] sm:$0xff]
    %v726 = vld [vmem:[#allocation4 + $0x1220] sm:$0xff]
    %v727 = vld [vmem:[#allocation4 + $0x1228] sm:$0xff]
    %v728 = vld [vmem:[#allocation4 + $0x1230] sm:$0xff]
    %v729 = vld [vmem:[#allocation4 + $0x1238] sm:$0xff]
    %v730 = vld [vmem:[#allocation4 + $0x1240] sm:$0xff]
    %v731 = vld [vmem:[#allocation4 + $0x1248] sm:$0xff]
    %v732 = vld [vmem:[#allocation4 + $0x1250] sm:$0xff]
    %v733 = vld [vmem:[#allocation4 + $0x1258] sm:$0xff]
    %v734 = vld [vmem:[#allocation4 + $0x1260] sm:$0xff]
    %v735 = vld [vmem:[#allocation4 + $0x1268] sm:$0xff]
    %v736 = vld [vmem:[#allocation4 + $0x1270] sm:$0xff]
    %v737 = vld [vmem:[#allocation4 + $0x1278] sm:$0xff]
    %v738 = vld [vmem:[#allocation4 + $0x1280] sm:$0xff]
    %v739 = vld [vmem:[#allocation4 + $0x1288] sm:$0xff]
    %v740 = vld [vmem:[#allocation4 + $0x1290] sm:$0xff]
    %v741 = vld [vmem:[#allocation4 + $0x1298] sm:$0xff]
    %v742 = vld [vmem:[#allocation4 + $0x12a0] sm:$0xff]
    %v743 = vld [vmem:[#allocation4 + $0x12a8] sm:$0xff]
    %v744 = vld [vmem:[#allocation4 + $0x12b0] sm:$0xff]
    %v745 = vld [vmem:[#allocation4 + $0x12b8] sm:$0xff]
    %v746 = vld [vmem:[#allocation4 + $0x12c0] sm:$0xff]
    %v747 = vld [vmem:[#allocation4 + $0x12c8] sm:$0xff]
    %v748 = vld [vmem:[#allocation4 + $0x12d0] sm:$0xff]
    %v749 = vld [vmem:[#allocation4 + $0x12d8] sm:$0xff]
    %v750 = vld [vmem:[#allocation4 + $0x12e0] sm:$0xff]
    %v751 = vld [vmem:[#allocation4 + $0x12e8] sm:$0xff]
    %v752 = vld [vmem:[#allocation4 + $0x12f0] sm:$0xff]
    %v753 = vld [vmem:[#allocation4 + $0x12f8] sm:$0xff]
    %v754 = vld [vmem:[#allocation4 + $0x1300] sm:$0xff]
    %v755 = vld [vmem:[#allocation4 + $0x1308] sm:$0xff]
    %v756 = vld [vmem:[#allocation4 + $0x1310] sm:$0xff]
    %v757 = vld [vmem:[#allocation4 + $0x1318] sm:$0xff]
    %v758 = vld [vmem:[#allocation4 + $0x1320] sm:$0xff]
    %v759 = vld [vmem:[#allocation4 + $0x1328] sm:$0xff]
    %v760 = vld [vmem:[#allocation4 + $0x1330] sm:$0xff]
    %v761 = vld [vmem:[#allocation4 + $0x1338] sm:$0xff]
    %v762 = vld [vmem:[#allocation4 + $0x1340] sm:$0xff]
    %v763 = vld [vmem:[#allocation4 + $0x1348] sm:$0xff]
    %v764 = vld [vmem:[#allocation4 + $0x1350] sm:$0xff]
    %v765 = vld [vmem:[#allocation4 + $0x1358] sm:$0xff]
    %v766 = vld [vmem:[#allocation4 + $0x1360] sm:$0xff]
    %v767 = vld [vmem:[#allocation4 + $0x1368] sm:$0xff]
    %v768 = vld [vmem:[#allocation4 + $0x1370] sm:$0xff]
    %v769 = vld [vmem:[#allocation4 + $0x1378] sm:$0xff]
    %v770 = vld [vmem:[#allocation4 + $0x1380] sm:$0xff]
    %v771 = vld [vmem:[#allocation4 + $0x1388] sm:$0xff]
    %v772 = vld [vmem:[#allocation4 + $0x1390] sm:$0xff]
    %v773 = vld [vmem:[#allocation4 + $0x1398] sm:$0xff]
    %v774 = vld [vmem:[#allocation4 + $0x13a0] sm:$0xff]
    %v775 = vld [vmem:[#allocation4 + $0x13a8] sm:$0xff]
    %v776 = vld [vmem:[#allocation4 + $0x13b0] sm:$0xff]
    %v777 = vld [vmem:[#allocation4 + $0x13b8] sm:$0xff]
    %v778 = vld [vmem:[#allocation4 + $0x13c0] sm:$0xff]
    %v779 = vld [vmem:[#allocation4 + $0x13c8] sm:$0xff]
    %v780 = vld [vmem:[#allocation4 + $0x13d0] sm:$0xff]
    %v781 = vld [vmem:[#allocation4 + $0x13d8] sm:$0xff]
    %v782 = vld [vmem:[#allocation4 + $0x13e0] sm:$0xff]
    %v783 = vld [vmem:[#allocation4 + $0x13e8] sm:$0xff]
    %v784 = vld [vmem:[#allocation4 + $0x13f0] sm:$0xff]
    %v785 = vld [vmem:[#allocation4 + $0x13f8] sm:$0xff]
    %v786 = vld [vmem:[#allocation4 + $0x1400] sm:$0xff]
    %v787 = vld [vmem:[#allocation4 + $0x1408] sm:$0xff]
    %v788 = vld [vmem:[#allocation4 + $0x1410] sm:$0xff]
    %v789 = vld [vmem:[#allocation4 + $0x1418] sm:$0xff]
    %v790 = vld [vmem:[#allocation4 + $0x1420] sm:$0xff]
    %v791 = vld [vmem:[#allocation4 + $0x1428] sm:$0xff]
    %v792 = vld [vmem:[#allocation4 + $0x1430] sm:$0xff]
    %v793 = vld [vmem:[#allocation4 + $0x1438] sm:$0xff]
    %v794 = vld [vmem:[#allocation4 + $0x1440] sm:$0xff]
    %v795 = vld [vmem:[#allocation4 + $0x1448] sm:$0xff]
    %v796 = vld [vmem:[#allocation4 + $0x1450] sm:$0xff]
    %v797 = vld [vmem:[#allocation4 + $0x1458] sm:$0xff]
    %v798 = vld [vmem:[#allocation4 + $0x1460] sm:$0xff]
    %v799 = vld [vmem:[#allocation4 + $0x1468] sm:$0xff]
    %v800 = vld [vmem:[#allocation4 + $0x1470] sm:$0xff]
    %v801 = vld [vmem:[#allocation4 + $0x1478] sm:$0xff]
    %v802 = vld [vmem:[#allocation4 + $0x1480] sm:$0xff]
    %v803 = vld [vmem:[#allocation4 + $0x1488] sm:$0xff]
    %v804 = vld [vmem:[#allocation4 + $0x1490] sm:$0xff]
    %v805 = vld [vmem:[#allocation4 + $0x1498] sm:$0xff]
    %v806 = vld [vmem:[#allocation4 + $0x14a0] sm:$0xff]
    %v807 = vld [vmem:[#allocation4 + $0x14a8] sm:$0xff]
    %v808 = vld [vmem:[#allocation4 + $0x14b0] sm:$0xff]
    %v809 = vld [vmem:[#allocation4 + $0x14b8] sm:$0xff]
    %v810 = vld [vmem:[#allocation4 + $0x14c0] sm:$0xff]
    %v811 = vld [vmem:[#allocation4 + $0x14c8] sm:$0xff]
    %v812 = vld [vmem:[#allocation4 + $0x14d0] sm:$0xff]
    %v813 = vld [vmem:[#allocation4 + $0x14d8] sm:$0xff]
    %v814 = vld [vmem:[#allocation4 + $0x14e0] sm:$0xff]
    %v815 = vld [vmem:[#allocation4 + $0x14e8] sm:$0xff]
    %v816 = vld [vmem:[#allocation4 + $0x14f0] sm:$0xff]
    %v817 = vld [vmem:[#allocation4 + $0x14f8] sm:$0xff]
    %v818 = vld [vmem:[#allocation4 + $0x1500] sm:$0xff]
    %v819 = vld [vmem:[#allocation4 + $0x1508] sm:$0xff]
    %v820 = vld [vmem:[#allocation4 + $0x1510] sm:$0xff]
    %v821 = vld [vmem:[#allocation4 + $0x1518] sm:$0xff]
    %v822 = vld [vmem:[#allocation4 + $0x1520] sm:$0xff]
    %v823 = vld [vmem:[#allocation4 + $0x1528] sm:$0xff]
    %v824 = vld [vmem:[#allocation4 + $0x1530] sm:$0xff]
    %v825 = vld [vmem:[#allocation4 + $0x1538] sm:$0xff]
    %v826 = vld [vmem:[#allocation4 + $0x1540] sm:$0xff]
    %v827 = vld [vmem:[#allocation4 + $0x1548] sm:$0xff]
    %v828 = vld [vmem:[#allocation4 + $0x1550] sm:$0xff]
    %v829 = vld [vmem:[#allocation4 + $0x1558] sm:$0xff]
    %v830 = vld [vmem:[#allocation4 + $0x1560] sm:$0xff]
    %v831 = vld [vmem:[#allocation4 + $0x1568] sm:$0xff]
    %v832 = vld [vmem:[#allocation4 + $0x1570] sm:$0xff]
    %v833 = vld [vmem:[#allocation4 + $0x1578] sm:$0xff]
    %v834 = vld [vmem:[#allocation4 + $0x1580] sm:$0xff]
    %v835 = vld [vmem:[#allocation4 + $0x1588] sm:$0xff]
    %v836 = vld [vmem:[#allocation4 + $0x1590] sm:$0xff]
    %v837 = vld [vmem:[#allocation4 + $0x1598] sm:$0xff]
    %v838 = vld [vmem:[#allocation4 + $0x15a0] sm:$0xff]
    %v839 = vld [vmem:[#allocation4 + $0x15a8] sm:$0xff]
    %v840 = vld [vmem:[#allocation4 + $0x15b0] sm:$0xff]
    %v841 = vld [vmem:[#allocation4 + $0x15b8] sm:$0xff]
    %v842 = vld [vmem:[#allocation4 + $0x15c0] sm:$0xff]
    %v843 = vld [vmem:[#allocation4 + $0x15c8] sm:$0xff]
    %v844 = vld [vmem:[#allocation4 + $0x15d0] sm:$0xff]
    %v845 = vld [vmem:[#allocation4 + $0x15d8] sm:$0xff]
    %v846 = vld [vmem:[#allocation4 + $0x15e0] sm:$0xff]
    %v847 = vld [vmem:[#allocation4 + $0x15e8] sm:$0xff]
    %v848 = vld [vmem:[#allocation4 + $0x15f0] sm:$0xff]
    %v849 = vld [vmem:[#allocation4 + $0x15f8] sm:$0xff]
    %v850 = vld [vmem:[#allocation4 + $0x1600] sm:$0xff]
    %v851 = vld [vmem:[#allocation4 + $0x1608] sm:$0xff]
    %v852 = vld [vmem:[#allocation4 + $0x1610] sm:$0xff]
    %v853 = vld [vmem:[#allocation4 + $0x1618] sm:$0xff]
    %v854 = vld [vmem:[#allocation4 + $0x1620] sm:$0xff]
    %v855 = vld [vmem:[#allocation4 + $0x1628] sm:$0xff]
    %v856 = vld [vmem:[#allocation4 + $0x1630] sm:$0xff]
    %v857 = vld [vmem:[#allocation4 + $0x1638] sm:$0xff]
    %v858 = vld [vmem:[#allocation4 + $0x1640] sm:$0xff]
    %v859 = vld [vmem:[#allocation4 + $0x1648] sm:$0xff]
    %v860 = vld [vmem:[#allocation4 + $0x1650] sm:$0xff]
    %v861 = vld [vmem:[#allocation4 + $0x1658] sm:$0xff]
    %v862 = vld [vmem:[#allocation4 + $0x1660] sm:$0xff]
    %v863 = vld [vmem:[#allocation4 + $0x1668] sm:$0xff]
    %v864 = vld [vmem:[#allocation4 + $0x1670] sm:$0xff]
    %v865 = vld [vmem:[#allocation4 + $0x1678] sm:$0xff]
    %v866 = vld [vmem:[#allocation4 + $0x1680] sm:$0xff]
    %v867 = vld [vmem:[#allocation4 + $0x1688] sm:$0xff]
    %v868 = vld [vmem:[#allocation4 + $0x1690] sm:$0xff]
    %v869 = vld [vmem:[#allocation4 + $0x1698] sm:$0xff]
    %v870 = vld [vmem:[#allocation4 + $0x16a0] sm:$0xff]
    %v871 = vld [vmem:[#allocation4 + $0x16a8] sm:$0xff]
    %v872 = vld [vmem:[#allocation4 + $0x16b0] sm:$0xff]
    %v873 = vld [vmem:[#allocation4 + $0x16b8] sm:$0xff]
    %v874 = vld [vmem:[#allocation4 + $0x16c0] sm:$0xff]
    %v875 = vld [vmem:[#allocation4 + $0x16c8] sm:$0xff]
    %v876 = vld [vmem:[#allocation4 + $0x16d0] sm:$0xff]
    %v877 = vld [vmem:[#allocation4 + $0x16d8] sm:$0xff]
    %v878 = vld [vmem:[#allocation4 + $0x16e0] sm:$0xff]
    %v879 = vld [vmem:[#allocation4 + $0x16e8] sm:$0xff]
    %v880 = vld [vmem:[#allocation4 + $0x16f0] sm:$0xff]
    %v881 = vld [vmem:[#allocation4 + $0x16f8] sm:$0xff]
    %v882 = vld [vmem:[#allocation4 + $0x1700] sm:$0xff]
    %v883 = vld [vmem:[#allocation4 + $0x1708] sm:$0xff]
    %v884 = vld [vmem:[#allocation4 + $0x1710] sm:$0xff]
    %v885 = vld [vmem:[#allocation4 + $0x1718] sm:$0xff]
    %v886 = vld [vmem:[#allocation4 + $0x1720] sm:$0xff]
    %v887 = vld [vmem:[#allocation4 + $0x1728] sm:$0xff]
    %v888 = vld [vmem:[#allocation4 + $0x1730] sm:$0xff]
    %v889 = vld [vmem:[#allocation4 + $0x1738] sm:$0xff]
    %v890 = vld [vmem:[#allocation4 + $0x1740] sm:$0xff]
    %v891 = vld [vmem:[#allocation4 + $0x1748] sm:$0xff]
    %v892 = vld [vmem:[#allocation4 + $0x1750] sm:$0xff]
    %v893 = vld [vmem:[#allocation4 + $0x1758] sm:$0xff]
    %v894 = vld [vmem:[#allocation4 + $0x1760] sm:$0xff]
    %v895 = vld [vmem:[#allocation4 + $0x1768] sm:$0xff]
    %v896 = vld [vmem:[#allocation4 + $0x1770] sm:$0xff]
    %v897 = vld [vmem:[#allocation4 + $0x1778] sm:$0xff]
    %v898 = vld [vmem:[#allocation4 + $0x1780] sm:$0xff]
    %v899 = vld [vmem:[#allocation4 + $0x1788] sm:$0xff]
    %v900 = vld [vmem:[#allocation4 + $0x1790] sm:$0xff]
    %v901 = vld [vmem:[#allocation4 + $0x1798] sm:$0xff]
    %v902 = vld [vmem:[#allocation4 + $0x17a0] sm:$0xff]
    %v903 = vld [vmem:[#allocation4 + $0x17a8] sm:$0xff]
    %v904 = vld [vmem:[#allocation4 + $0x17b0] sm:$0xff]
    %v905 = vld [vmem:[#allocation4 + $0x17b8] sm:$0xff]
    %v906 = vld [vmem:[#allocation4 + $0x17c0] sm:$0xff]
    %v907 = vld [vmem:[#allocation4 + $0x17c8] sm:$0xff]
    %v908 = vld [vmem:[#allocation4 + $0x17d0] sm:$0xff]
    %v909 = vld [vmem:[#allocation4 + $0x17d8] sm:$0xff]
    %v910 = vld [vmem:[#allocation4 + $0x17e0] sm:$0xff]
    %v911 = vld [vmem:[#allocation4 + $0x17e8] sm:$0xff]
    %v912 = vld [vmem:[#allocation4 + $0x17f0] sm:$0xff]
    %v913 = vld [vmem:[#allocation4 + $0x17f8] sm:$0xff]
    %v914 = vld [vmem:[#allocation4 + $0x1800] sm:$0xff]
    %v915 = vld [vmem:[#allocation4 + $0x1808] sm:$0xff]
    %v916 = vld [vmem:[#allocation4 + $0x1810] sm:$0xff]
    %v917 = vld [vmem:[#allocation4 + $0x1818] sm:$0xff]
    %v918 = vld [vmem:[#allocation4 + $0x1820] sm:$0xff]
    %v919 = vld [vmem:[#allocation4 + $0x1828] sm:$0xff]
    %v920 = vld [vmem:[#allocation4 + $0x1830] sm:$0xff]
    %v921 = vld [vmem:[#allocation4 + $0x1838] sm:$0xff]
    %v922 = vld [vmem:[#allocation4 + $0x1840] sm:$0xff]
    %v923 = vld [vmem:[#allocation4 + $0x1848] sm:$0xff]
    %v924 = vld [vmem:[#allocation4 + $0x1850] sm:$0xff]
    %v925 = vld [vmem:[#allocation4 + $0x1858] sm:$0xff]
    %v926 = vld [vmem:[#allocation4 + $0x1860] sm:$0xff]
    %v927 = vld [vmem:[#allocation4 + $0x1868] sm:$0xff]
    %v928 = vld [vmem:[#allocation4 + $0x1870] sm:$0xff]
    %v929 = vld [vmem:[#allocation4 + $0x1878] sm:$0xff]
    %v930 = vld [vmem:[#allocation4 + $0x1880] sm:$0xff]
    %v931 = vld [vmem:[#allocation4 + $0x1888] sm:$0xff]
    %v932 = vld [vmem:[#allocation4 + $0x1890] sm:$0xff]
    %v933 = vld [vmem:[#allocation4 + $0x1898] sm:$0xff]
    %v934 = vld [vmem:[#allocation4 + $0x18a0] sm:$0xff]
    %v935 = vld [vmem:[#allocation4 + $0x18a8] sm:$0xff]
    %v936 = vld [vmem:[#allocation4 + $0x18b0] sm:$0xff]
    %v937 = vld [vmem:[#allocation4 + $0x18b8] sm:$0xff]
    %v938 = vld [vmem:[#allocation4 + $0x18c0] sm:$0xff]
    %v939 = vld [vmem:[#allocation4 + $0x18c8] sm:$0xff]
    %v940 = vld [vmem:[#allocation4 + $0x18d0] sm:$0xff]
    %v941 = vld [vmem:[#allocation4 + $0x18d8] sm:$0xff]
    %v942 = vld [vmem:[#allocation4 + $0x18e0] sm:$0xff]
    %v943 = vld [vmem:[#allocation4 + $0x18e8] sm:$0xff]
    %v944 = vld [vmem:[#allocation4 + $0x18f0] sm:$0xff]
    %v945 = vld [vmem:[#allocation4 + $0x18f8] sm:$0xff]
    %v946 = vld [vmem:[#allocation4 + $0x1900] sm:$0xff]
    %v947 = vld [vmem:[#allocation4 + $0x1908] sm:$0xff]
    %v948 = vld [vmem:[#allocation4 + $0x1910] sm:$0xff]
    %v949 = vld [vmem:[#allocation4 + $0x1918] sm:$0xff]
    %v950 = vld [vmem:[#allocation4 + $0x1920] sm:$0xff]
    %v951 = vld [vmem:[#allocation4 + $0x1928] sm:$0xff]
    %v952 = vld [vmem:[#allocation4 + $0x1930] sm:$0xff]
    %v953 = vld [vmem:[#allocation4 + $0x1938] sm:$0xff]
    %v954 = vld [vmem:[#allocation4 + $0x1940] sm:$0xff]
    %v955 = vld [vmem:[#allocation4 + $0x1948] sm:$0xff]
    %v956 = vld [vmem:[#allocation4 + $0x1950] sm:$0xff]
    %v957 = vld [vmem:[#allocation4 + $0x1958] sm:$0xff]
    %v958 = vld [vmem:[#allocation4 + $0x1960] sm:$0xff]
    %v959 = vld [vmem:[#allocation4 + $0x1968] sm:$0xff]
    %v960 = vld [vmem:[#allocation4 + $0x1970] sm:$0xff]
    %v961 = vld [vmem:[#allocation4 + $0x1978] sm:$0xff]
    %v962 = vld [vmem:[#allocation4 + $0x1980] sm:$0xff]
    %v963 = vld [vmem:[#allocation4 + $0x1988] sm:$0xff]
    %v964 = vld [vmem:[#allocation4 + $0x1990] sm:$0xff]
    %v965 = vld [vmem:[#allocation4 + $0x1998] sm:$0xff]
    %v966 = vld [vmem:[#allocation4 + $0x19a0] sm:$0xff]
    %v967 = vld [vmem:[#allocation4 + $0x19a8] sm:$0xff]
    %v968 = vld [vmem:[#allocation4 + $0x19b0] sm:$0xff]
    %v969 = vld [vmem:[#allocation4 + $0x19b8] sm:$0xff]
    %v970 = vld [vmem:[#allocation4 + $0x19c0] sm:$0xff]
    %v971 = vld [vmem:[#allocation4 + $0x19c8] sm:$0xff]
    %v972 = vld [vmem:[#allocation4 + $0x19d0] sm:$0xff]
    %v973 = vld [vmem:[#allocation4 + $0x19d8] sm:$0xff]
    %v974 = vld [vmem:[#allocation4 + $0x19e0] sm:$0xff]
    %v975 = vld [vmem:[#allocation4 + $0x19e8] sm:$0xff]
    %v976 = vld [vmem:[#allocation4 + $0x19f0] sm:$0xff]
    %v977 = vld [vmem:[#allocation4 + $0x19f8] sm:$0xff]
    %v978 = vld [vmem:[#allocation4 + $0x1a00] sm:$0xff]
    %v979 = vld [vmem:[#allocation4 + $0x1a08] sm:$0xff]
    %v980 = vld [vmem:[#allocation4 + $0x1a10] sm:$0xff]
    %v981 = vld [vmem:[#allocation4 + $0x1a18] sm:$0xff]
    %v982 = vld [vmem:[#allocation4 + $0x1a20] sm:$0xff]
    %v983 = vld [vmem:[#allocation4 + $0x1a28] sm:$0xff]
    %v984 = vld [vmem:[#allocation4 + $0x1a30] sm:$0xff]
    %v985 = vld [vmem:[#allocation4 + $0x1a38] sm:$0xff]
    %v986 = vld [vmem:[#allocation4 + $0x1a40] sm:$0xff]
    %v987 = vld [vmem:[#allocation4 + $0x1a48] sm:$0xff]
    %v988 = vld [vmem:[#allocation4 + $0x1a50] sm:$0xff]
    %v989 = vld [vmem:[#allocation4 + $0x1a58] sm:$0xff]
    %v990 = vld [vmem:[#allocation4 + $0x1a60] sm:$0xff]
    %v991 = vld [vmem:[#allocation4 + $0x1a68] sm:$0xff]
    %v992 = vld [vmem:[#allocation4 + $0x1a70] sm:$0xff]
    %v993 = vld [vmem:[#allocation4 + $0x1a78] sm:$0xff]
    %v994 = vld [vmem:[#allocation4 + $0x1a80] sm:$0xff]
    %v995 = vld [vmem:[#allocation4 + $0x1a88] sm:$0xff]
    %v996 = vld [vmem:[#allocation4 + $0x1a90] sm:$0xff]
    %v997 = vld [vmem:[#allocation4 + $0x1a98] sm:$0xff]
    %v998 = vld [vmem:[#allocation4 + $0x1aa0] sm:$0xff]
    %v999 = vld [vmem:[#allocation4 + $0x1aa8] sm:$0xff]
    %v1000 = vld [vmem:[#allocation4 + $0x1ab0] sm:$0xff]
    %v1001 = vld [vmem:[#allocation4 + $0x1ab8] sm:$0xff]
    %v1002 = vld [vmem:[#allocation4 + $0x1ac0] sm:$0xff]
    %v1003 = vld [vmem:[#allocation4 + $0x1ac8] sm:$0xff]
    %v1004 = vld [vmem:[#allocation4 + $0x1ad0] sm:$0xff]
    %v1005 = vld [vmem:[#allocation4 + $0x1ad8] sm:$0xff]
    %v1006 = vld [vmem:[#allocation4 + $0x1ae0] sm:$0xff]
    %v1007 = vld [vmem:[#allocation4 + $0x1ae8] sm:$0xff]
    %v1008 = vld [vmem:[#allocation4 + $0x1af0] sm:$0xff]
    %v1009 = vld [vmem:[#allocation4 + $0x1af8] sm:$0xff]
    %v1010 = vld [vmem:[#allocation4 + $0x1b00] sm:$0xff]
    %v1011 = vld [vmem:[#allocation4 + $0x1b08] sm:$0xff]
    %v1012 = vld [vmem:[#allocation4 + $0x1b10] sm:$0xff]
    %v1013 = vld [vmem:[#allocation4 + $0x1b18] sm:$0xff]
    %v1014 = vld [vmem:[#allocation4 + $0x1b20] sm:$0xff]
    %v1015 = vld [vmem:[#allocation4 + $0x1b28] sm:$0xff]
    %v1016 = vld [vmem:[#allocation4 + $0x1b30] sm:$0xff]
    %v1017 = vld [vmem:[#allocation4 + $0x1b38] sm:$0xff]
    %v1018 = vld [vmem:[#allocation4 + $0x1b40] sm:$0xff]
    %v1019 = vld [vmem:[#allocation4 + $0x1b48] sm:$0xff]
    %v1020 = vld [vmem:[#allocation4 + $0x1b50] sm:$0xff]
    %v1021 = vld [vmem:[#allocation4 + $0x1b58] sm:$0xff]
    %v1022 = vld [vmem:[#allocation4 + $0x1b60] sm:$0xff]
    %v1023 = vld [vmem:[#allocation4 + $0x1b68] sm:$0xff]
    %v1024 = vld [vmem:[#allocation4 + $0x1b70] sm:$0xff]
    %v1025 = vld [vmem:[#allocation4 + $0x1b78] sm:$0xff]
    %v1026 = vld [vmem:[#allocation4 + $0x1b80] sm:$0xff]
    %v1027 = vld [vmem:[#allocation4 + $0x1b88] sm:$0xff]
    %v1028 = vld [vmem:[#allocation4 + $0x1b90] sm:$0xff]
    %v1029 = vld [vmem:[#allocation4 + $0x1b98] sm:$0xff]
    %v1030 = vld [vmem:[#allocation4 + $0x1ba0] sm:$0xff]
    %v1031 = vld [vmem:[#allocation4 + $0x1ba8] sm:$0xff]
    %v1032 = vld [vmem:[#allocation4 + $0x1bb0] sm:$0xff]
    %v1033 = vld [vmem:[#allocation4 + $0x1bb8] sm:$0xff]
    %v1034 = vld [vmem:[#allocation4 + $0x1bc0] sm:$0xff]
    %v1035 = vld [vmem:[#allocation4 + $0x1bc8] sm:$0xff]
    %v1036 = vld [vmem:[#allocation4 + $0x1bd0] sm:$0xff]
    %v1037 = vld [vmem:[#allocation4 + $0x1bd8] sm:$0xff]
    %v1038 = vld [vmem:[#allocation4 + $0x1be0] sm:$0xff]
    %v1039 = vld [vmem:[#allocation4 + $0x1be8] sm:$0xff]
    %v1040 = vld [vmem:[#allocation4 + $0x1bf0] sm:$0xff]
    %v1041 = vld [vmem:[#allocation4 + $0x1bf8] sm:$0xff]
    %v1042 = vld [vmem:[#allocation4 + $0x1c00] sm:$0xff]
    %v1043 = vld [vmem:[#allocation4 + $0x1c08] sm:$0xff]
    %v1044 = vld [vmem:[#allocation4 + $0x1c10] sm:$0xff]
    %v1045 = vld [vmem:[#allocation4 + $0x1c18] sm:$0xff]
    %v1046 = vld [vmem:[#allocation4 + $0x1c20] sm:$0xff]
    %v1047 = vld [vmem:[#allocation4 + $0x1c28] sm:$0xff]
    %v1048 = vld [vmem:[#allocation4 + $0x1c30] sm:$0xff]
    %v1049 = vld [vmem:[#allocation4 + $0x1c38] sm:$0xff]
    %v1050 = vld [vmem:[#allocation4 + $0x1c40] sm:$0xff]
    %v1051 = vld [vmem:[#allocation4 + $0x1c48] sm:$0xff]
    %v1052 = vld [vmem:[#allocation4 + $0x1c50] sm:$0xff]
    %v1053 = vld [vmem:[#allocation4 + $0x1c58] sm:$0xff]
    %v1054 = vld [vmem:[#allocation4 + $0x1c60] sm:$0xff]
    %v1055 = vld [vmem:[#allocation4 + $0x1c68] sm:$0xff]
    %v1056 = vld [vmem:[#allocation4 + $0x1c70] sm:$0xff]
    %v1057 = vld [vmem:[#allocation4 + $0x1c78] sm:$0xff]
    %v1058 = vld [vmem:[#allocation4 + $0x1c80] sm:$0xff]
    %v1059 = vld [vmem:[#allocation4 + $0x1c88] sm:$0xff]
    %v1060 = vld [vmem:[#allocation4 + $0x1c90] sm:$0xff]
    %v1061 = vld [vmem:[#allocation4 + $0x1c98] sm:$0xff]
    %v1062 = vld [vmem:[#allocation4 + $0x1ca0] sm:$0xff]
    %v1063 = vld [vmem:[#allocation4 + $0x1ca8] sm:$0xff]
    %v1064 = vld [vmem:[#allocation4 + $0x1cb0] sm:$0xff]
    %v1065 = vld [vmem:[#allocation4 + $0x1cb8] sm:$0xff]
    %v1066 = vld [vmem:[#allocation4 + $0x1cc0] sm:$0xff]
    %v1067 = vld [vmem:[#allocation4 + $0x1cc8] sm:$0xff]
    %v1068 = vld [vmem:[#allocation4 + $0x1cd0] sm:$0xff]
    %v1069 = vld [vmem:[#allocation4 + $0x1cd8] sm:$0xff]
    %v1070 = vld [vmem:[#allocation4 + $0x1ce0] sm:$0xff]
    %v1071 = vld [vmem:[#allocation4 + $0x1ce8] sm:$0xff]
    %v1072 = vld [vmem:[#allocation4 + $0x1cf0] sm:$0xff]
    %v1073 = vld [vmem:[#allocation4 + $0x1cf8] sm:$0xff]
    %v1074 = vld [vmem:[#allocation4 + $0x1d00] sm:$0xff]
    %v1075 = vld [vmem:[#allocation4 + $0x1d08] sm:$0xff]
    %v1076 = vld [vmem:[#allocation4 + $0x1d10] sm:$0xff]
    %v1077 = vld [vmem:[#allocation4 + $0x1d18] sm:$0xff]
    %v1078 = vld [vmem:[#allocation4 + $0x1d20] sm:$0xff]
    %v1079 = vld [vmem:[#allocation4 + $0x1d28] sm:$0xff]
    %v1080 = vld [vmem:[#allocation4 + $0x1d30] sm:$0xff]
    %v1081 = vld [vmem:[#allocation4 + $0x1d38] sm:$0xff]
    %v1082 = vld [vmem:[#allocation4 + $0x1d40] sm:$0xff]
    %v1083 = vld [vmem:[#allocation4 + $0x1d48] sm:$0xff]
    %v1084 = vld [vmem:[#allocation4 + $0x1d50] sm:$0xff]
    %v1085 = vld [vmem:[#allocation4 + $0x1d58] sm:$0xff]
    %v1086 = vld [vmem:[#allocation4 + $0x1d60] sm:$0xff]
    %v1087 = vld [vmem:[#allocation4 + $0x1d68] sm:$0xff]
    %v1088 = vld [vmem:[#allocation4 + $0x1d70] sm:$0xff]
    %v1089 = vld [vmem:[#allocation4 + $0x1d78] sm:$0xff]
    %v1090 = vld [vmem:[#allocation4 + $0x1d80] sm:$0xff]
    %v1091 = vld [vmem:[#allocation4 + $0x1d88] sm:$0xff]
    %v1092 = vld [vmem:[#allocation4 + $0x1d90] sm:$0xff]
    %v1093 = vld [vmem:[#allocation4 + $0x1d98] sm:$0xff]
    %v1094 = vld [vmem:[#allocation4 + $0x1da0] sm:$0xff]
    %v1095 = vld [vmem:[#allocation4 + $0x1da8] sm:$0xff]
    %v1096 = vld [vmem:[#allocation4 + $0x1db0] sm:$0xff]
    %v1097 = vld [vmem:[#allocation4 + $0x1db8] sm:$0xff]
    %v1098 = vld [vmem:[#allocation4 + $0x1dc0] sm:$0xff]
    %v1099 = vld [vmem:[#allocation4 + $0x1dc8] sm:$0xff]
    %v1100 = vld [vmem:[#allocation4 + $0x1dd0] sm:$0xff]
    %v1101 = vld [vmem:[#allocation4 + $0x1dd8] sm:$0xff]
    %v1102 = vld [vmem:[#allocation4 + $0x1de0] sm:$0xff]
    %v1103 = vld [vmem:[#allocation4 + $0x1de8] sm:$0xff]
    %v1104 = vld [vmem:[#allocation4 + $0x1df0] sm:$0xff]
    %v1105 = vld [vmem:[#allocation4 + $0x1df8] sm:$0xff]
    %v1106 = vld [vmem:[#allocation4 + $0x1e00] sm:$0xff]
    %v1107 = vld [vmem:[#allocation4 + $0x1e08] sm:$0xff]
    %v1108 = vld [vmem:[#allocation4 + $0x1e10] sm:$0xff]
    %v1109 = vld [vmem:[#allocation4 + $0x1e18] sm:$0xff]
    %v1110 = vld [vmem:[#allocation4 + $0x1e20] sm:$0xff]
    %v1111 = vld [vmem:[#allocation4 + $0x1e28] sm:$0xff]
    %v1112 = vld [vmem:[#allocation4 + $0x1e30] sm:$0xff]
    %v1113 = vld [vmem:[#allocation4 + $0x1e38] sm:$0xff]
    %v1114 = vld [vmem:[#allocation4 + $0x1e40] sm:$0xff]
    %v1115 = vld [vmem:[#allocation4 + $0x1e48] sm:$0xff]
    %v1116 = vld [vmem:[#allocation4 + $0x1e50] sm:$0xff]
    %v1117 = vld [vmem:[#allocation4 + $0x1e58] sm:$0xff]
    %v1118 = vld [vmem:[#allocation4 + $0x1e60] sm:$0xff]
    %v1119 = vld [vmem:[#allocation4 + $0x1e68] sm:$0xff]
    %v1120 = vld [vmem:[#allocation4 + $0x1e70] sm:$0xff]
    %v1121 = vld [vmem:[#allocation4 + $0x1e78] sm:$0xff]
    %v1122 = vld [vmem:[#allocation4 + $0x1e80] sm:$0xff]
    %v1123 = vld [vmem:[#allocation4 + $0x1e88] sm:$0xff]
    %v1124 = vld [vmem:[#allocation4 + $0x1e90] sm:$0xff]
    %v1125 = vld [vmem:[#allocation4 + $0x1e98] sm:$0xff]
    %v1126 = vld [vmem:[#allocation4 + $0x1ea0] sm:$0xff]
    %v1127 = vld [vmem:[#allocation4 + $0x1ea8] sm:$0xff]
    %v1128 = vld [vmem:[#allocation4 + $0x1eb0] sm:$0xff]
    %v1129 = vld [vmem:[#allocation4 + $0x1eb8] sm:$0xff]
    %v1130 = vld [vmem:[#allocation4 + $0x1ec0] sm:$0xff]
    %v1131 = vld [vmem:[#allocation4 + $0x1ec8] sm:$0xff]
    %v1132 = vld [vmem:[#allocation4 + $0x1ed0] sm:$0xff]
    %v1133 = vld [vmem:[#allocation4 + $0x1ed8] sm:$0xff]
    %v1134 = vld [vmem:[#allocation4 + $0x1ee0] sm:$0xff]
    %v1135 = vld [vmem:[#allocation4 + $0x1ee8] sm:$0xff]
    %v1136 = vld [vmem:[#allocation4 + $0x1ef0] sm:$0xff]
    %v1137 = vld [vmem:[#allocation4 + $0x1ef8] sm:$0xff]
    %v1138 = vld [vmem:[#allocation4 + $0x1f00] sm:$0xff]
    %v1139 = vld [vmem:[#allocation4 + $0x1f08] sm:$0xff]
    %v1140 = vld [vmem:[#allocation4 + $0x1f10] sm:$0xff]
    %v1141 = vld [vmem:[#allocation4 + $0x1f18] sm:$0xff]
    %v1142 = vld [vmem:[#allocation4 + $0x1f20] sm:$0xff]
    %v1143 = vld [vmem:[#allocation4 + $0x1f28] sm:$0xff]
    %v1144 = vld [vmem:[#allocation4 + $0x1f30] sm:$0xff]
    %v1145 = vld [vmem:[#allocation4 + $0x1f38] sm:$0xff]
    %v1146 = vld [vmem:[#allocation4 + $0x1f40] sm:$0xff]
    %v1147 = vld [vmem:[#allocation4 + $0x1f48] sm:$0xff]
    %v1148 = vld [vmem:[#allocation4 + $0x1f50] sm:$0xff]
    %v1149 = vld [vmem:[#allocation4 + $0x1f58] sm:$0xff]
    %v1150 = vld [vmem:[#allocation4 + $0x1f60] sm:$0xff]
    %v1151 = vld [vmem:[#allocation4 + $0x1f68] sm:$0xff]
    %v1152 = vld [vmem:[#allocation4 + $0x1f70] sm:$0xff]
    %v1153 = vld [vmem:[#allocation4 + $0x1f78] sm:$0xff]
    %v1154 = vld [vmem:[#allocation4 + $0x1f80] sm:$0xff]
    %v1155 = vld [vmem:[#allocation4 + $0x1f88] sm:$0xff]
    %v1156 = vld [vmem:[#allocation4 + $0x1f90] sm:$0xff]
    %v1157 = vld [vmem:[#allocation4 + $0x1f98] sm:$0xff]
    %v1158 = vld [vmem:[#allocation4 + $0x1fa0] sm:$0xff]
    %v1159 = vld [vmem:[#allocation4 + $0x1fa8] sm:$0xff]
    %v1160 = vld [vmem:[#allocation4 + $0x1fb0] sm:$0xff]
    %v1161 = vld [vmem:[#allocation4 + $0x1fb8] sm:$0xff]
    %v1162 = vld [vmem:[#allocation4 + $0x1fc0] sm:$0xff]
    %v1163 = vld [vmem:[#allocation4 + $0x1fc8] sm:$0xff]
    %v1164 = vld [vmem:[#allocation4 + $0x1fd0] sm:$0xff]
    %v1165 = vld [vmem:[#allocation4 + $0x1fd8] sm:$0xff]
    %v1166 = vld [vmem:[#allocation4 + $0x1fe0] sm:$0xff]
    %v1167 = vld [vmem:[#allocation4 + $0x1fe8] sm:$0xff]
    %v1168 = vld [vmem:[#allocation4 + $0x1ff0] sm:$0xff]
    %v1169 = vld [vmem:[#allocation4 + $0x1ff8] sm:$0xff]
    %v1170 = vld [vmem:[#allocation6] sm:$0xff]
    %v1172 = vlaneseq
    %v1173 = vshrl.u32 %v1172, 7
    %v1174 = vsub.s32 0, %v1173
    %v1175 = vrot.slane %v1170, %v1174
    %v1176 = vlaneseq
    %v1177 = vshrl.u32 %v1176, 7
    %v1178 = vsub.s32 1, %v1177
    %v1179 = vrot.slane %v1170, %v1178
    %v1180 = vlaneseq
    %v1181 = vshrl.u32 %v1180, 7
    %v1182 = vsub.s32 2, %v1181
    %v1183 = vrot.slane %v1170, %v1182
    %v1184 = vlaneseq
    %v1185 = vshrl.u32 %v1184, 7
    %v1186 = vsub.s32 3, %v1185
    %v1187 = vrot.slane %v1170, %v1186
    %v1188 = vlaneseq
    %v1189 = vshrl.u32 %v1188, 7
    %v1190 = vsub.s32 4, %v1189
    %v1191 = vrot.slane %v1170, %v1190
    %v1192 = vlaneseq
    %v1193 = vshrl.u32 %v1192, 7
    %v1194 = vsub.s32 5, %v1193
    %v1195 = vrot.slane %v1170, %v1194
    %v1196 = vlaneseq
    %v1197 = vshrl.u32 %v1196, 7
    %v1198 = vsub.s32 6, %v1197
    %v1199 = vrot.slane %v1170, %v1198
    %v1200 = vlaneseq
    %v1201 = vshrl.u32 %v1200, 7
    %v1202 = vsub.s32 7, %v1201
    %v1203 = vrot.slane %v1170, %v1202
    %v2236 = vunpack.c.l.b16 %v146
    %v2237 = vunpack.c.h.b16 %v146
    %v2238 = vunpack.c.l.b16 %v147
    %v2239 = vunpack.c.h.b16 %v147
    %v2240 = vunpack.c.l.b16 %v148
    %v2241 = vunpack.c.h.b16 %v148
    %v2242 = vunpack.c.l.b16 %v149
    %v2243 = vunpack.c.h.b16 %v149
    %v2244 = vunpack.c.l.b16 %v150
    %v2245 = vunpack.c.h.b16 %v150
    %v2246 = vunpack.c.l.b16 %v151
    %v2247 = vunpack.c.h.b16 %v151
    %v2248 = vunpack.c.l.b16 %v152
    %v2249 = vunpack.c.h.b16 %v152
    %v2250 = vunpack.c.l.b16 %v153
    %v2251 = vunpack.c.h.b16 %v153
    %v2252 = vunpack.c.l.b16 %v154
    %v2253 = vunpack.c.h.b16 %v154
    %v2254 = vunpack.c.l.b16 %v155
    %v2255 = vunpack.c.h.b16 %v155
    %v2256 = vunpack.c.l.b16 %v156
    %v2257 = vunpack.c.h.b16 %v156
    %v2258 = vunpack.c.l.b16 %v157
    %v2259 = vunpack.c.h.b16 %v157
    %v2260 = vunpack.c.l.b16 %v158
    %v2261 = vunpack.c.h.b16 %v158
    %v2262 = vunpack.c.l.b16 %v159
    %v2263 = vunpack.c.h.b16 %v159
    %v2264 = vunpack.c.l.b16 %v160
    %v2265 = vunpack.c.h.b16 %v160
    %v2266 = vunpack.c.l.b16 %v161
    %v2267 = vunpack.c.h.b16 %v161
    %v2268 = vunpack.c.l.b16 %v162
    %v2269 = vunpack.c.h.b16 %v162
    %v2270 = vunpack.c.l.b16 %v163
    %v2271 = vunpack.c.h.b16 %v163
    %v2272 = vunpack.c.l.b16 %v164
    %v2273 = vunpack.c.h.b16 %v164
    %v2274 = vunpack.c.l.b16 %v165
    %v2275 = vunpack.c.h.b16 %v165
    %v2276 = vunpack.c.l.b16 %v166
    %v2277 = vunpack.c.h.b16 %v166
    %v2278 = vunpack.c.l.b16 %v167
    %v2279 = vunpack.c.h.b16 %v167
    %v2280 = vunpack.c.l.b16 %v168
    %v2281 = vunpack.c.h.b16 %v168
    %v2282 = vunpack.c.l.b16 %v169
    %v2283 = vunpack.c.h.b16 %v169
    %v2284 = vunpack.c.l.b16 %v170
    %v2285 = vunpack.c.h.b16 %v170
    %v2286 = vunpack.c.l.b16 %v171
    %v2287 = vunpack.c.h.b16 %v171
    %v2288 = vunpack.c.l.b16 %v172
    %v2289 = vunpack.c.h.b16 %v172
    %v2290 = vunpack.c.l.b16 %v173
    %v2291 = vunpack.c.h.b16 %v173
    %v2292 = vunpack.c.l.b16 %v174
    %v2293 = vunpack.c.h.b16 %v174
    %v2294 = vunpack.c.l.b16 %v175
    %v2295 = vunpack.c.h.b16 %v175
    %v2296 = vunpack.c.l.b16 %v176
    %v2297 = vunpack.c.h.b16 %v176
    %v2298 = vunpack.c.l.b16 %v177
    %v2299 = vunpack.c.h.b16 %v177
    %v2300 = vunpack.c.l.b16 %v178
    %v2301 = vunpack.c.h.b16 %v178
    %v2302 = vunpack.c.l.b16 %v179
    %v2303 = vunpack.c.h.b16 %v179
    %v2304 = vunpack.c.l.b16 %v180
    %v2305 = vunpack.c.h.b16 %v180
    %v2306 = vunpack.c.l.b16 %v181
    %v2307 = vunpack.c.h.b16 %v181
    %v2308 = vunpack.c.l.b16 %v182
    %v2309 = vunpack.c.h.b16 %v182
    %v2310 = vunpack.c.l.b16 %v183
    %v2311 = vunpack.c.h.b16 %v183
    %v2312 = vunpack.c.l.b16 %v184
    %v2313 = vunpack.c.h.b16 %v184
    %v2314 = vunpack.c.l.b16 %v185
    %v2315 = vunpack.c.h.b16 %v185
    %v2316 = vunpack.c.l.b16 %v186
    %v2317 = vunpack.c.h.b16 %v186
    %v2318 = vunpack.c.l.b16 %v187
    %v2319 = vunpack.c.h.b16 %v187
    %v2320 = vunpack.c.l.b16 %v188
    %v2321 = vunpack.c.h.b16 %v188
    %v2322 = vunpack.c.l.b16 %v189
    %v2323 = vunpack.c.h.b16 %v189
    %v2324 = vunpack.c.l.b16 %v190
    %v2325 = vunpack.c.h.b16 %v190
    %v2326 = vunpack.c.l.b16 %v191
    %v2327 = vunpack.c.h.b16 %v191
    %v2328 = vunpack.c.l.b16 %v192
    %v2329 = vunpack.c.h.b16 %v192
    %v2330 = vunpack.c.l.b16 %v193
    %v2331 = vunpack.c.h.b16 %v193
    %v2332 = vunpack.c.l.b16 %v194
    %v2333 = vunpack.c.h.b16 %v194
    %v2334 = vunpack.c.l.b16 %v195
    %v2335 = vunpack.c.h.b16 %v195
    %v2336 = vunpack.c.l.b16 %v196
    %v2337 = vunpack.c.h.b16 %v196
    %v2338 = vunpack.c.l.b16 %v197
    %v2339 = vunpack.c.h.b16 %v197
    %v2340 = vunpack.c.l.b16 %v198
    %v2341 = vunpack.c.h.b16 %v198
    %v2342 = vunpack.c.l.b16 %v199
    %v2343 = vunpack.c.h.b16 %v199
    %v2344 = vunpack.c.l.b16 %v200
    %v2345 = vunpack.c.h.b16 %v200
    %v2346 = vunpack.c.l.b16 %v201
    %v2347 = vunpack.c.h.b16 %v201
    %v2348 = vunpack.c.l.b16 %v202
    %v2349 = vunpack.c.h.b16 %v202
    %v2350 = vunpack.c.l.b16 %v203
    %v2351 = vunpack.c.h.b16 %v203
    %v2352 = vunpack.c.l.b16 %v204
    %v2353 = vunpack.c.h.b16 %v204
    %v2354 = vunpack.c.l.b16 %v205
    %v2355 = vunpack.c.h.b16 %v205
    %v2356 = vunpack.c.l.b16 %v206
    %v2357 = vunpack.c.h.b16 %v206
    %v2358 = vunpack.c.l.b16 %v207
    %v2359 = vunpack.c.h.b16 %v207
    %v2360 = vunpack.c.l.b16 %v208
    %v2361 = vunpack.c.h.b16 %v208
    %v2362 = vunpack.c.l.b16 %v209
    %v2363 = vunpack.c.h.b16 %v209
    %v2364 = vunpack.c.l.b16 %v210
    %v2365 = vunpack.c.h.b16 %v210
    %v2366 = vunpack.c.l.b16 %v211
    %v2367 = vunpack.c.h.b16 %v211
    %v2368 = vunpack.c.l.b16 %v212
    %v2369 = vunpack.c.h.b16 %v212
    %v2370 = vunpack.c.l.b16 %v213
    %v2371 = vunpack.c.h.b16 %v213
    %v2372 = vunpack.c.l.b16 %v214
    %v2373 = vunpack.c.h.b16 %v214
    %v2374 = vunpack.c.l.b16 %v215
    %v2375 = vunpack.c.h.b16 %v215
    %v2376 = vunpack.c.l.b16 %v216
    %v2377 = vunpack.c.h.b16 %v216
    %v2378 = vunpack.c.l.b16 %v217
    %v2379 = vunpack.c.h.b16 %v217
    %v2380 = vunpack.c.l.b16 %v218
    %v2381 = vunpack.c.h.b16 %v218
    %v2382 = vunpack.c.l.b16 %v219
    %v2383 = vunpack.c.h.b16 %v219
    %v2384 = vunpack.c.l.b16 %v220
    %v2385 = vunpack.c.h.b16 %v220
    %v2386 = vunpack.c.l.b16 %v221
    %v2387 = vunpack.c.h.b16 %v221
    %v2388 = vunpack.c.l.b16 %v222
    %v2389 = vunpack.c.h.b16 %v222
    %v2390 = vunpack.c.l.b16 %v223
    %v2391 = vunpack.c.h.b16 %v223
    %v2392 = vunpack.c.l.b16 %v224
    %v2393 = vunpack.c.h.b16 %v224
    %v2394 = vunpack.c.l.b16 %v225
    %v2395 = vunpack.c.h.b16 %v225
    %v2396 = vunpack.c.l.b16 %v226
    %v2397 = vunpack.c.h.b16 %v226
    %v2398 = vunpack.c.l.b16 %v227
    %v2399 = vunpack.c.h.b16 %v227
    %v2400 = vunpack.c.l.b16 %v228
    %v2401 = vunpack.c.h.b16 %v228
    %v2402 = vunpack.c.l.b16 %v229
    %v2403 = vunpack.c.h.b16 %v229
    %v2404 = vunpack.c.l.b16 %v230
    %v2405 = vunpack.c.h.b16 %v230
    %v2406 = vunpack.c.l.b16 %v231
    %v2407 = vunpack.c.h.b16 %v231
    %v2408 = vunpack.c.l.b16 %v232
    %v2409 = vunpack.c.h.b16 %v232
    %v2410 = vunpack.c.l.b16 %v233
    %v2411 = vunpack.c.h.b16 %v233
    %v2412 = vunpack.c.l.b16 %v234
    %v2413 = vunpack.c.h.b16 %v234
    %v2414 = vunpack.c.l.b16 %v235
    %v2415 = vunpack.c.h.b16 %v235
    %v2416 = vunpack.c.l.b16 %v236
    %v2417 = vunpack.c.h.b16 %v236
    %v2418 = vunpack.c.l.b16 %v237
    %v2419 = vunpack.c.h.b16 %v237
    %v2420 = vunpack.c.l.b16 %v238
    %v2421 = vunpack.c.h.b16 %v238
    %v2422 = vunpack.c.l.b16 %v239
    %v2423 = vunpack.c.h.b16 %v239
    %v2424 = vunpack.c.l.b16 %v240
    %v2425 = vunpack.c.h.b16 %v240
    %v2426 = vunpack.c.l.b16 %v241
    %v2427 = vunpack.c.h.b16 %v241
    %v2428 = vunpack.c.l.b16 %v242
    %v2429 = vunpack.c.h.b16 %v242
    %v2430 = vunpack.c.l.b16 %v243
    %v2431 = vunpack.c.h.b16 %v243
    %v2432 = vunpack.c.l.b16 %v244
    %v2433 = vunpack.c.h.b16 %v244
    %v2434 = vunpack.c.l.b16 %v245
    %v2435 = vunpack.c.h.b16 %v245
    %v2436 = vunpack.c.l.b16 %v246
    %v2437 = vunpack.c.h.b16 %v246
    %v2438 = vunpack.c.l.b16 %v247
    %v2439 = vunpack.c.h.b16 %v247
    %v2440 = vunpack.c.l.b16 %v248
    %v2441 = vunpack.c.h.b16 %v248
    %v2442 = vunpack.c.l.b16 %v249
    %v2443 = vunpack.c.h.b16 %v249
    %v2444 = vunpack.c.l.b16 %v250
    %v2445 = vunpack.c.h.b16 %v250
    %v2446 = vunpack.c.l.b16 %v251
    %v2447 = vunpack.c.h.b16 %v251
    %v2448 = vunpack.c.l.b16 %v252
    %v2449 = vunpack.c.h.b16 %v252
    %v2450 = vunpack.c.l.b16 %v253
    %v2451 = vunpack.c.h.b16 %v253
    %v2452 = vunpack.c.l.b16 %v254
    %v2453 = vunpack.c.h.b16 %v254
    %v2454 = vunpack.c.l.b16 %v255
    %v2455 = vunpack.c.h.b16 %v255
    %v2456 = vunpack.c.l.b16 %v256
    %v2457 = vunpack.c.h.b16 %v256
    %v2458 = vunpack.c.l.b16 %v257
    %v2459 = vunpack.c.h.b16 %v257
    %v2460 = vunpack.c.l.b16 %v258
    %v2461 = vunpack.c.h.b16 %v258
    %v2462 = vunpack.c.l.b16 %v259
    %v2463 = vunpack.c.h.b16 %v259
    %v2464 = vunpack.c.l.b16 %v260
    %v2465 = vunpack.c.h.b16 %v260
    %v2466 = vunpack.c.l.b16 %v261
    %v2467 = vunpack.c.h.b16 %v261
    %v2468 = vunpack.c.l.b16 %v262
    %v2469 = vunpack.c.h.b16 %v262
    %v2470 = vunpack.c.l.b16 %v263
    %v2471 = vunpack.c.h.b16 %v263
    %v2472 = vunpack.c.l.b16 %v264
    %v2473 = vunpack.c.h.b16 %v264
    %v2474 = vunpack.c.l.b16 %v265
    %v2475 = vunpack.c.h.b16 %v265
    %v2476 = vunpack.c.l.b16 %v266
    %v2477 = vunpack.c.h.b16 %v266
    %v2478 = vunpack.c.l.b16 %v267
    %v2479 = vunpack.c.h.b16 %v267
    %v2480 = vunpack.c.l.b16 %v268
    %v2481 = vunpack.c.h.b16 %v268
    %v2482 = vunpack.c.l.b16 %v269
    %v2483 = vunpack.c.h.b16 %v269
    %v2484 = vunpack.c.l.b16 %v270
    %v2485 = vunpack.c.h.b16 %v270
    %v2486 = vunpack.c.l.b16 %v271
    %v2487 = vunpack.c.h.b16 %v271
    %v2488 = vunpack.c.l.b16 %v272
    %v2489 = vunpack.c.h.b16 %v272
    %v2490 = vunpack.c.l.b16 %v273
    %v2491 = vunpack.c.h.b16 %v273
    %v2492 = vunpack.c.l.b16 %v274
    %v2493 = vunpack.c.h.b16 %v274
    %v2494 = vunpack.c.l.b16 %v275
    %v2495 = vunpack.c.h.b16 %v275
    %v2496 = vunpack.c.l.b16 %v276
    %v2497 = vunpack.c.h.b16 %v276
    %v2498 = vunpack.c.l.b16 %v277
    %v2499 = vunpack.c.h.b16 %v277
    %v2500 = vunpack.c.l.b16 %v278
    %v2501 = vunpack.c.h.b16 %v278
    %v2502 = vunpack.c.l.b16 %v279
    %v2503 = vunpack.c.h.b16 %v279
    %v2504 = vunpack.c.l.b16 %v280
    %v2505 = vunpack.c.h.b16 %v280
    %v2506 = vunpack.c.l.b16 %v281
    %v2507 = vunpack.c.h.b16 %v281
    %v2508 = vunpack.c.l.b16 %v282
    %v2509 = vunpack.c.h.b16 %v282
    %v2510 = vunpack.c.l.b16 %v283
    %v2511 = vunpack.c.h.b16 %v283
    %v2512 = vunpack.c.l.b16 %v284
    %v2513 = vunpack.c.h.b16 %v284
    %v2514 = vunpack.c.l.b16 %v285
    %v2515 = vunpack.c.h.b16 %v285
    %v2516 = vunpack.c.l.b16 %v286
    %v2517 = vunpack.c.h.b16 %v286
    %v2518 = vunpack.c.l.b16 %v287
    %v2519 = vunpack.c.h.b16 %v287
    %v2520 = vunpack.c.l.b16 %v288
    %v2521 = vunpack.c.h.b16 %v288
    %v2522 = vunpack.c.l.b16 %v289
    %v2523 = vunpack.c.h.b16 %v289
    %v2524 = vunpack.c.l.b16 %v290
    %v2525 = vunpack.c.h.b16 %v290
    %v2526 = vunpack.c.l.b16 %v291
    %v2527 = vunpack.c.h.b16 %v291
    %v2528 = vunpack.c.l.b16 %v292
    %v2529 = vunpack.c.h.b16 %v292
    %v2530 = vunpack.c.l.b16 %v293
    %v2531 = vunpack.c.h.b16 %v293
    %v2532 = vunpack.c.l.b16 %v294
    %v2533 = vunpack.c.h.b16 %v294
    %v2534 = vunpack.c.l.b16 %v295
    %v2535 = vunpack.c.h.b16 %v295
    %v2536 = vunpack.c.l.b16 %v296
    %v2537 = vunpack.c.h.b16 %v296
    %v2538 = vunpack.c.l.b16 %v297
    %v2539 = vunpack.c.h.b16 %v297
    %v2540 = vunpack.c.l.b16 %v298
    %v2541 = vunpack.c.h.b16 %v298
    %v2542 = vunpack.c.l.b16 %v299
    %v2543 = vunpack.c.h.b16 %v299
    %v2544 = vunpack.c.l.b16 %v300
    %v2545 = vunpack.c.h.b16 %v300
    %v2546 = vunpack.c.l.b16 %v301
    %v2547 = vunpack.c.h.b16 %v301
    %v2548 = vunpack.c.l.b16 %v302
    %v2549 = vunpack.c.h.b16 %v302
    %v2550 = vunpack.c.l.b16 %v303
    %v2551 = vunpack.c.h.b16 %v303
    %v2552 = vunpack.c.l.b16 %v304
    %v2553 = vunpack.c.h.b16 %v304
    %v2554 = vunpack.c.l.b16 %v305
    %v2555 = vunpack.c.h.b16 %v305
    %v2556 = vunpack.c.l.b16 %v306
    %v2557 = vunpack.c.h.b16 %v306
    %v2558 = vunpack.c.l.b16 %v307
    %v2559 = vunpack.c.h.b16 %v307
    %v2560 = vunpack.c.l.b16 %v308
    %v2561 = vunpack.c.h.b16 %v308
    %v2562 = vunpack.c.l.b16 %v309
    %v2563 = vunpack.c.h.b16 %v309
    %v2564 = vunpack.c.l.b16 %v310
    %v2565 = vunpack.c.h.b16 %v310
    %v2566 = vunpack.c.l.b16 %v311
    %v2567 = vunpack.c.h.b16 %v311
    %v2568 = vunpack.c.l.b16 %v312
    %v2569 = vunpack.c.h.b16 %v312
    %v2570 = vunpack.c.l.b16 %v313
    %v2571 = vunpack.c.h.b16 %v313
    %v2572 = vunpack.c.l.b16 %v314
    %v2573 = vunpack.c.h.b16 %v314
    %v2574 = vunpack.c.l.b16 %v315
    %v2575 = vunpack.c.h.b16 %v315
    %v2576 = vunpack.c.l.b16 %v316
    %v2577 = vunpack.c.h.b16 %v316
    %v2578 = vunpack.c.l.b16 %v317
    %v2579 = vunpack.c.h.b16 %v317
    %v2580 = vunpack.c.l.b16 %v318
    %v2581 = vunpack.c.h.b16 %v318
    %v2582 = vunpack.c.l.b16 %v319
    %v2583 = vunpack.c.h.b16 %v319
    %v2584 = vunpack.c.l.b16 %v320
    %v2585 = vunpack.c.h.b16 %v320
    %v2586 = vunpack.c.l.b16 %v321
    %v2587 = vunpack.c.h.b16 %v321
    %v2588 = vunpack.c.l.b16 %v322
    %v2589 = vunpack.c.h.b16 %v322
    %v2590 = vunpack.c.l.b16 %v323
    %v2591 = vunpack.c.h.b16 %v323
    %v2592 = vunpack.c.l.b16 %v324
    %v2593 = vunpack.c.h.b16 %v324
    %v2594 = vunpack.c.l.b16 %v325
    %v2595 = vunpack.c.h.b16 %v325
    %v2596 = vunpack.c.l.b16 %v326
    %v2597 = vunpack.c.h.b16 %v326
    %v2598 = vunpack.c.l.b16 %v327
    %v2599 = vunpack.c.h.b16 %v327
    %v2600 = vunpack.c.l.b16 %v328
    %v2601 = vunpack.c.h.b16 %v328
    %v2602 = vunpack.c.l.b16 %v329
    %v2603 = vunpack.c.h.b16 %v329
    %v2604 = vunpack.c.l.b16 %v330
    %v2605 = vunpack.c.h.b16 %v330
    %v2606 = vunpack.c.l.b16 %v331
    %v2607 = vunpack.c.h.b16 %v331
    %v2608 = vunpack.c.l.b16 %v332
    %v2609 = vunpack.c.h.b16 %v332
    %v2610 = vunpack.c.l.b16 %v333
    %v2611 = vunpack.c.h.b16 %v333
    %v2612 = vunpack.c.l.b16 %v334
    %v2613 = vunpack.c.h.b16 %v334
    %v2614 = vunpack.c.l.b16 %v335
    %v2615 = vunpack.c.h.b16 %v335
    %v2616 = vunpack.c.l.b16 %v336
    %v2617 = vunpack.c.h.b16 %v336
    %v2618 = vunpack.c.l.b16 %v337
    %v2619 = vunpack.c.h.b16 %v337
    %v2620 = vunpack.c.l.b16 %v338
    %v2621 = vunpack.c.h.b16 %v338
    %v2622 = vunpack.c.l.b16 %v339
    %v2623 = vunpack.c.h.b16 %v339
    %v2624 = vunpack.c.l.b16 %v340
    %v2625 = vunpack.c.h.b16 %v340
    %v2626 = vunpack.c.l.b16 %v341
    %v2627 = vunpack.c.h.b16 %v341
    %v2628 = vunpack.c.l.b16 %v342
    %v2629 = vunpack.c.h.b16 %v342
    %v2630 = vunpack.c.l.b16 %v343
    %v2631 = vunpack.c.h.b16 %v343
    %v2632 = vunpack.c.l.b16 %v344
    %v2633 = vunpack.c.h.b16 %v344
    %v2634 = vunpack.c.l.b16 %v345
    %v2635 = vunpack.c.h.b16 %v345
    %v2636 = vunpack.c.l.b16 %v346
    %v2637 = vunpack.c.h.b16 %v346
    %v2638 = vunpack.c.l.b16 %v347
    %v2639 = vunpack.c.h.b16 %v347
    %v2640 = vunpack.c.l.b16 %v348
    %v2641 = vunpack.c.h.b16 %v348
    %v2642 = vunpack.c.l.b16 %v349
    %v2643 = vunpack.c.h.b16 %v349
    %v2644 = vunpack.c.l.b16 %v350
    %v2645 = vunpack.c.h.b16 %v350
    %v2646 = vunpack.c.l.b16 %v351
    %v2647 = vunpack.c.h.b16 %v351
    %v2648 = vunpack.c.l.b16 %v352
    %v2649 = vunpack.c.h.b16 %v352
    %v2650 = vunpack.c.l.b16 %v353
    %v2651 = vunpack.c.h.b16 %v353
    %v2652 = vunpack.c.l.b16 %v354
    %v2653 = vunpack.c.h.b16 %v354
    %v2654 = vunpack.c.l.b16 %v355
    %v2655 = vunpack.c.h.b16 %v355
    %v2656 = vunpack.c.l.b16 %v356
    %v2657 = vunpack.c.h.b16 %v356
    %v2658 = vunpack.c.l.b16 %v357
    %v2659 = vunpack.c.h.b16 %v357
    %v2660 = vunpack.c.l.b16 %v358
    %v2661 = vunpack.c.h.b16 %v358
    %v2662 = vunpack.c.l.b16 %v359
    %v2663 = vunpack.c.h.b16 %v359
    %v2664 = vunpack.c.l.b16 %v360
    %v2665 = vunpack.c.h.b16 %v360
    %v2666 = vunpack.c.l.b16 %v361
    %v2667 = vunpack.c.h.b16 %v361
    %v2668 = vunpack.c.l.b16 %v362
    %v2669 = vunpack.c.h.b16 %v362
    %v2670 = vunpack.c.l.b16 %v363
    %v2671 = vunpack.c.h.b16 %v363
    %v2672 = vunpack.c.l.b16 %v364
    %v2673 = vunpack.c.h.b16 %v364
    %v2674 = vunpack.c.l.b16 %v365
    %v2675 = vunpack.c.h.b16 %v365
    %v2676 = vunpack.c.l.b16 %v366
    %v2677 = vunpack.c.h.b16 %v366
    %v2678 = vunpack.c.l.b16 %v367
    %v2679 = vunpack.c.h.b16 %v367
    %v2680 = vunpack.c.l.b16 %v368
    %v2681 = vunpack.c.h.b16 %v368
    %v2682 = vunpack.c.l.b16 %v369
    %v2683 = vunpack.c.h.b16 %v369
    %v2684 = vunpack.c.l.b16 %v370
    %v2685 = vunpack.c.h.b16 %v370
    %v2686 = vunpack.c.l.b16 %v371
    %v2687 = vunpack.c.h.b16 %v371
    %v2688 = vunpack.c.l.b16 %v372
    %v2689 = vunpack.c.h.b16 %v372
    %v2690 = vunpack.c.l.b16 %v373
    %v2691 = vunpack.c.h.b16 %v373
    %v2692 = vunpack.c.l.b16 %v374
    %v2693 = vunpack.c.h.b16 %v374
    %v2694 = vunpack.c.l.b16 %v375
    %v2695 = vunpack.c.h.b16 %v375
    %v2696 = vunpack.c.l.b16 %v376
    %v2697 = vunpack.c.h.b16 %v376
    %v2698 = vunpack.c.l.b16 %v377
    %v2699 = vunpack.c.h.b16 %v377
    %v2700 = vunpack.c.l.b16 %v378
    %v2701 = vunpack.c.h.b16 %v378
    %v2702 = vunpack.c.l.b16 %v379
    %v2703 = vunpack.c.h.b16 %v379
    %v2704 = vunpack.c.l.b16 %v380
    %v2705 = vunpack.c.h.b16 %v380
    %v2706 = vunpack.c.l.b16 %v381
    %v2707 = vunpack.c.h.b16 %v381
    %v2708 = vunpack.c.l.b16 %v382
    %v2709 = vunpack.c.h.b16 %v382
    %v2710 = vunpack.c.l.b16 %v383
    %v2711 = vunpack.c.h.b16 %v383
    %v2712 = vunpack.c.l.b16 %v384
    %v2713 = vunpack.c.h.b16 %v384
    %v2714 = vunpack.c.l.b16 %v385
    %v2715 = vunpack.c.h.b16 %v385
    %v2716 = vunpack.c.l.b16 %v386
    %v2717 = vunpack.c.h.b16 %v386
    %v2718 = vunpack.c.l.b16 %v387
    %v2719 = vunpack.c.h.b16 %v387
    %v2720 = vunpack.c.l.b16 %v388
    %v2721 = vunpack.c.h.b16 %v388
    %v2722 = vunpack.c.l.b16 %v389
    %v2723 = vunpack.c.h.b16 %v389
    %v2724 = vunpack.c.l.b16 %v390
    %v2725 = vunpack.c.h.b16 %v390
    %v2726 = vunpack.c.l.b16 %v391
    %v2727 = vunpack.c.h.b16 %v391
    %v2728 = vunpack.c.l.b16 %v392
    %v2729 = vunpack.c.h.b16 %v392
    %v2730 = vunpack.c.l.b16 %v393
    %v2731 = vunpack.c.h.b16 %v393
    %v2732 = vunpack.c.l.b16 %v394
    %v2733 = vunpack.c.h.b16 %v394
    %v2734 = vunpack.c.l.b16 %v395
    %v2735 = vunpack.c.h.b16 %v395
    %v2736 = vunpack.c.l.b16 %v396
    %v2737 = vunpack.c.h.b16 %v396
    %v2738 = vunpack.c.l.b16 %v397
    %v2739 = vunpack.c.h.b16 %v397
    %v2740 = vunpack.c.l.b16 %v398
    %v2741 = vunpack.c.h.b16 %v398
    %v2742 = vunpack.c.l.b16 %v399
    %v2743 = vunpack.c.h.b16 %v399
    %v2744 = vunpack.c.l.b16 %v400
    %v2745 = vunpack.c.h.b16 %v400
    %v2746 = vunpack.c.l.b16 %v401
    %v2747 = vunpack.c.h.b16 %v401
    %v2748 = vunpack.c.l.b16 %v402
    %v2749 = vunpack.c.h.b16 %v402
    %v2750 = vunpack.c.l.b16 %v403
    %v2751 = vunpack.c.h.b16 %v403
    %v2752 = vunpack.c.l.b16 %v404
    %v2753 = vunpack.c.h.b16 %v404
    %v2754 = vunpack.c.l.b16 %v405
    %v2755 = vunpack.c.h.b16 %v405
    %v2756 = vunpack.c.l.b16 %v406
    %v2757 = vunpack.c.h.b16 %v406
    %v2758 = vunpack.c.l.b16 %v407
    %v2759 = vunpack.c.h.b16 %v407
    %v2760 = vunpack.c.l.b16 %v408
    %v2761 = vunpack.c.h.b16 %v408
    %v2762 = vunpack.c.l.b16 %v409
    %v2763 = vunpack.c.h.b16 %v409
    %v2764 = vunpack.c.l.b16 %v410
    %v2765 = vunpack.c.h.b16 %v410
    %v2766 = vunpack.c.l.b16 %v411
    %v2767 = vunpack.c.h.b16 %v411
    %v2768 = vunpack.c.l.b16 %v412
    %v2769 = vunpack.c.h.b16 %v412
    %v2770 = vunpack.c.l.b16 %v413
    %v2771 = vunpack.c.h.b16 %v413
    %v2772 = vunpack.c.l.b16 %v414
    %v2773 = vunpack.c.h.b16 %v414
    %v2774 = vunpack.c.l.b16 %v415
    %v2775 = vunpack.c.h.b16 %v415
    %v2776 = vunpack.c.l.b16 %v416
    %v2777 = vunpack.c.h.b16 %v416
    %v2778 = vunpack.c.l.b16 %v417
    %v2779 = vunpack.c.h.b16 %v417
    %v2780 = vunpack.c.l.b16 %v418
    %v2781 = vunpack.c.h.b16 %v418
    %v2782 = vunpack.c.l.b16 %v419
    %v2783 = vunpack.c.h.b16 %v419
    %v2784 = vunpack.c.l.b16 %v420
    %v2785 = vunpack.c.h.b16 %v420
    %v2786 = vunpack.c.l.b16 %v421
    %v2787 = vunpack.c.h.b16 %v421
    %v2788 = vunpack.c.l.b16 %v422
    %v2789 = vunpack.c.h.b16 %v422
    %v2790 = vunpack.c.l.b16 %v423
    %v2791 = vunpack.c.h.b16 %v423
    %v2792 = vunpack.c.l.b16 %v424
    %v2793 = vunpack.c.h.b16 %v424
    %v2794 = vunpack.c.l.b16 %v425
    %v2795 = vunpack.c.h.b16 %v425
    %v2796 = vunpack.c.l.b16 %v426
    %v2797 = vunpack.c.h.b16 %v426
    %v2798 = vunpack.c.l.b16 %v427
    %v2799 = vunpack.c.h.b16 %v427
    %v2800 = vunpack.c.l.b16 %v428
    %v2801 = vunpack.c.h.b16 %v428
    %v2802 = vunpack.c.l.b16 %v429
    %v2803 = vunpack.c.h.b16 %v429
    %v2804 = vunpack.c.l.b16 %v430
    %v2805 = vunpack.c.h.b16 %v430
    %v2806 = vunpack.c.l.b16 %v431
    %v2807 = vunpack.c.h.b16 %v431
    %v2808 = vunpack.c.l.b16 %v432
    %v2809 = vunpack.c.h.b16 %v432
    %v2810 = vunpack.c.l.b16 %v433
    %v2811 = vunpack.c.h.b16 %v433
    %v2812 = vunpack.c.l.b16 %v434
    %v2813 = vunpack.c.h.b16 %v434
    %v2814 = vunpack.c.l.b16 %v435
    %v2815 = vunpack.c.h.b16 %v435
    %v2816 = vunpack.c.l.b16 %v436
    %v2817 = vunpack.c.h.b16 %v436
    %v2818 = vunpack.c.l.b16 %v437
    %v2819 = vunpack.c.h.b16 %v437
    %v2820 = vunpack.c.l.b16 %v438
    %v2821 = vunpack.c.h.b16 %v438
    %v2822 = vunpack.c.l.b16 %v439
    %v2823 = vunpack.c.h.b16 %v439
    %v2824 = vunpack.c.l.b16 %v440
    %v2825 = vunpack.c.h.b16 %v440
    %v2826 = vunpack.c.l.b16 %v441
    %v2827 = vunpack.c.h.b16 %v441
    %v2828 = vunpack.c.l.b16 %v442
    %v2829 = vunpack.c.h.b16 %v442
    %v2830 = vunpack.c.l.b16 %v443
    %v2831 = vunpack.c.h.b16 %v443
    %v2832 = vunpack.c.l.b16 %v444
    %v2833 = vunpack.c.h.b16 %v444
    %v2834 = vunpack.c.l.b16 %v445
    %v2835 = vunpack.c.h.b16 %v445
    %v2836 = vunpack.c.l.b16 %v446
    %v2837 = vunpack.c.h.b16 %v446
    %v2838 = vunpack.c.l.b16 %v447
    %v2839 = vunpack.c.h.b16 %v447
    %v2840 = vunpack.c.l.b16 %v448
    %v2841 = vunpack.c.h.b16 %v448
    %v2842 = vunpack.c.l.b16 %v449
    %v2843 = vunpack.c.h.b16 %v449
    %v2844 = vunpack.c.l.b16 %v450
    %v2845 = vunpack.c.h.b16 %v450
    %v2846 = vunpack.c.l.b16 %v451
    %v2847 = vunpack.c.h.b16 %v451
    %v2848 = vunpack.c.l.b16 %v452
    %v2849 = vunpack.c.h.b16 %v452
    %v2850 = vunpack.c.l.b16 %v453
    %v2851 = vunpack.c.h.b16 %v453
    %v2852 = vunpack.c.l.b16 %v454
    %v2853 = vunpack.c.h.b16 %v454
    %v2854 = vunpack.c.l.b16 %v455
    %v2855 = vunpack.c.h.b16 %v455
    %v2856 = vunpack.c.l.b16 %v456
    %v2857 = vunpack.c.h.b16 %v456
    %v2858 = vunpack.c.l.b16 %v457
    %v2859 = vunpack.c.h.b16 %v457
    %v2860 = vunpack.c.l.b16 %v458
    %v2861 = vunpack.c.h.b16 %v458
    %v2862 = vunpack.c.l.b16 %v459
    %v2863 = vunpack.c.h.b16 %v459
    %v2864 = vunpack.c.l.b16 %v460
    %v2865 = vunpack.c.h.b16 %v460
    %v2866 = vunpack.c.l.b16 %v461
    %v2867 = vunpack.c.h.b16 %v461
    %v2868 = vunpack.c.l.b16 %v462
    %v2869 = vunpack.c.h.b16 %v462
    %v2870 = vunpack.c.l.b16 %v463
    %v2871 = vunpack.c.h.b16 %v463
    %v2872 = vunpack.c.l.b16 %v464
    %v2873 = vunpack.c.h.b16 %v464
    %v2874 = vunpack.c.l.b16 %v465
    %v2875 = vunpack.c.h.b16 %v465
    %v2876 = vunpack.c.l.b16 %v466
    %v2877 = vunpack.c.h.b16 %v466
    %v2878 = vunpack.c.l.b16 %v467
    %v2879 = vunpack.c.h.b16 %v467
    %v2880 = vunpack.c.l.b16 %v468
    %v2881 = vunpack.c.h.b16 %v468
    %v2882 = vunpack.c.l.b16 %v469
    %v2883 = vunpack.c.h.b16 %v469
    %v2884 = vunpack.c.l.b16 %v470
    %v2885 = vunpack.c.h.b16 %v470
    %v2886 = vunpack.c.l.b16 %v471
    %v2887 = vunpack.c.h.b16 %v471
    %v2888 = vunpack.c.l.b16 %v472
    %v2889 = vunpack.c.h.b16 %v472
    %v2890 = vunpack.c.l.b16 %v473
    %v2891 = vunpack.c.h.b16 %v473
    %v2892 = vunpack.c.l.b16 %v474
    %v2893 = vunpack.c.h.b16 %v474
    %v2894 = vunpack.c.l.b16 %v475
    %v2895 = vunpack.c.h.b16 %v475
    %v2896 = vunpack.c.l.b16 %v476
    %v2897 = vunpack.c.h.b16 %v476
    %v2898 = vunpack.c.l.b16 %v477
    %v2899 = vunpack.c.h.b16 %v477
    %v2900 = vunpack.c.l.b16 %v478
    %v2901 = vunpack.c.h.b16 %v478
    %v2902 = vunpack.c.l.b16 %v479
    %v2903 = vunpack.c.h.b16 %v479
    %v2904 = vunpack.c.l.b16 %v480
    %v2905 = vunpack.c.h.b16 %v480
    %v2906 = vunpack.c.l.b16 %v481
    %v2907 = vunpack.c.h.b16 %v481
    %v2908 = vunpack.c.l.b16 %v482
    %v2909 = vunpack.c.h.b16 %v482
    %v2910 = vunpack.c.l.b16 %v483
    %v2911 = vunpack.c.h.b16 %v483
    %v2912 = vunpack.c.l.b16 %v484
    %v2913 = vunpack.c.h.b16 %v484
    %v2914 = vunpack.c.l.b16 %v485
    %v2915 = vunpack.c.h.b16 %v485
    %v2916 = vunpack.c.l.b16 %v486
    %v2917 = vunpack.c.h.b16 %v486
    %v2918 = vunpack.c.l.b16 %v487
    %v2919 = vunpack.c.h.b16 %v487
    %v2920 = vunpack.c.l.b16 %v488
    %v2921 = vunpack.c.h.b16 %v488
    %v2922 = vunpack.c.l.b16 %v489
    %v2923 = vunpack.c.h.b16 %v489
    %v2924 = vunpack.c.l.b16 %v490
    %v2925 = vunpack.c.h.b16 %v490
    %v2926 = vunpack.c.l.b16 %v491
    %v2927 = vunpack.c.h.b16 %v491
    %v2928 = vunpack.c.l.b16 %v492
    %v2929 = vunpack.c.h.b16 %v492
    %v2930 = vunpack.c.l.b16 %v493
    %v2931 = vunpack.c.h.b16 %v493
    %v2932 = vunpack.c.l.b16 %v494
    %v2933 = vunpack.c.h.b16 %v494
    %v2934 = vunpack.c.l.b16 %v495
    %v2935 = vunpack.c.h.b16 %v495
    %v2936 = vunpack.c.l.b16 %v496
    %v2937 = vunpack.c.h.b16 %v496
    %v2938 = vunpack.c.l.b16 %v497
    %v2939 = vunpack.c.h.b16 %v497
    %v2940 = vunpack.c.l.b16 %v498
    %v2941 = vunpack.c.h.b16 %v498
    %v2942 = vunpack.c.l.b16 %v499
    %v2943 = vunpack.c.h.b16 %v499
    %v2944 = vunpack.c.l.b16 %v500
    %v2945 = vunpack.c.h.b16 %v500
    %v2946 = vunpack.c.l.b16 %v501
    %v2947 = vunpack.c.h.b16 %v501
    %v2948 = vunpack.c.l.b16 %v502
    %v2949 = vunpack.c.h.b16 %v502
    %v2950 = vunpack.c.l.b16 %v503
    %v2951 = vunpack.c.h.b16 %v503
    %v2952 = vunpack.c.l.b16 %v504
    %v2953 = vunpack.c.h.b16 %v504
    %v2954 = vunpack.c.l.b16 %v505
    %v2955 = vunpack.c.h.b16 %v505
    %v2956 = vunpack.c.l.b16 %v506
    %v2957 = vunpack.c.h.b16 %v506
    %v2958 = vunpack.c.l.b16 %v507
    %v2959 = vunpack.c.h.b16 %v507
    %v2960 = vunpack.c.l.b16 %v508
    %v2961 = vunpack.c.h.b16 %v508
    %v2962 = vunpack.c.l.b16 %v509
    %v2963 = vunpack.c.h.b16 %v509
    %v2964 = vunpack.c.l.b16 %v510
    %v2965 = vunpack.c.h.b16 %v510
    %v2966 = vunpack.c.l.b16 %v511
    %v2967 = vunpack.c.h.b16 %v511
    %v2968 = vunpack.c.l.b16 %v512
    %v2969 = vunpack.c.h.b16 %v512
    %v2970 = vunpack.c.l.b16 %v513
    %v2971 = vunpack.c.h.b16 %v513
    %v2972 = vunpack.c.l.b16 %v514
    %v2973 = vunpack.c.h.b16 %v514
    %v2974 = vunpack.c.l.b16 %v515
    %v2975 = vunpack.c.h.b16 %v515
    %v2976 = vunpack.c.l.b16 %v516
    %v2977 = vunpack.c.h.b16 %v516
    %v2978 = vunpack.c.l.b16 %v517
    %v2979 = vunpack.c.h.b16 %v517
    %v2980 = vunpack.c.l.b16 %v518
    %v2981 = vunpack.c.h.b16 %v518
    %v2982 = vunpack.c.l.b16 %v519
    %v2983 = vunpack.c.h.b16 %v519
    %v2984 = vunpack.c.l.b16 %v520
    %v2985 = vunpack.c.h.b16 %v520
    %v2986 = vunpack.c.l.b16 %v521
    %v2987 = vunpack.c.h.b16 %v521
    %v2988 = vunpack.c.l.b16 %v522
    %v2989 = vunpack.c.h.b16 %v522
    %v2990 = vunpack.c.l.b16 %v523
    %v2991 = vunpack.c.h.b16 %v523
    %v2992 = vunpack.c.l.b16 %v524
    %v2993 = vunpack.c.h.b16 %v524
    %v2994 = vunpack.c.l.b16 %v525
    %v2995 = vunpack.c.h.b16 %v525
    %v2996 = vunpack.c.l.b16 %v526
    %v2997 = vunpack.c.h.b16 %v526
    %v2998 = vunpack.c.l.b16 %v527
    %v2999 = vunpack.c.h.b16 %v527
    %v3000 = vunpack.c.l.b16 %v528
    %v3001 = vunpack.c.h.b16 %v528
    %v3002 = vunpack.c.l.b16 %v529
    %v3003 = vunpack.c.h.b16 %v529
    %v3004 = vunpack.c.l.b16 %v530
    %v3005 = vunpack.c.h.b16 %v530
    %v3006 = vunpack.c.l.b16 %v531
    %v3007 = vunpack.c.h.b16 %v531
    %v3008 = vunpack.c.l.b16 %v532
    %v3009 = vunpack.c.h.b16 %v532
    %v3010 = vunpack.c.l.b16 %v533
    %v3011 = vunpack.c.h.b16 %v533
    %v3012 = vunpack.c.l.b16 %v534
    %v3013 = vunpack.c.h.b16 %v534
    %v3014 = vunpack.c.l.b16 %v535
    %v3015 = vunpack.c.h.b16 %v535
    %v3016 = vunpack.c.l.b16 %v536
    %v3017 = vunpack.c.h.b16 %v536
    %v3018 = vunpack.c.l.b16 %v537
    %v3019 = vunpack.c.h.b16 %v537
    %v3020 = vunpack.c.l.b16 %v538
    %v3021 = vunpack.c.h.b16 %v538
    %v3022 = vunpack.c.l.b16 %v539
    %v3023 = vunpack.c.h.b16 %v539
    %v3024 = vunpack.c.l.b16 %v540
    %v3025 = vunpack.c.h.b16 %v540
    %v3026 = vunpack.c.l.b16 %v541
    %v3027 = vunpack.c.h.b16 %v541
    %v3028 = vunpack.c.l.b16 %v542
    %v3029 = vunpack.c.h.b16 %v542
    %v3030 = vunpack.c.l.b16 %v543
    %v3031 = vunpack.c.h.b16 %v543
    %v3032 = vunpack.c.l.b16 %v544
    %v3033 = vunpack.c.h.b16 %v544
    %v3034 = vunpack.c.l.b16 %v545
    %v3035 = vunpack.c.h.b16 %v545
    %v3036 = vunpack.c.l.b16 %v546
    %v3037 = vunpack.c.h.b16 %v546
    %v3038 = vunpack.c.l.b16 %v547
    %v3039 = vunpack.c.h.b16 %v547
    %v3040 = vunpack.c.l.b16 %v548
    %v3041 = vunpack.c.h.b16 %v548
    %v3042 = vunpack.c.l.b16 %v549
    %v3043 = vunpack.c.h.b16 %v549
    %v3044 = vunpack.c.l.b16 %v550
    %v3045 = vunpack.c.h.b16 %v550
    %v3046 = vunpack.c.l.b16 %v551
    %v3047 = vunpack.c.h.b16 %v551
    %v3048 = vunpack.c.l.b16 %v552
    %v3049 = vunpack.c.h.b16 %v552
    %v3050 = vunpack.c.l.b16 %v553
    %v3051 = vunpack.c.h.b16 %v553
    %v3052 = vunpack.c.l.b16 %v554
    %v3053 = vunpack.c.h.b16 %v554
    %v3054 = vunpack.c.l.b16 %v555
    %v3055 = vunpack.c.h.b16 %v555
    %v3056 = vunpack.c.l.b16 %v556
    %v3057 = vunpack.c.h.b16 %v556
    %v3058 = vunpack.c.l.b16 %v557
    %v3059 = vunpack.c.h.b16 %v557
    %v3060 = vunpack.c.l.b16 %v558
    %v3061 = vunpack.c.h.b16 %v558
    %v3062 = vunpack.c.l.b16 %v559
    %v3063 = vunpack.c.h.b16 %v559
    %v3064 = vunpack.c.l.b16 %v560
    %v3065 = vunpack.c.h.b16 %v560
    %v3066 = vunpack.c.l.b16 %v561
    %v3067 = vunpack.c.h.b16 %v561
    %v3068 = vunpack.c.l.b16 %v562
    %v3069 = vunpack.c.h.b16 %v562
    %v3070 = vunpack.c.l.b16 %v563
    %v3071 = vunpack.c.h.b16 %v563
    %v3072 = vunpack.c.l.b16 %v564
    %v3073 = vunpack.c.h.b16 %v564
    %v3074 = vunpack.c.l.b16 %v565
    %v3075 = vunpack.c.h.b16 %v565
    %v3076 = vunpack.c.l.b16 %v566
    %v3077 = vunpack.c.h.b16 %v566
    %v3078 = vunpack.c.l.b16 %v567
    %v3079 = vunpack.c.h.b16 %v567
    %v3080 = vunpack.c.l.b16 %v568
    %v3081 = vunpack.c.h.b16 %v568
    %v3082 = vunpack.c.l.b16 %v569
    %v3083 = vunpack.c.h.b16 %v569
    %v3084 = vunpack.c.l.b16 %v570
    %v3085 = vunpack.c.h.b16 %v570
    %v3086 = vunpack.c.l.b16 %v571
    %v3087 = vunpack.c.h.b16 %v571
    %v3088 = vunpack.c.l.b16 %v572
    %v3089 = vunpack.c.h.b16 %v572
    %v3090 = vunpack.c.l.b16 %v573
    %v3091 = vunpack.c.h.b16 %v573
    %v3092 = vunpack.c.l.b16 %v574
    %v3093 = vunpack.c.h.b16 %v574
    %v3094 = vunpack.c.l.b16 %v575
    %v3095 = vunpack.c.h.b16 %v575
    %v3096 = vunpack.c.l.b16 %v576
    %v3097 = vunpack.c.h.b16 %v576
    %v3098 = vunpack.c.l.b16 %v577
    %v3099 = vunpack.c.h.b16 %v577
    %v3100 = vunpack.c.l.b16 %v578
    %v3101 = vunpack.c.h.b16 %v578
    %v3102 = vunpack.c.l.b16 %v579
    %v3103 = vunpack.c.h.b16 %v579
    %v3104 = vunpack.c.l.b16 %v580
    %v3105 = vunpack.c.h.b16 %v580
    %v3106 = vunpack.c.l.b16 %v581
    %v3107 = vunpack.c.h.b16 %v581
    %v3108 = vunpack.c.l.b16 %v582
    %v3109 = vunpack.c.h.b16 %v582
    %v3110 = vunpack.c.l.b16 %v583
    %v3111 = vunpack.c.h.b16 %v583
    %v3112 = vunpack.c.l.b16 %v584
    %v3113 = vunpack.c.h.b16 %v584
    %v3114 = vunpack.c.l.b16 %v585
    %v3115 = vunpack.c.h.b16 %v585
    %v3116 = vunpack.c.l.b16 %v586
    %v3117 = vunpack.c.h.b16 %v586
    %v3118 = vunpack.c.l.b16 %v587
    %v3119 = vunpack.c.h.b16 %v587
    %v3120 = vunpack.c.l.b16 %v588
    %v3121 = vunpack.c.h.b16 %v588
    %v3122 = vunpack.c.l.b16 %v589
    %v3123 = vunpack.c.h.b16 %v589
    %v3124 = vunpack.c.l.b16 %v590
    %v3125 = vunpack.c.h.b16 %v590
    %v3126 = vunpack.c.l.b16 %v591
    %v3127 = vunpack.c.h.b16 %v591
    %v3128 = vunpack.c.l.b16 %v592
    %v3129 = vunpack.c.h.b16 %v592
    %v3130 = vunpack.c.l.b16 %v593
    %v3131 = vunpack.c.h.b16 %v593
    %v3132 = vunpack.c.l.b16 %v594
    %v3133 = vunpack.c.h.b16 %v594
    %v3134 = vunpack.c.l.b16 %v595
    %v3135 = vunpack.c.h.b16 %v595
    %v3136 = vunpack.c.l.b16 %v596
    %v3137 = vunpack.c.h.b16 %v596
    %v3138 = vunpack.c.l.b16 %v597
    %v3139 = vunpack.c.h.b16 %v597
    %v3140 = vunpack.c.l.b16 %v598
    %v3141 = vunpack.c.h.b16 %v598
    %v3142 = vunpack.c.l.b16 %v599
    %v3143 = vunpack.c.h.b16 %v599
    %v3144 = vunpack.c.l.b16 %v600
    %v3145 = vunpack.c.h.b16 %v600
    %v3146 = vunpack.c.l.b16 %v601
    %v3147 = vunpack.c.h.b16 %v601
    %v3148 = vunpack.c.l.b16 %v602
    %v3149 = vunpack.c.h.b16 %v602
    %v3150 = vunpack.c.l.b16 %v603
    %v3151 = vunpack.c.h.b16 %v603
    %v3152 = vunpack.c.l.b16 %v604
    %v3153 = vunpack.c.h.b16 %v604
    %v3154 = vunpack.c.l.b16 %v605
    %v3155 = vunpack.c.h.b16 %v605
    %v3156 = vunpack.c.l.b16 %v606
    %v3157 = vunpack.c.h.b16 %v606
    %v3158 = vunpack.c.l.b16 %v607
    %v3159 = vunpack.c.h.b16 %v607
    %v3160 = vunpack.c.l.b16 %v608
    %v3161 = vunpack.c.h.b16 %v608
    %v3162 = vunpack.c.l.b16 %v609
    %v3163 = vunpack.c.h.b16 %v609
    %v3164 = vunpack.c.l.b16 %v610
    %v3165 = vunpack.c.h.b16 %v610
    %v3166 = vunpack.c.l.b16 %v611
    %v3167 = vunpack.c.h.b16 %v611
    %v3168 = vunpack.c.l.b16 %v612
    %v3169 = vunpack.c.h.b16 %v612
    %v3170 = vunpack.c.l.b16 %v613
    %v3171 = vunpack.c.h.b16 %v613
    %v3172 = vunpack.c.l.b16 %v614
    %v3173 = vunpack.c.h.b16 %v614
    %v3174 = vunpack.c.l.b16 %v615
    %v3175 = vunpack.c.h.b16 %v615
    %v3176 = vunpack.c.l.b16 %v616
    %v3177 = vunpack.c.h.b16 %v616
    %v3178 = vunpack.c.l.b16 %v617
    %v3179 = vunpack.c.h.b16 %v617
    %v3180 = vunpack.c.l.b16 %v618
    %v3181 = vunpack.c.h.b16 %v618
    %v3182 = vunpack.c.l.b16 %v619
    %v3183 = vunpack.c.h.b16 %v619
    %v3184 = vunpack.c.l.b16 %v620
    %v3185 = vunpack.c.h.b16 %v620
    %v3186 = vunpack.c.l.b16 %v621
    %v3187 = vunpack.c.h.b16 %v621
    %v3188 = vunpack.c.l.b16 %v622
    %v3189 = vunpack.c.h.b16 %v622
    %v3190 = vunpack.c.l.b16 %v623
    %v3191 = vunpack.c.h.b16 %v623
    %v3192 = vunpack.c.l.b16 %v624
    %v3193 = vunpack.c.h.b16 %v624
    %v3194 = vunpack.c.l.b16 %v625
    %v3195 = vunpack.c.h.b16 %v625
    %v3196 = vunpack.c.l.b16 %v626
    %v3197 = vunpack.c.h.b16 %v626
    %v3198 = vunpack.c.l.b16 %v627
    %v3199 = vunpack.c.h.b16 %v627
    %v3200 = vunpack.c.l.b16 %v628
    %v3201 = vunpack.c.h.b16 %v628
    %v3202 = vunpack.c.l.b16 %v629
    %v3203 = vunpack.c.h.b16 %v629
    %v3204 = vunpack.c.l.b16 %v630
    %v3205 = vunpack.c.h.b16 %v630
    %v3206 = vunpack.c.l.b16 %v631
    %v3207 = vunpack.c.h.b16 %v631
    %v3208 = vunpack.c.l.b16 %v632
    %v3209 = vunpack.c.h.b16 %v632
    %v3210 = vunpack.c.l.b16 %v633
    %v3211 = vunpack.c.h.b16 %v633
    %v3212 = vunpack.c.l.b16 %v634
    %v3213 = vunpack.c.h.b16 %v634
    %v3214 = vunpack.c.l.b16 %v635
    %v3215 = vunpack.c.h.b16 %v635
    %v3216 = vunpack.c.l.b16 %v636
    %v3217 = vunpack.c.h.b16 %v636
    %v3218 = vunpack.c.l.b16 %v637
    %v3219 = vunpack.c.h.b16 %v637
    %v3220 = vunpack.c.l.b16 %v638
    %v3221 = vunpack.c.h.b16 %v638
    %v3222 = vunpack.c.l.b16 %v639
    %v3223 = vunpack.c.h.b16 %v639
    %v3224 = vunpack.c.l.b16 %v640
    %v3225 = vunpack.c.h.b16 %v640
    %v3226 = vunpack.c.l.b16 %v641
    %v3227 = vunpack.c.h.b16 %v641
    %v3228 = vunpack.c.l.b16 %v642
    %v3229 = vunpack.c.h.b16 %v642
    %v3230 = vunpack.c.l.b16 %v643
    %v3231 = vunpack.c.h.b16 %v643
    %v3232 = vunpack.c.l.b16 %v644
    %v3233 = vunpack.c.h.b16 %v644
    %v3234 = vunpack.c.l.b16 %v645
    %v3235 = vunpack.c.h.b16 %v645
    %v3236 = vunpack.c.l.b16 %v646
    %v3237 = vunpack.c.h.b16 %v646
    %v3238 = vunpack.c.l.b16 %v647
    %v3239 = vunpack.c.h.b16 %v647
    %v3240 = vunpack.c.l.b16 %v648
    %v3241 = vunpack.c.h.b16 %v648
    %v3242 = vunpack.c.l.b16 %v649
    %v3243 = vunpack.c.h.b16 %v649
    %v3244 = vunpack.c.l.b16 %v650
    %v3245 = vunpack.c.h.b16 %v650
    %v3246 = vunpack.c.l.b16 %v651
    %v3247 = vunpack.c.h.b16 %v651
    %v3248 = vunpack.c.l.b16 %v652
    %v3249 = vunpack.c.h.b16 %v652
    %v3250 = vunpack.c.l.b16 %v653
    %v3251 = vunpack.c.h.b16 %v653
    %v3252 = vunpack.c.l.b16 %v654
    %v3253 = vunpack.c.h.b16 %v654
    %v3254 = vunpack.c.l.b16 %v655
    %v3255 = vunpack.c.h.b16 %v655
    %v3256 = vunpack.c.l.b16 %v656
    %v3257 = vunpack.c.h.b16 %v656
    %v3258 = vunpack.c.l.b16 %v657
    %v3259 = vunpack.c.h.b16 %v657
    %v3260 = vunpack.c.l.b16 %v658
    %v3261 = vunpack.c.h.b16 %v658
    %v3262 = vunpack.c.l.b16 %v659
    %v3263 = vunpack.c.h.b16 %v659
    %v3264 = vunpack.c.l.b16 %v660
    %v3265 = vunpack.c.h.b16 %v660
    %v3266 = vunpack.c.l.b16 %v661
    %v3267 = vunpack.c.h.b16 %v661
    %v3268 = vunpack.c.l.b16 %v662
    %v3269 = vunpack.c.h.b16 %v662
    %v3270 = vunpack.c.l.b16 %v663
    %v3271 = vunpack.c.h.b16 %v663
    %v3272 = vunpack.c.l.b16 %v664
    %v3273 = vunpack.c.h.b16 %v664
    %v3274 = vunpack.c.l.b16 %v665
    %v3275 = vunpack.c.h.b16 %v665
    %v3276 = vunpack.c.l.b16 %v666
    %v3277 = vunpack.c.h.b16 %v666
    %v3278 = vunpack.c.l.b16 %v667
    %v3279 = vunpack.c.h.b16 %v667
    %v3280 = vunpack.c.l.b16 %v668
    %v3281 = vunpack.c.h.b16 %v668
    %v3282 = vunpack.c.l.b16 %v669
    %v3283 = vunpack.c.h.b16 %v669
    %v3284 = vunpack.c.l.b16 %v670
    %v3285 = vunpack.c.h.b16 %v670
    %v3286 = vunpack.c.l.b16 %v671
    %v3287 = vunpack.c.h.b16 %v671
    %v3288 = vunpack.c.l.b16 %v672
    %v3289 = vunpack.c.h.b16 %v672
    %v3290 = vunpack.c.l.b16 %v673
    %v3291 = vunpack.c.h.b16 %v673
    %v3292 = vunpack.c.l.b16 %v674
    %v3293 = vunpack.c.h.b16 %v674
    %v3294 = vunpack.c.l.b16 %v675
    %v3295 = vunpack.c.h.b16 %v675
    %v3296 = vunpack.c.l.b16 %v676
    %v3297 = vunpack.c.h.b16 %v676
    %v3298 = vunpack.c.l.b16 %v677
    %v3299 = vunpack.c.h.b16 %v677
    %v3300 = vunpack.c.l.b16 %v678
    %v3301 = vunpack.c.h.b16 %v678
    %v3302 = vunpack.c.l.b16 %v679
    %v3303 = vunpack.c.h.b16 %v679
    %v3304 = vunpack.c.l.b16 %v680
    %v3305 = vunpack.c.h.b16 %v680
    %v3306 = vunpack.c.l.b16 %v681
    %v3307 = vunpack.c.h.b16 %v681
    %v3308 = vunpack.c.l.b16 %v682
    %v3309 = vunpack.c.h.b16 %v682
    %v3310 = vunpack.c.l.b16 %v683
    %v3311 = vunpack.c.h.b16 %v683
    %v3312 = vunpack.c.l.b16 %v684
    %v3313 = vunpack.c.h.b16 %v684
    %v3314 = vunpack.c.l.b16 %v685
    %v3315 = vunpack.c.h.b16 %v685
    %v3316 = vunpack.c.l.b16 %v686
    %v3317 = vunpack.c.h.b16 %v686
    %v3318 = vunpack.c.l.b16 %v687
    %v3319 = vunpack.c.h.b16 %v687
    %v3320 = vunpack.c.l.b16 %v688
    %v3321 = vunpack.c.h.b16 %v688
    %v3322 = vunpack.c.l.b16 %v689
    %v3323 = vunpack.c.h.b16 %v689
    %v3324 = vunpack.c.l.b16 %v690
    %v3325 = vunpack.c.h.b16 %v690
    %v3326 = vunpack.c.l.b16 %v691
    %v3327 = vunpack.c.h.b16 %v691
    %v3328 = vunpack.c.l.b16 %v692
    %v3329 = vunpack.c.h.b16 %v692
    %v3330 = vunpack.c.l.b16 %v693
    %v3331 = vunpack.c.h.b16 %v693
    %v3332 = vunpack.c.l.b16 %v694
    %v3333 = vunpack.c.h.b16 %v694
    %v3334 = vunpack.c.l.b16 %v695
    %v3335 = vunpack.c.h.b16 %v695
    %v3336 = vunpack.c.l.b16 %v696
    %v3337 = vunpack.c.h.b16 %v696
    %v3338 = vunpack.c.l.b16 %v697
    %v3339 = vunpack.c.h.b16 %v697
    %v3340 = vunpack.c.l.b16 %v698
    %v3341 = vunpack.c.h.b16 %v698
    %v3342 = vunpack.c.l.b16 %v699
    %v3343 = vunpack.c.h.b16 %v699
    %v3344 = vunpack.c.l.b16 %v700
    %v3345 = vunpack.c.h.b16 %v700
    %v3346 = vunpack.c.l.b16 %v701
    %v3347 = vunpack.c.h.b16 %v701
    %v3348 = vunpack.c.l.b16 %v702
    %v3349 = vunpack.c.h.b16 %v702
    %v3350 = vunpack.c.l.b16 %v703
    %v3351 = vunpack.c.h.b16 %v703
    %v3352 = vunpack.c.l.b16 %v704
    %v3353 = vunpack.c.h.b16 %v704
    %v3354 = vunpack.c.l.b16 %v705
    %v3355 = vunpack.c.h.b16 %v705
    %v3356 = vunpack.c.l.b16 %v706
    %v3357 = vunpack.c.h.b16 %v706
    %v3358 = vunpack.c.l.b16 %v707
    %v3359 = vunpack.c.h.b16 %v707
    %v3360 = vunpack.c.l.b16 %v708
    %v3361 = vunpack.c.h.b16 %v708
    %v3362 = vunpack.c.l.b16 %v709
    %v3363 = vunpack.c.h.b16 %v709
    %v3364 = vunpack.c.l.b16 %v710
    %v3365 = vunpack.c.h.b16 %v710
    %v3366 = vunpack.c.l.b16 %v711
    %v3367 = vunpack.c.h.b16 %v711
    %v3368 = vunpack.c.l.b16 %v712
    %v3369 = vunpack.c.h.b16 %v712
    %v3370 = vunpack.c.l.b16 %v713
    %v3371 = vunpack.c.h.b16 %v713
    %v3372 = vunpack.c.l.b16 %v714
    %v3373 = vunpack.c.h.b16 %v714
    %v3374 = vunpack.c.l.b16 %v715
    %v3375 = vunpack.c.h.b16 %v715
    %v3376 = vunpack.c.l.b16 %v716
    %v3377 = vunpack.c.h.b16 %v716
    %v3378 = vunpack.c.l.b16 %v717
    %v3379 = vunpack.c.h.b16 %v717
    %v3380 = vunpack.c.l.b16 %v718
    %v3381 = vunpack.c.h.b16 %v718
    %v3382 = vunpack.c.l.b16 %v719
    %v3383 = vunpack.c.h.b16 %v719
    %v3384 = vunpack.c.l.b16 %v720
    %v3385 = vunpack.c.h.b16 %v720
    %v3386 = vunpack.c.l.b16 %v721
    %v3387 = vunpack.c.h.b16 %v721
    %v3388 = vunpack.c.l.b16 %v722
    %v3389 = vunpack.c.h.b16 %v722
    %v3390 = vunpack.c.l.b16 %v723
    %v3391 = vunpack.c.h.b16 %v723
    %v3392 = vunpack.c.l.b16 %v724
    %v3393 = vunpack.c.h.b16 %v724
    %v3394 = vunpack.c.l.b16 %v725
    %v3395 = vunpack.c.h.b16 %v725
    %v3396 = vunpack.c.l.b16 %v726
    %v3397 = vunpack.c.h.b16 %v726
    %v3398 = vunpack.c.l.b16 %v727
    %v3399 = vunpack.c.h.b16 %v727
    %v3400 = vunpack.c.l.b16 %v728
    %v3401 = vunpack.c.h.b16 %v728
    %v3402 = vunpack.c.l.b16 %v729
    %v3403 = vunpack.c.h.b16 %v729
    %v3404 = vunpack.c.l.b16 %v730
    %v3405 = vunpack.c.h.b16 %v730
    %v3406 = vunpack.c.l.b16 %v731
    %v3407 = vunpack.c.h.b16 %v731
    %v3408 = vunpack.c.l.b16 %v732
    %v3409 = vunpack.c.h.b16 %v732
    %v3410 = vunpack.c.l.b16 %v733
    %v3411 = vunpack.c.h.b16 %v733
    %v3412 = vunpack.c.l.b16 %v734
    %v3413 = vunpack.c.h.b16 %v734
    %v3414 = vunpack.c.l.b16 %v735
    %v3415 = vunpack.c.h.b16 %v735
    %v3416 = vunpack.c.l.b16 %v736
    %v3417 = vunpack.c.h.b16 %v736
    %v3418 = vunpack.c.l.b16 %v737
    %v3419 = vunpack.c.h.b16 %v737
    %v3420 = vunpack.c.l.b16 %v738
    %v3421 = vunpack.c.h.b16 %v738
    %v3422 = vunpack.c.l.b16 %v739
    %v3423 = vunpack.c.h.b16 %v739
    %v3424 = vunpack.c.l.b16 %v740
    %v3425 = vunpack.c.h.b16 %v740
    %v3426 = vunpack.c.l.b16 %v741
    %v3427 = vunpack.c.h.b16 %v741
    %v3428 = vunpack.c.l.b16 %v742
    %v3429 = vunpack.c.h.b16 %v742
    %v3430 = vunpack.c.l.b16 %v743
    %v3431 = vunpack.c.h.b16 %v743
    %v3432 = vunpack.c.l.b16 %v744
    %v3433 = vunpack.c.h.b16 %v744
    %v3434 = vunpack.c.l.b16 %v745
    %v3435 = vunpack.c.h.b16 %v745
    %v3436 = vunpack.c.l.b16 %v746
    %v3437 = vunpack.c.h.b16 %v746
    %v3438 = vunpack.c.l.b16 %v747
    %v3439 = vunpack.c.h.b16 %v747
    %v3440 = vunpack.c.l.b16 %v748
    %v3441 = vunpack.c.h.b16 %v748
    %v3442 = vunpack.c.l.b16 %v749
    %v3443 = vunpack.c.h.b16 %v749
    %v3444 = vunpack.c.l.b16 %v750
    %v3445 = vunpack.c.h.b16 %v750
    %v3446 = vunpack.c.l.b16 %v751
    %v3447 = vunpack.c.h.b16 %v751
    %v3448 = vunpack.c.l.b16 %v752
    %v3449 = vunpack.c.h.b16 %v752
    %v3450 = vunpack.c.l.b16 %v753
    %v3451 = vunpack.c.h.b16 %v753
    %v3452 = vunpack.c.l.b16 %v754
    %v3453 = vunpack.c.h.b16 %v754
    %v3454 = vunpack.c.l.b16 %v755
    %v3455 = vunpack.c.h.b16 %v755
    %v3456 = vunpack.c.l.b16 %v756
    %v3457 = vunpack.c.h.b16 %v756
    %v3458 = vunpack.c.l.b16 %v757
    %v3459 = vunpack.c.h.b16 %v757
    %v3460 = vunpack.c.l.b16 %v758
    %v3461 = vunpack.c.h.b16 %v758
    %v3462 = vunpack.c.l.b16 %v759
    %v3463 = vunpack.c.h.b16 %v759
    %v3464 = vunpack.c.l.b16 %v760
    %v3465 = vunpack.c.h.b16 %v760
    %v3466 = vunpack.c.l.b16 %v761
    %v3467 = vunpack.c.h.b16 %v761
    %v3468 = vunpack.c.l.b16 %v762
    %v3469 = vunpack.c.h.b16 %v762
    %v3470 = vunpack.c.l.b16 %v763
    %v3471 = vunpack.c.h.b16 %v763
    %v3472 = vunpack.c.l.b16 %v764
    %v3473 = vunpack.c.h.b16 %v764
    %v3474 = vunpack.c.l.b16 %v765
    %v3475 = vunpack.c.h.b16 %v765
    %v3476 = vunpack.c.l.b16 %v766
    %v3477 = vunpack.c.h.b16 %v766
    %v3478 = vunpack.c.l.b16 %v767
    %v3479 = vunpack.c.h.b16 %v767
    %v3480 = vunpack.c.l.b16 %v768
    %v3481 = vunpack.c.h.b16 %v768
    %v3482 = vunpack.c.l.b16 %v769
    %v3483 = vunpack.c.h.b16 %v769
    %v3484 = vunpack.c.l.b16 %v770
    %v3485 = vunpack.c.h.b16 %v770
    %v3486 = vunpack.c.l.b16 %v771
    %v3487 = vunpack.c.h.b16 %v771
    %v3488 = vunpack.c.l.b16 %v772
    %v3489 = vunpack.c.h.b16 %v772
    %v3490 = vunpack.c.l.b16 %v773
    %v3491 = vunpack.c.h.b16 %v773
    %v3492 = vunpack.c.l.b16 %v774
    %v3493 = vunpack.c.h.b16 %v774
    %v3494 = vunpack.c.l.b16 %v775
    %v3495 = vunpack.c.h.b16 %v775
    %v3496 = vunpack.c.l.b16 %v776
    %v3497 = vunpack.c.h.b16 %v776
    %v3498 = vunpack.c.l.b16 %v777
    %v3499 = vunpack.c.h.b16 %v777
    %v3500 = vunpack.c.l.b16 %v778
    %v3501 = vunpack.c.h.b16 %v778
    %v3502 = vunpack.c.l.b16 %v779
    %v3503 = vunpack.c.h.b16 %v779
    %v3504 = vunpack.c.l.b16 %v780
    %v3505 = vunpack.c.h.b16 %v780
    %v3506 = vunpack.c.l.b16 %v781
    %v3507 = vunpack.c.h.b16 %v781
    %v3508 = vunpack.c.l.b16 %v782
    %v3509 = vunpack.c.h.b16 %v782
    %v3510 = vunpack.c.l.b16 %v783
    %v3511 = vunpack.c.h.b16 %v783
    %v3512 = vunpack.c.l.b16 %v784
    %v3513 = vunpack.c.h.b16 %v784
    %v3514 = vunpack.c.l.b16 %v785
    %v3515 = vunpack.c.h.b16 %v785
    %v3516 = vunpack.c.l.b16 %v786
    %v3517 = vunpack.c.h.b16 %v786
    %v3518 = vunpack.c.l.b16 %v787
    %v3519 = vunpack.c.h.b16 %v787
    %v3520 = vunpack.c.l.b16 %v788
    %v3521 = vunpack.c.h.b16 %v788
    %v3522 = vunpack.c.l.b16 %v789
    %v3523 = vunpack.c.h.b16 %v789
    %v3524 = vunpack.c.l.b16 %v790
    %v3525 = vunpack.c.h.b16 %v790
    %v3526 = vunpack.c.l.b16 %v791
    %v3527 = vunpack.c.h.b16 %v791
    %v3528 = vunpack.c.l.b16 %v792
    %v3529 = vunpack.c.h.b16 %v792
    %v3530 = vunpack.c.l.b16 %v793
    %v3531 = vunpack.c.h.b16 %v793
    %v3532 = vunpack.c.l.b16 %v794
    %v3533 = vunpack.c.h.b16 %v794
    %v3534 = vunpack.c.l.b16 %v795
    %v3535 = vunpack.c.h.b16 %v795
    %v3536 = vunpack.c.l.b16 %v796
    %v3537 = vunpack.c.h.b16 %v796
    %v3538 = vunpack.c.l.b16 %v797
    %v3539 = vunpack.c.h.b16 %v797
    %v3540 = vunpack.c.l.b16 %v798
    %v3541 = vunpack.c.h.b16 %v798
    %v3542 = vunpack.c.l.b16 %v799
    %v3543 = vunpack.c.h.b16 %v799
    %v3544 = vunpack.c.l.b16 %v800
    %v3545 = vunpack.c.h.b16 %v800
    %v3546 = vunpack.c.l.b16 %v801
    %v3547 = vunpack.c.h.b16 %v801
    %v3548 = vunpack.c.l.b16 %v802
    %v3549 = vunpack.c.h.b16 %v802
    %v3550 = vunpack.c.l.b16 %v803
    %v3551 = vunpack.c.h.b16 %v803
    %v3552 = vunpack.c.l.b16 %v804
    %v3553 = vunpack.c.h.b16 %v804
    %v3554 = vunpack.c.l.b16 %v805
    %v3555 = vunpack.c.h.b16 %v805
    %v3556 = vunpack.c.l.b16 %v806
    %v3557 = vunpack.c.h.b16 %v806
    %v3558 = vunpack.c.l.b16 %v807
    %v3559 = vunpack.c.h.b16 %v807
    %v3560 = vunpack.c.l.b16 %v808
    %v3561 = vunpack.c.h.b16 %v808
    %v3562 = vunpack.c.l.b16 %v809
    %v3563 = vunpack.c.h.b16 %v809
    %v3564 = vunpack.c.l.b16 %v810
    %v3565 = vunpack.c.h.b16 %v810
    %v3566 = vunpack.c.l.b16 %v811
    %v3567 = vunpack.c.h.b16 %v811
    %v3568 = vunpack.c.l.b16 %v812
    %v3569 = vunpack.c.h.b16 %v812
    %v3570 = vunpack.c.l.b16 %v813
    %v3571 = vunpack.c.h.b16 %v813
    %v3572 = vunpack.c.l.b16 %v814
    %v3573 = vunpack.c.h.b16 %v814
    %v3574 = vunpack.c.l.b16 %v815
    %v3575 = vunpack.c.h.b16 %v815
    %v3576 = vunpack.c.l.b16 %v816
    %v3577 = vunpack.c.h.b16 %v816
    %v3578 = vunpack.c.l.b16 %v817
    %v3579 = vunpack.c.h.b16 %v817
    %v3580 = vunpack.c.l.b16 %v818
    %v3581 = vunpack.c.h.b16 %v818
    %v3582 = vunpack.c.l.b16 %v819
    %v3583 = vunpack.c.h.b16 %v819
    %v3584 = vunpack.c.l.b16 %v820
    %v3585 = vunpack.c.h.b16 %v820
    %v3586 = vunpack.c.l.b16 %v821
    %v3587 = vunpack.c.h.b16 %v821
    %v3588 = vunpack.c.l.b16 %v822
    %v3589 = vunpack.c.h.b16 %v822
    %v3590 = vunpack.c.l.b16 %v823
    %v3591 = vunpack.c.h.b16 %v823
    %v3592 = vunpack.c.l.b16 %v824
    %v3593 = vunpack.c.h.b16 %v824
    %v3594 = vunpack.c.l.b16 %v825
    %v3595 = vunpack.c.h.b16 %v825
    %v3596 = vunpack.c.l.b16 %v826
    %v3597 = vunpack.c.h.b16 %v826
    %v3598 = vunpack.c.l.b16 %v827
    %v3599 = vunpack.c.h.b16 %v827
    %v3600 = vunpack.c.l.b16 %v828
    %v3601 = vunpack.c.h.b16 %v828
    %v3602 = vunpack.c.l.b16 %v829
    %v3603 = vunpack.c.h.b16 %v829
    %v3604 = vunpack.c.l.b16 %v830
    %v3605 = vunpack.c.h.b16 %v830
    %v3606 = vunpack.c.l.b16 %v831
    %v3607 = vunpack.c.h.b16 %v831
    %v3608 = vunpack.c.l.b16 %v832
    %v3609 = vunpack.c.h.b16 %v832
    %v3610 = vunpack.c.l.b16 %v833
    %v3611 = vunpack.c.h.b16 %v833
    %v3612 = vunpack.c.l.b16 %v834
    %v3613 = vunpack.c.h.b16 %v834
    %v3614 = vunpack.c.l.b16 %v835
    %v3615 = vunpack.c.h.b16 %v835
    %v3616 = vunpack.c.l.b16 %v836
    %v3617 = vunpack.c.h.b16 %v836
    %v3618 = vunpack.c.l.b16 %v837
    %v3619 = vunpack.c.h.b16 %v837
    %v3620 = vunpack.c.l.b16 %v838
    %v3621 = vunpack.c.h.b16 %v838
    %v3622 = vunpack.c.l.b16 %v839
    %v3623 = vunpack.c.h.b16 %v839
    %v3624 = vunpack.c.l.b16 %v840
    %v3625 = vunpack.c.h.b16 %v840
    %v3626 = vunpack.c.l.b16 %v841
    %v3627 = vunpack.c.h.b16 %v841
    %v3628 = vunpack.c.l.b16 %v842
    %v3629 = vunpack.c.h.b16 %v842
    %v3630 = vunpack.c.l.b16 %v843
    %v3631 = vunpack.c.h.b16 %v843
    %v3632 = vunpack.c.l.b16 %v844
    %v3633 = vunpack.c.h.b16 %v844
    %v3634 = vunpack.c.l.b16 %v845
    %v3635 = vunpack.c.h.b16 %v845
    %v3636 = vunpack.c.l.b16 %v846
    %v3637 = vunpack.c.h.b16 %v846
    %v3638 = vunpack.c.l.b16 %v847
    %v3639 = vunpack.c.h.b16 %v847
    %v3640 = vunpack.c.l.b16 %v848
    %v3641 = vunpack.c.h.b16 %v848
    %v3642 = vunpack.c.l.b16 %v849
    %v3643 = vunpack.c.h.b16 %v849
    %v3644 = vunpack.c.l.b16 %v850
    %v3645 = vunpack.c.h.b16 %v850
    %v3646 = vunpack.c.l.b16 %v851
    %v3647 = vunpack.c.h.b16 %v851
    %v3648 = vunpack.c.l.b16 %v852
    %v3649 = vunpack.c.h.b16 %v852
    %v3650 = vunpack.c.l.b16 %v853
    %v3651 = vunpack.c.h.b16 %v853
    %v3652 = vunpack.c.l.b16 %v854
    %v3653 = vunpack.c.h.b16 %v854
    %v3654 = vunpack.c.l.b16 %v855
    %v3655 = vunpack.c.h.b16 %v855
    %v3656 = vunpack.c.l.b16 %v856
    %v3657 = vunpack.c.h.b16 %v856
    %v3658 = vunpack.c.l.b16 %v857
    %v3659 = vunpack.c.h.b16 %v857
    %v3660 = vunpack.c.l.b16 %v858
    %v3661 = vunpack.c.h.b16 %v858
    %v3662 = vunpack.c.l.b16 %v859
    %v3663 = vunpack.c.h.b16 %v859
    %v3664 = vunpack.c.l.b16 %v860
    %v3665 = vunpack.c.h.b16 %v860
    %v3666 = vunpack.c.l.b16 %v861
    %v3667 = vunpack.c.h.b16 %v861
    %v3668 = vunpack.c.l.b16 %v862
    %v3669 = vunpack.c.h.b16 %v862
    %v3670 = vunpack.c.l.b16 %v863
    %v3671 = vunpack.c.h.b16 %v863
    %v3672 = vunpack.c.l.b16 %v864
    %v3673 = vunpack.c.h.b16 %v864
    %v3674 = vunpack.c.l.b16 %v865
    %v3675 = vunpack.c.h.b16 %v865
    %v3676 = vunpack.c.l.b16 %v866
    %v3677 = vunpack.c.h.b16 %v866
    %v3678 = vunpack.c.l.b16 %v867
    %v3679 = vunpack.c.h.b16 %v867
    %v3680 = vunpack.c.l.b16 %v868
    %v3681 = vunpack.c.h.b16 %v868
    %v3682 = vunpack.c.l.b16 %v869
    %v3683 = vunpack.c.h.b16 %v869
    %v3684 = vunpack.c.l.b16 %v870
    %v3685 = vunpack.c.h.b16 %v870
    %v3686 = vunpack.c.l.b16 %v871
    %v3687 = vunpack.c.h.b16 %v871
    %v3688 = vunpack.c.l.b16 %v872
    %v3689 = vunpack.c.h.b16 %v872
    %v3690 = vunpack.c.l.b16 %v873
    %v3691 = vunpack.c.h.b16 %v873
    %v3692 = vunpack.c.l.b16 %v874
    %v3693 = vunpack.c.h.b16 %v874
    %v3694 = vunpack.c.l.b16 %v875
    %v3695 = vunpack.c.h.b16 %v875
    %v3696 = vunpack.c.l.b16 %v876
    %v3697 = vunpack.c.h.b16 %v876
    %v3698 = vunpack.c.l.b16 %v877
    %v3699 = vunpack.c.h.b16 %v877
    %v3700 = vunpack.c.l.b16 %v878
    %v3701 = vunpack.c.h.b16 %v878
    %v3702 = vunpack.c.l.b16 %v879
    %v3703 = vunpack.c.h.b16 %v879
    %v3704 = vunpack.c.l.b16 %v880
    %v3705 = vunpack.c.h.b16 %v880
    %v3706 = vunpack.c.l.b16 %v881
    %v3707 = vunpack.c.h.b16 %v881
    %v3708 = vunpack.c.l.b16 %v882
    %v3709 = vunpack.c.h.b16 %v882
    %v3710 = vunpack.c.l.b16 %v883
    %v3711 = vunpack.c.h.b16 %v883
    %v3712 = vunpack.c.l.b16 %v884
    %v3713 = vunpack.c.h.b16 %v884
    %v3714 = vunpack.c.l.b16 %v885
    %v3715 = vunpack.c.h.b16 %v885
    %v3716 = vunpack.c.l.b16 %v886
    %v3717 = vunpack.c.h.b16 %v886
    %v3718 = vunpack.c.l.b16 %v887
    %v3719 = vunpack.c.h.b16 %v887
    %v3720 = vunpack.c.l.b16 %v888
    %v3721 = vunpack.c.h.b16 %v888
    %v3722 = vunpack.c.l.b16 %v889
    %v3723 = vunpack.c.h.b16 %v889
    %v3724 = vunpack.c.l.b16 %v890
    %v3725 = vunpack.c.h.b16 %v890
    %v3726 = vunpack.c.l.b16 %v891
    %v3727 = vunpack.c.h.b16 %v891
    %v3728 = vunpack.c.l.b16 %v892
    %v3729 = vunpack.c.h.b16 %v892
    %v3730 = vunpack.c.l.b16 %v893
    %v3731 = vunpack.c.h.b16 %v893
    %v3732 = vunpack.c.l.b16 %v894
    %v3733 = vunpack.c.h.b16 %v894
    %v3734 = vunpack.c.l.b16 %v895
    %v3735 = vunpack.c.h.b16 %v895
    %v3736 = vunpack.c.l.b16 %v896
    %v3737 = vunpack.c.h.b16 %v896
    %v3738 = vunpack.c.l.b16 %v897
    %v3739 = vunpack.c.h.b16 %v897
    %v3740 = vunpack.c.l.b16 %v898
    %v3741 = vunpack.c.h.b16 %v898
    %v3742 = vunpack.c.l.b16 %v899
    %v3743 = vunpack.c.h.b16 %v899
    %v3744 = vunpack.c.l.b16 %v900
    %v3745 = vunpack.c.h.b16 %v900
    %v3746 = vunpack.c.l.b16 %v901
    %v3747 = vunpack.c.h.b16 %v901
    %v3748 = vunpack.c.l.b16 %v902
    %v3749 = vunpack.c.h.b16 %v902
    %v3750 = vunpack.c.l.b16 %v903
    %v3751 = vunpack.c.h.b16 %v903
    %v3752 = vunpack.c.l.b16 %v904
    %v3753 = vunpack.c.h.b16 %v904
    %v3754 = vunpack.c.l.b16 %v905
    %v3755 = vunpack.c.h.b16 %v905
    %v3756 = vunpack.c.l.b16 %v906
    %v3757 = vunpack.c.h.b16 %v906
    %v3758 = vunpack.c.l.b16 %v907
    %v3759 = vunpack.c.h.b16 %v907
    %v3760 = vunpack.c.l.b16 %v908
    %v3761 = vunpack.c.h.b16 %v908
    %v3762 = vunpack.c.l.b16 %v909
    %v3763 = vunpack.c.h.b16 %v909
    %v3764 = vunpack.c.l.b16 %v910
    %v3765 = vunpack.c.h.b16 %v910
    %v3766 = vunpack.c.l.b16 %v911
    %v3767 = vunpack.c.h.b16 %v911
    %v3768 = vunpack.c.l.b16 %v912
    %v3769 = vunpack.c.h.b16 %v912
    %v3770 = vunpack.c.l.b16 %v913
    %v3771 = vunpack.c.h.b16 %v913
    %v3772 = vunpack.c.l.b16 %v914
    %v3773 = vunpack.c.h.b16 %v914
    %v3774 = vunpack.c.l.b16 %v915
    %v3775 = vunpack.c.h.b16 %v915
    %v3776 = vunpack.c.l.b16 %v916
    %v3777 = vunpack.c.h.b16 %v916
    %v3778 = vunpack.c.l.b16 %v917
    %v3779 = vunpack.c.h.b16 %v917
    %v3780 = vunpack.c.l.b16 %v918
    %v3781 = vunpack.c.h.b16 %v918
    %v3782 = vunpack.c.l.b16 %v919
    %v3783 = vunpack.c.h.b16 %v919
    %v3784 = vunpack.c.l.b16 %v920
    %v3785 = vunpack.c.h.b16 %v920
    %v3786 = vunpack.c.l.b16 %v921
    %v3787 = vunpack.c.h.b16 %v921
    %v3788 = vunpack.c.l.b16 %v922
    %v3789 = vunpack.c.h.b16 %v922
    %v3790 = vunpack.c.l.b16 %v923
    %v3791 = vunpack.c.h.b16 %v923
    %v3792 = vunpack.c.l.b16 %v924
    %v3793 = vunpack.c.h.b16 %v924
    %v3794 = vunpack.c.l.b16 %v925
    %v3795 = vunpack.c.h.b16 %v925
    %v3796 = vunpack.c.l.b16 %v926
    %v3797 = vunpack.c.h.b16 %v926
    %v3798 = vunpack.c.l.b16 %v927
    %v3799 = vunpack.c.h.b16 %v927
    %v3800 = vunpack.c.l.b16 %v928
    %v3801 = vunpack.c.h.b16 %v928
    %v3802 = vunpack.c.l.b16 %v929
    %v3803 = vunpack.c.h.b16 %v929
    %v3804 = vunpack.c.l.b16 %v930
    %v3805 = vunpack.c.h.b16 %v930
    %v3806 = vunpack.c.l.b16 %v931
    %v3807 = vunpack.c.h.b16 %v931
    %v3808 = vunpack.c.l.b16 %v932
    %v3809 = vunpack.c.h.b16 %v932
    %v3810 = vunpack.c.l.b16 %v933
    %v3811 = vunpack.c.h.b16 %v933
    %v3812 = vunpack.c.l.b16 %v934
    %v3813 = vunpack.c.h.b16 %v934
    %v3814 = vunpack.c.l.b16 %v935
    %v3815 = vunpack.c.h.b16 %v935
    %v3816 = vunpack.c.l.b16 %v936
    %v3817 = vunpack.c.h.b16 %v936
    %v3818 = vunpack.c.l.b16 %v937
    %v3819 = vunpack.c.h.b16 %v937
    %v3820 = vunpack.c.l.b16 %v938
    %v3821 = vunpack.c.h.b16 %v938
    %v3822 = vunpack.c.l.b16 %v939
    %v3823 = vunpack.c.h.b16 %v939
    %v3824 = vunpack.c.l.b16 %v940
    %v3825 = vunpack.c.h.b16 %v940
    %v3826 = vunpack.c.l.b16 %v941
    %v3827 = vunpack.c.h.b16 %v941
    %v3828 = vunpack.c.l.b16 %v942
    %v3829 = vunpack.c.h.b16 %v942
    %v3830 = vunpack.c.l.b16 %v943
    %v3831 = vunpack.c.h.b16 %v943
    %v3832 = vunpack.c.l.b16 %v944
    %v3833 = vunpack.c.h.b16 %v944
    %v3834 = vunpack.c.l.b16 %v945
    %v3835 = vunpack.c.h.b16 %v945
    %v3836 = vunpack.c.l.b16 %v946
    %v3837 = vunpack.c.h.b16 %v946
    %v3838 = vunpack.c.l.b16 %v947
    %v3839 = vunpack.c.h.b16 %v947
    %v3840 = vunpack.c.l.b16 %v948
    %v3841 = vunpack.c.h.b16 %v948
    %v3842 = vunpack.c.l.b16 %v949
    %v3843 = vunpack.c.h.b16 %v949
    %v3844 = vunpack.c.l.b16 %v950
    %v3845 = vunpack.c.h.b16 %v950
    %v3846 = vunpack.c.l.b16 %v951
    %v3847 = vunpack.c.h.b16 %v951
    %v3848 = vunpack.c.l.b16 %v952
    %v3849 = vunpack.c.h.b16 %v952
    %v3850 = vunpack.c.l.b16 %v953
    %v3851 = vunpack.c.h.b16 %v953
    %v3852 = vunpack.c.l.b16 %v954
    %v3853 = vunpack.c.h.b16 %v954
    %v3854 = vunpack.c.l.b16 %v955
    %v3855 = vunpack.c.h.b16 %v955
    %v3856 = vunpack.c.l.b16 %v956
    %v3857 = vunpack.c.h.b16 %v956
    %v3858 = vunpack.c.l.b16 %v957
    %v3859 = vunpack.c.h.b16 %v957
    %v3860 = vunpack.c.l.b16 %v958
    %v3861 = vunpack.c.h.b16 %v958
    %v3862 = vunpack.c.l.b16 %v959
    %v3863 = vunpack.c.h.b16 %v959
    %v3864 = vunpack.c.l.b16 %v960
    %v3865 = vunpack.c.h.b16 %v960
    %v3866 = vunpack.c.l.b16 %v961
    %v3867 = vunpack.c.h.b16 %v961
    %v3868 = vunpack.c.l.b16 %v962
    %v3869 = vunpack.c.h.b16 %v962
    %v3870 = vunpack.c.l.b16 %v963
    %v3871 = vunpack.c.h.b16 %v963
    %v3872 = vunpack.c.l.b16 %v964
    %v3873 = vunpack.c.h.b16 %v964
    %v3874 = vunpack.c.l.b16 %v965
    %v3875 = vunpack.c.h.b16 %v965
    %v3876 = vunpack.c.l.b16 %v966
    %v3877 = vunpack.c.h.b16 %v966
    %v3878 = vunpack.c.l.b16 %v967
    %v3879 = vunpack.c.h.b16 %v967
    %v3880 = vunpack.c.l.b16 %v968
    %v3881 = vunpack.c.h.b16 %v968
    %v3882 = vunpack.c.l.b16 %v969
    %v3883 = vunpack.c.h.b16 %v969
    %v3884 = vunpack.c.l.b16 %v970
    %v3885 = vunpack.c.h.b16 %v970
    %v3886 = vunpack.c.l.b16 %v971
    %v3887 = vunpack.c.h.b16 %v971
    %v3888 = vunpack.c.l.b16 %v972
    %v3889 = vunpack.c.h.b16 %v972
    %v3890 = vunpack.c.l.b16 %v973
    %v3891 = vunpack.c.h.b16 %v973
    %v3892 = vunpack.c.l.b16 %v974
    %v3893 = vunpack.c.h.b16 %v974
    %v3894 = vunpack.c.l.b16 %v975
    %v3895 = vunpack.c.h.b16 %v975
    %v3896 = vunpack.c.l.b16 %v976
    %v3897 = vunpack.c.h.b16 %v976
    %v3898 = vunpack.c.l.b16 %v977
    %v3899 = vunpack.c.h.b16 %v977
    %v3900 = vunpack.c.l.b16 %v978
    %v3901 = vunpack.c.h.b16 %v978
    %v3902 = vunpack.c.l.b16 %v979
    %v3903 = vunpack.c.h.b16 %v979
    %v3904 = vunpack.c.l.b16 %v980
    %v3905 = vunpack.c.h.b16 %v980
    %v3906 = vunpack.c.l.b16 %v981
    %v3907 = vunpack.c.h.b16 %v981
    %v3908 = vunpack.c.l.b16 %v982
    %v3909 = vunpack.c.h.b16 %v982
    %v3910 = vunpack.c.l.b16 %v983
    %v3911 = vunpack.c.h.b16 %v983
    %v3912 = vunpack.c.l.b16 %v984
    %v3913 = vunpack.c.h.b16 %v984
    %v3914 = vunpack.c.l.b16 %v985
    %v3915 = vunpack.c.h.b16 %v985
    %v3916 = vunpack.c.l.b16 %v986
    %v3917 = vunpack.c.h.b16 %v986
    %v3918 = vunpack.c.l.b16 %v987
    %v3919 = vunpack.c.h.b16 %v987
    %v3920 = vunpack.c.l.b16 %v988
    %v3921 = vunpack.c.h.b16 %v988
    %v3922 = vunpack.c.l.b16 %v989
    %v3923 = vunpack.c.h.b16 %v989
    %v3924 = vunpack.c.l.b16 %v990
    %v3925 = vunpack.c.h.b16 %v990
    %v3926 = vunpack.c.l.b16 %v991
    %v3927 = vunpack.c.h.b16 %v991
    %v3928 = vunpack.c.l.b16 %v992
    %v3929 = vunpack.c.h.b16 %v992
    %v3930 = vunpack.c.l.b16 %v993
    %v3931 = vunpack.c.h.b16 %v993
    %v3932 = vunpack.c.l.b16 %v994
    %v3933 = vunpack.c.h.b16 %v994
    %v3934 = vunpack.c.l.b16 %v995
    %v3935 = vunpack.c.h.b16 %v995
    %v3936 = vunpack.c.l.b16 %v996
    %v3937 = vunpack.c.h.b16 %v996
    %v3938 = vunpack.c.l.b16 %v997
    %v3939 = vunpack.c.h.b16 %v997
    %v3940 = vunpack.c.l.b16 %v998
    %v3941 = vunpack.c.h.b16 %v998
    %v3942 = vunpack.c.l.b16 %v999
    %v3943 = vunpack.c.h.b16 %v999
    %v3944 = vunpack.c.l.b16 %v1000
    %v3945 = vunpack.c.h.b16 %v1000
    %v3946 = vunpack.c.l.b16 %v1001
    %v3947 = vunpack.c.h.b16 %v1001
    %v3948 = vunpack.c.l.b16 %v1002
    %v3949 = vunpack.c.h.b16 %v1002
    %v3950 = vunpack.c.l.b16 %v1003
    %v3951 = vunpack.c.h.b16 %v1003
    %v3952 = vunpack.c.l.b16 %v1004
    %v3953 = vunpack.c.h.b16 %v1004
    %v3954 = vunpack.c.l.b16 %v1005
    %v3955 = vunpack.c.h.b16 %v1005
    %v3956 = vunpack.c.l.b16 %v1006
    %v3957 = vunpack.c.h.b16 %v1006
    %v3958 = vunpack.c.l.b16 %v1007
    %v3959 = vunpack.c.h.b16 %v1007
    %v3960 = vunpack.c.l.b16 %v1008
    %v3961 = vunpack.c.h.b16 %v1008
    %v3962 = vunpack.c.l.b16 %v1009
    %v3963 = vunpack.c.h.b16 %v1009
    %v3964 = vunpack.c.l.b16 %v1010
    %v3965 = vunpack.c.h.b16 %v1010
    %v3966 = vunpack.c.l.b16 %v1011
    %v3967 = vunpack.c.h.b16 %v1011
    %v3968 = vunpack.c.l.b16 %v1012
    %v3969 = vunpack.c.h.b16 %v1012
    %v3970 = vunpack.c.l.b16 %v1013
    %v3971 = vunpack.c.h.b16 %v1013
    %v3972 = vunpack.c.l.b16 %v1014
    %v3973 = vunpack.c.h.b16 %v1014
    %v3974 = vunpack.c.l.b16 %v1015
    %v3975 = vunpack.c.h.b16 %v1015
    %v3976 = vunpack.c.l.b16 %v1016
    %v3977 = vunpack.c.h.b16 %v1016
    %v3978 = vunpack.c.l.b16 %v1017
    %v3979 = vunpack.c.h.b16 %v1017
    %v3980 = vunpack.c.l.b16 %v1018
    %v3981 = vunpack.c.h.b16 %v1018
    %v3982 = vunpack.c.l.b16 %v1019
    %v3983 = vunpack.c.h.b16 %v1019
    %v3984 = vunpack.c.l.b16 %v1020
    %v3985 = vunpack.c.h.b16 %v1020
    %v3986 = vunpack.c.l.b16 %v1021
    %v3987 = vunpack.c.h.b16 %v1021
    %v3988 = vunpack.c.l.b16 %v1022
    %v3989 = vunpack.c.h.b16 %v1022
    %v3990 = vunpack.c.l.b16 %v1023
    %v3991 = vunpack.c.h.b16 %v1023
    %v3992 = vunpack.c.l.b16 %v1024
    %v3993 = vunpack.c.h.b16 %v1024
    %v3994 = vunpack.c.l.b16 %v1025
    %v3995 = vunpack.c.h.b16 %v1025
    %v3996 = vunpack.c.l.b16 %v1026
    %v3997 = vunpack.c.h.b16 %v1026
    %v3998 = vunpack.c.l.b16 %v1027
    %v3999 = vunpack.c.h.b16 %v1027
    %v4000 = vunpack.c.l.b16 %v1028
    %v4001 = vunpack.c.h.b16 %v1028
    %v4002 = vunpack.c.l.b16 %v1029
    %v4003 = vunpack.c.h.b16 %v1029
    %v4004 = vunpack.c.l.b16 %v1030
    %v4005 = vunpack.c.h.b16 %v1030
    %v4006 = vunpack.c.l.b16 %v1031
    %v4007 = vunpack.c.h.b16 %v1031
    %v4008 = vunpack.c.l.b16 %v1032
    %v4009 = vunpack.c.h.b16 %v1032
    %v4010 = vunpack.c.l.b16 %v1033
    %v4011 = vunpack.c.h.b16 %v1033
    %v4012 = vunpack.c.l.b16 %v1034
    %v4013 = vunpack.c.h.b16 %v1034
    %v4014 = vunpack.c.l.b16 %v1035
    %v4015 = vunpack.c.h.b16 %v1035
    %v4016 = vunpack.c.l.b16 %v1036
    %v4017 = vunpack.c.h.b16 %v1036
    %v4018 = vunpack.c.l.b16 %v1037
    %v4019 = vunpack.c.h.b16 %v1037
    %v4020 = vunpack.c.l.b16 %v1038
    %v4021 = vunpack.c.h.b16 %v1038
    %v4022 = vunpack.c.l.b16 %v1039
    %v4023 = vunpack.c.h.b16 %v1039
    %v4024 = vunpack.c.l.b16 %v1040
    %v4025 = vunpack.c.h.b16 %v1040
    %v4026 = vunpack.c.l.b16 %v1041
    %v4027 = vunpack.c.h.b16 %v1041
    %v4028 = vunpack.c.l.b16 %v1042
    %v4029 = vunpack.c.h.b16 %v1042
    %v4030 = vunpack.c.l.b16 %v1043
    %v4031 = vunpack.c.h.b16 %v1043
    %v4032 = vunpack.c.l.b16 %v1044
    %v4033 = vunpack.c.h.b16 %v1044
    %v4034 = vunpack.c.l.b16 %v1045
    %v4035 = vunpack.c.h.b16 %v1045
    %v4036 = vunpack.c.l.b16 %v1046
    %v4037 = vunpack.c.h.b16 %v1046
    %v4038 = vunpack.c.l.b16 %v1047
    %v4039 = vunpack.c.h.b16 %v1047
    %v4040 = vunpack.c.l.b16 %v1048
    %v4041 = vunpack.c.h.b16 %v1048
    %v4042 = vunpack.c.l.b16 %v1049
    %v4043 = vunpack.c.h.b16 %v1049
    %v4044 = vunpack.c.l.b16 %v1050
    %v4045 = vunpack.c.h.b16 %v1050
    %v4046 = vunpack.c.l.b16 %v1051
    %v4047 = vunpack.c.h.b16 %v1051
    %v4048 = vunpack.c.l.b16 %v1052
    %v4049 = vunpack.c.h.b16 %v1052
    %v4050 = vunpack.c.l.b16 %v1053
    %v4051 = vunpack.c.h.b16 %v1053
    %v4052 = vunpack.c.l.b16 %v1054
    %v4053 = vunpack.c.h.b16 %v1054
    %v4054 = vunpack.c.l.b16 %v1055
    %v4055 = vunpack.c.h.b16 %v1055
    %v4056 = vunpack.c.l.b16 %v1056
    %v4057 = vunpack.c.h.b16 %v1056
    %v4058 = vunpack.c.l.b16 %v1057
    %v4059 = vunpack.c.h.b16 %v1057
    %v4060 = vunpack.c.l.b16 %v1058
    %v4061 = vunpack.c.h.b16 %v1058
    %v4062 = vunpack.c.l.b16 %v1059
    %v4063 = vunpack.c.h.b16 %v1059
    %v4064 = vunpack.c.l.b16 %v1060
    %v4065 = vunpack.c.h.b16 %v1060
    %v4066 = vunpack.c.l.b16 %v1061
    %v4067 = vunpack.c.h.b16 %v1061
    %v4068 = vunpack.c.l.b16 %v1062
    %v4069 = vunpack.c.h.b16 %v1062
    %v4070 = vunpack.c.l.b16 %v1063
    %v4071 = vunpack.c.h.b16 %v1063
    %v4072 = vunpack.c.l.b16 %v1064
    %v4073 = vunpack.c.h.b16 %v1064
    %v4074 = vunpack.c.l.b16 %v1065
    %v4075 = vunpack.c.h.b16 %v1065
    %v4076 = vunpack.c.l.b16 %v1066
    %v4077 = vunpack.c.h.b16 %v1066
    %v4078 = vunpack.c.l.b16 %v1067
    %v4079 = vunpack.c.h.b16 %v1067
    %v4080 = vunpack.c.l.b16 %v1068
    %v4081 = vunpack.c.h.b16 %v1068
    %v4082 = vunpack.c.l.b16 %v1069
    %v4083 = vunpack.c.h.b16 %v1069
    %v4084 = vunpack.c.l.b16 %v1070
    %v4085 = vunpack.c.h.b16 %v1070
    %v4086 = vunpack.c.l.b16 %v1071
    %v4087 = vunpack.c.h.b16 %v1071
    %v4088 = vunpack.c.l.b16 %v1072
    %v4089 = vunpack.c.h.b16 %v1072
    %v4090 = vunpack.c.l.b16 %v1073
    %v4091 = vunpack.c.h.b16 %v1073
    %v4092 = vunpack.c.l.b16 %v1074
    %v4093 = vunpack.c.h.b16 %v1074
    %v4094 = vunpack.c.l.b16 %v1075
    %v4095 = vunpack.c.h.b16 %v1075
    %v4096 = vunpack.c.l.b16 %v1076
    %v4097 = vunpack.c.h.b16 %v1076
    %v4098 = vunpack.c.l.b16 %v1077
    %v4099 = vunpack.c.h.b16 %v1077
    %v4100 = vunpack.c.l.b16 %v1078
    %v4101 = vunpack.c.h.b16 %v1078
    %v4102 = vunpack.c.l.b16 %v1079
    %v4103 = vunpack.c.h.b16 %v1079
    %v4104 = vunpack.c.l.b16 %v1080
    %v4105 = vunpack.c.h.b16 %v1080
    %v4106 = vunpack.c.l.b16 %v1081
    %v4107 = vunpack.c.h.b16 %v1081
    %v4108 = vunpack.c.l.b16 %v1082
    %v4109 = vunpack.c.h.b16 %v1082
    %v4110 = vunpack.c.l.b16 %v1083
    %v4111 = vunpack.c.h.b16 %v1083
    %v4112 = vunpack.c.l.b16 %v1084
    %v4113 = vunpack.c.h.b16 %v1084
    %v4114 = vunpack.c.l.b16 %v1085
    %v4115 = vunpack.c.h.b16 %v1085
    %v4116 = vunpack.c.l.b16 %v1086
    %v4117 = vunpack.c.h.b16 %v1086
    %v4118 = vunpack.c.l.b16 %v1087
    %v4119 = vunpack.c.h.b16 %v1087
    %v4120 = vunpack.c.l.b16 %v1088
    %v4121 = vunpack.c.h.b16 %v1088
    %v4122 = vunpack.c.l.b16 %v1089
    %v4123 = vunpack.c.h.b16 %v1089
    %v4124 = vunpack.c.l.b16 %v1090
    %v4125 = vunpack.c.h.b16 %v1090
    %v4126 = vunpack.c.l.b16 %v1091
    %v4127 = vunpack.c.h.b16 %v1091
    %v4128 = vunpack.c.l.b16 %v1092
    %v4129 = vunpack.c.h.b16 %v1092
    %v4130 = vunpack.c.l.b16 %v1093
    %v4131 = vunpack.c.h.b16 %v1093
    %v4132 = vunpack.c.l.b16 %v1094
    %v4133 = vunpack.c.h.b16 %v1094
    %v4134 = vunpack.c.l.b16 %v1095
    %v4135 = vunpack.c.h.b16 %v1095
    %v4136 = vunpack.c.l.b16 %v1096
    %v4137 = vunpack.c.h.b16 %v1096
    %v4138 = vunpack.c.l.b16 %v1097
    %v4139 = vunpack.c.h.b16 %v1097
    %v4140 = vunpack.c.l.b16 %v1098
    %v4141 = vunpack.c.h.b16 %v1098
    %v4142 = vunpack.c.l.b16 %v1099
    %v4143 = vunpack.c.h.b16 %v1099
    %v4144 = vunpack.c.l.b16 %v1100
    %v4145 = vunpack.c.h.b16 %v1100
    %v4146 = vunpack.c.l.b16 %v1101
    %v4147 = vunpack.c.h.b16 %v1101
    %v4148 = vunpack.c.l.b16 %v1102
    %v4149 = vunpack.c.h.b16 %v1102
    %v4150 = vunpack.c.l.b16 %v1103
    %v4151 = vunpack.c.h.b16 %v1103
    %v4152 = vunpack.c.l.b16 %v1104
    %v4153 = vunpack.c.h.b16 %v1104
    %v4154 = vunpack.c.l.b16 %v1105
    %v4155 = vunpack.c.h.b16 %v1105
    %v4156 = vunpack.c.l.b16 %v1106
    %v4157 = vunpack.c.h.b16 %v1106
    %v4158 = vunpack.c.l.b16 %v1107
    %v4159 = vunpack.c.h.b16 %v1107
    %v4160 = vunpack.c.l.b16 %v1108
    %v4161 = vunpack.c.h.b16 %v1108
    %v4162 = vunpack.c.l.b16 %v1109
    %v4163 = vunpack.c.h.b16 %v1109
    %v4164 = vunpack.c.l.b16 %v1110
    %v4165 = vunpack.c.h.b16 %v1110
    %v4166 = vunpack.c.l.b16 %v1111
    %v4167 = vunpack.c.h.b16 %v1111
    %v4168 = vunpack.c.l.b16 %v1112
    %v4169 = vunpack.c.h.b16 %v1112
    %v4170 = vunpack.c.l.b16 %v1113
    %v4171 = vunpack.c.h.b16 %v1113
    %v4172 = vunpack.c.l.b16 %v1114
    %v4173 = vunpack.c.h.b16 %v1114
    %v4174 = vunpack.c.l.b16 %v1115
    %v4175 = vunpack.c.h.b16 %v1115
    %v4176 = vunpack.c.l.b16 %v1116
    %v4177 = vunpack.c.h.b16 %v1116
    %v4178 = vunpack.c.l.b16 %v1117
    %v4179 = vunpack.c.h.b16 %v1117
    %v4180 = vunpack.c.l.b16 %v1118
    %v4181 = vunpack.c.h.b16 %v1118
    %v4182 = vunpack.c.l.b16 %v1119
    %v4183 = vunpack.c.h.b16 %v1119
    %v4184 = vunpack.c.l.b16 %v1120
    %v4185 = vunpack.c.h.b16 %v1120
    %v4186 = vunpack.c.l.b16 %v1121
    %v4187 = vunpack.c.h.b16 %v1121
    %v4188 = vunpack.c.l.b16 %v1122
    %v4189 = vunpack.c.h.b16 %v1122
    %v4190 = vunpack.c.l.b16 %v1123
    %v4191 = vunpack.c.h.b16 %v1123
    %v4192 = vunpack.c.l.b16 %v1124
    %v4193 = vunpack.c.h.b16 %v1124
    %v4194 = vunpack.c.l.b16 %v1125
    %v4195 = vunpack.c.h.b16 %v1125
    %v4196 = vunpack.c.l.b16 %v1126
    %v4197 = vunpack.c.h.b16 %v1126
    %v4198 = vunpack.c.l.b16 %v1127
    %v4199 = vunpack.c.h.b16 %v1127
    %v4200 = vunpack.c.l.b16 %v1128
    %v4201 = vunpack.c.h.b16 %v1128
    %v4202 = vunpack.c.l.b16 %v1129
    %v4203 = vunpack.c.h.b16 %v1129
    %v4204 = vunpack.c.l.b16 %v1130
    %v4205 = vunpack.c.h.b16 %v1130
    %v4206 = vunpack.c.l.b16 %v1131
    %v4207 = vunpack.c.h.b16 %v1131
    %v4208 = vunpack.c.l.b16 %v1132
    %v4209 = vunpack.c.h.b16 %v1132
    %v4210 = vunpack.c.l.b16 %v1133
    %v4211 = vunpack.c.h.b16 %v1133
    %v4212 = vunpack.c.l.b16 %v1134
    %v4213 = vunpack.c.h.b16 %v1134
    %v4214 = vunpack.c.l.b16 %v1135
    %v4215 = vunpack.c.h.b16 %v1135
    %v4216 = vunpack.c.l.b16 %v1136
    %v4217 = vunpack.c.h.b16 %v1136
    %v4218 = vunpack.c.l.b16 %v1137
    %v4219 = vunpack.c.h.b16 %v1137
    %v4220 = vunpack.c.l.b16 %v1138
    %v4221 = vunpack.c.h.b16 %v1138
    %v4222 = vunpack.c.l.b16 %v1139
    %v4223 = vunpack.c.h.b16 %v1139
    %v4224 = vunpack.c.l.b16 %v1140
    %v4225 = vunpack.c.h.b16 %v1140
    %v4226 = vunpack.c.l.b16 %v1141
    %v4227 = vunpack.c.h.b16 %v1141
    %v4228 = vunpack.c.l.b16 %v1142
    %v4229 = vunpack.c.h.b16 %v1142
    %v4230 = vunpack.c.l.b16 %v1143
    %v4231 = vunpack.c.h.b16 %v1143
    %v4232 = vunpack.c.l.b16 %v1144
    %v4233 = vunpack.c.h.b16 %v1144
    %v4234 = vunpack.c.l.b16 %v1145
    %v4235 = vunpack.c.h.b16 %v1145
    %v4236 = vunpack.c.l.b16 %v1146
    %v4237 = vunpack.c.h.b16 %v1146
    %v4238 = vunpack.c.l.b16 %v1147
    %v4239 = vunpack.c.h.b16 %v1147
    %v4240 = vunpack.c.l.b16 %v1148
    %v4241 = vunpack.c.h.b16 %v1148
    %v4242 = vunpack.c.l.b16 %v1149
    %v4243 = vunpack.c.h.b16 %v1149
    %v4244 = vunpack.c.l.b16 %v1150
    %v4245 = vunpack.c.h.b16 %v1150
    %v4246 = vunpack.c.l.b16 %v1151
    %v4247 = vunpack.c.h.b16 %v1151
    %v4248 = vunpack.c.l.b16 %v1152
    %v4249 = vunpack.c.h.b16 %v1152
    %v4250 = vunpack.c.l.b16 %v1153
    %v4251 = vunpack.c.h.b16 %v1153
    %v4252 = vunpack.c.l.b16 %v1154
    %v4253 = vunpack.c.h.b16 %v1154
    %v4254 = vunpack.c.l.b16 %v1155
    %v4255 = vunpack.c.h.b16 %v1155
    %v4256 = vunpack.c.l.b16 %v1156
    %v4257 = vunpack.c.h.b16 %v1156
    %v4258 = vunpack.c.l.b16 %v1157
    %v4259 = vunpack.c.h.b16 %v1157
    %v4260 = vunpack.c.l.b16 %v1158
    %v4261 = vunpack.c.h.b16 %v1158
    %v4262 = vunpack.c.l.b16 %v1159
    %v4263 = vunpack.c.h.b16 %v1159
    %v4264 = vunpack.c.l.b16 %v1160
    %v4265 = vunpack.c.h.b16 %v1160
    %v4266 = vunpack.c.l.b16 %v1161
    %v4267 = vunpack.c.h.b16 %v1161
    %v4268 = vunpack.c.l.b16 %v1162
    %v4269 = vunpack.c.h.b16 %v1162
    %v4270 = vunpack.c.l.b16 %v1163
    %v4271 = vunpack.c.h.b16 %v1163
    %v4272 = vunpack.c.l.b16 %v1164
    %v4273 = vunpack.c.h.b16 %v1164
    %v4274 = vunpack.c.l.b16 %v1165
    %v4275 = vunpack.c.h.b16 %v1165
    %v4276 = vunpack.c.l.b16 %v1166
    %v4277 = vunpack.c.h.b16 %v1166
    %v4278 = vunpack.c.l.b16 %v1167
    %v4279 = vunpack.c.h.b16 %v1167
    %v4280 = vunpack.c.l.b16 %v1168
    %v4281 = vunpack.c.h.b16 %v1168
    %v4282 = vunpack.c.l.b16 %v1169
    %v4283 = vunpack.c.h.b16 %v1169
    %v4284 = vpack.c.b16 %v2244, %v2236
    %v4285 = vpack.c.b16 %v2245, %v2237
    %v4286 = vpack.c.b16 %v2246, %v2238
    %v4287 = vpack.c.b16 %v2247, %v2239
    %v4288 = vpack.c.b16 %v2248, %v2240
    %v4289 = vpack.c.b16 %v2249, %v2241
    %v4290 = vpack.c.b16 %v2250, %v2242
    %v4291 = vpack.c.b16 %v2251, %v2243
    %v4292 = vpack.c.b16 %v2260, %v2252
    %v4293 = vpack.c.b16 %v2261, %v2253
    %v4294 = vpack.c.b16 %v2262, %v2254
    %v4295 = vpack.c.b16 %v2263, %v2255
    %v4296 = vpack.c.b16 %v2264, %v2256
    %v4297 = vpack.c.b16 %v2265, %v2257
    %v4298 = vpack.c.b16 %v2266, %v2258
    %v4299 = vpack.c.b16 %v2267, %v2259
    %v4300 = vpack.c.b16 %v2276, %v2268
    %v4301 = vpack.c.b16 %v2277, %v2269
    %v4302 = vpack.c.b16 %v2278, %v2270
    %v4303 = vpack.c.b16 %v2279, %v2271
    %v4304 = vpack.c.b16 %v2280, %v2272
    %v4305 = vpack.c.b16 %v2281, %v2273
    %v4306 = vpack.c.b16 %v2282, %v2274
    %v4307 = vpack.c.b16 %v2283, %v2275
    %v4308 = vpack.c.b16 %v2292, %v2284
    %v4309 = vpack.c.b16 %v2293, %v2285
    %v4310 = vpack.c.b16 %v2294, %v2286
    %v4311 = vpack.c.b16 %v2295, %v2287
    %v4312 = vpack.c.b16 %v2296, %v2288
    %v4313 = vpack.c.b16 %v2297, %v2289
    %v4314 = vpack.c.b16 %v2298, %v2290
    %v4315 = vpack.c.b16 %v2299, %v2291
    %v4316 = vpack.c.b16 %v2308, %v2300
    %v4317 = vpack.c.b16 %v2309, %v2301
    %v4318 = vpack.c.b16 %v2310, %v2302
    %v4319 = vpack.c.b16 %v2311, %v2303
    %v4320 = vpack.c.b16 %v2312, %v2304
    %v4321 = vpack.c.b16 %v2313, %v2305
    %v4322 = vpack.c.b16 %v2314, %v2306
    %v4323 = vpack.c.b16 %v2315, %v2307
    %v4324 = vpack.c.b16 %v2324, %v2316
    %v4325 = vpack.c.b16 %v2325, %v2317
    %v4326 = vpack.c.b16 %v2326, %v2318
    %v4327 = vpack.c.b16 %v2327, %v2319
    %v4328 = vpack.c.b16 %v2328, %v2320
    %v4329 = vpack.c.b16 %v2329, %v2321
    %v4330 = vpack.c.b16 %v2330, %v2322
    %v4331 = vpack.c.b16 %v2331, %v2323
    %v4332 = vpack.c.b16 %v2340, %v2332
    %v4333 = vpack.c.b16 %v2341, %v2333
    %v4334 = vpack.c.b16 %v2342, %v2334
    %v4335 = vpack.c.b16 %v2343, %v2335
    %v4336 = vpack.c.b16 %v2344, %v2336
    %v4337 = vpack.c.b16 %v2345, %v2337
    %v4338 = vpack.c.b16 %v2346, %v2338
    %v4339 = vpack.c.b16 %v2347, %v2339
    %v4340 = vpack.c.b16 %v2356, %v2348
    %v4341 = vpack.c.b16 %v2357, %v2349
    %v4342 = vpack.c.b16 %v2358, %v2350
    %v4343 = vpack.c.b16 %v2359, %v2351
    %v4344 = vpack.c.b16 %v2360, %v2352
    %v4345 = vpack.c.b16 %v2361, %v2353
    %v4346 = vpack.c.b16 %v2362, %v2354
    %v4347 = vpack.c.b16 %v2363, %v2355
    %v4348 = vpack.c.b16 %v2372, %v2364
    %v4349 = vpack.c.b16 %v2373, %v2365
    %v4350 = vpack.c.b16 %v2374, %v2366
    %v4351 = vpack.c.b16 %v2375, %v2367
    %v4352 = vpack.c.b16 %v2376, %v2368
    %v4353 = vpack.c.b16 %v2377, %v2369
    %v4354 = vpack.c.b16 %v2378, %v2370
    %v4355 = vpack.c.b16 %v2379, %v2371
    %v4356 = vpack.c.b16 %v2388, %v2380
    %v4357 = vpack.c.b16 %v2389, %v2381
    %v4358 = vpack.c.b16 %v2390, %v2382
    %v4359 = vpack.c.b16 %v2391, %v2383
    %v4360 = vpack.c.b16 %v2392, %v2384
    %v4361 = vpack.c.b16 %v2393, %v2385
    %v4362 = vpack.c.b16 %v2394, %v2386
    %v4363 = vpack.c.b16 %v2395, %v2387
    %v4364 = vpack.c.b16 %v2404, %v2396
    %v4365 = vpack.c.b16 %v2405, %v2397
    %v4366 = vpack.c.b16 %v2406, %v2398
    %v4367 = vpack.c.b16 %v2407, %v2399
    %v4368 = vpack.c.b16 %v2408, %v2400
    %v4369 = vpack.c.b16 %v2409, %v2401
    %v4370 = vpack.c.b16 %v2410, %v2402
    %v4371 = vpack.c.b16 %v2411, %v2403
    %v4372 = vpack.c.b16 %v2420, %v2412
    %v4373 = vpack.c.b16 %v2421, %v2413
    %v4374 = vpack.c.b16 %v2422, %v2414
    %v4375 = vpack.c.b16 %v2423, %v2415
    %v4376 = vpack.c.b16 %v2424, %v2416
    %v4377 = vpack.c.b16 %v2425, %v2417
    %v4378 = vpack.c.b16 %v2426, %v2418
    %v4379 = vpack.c.b16 %v2427, %v2419
    %v4380 = vpack.c.b16 %v2436, %v2428
    %v4381 = vpack.c.b16 %v2437, %v2429
    %v4382 = vpack.c.b16 %v2438, %v2430
    %v4383 = vpack.c.b16 %v2439, %v2431
    %v4384 = vpack.c.b16 %v2440, %v2432
    %v4385 = vpack.c.b16 %v2441, %v2433
    %v4386 = vpack.c.b16 %v2442, %v2434
    %v4387 = vpack.c.b16 %v2443, %v2435
    %v4388 = vpack.c.b16 %v2452, %v2444
    %v4389 = vpack.c.b16 %v2453, %v2445
    %v4390 = vpack.c.b16 %v2454, %v2446
    %v4391 = vpack.c.b16 %v2455, %v2447
    %v4392 = vpack.c.b16 %v2456, %v2448
    %v4393 = vpack.c.b16 %v2457, %v2449
    %v4394 = vpack.c.b16 %v2458, %v2450
    %v4395 = vpack.c.b16 %v2459, %v2451
    %v4396 = vpack.c.b16 %v2468, %v2460
    %v4397 = vpack.c.b16 %v2469, %v2461
    %v4398 = vpack.c.b16 %v2470, %v2462
    %v4399 = vpack.c.b16 %v2471, %v2463
    %v4400 = vpack.c.b16 %v2472, %v2464
    %v4401 = vpack.c.b16 %v2473, %v2465
    %v4402 = vpack.c.b16 %v2474, %v2466
    %v4403 = vpack.c.b16 %v2475, %v2467
    %v4404 = vpack.c.b16 %v2484, %v2476
    %v4405 = vpack.c.b16 %v2485, %v2477
    %v4406 = vpack.c.b16 %v2486, %v2478
    %v4407 = vpack.c.b16 %v2487, %v2479
    %v4408 = vpack.c.b16 %v2488, %v2480
    %v4409 = vpack.c.b16 %v2489, %v2481
    %v4410 = vpack.c.b16 %v2490, %v2482
    %v4411 = vpack.c.b16 %v2491, %v2483
    %v4412 = vpack.c.b16 %v2500, %v2492
    %v4413 = vpack.c.b16 %v2501, %v2493
    %v4414 = vpack.c.b16 %v2502, %v2494
    %v4415 = vpack.c.b16 %v2503, %v2495
    %v4416 = vpack.c.b16 %v2504, %v2496
    %v4417 = vpack.c.b16 %v2505, %v2497
    %v4418 = vpack.c.b16 %v2506, %v2498
    %v4419 = vpack.c.b16 %v2507, %v2499
    %v4420 = vpack.c.b16 %v2516, %v2508
    %v4421 = vpack.c.b16 %v2517, %v2509
    %v4422 = vpack.c.b16 %v2518, %v2510
    %v4423 = vpack.c.b16 %v2519, %v2511
    %v4424 = vpack.c.b16 %v2520, %v2512
    %v4425 = vpack.c.b16 %v2521, %v2513
    %v4426 = vpack.c.b16 %v2522, %v2514
    %v4427 = vpack.c.b16 %v2523, %v2515
    %v4428 = vpack.c.b16 %v2532, %v2524
    %v4429 = vpack.c.b16 %v2533, %v2525
    %v4430 = vpack.c.b16 %v2534, %v2526
    %v4431 = vpack.c.b16 %v2535, %v2527
    %v4432 = vpack.c.b16 %v2536, %v2528
    %v4433 = vpack.c.b16 %v2537, %v2529
    %v4434 = vpack.c.b16 %v2538, %v2530
    %v4435 = vpack.c.b16 %v2539, %v2531
    %v4436 = vpack.c.b16 %v2548, %v2540
    %v4437 = vpack.c.b16 %v2549, %v2541
    %v4438 = vpack.c.b16 %v2550, %v2542
    %v4439 = vpack.c.b16 %v2551, %v2543
    %v4440 = vpack.c.b16 %v2552, %v2544
    %v4441 = vpack.c.b16 %v2553, %v2545
    %v4442 = vpack.c.b16 %v2554, %v2546
    %v4443 = vpack.c.b16 %v2555, %v2547
    %v4444 = vpack.c.b16 %v2564, %v2556
    %v4445 = vpack.c.b16 %v2565, %v2557
    %v4446 = vpack.c.b16 %v2566, %v2558
    %v4447 = vpack.c.b16 %v2567, %v2559
    %v4448 = vpack.c.b16 %v2568, %v2560
    %v4449 = vpack.c.b16 %v2569, %v2561
    %v4450 = vpack.c.b16 %v2570, %v2562
    %v4451 = vpack.c.b16 %v2571, %v2563
    %v4452 = vpack.c.b16 %v2580, %v2572
    %v4453 = vpack.c.b16 %v2581, %v2573
    %v4454 = vpack.c.b16 %v2582, %v2574
    %v4455 = vpack.c.b16 %v2583, %v2575
    %v4456 = vpack.c.b16 %v2584, %v2576
    %v4457 = vpack.c.b16 %v2585, %v2577
    %v4458 = vpack.c.b16 %v2586, %v2578
    %v4459 = vpack.c.b16 %v2587, %v2579
    %v4460 = vpack.c.b16 %v2596, %v2588
    %v4461 = vpack.c.b16 %v2597, %v2589
    %v4462 = vpack.c.b16 %v2598, %v2590
    %v4463 = vpack.c.b16 %v2599, %v2591
    %v4464 = vpack.c.b16 %v2600, %v2592
    %v4465 = vpack.c.b16 %v2601, %v2593
    %v4466 = vpack.c.b16 %v2602, %v2594
    %v4467 = vpack.c.b16 %v2603, %v2595
    %v4468 = vpack.c.b16 %v2612, %v2604
    %v4469 = vpack.c.b16 %v2613, %v2605
    %v4470 = vpack.c.b16 %v2614, %v2606
    %v4471 = vpack.c.b16 %v2615, %v2607
    %v4472 = vpack.c.b16 %v2616, %v2608
    %v4473 = vpack.c.b16 %v2617, %v2609
    %v4474 = vpack.c.b16 %v2618, %v2610
    %v4475 = vpack.c.b16 %v2619, %v2611
    %v4476 = vpack.c.b16 %v2628, %v2620
    %v4477 = vpack.c.b16 %v2629, %v2621
    %v4478 = vpack.c.b16 %v2630, %v2622
    %v4479 = vpack.c.b16 %v2631, %v2623
    %v4480 = vpack.c.b16 %v2632, %v2624
    %v4481 = vpack.c.b16 %v2633, %v2625
    %v4482 = vpack.c.b16 %v2634, %v2626
    %v4483 = vpack.c.b16 %v2635, %v2627
    %v4484 = vpack.c.b16 %v2644, %v2636
    %v4485 = vpack.c.b16 %v2645, %v2637
    %v4486 = vpack.c.b16 %v2646, %v2638
    %v4487 = vpack.c.b16 %v2647, %v2639
    %v4488 = vpack.c.b16 %v2648, %v2640
    %v4489 = vpack.c.b16 %v2649, %v2641
    %v4490 = vpack.c.b16 %v2650, %v2642
    %v4491 = vpack.c.b16 %v2651, %v2643
    %v4492 = vpack.c.b16 %v2660, %v2652
    %v4493 = vpack.c.b16 %v2661, %v2653
    %v4494 = vpack.c.b16 %v2662, %v2654
    %v4495 = vpack.c.b16 %v2663, %v2655
    %v4496 = vpack.c.b16 %v2664, %v2656
    %v4497 = vpack.c.b16 %v2665, %v2657
    %v4498 = vpack.c.b16 %v2666, %v2658
    %v4499 = vpack.c.b16 %v2667, %v2659
    %v4500 = vpack.c.b16 %v2676, %v2668
    %v4501 = vpack.c.b16 %v2677, %v2669
    %v4502 = vpack.c.b16 %v2678, %v2670
    %v4503 = vpack.c.b16 %v2679, %v2671
    %v4504 = vpack.c.b16 %v2680, %v2672
    %v4505 = vpack.c.b16 %v2681, %v2673
    %v4506 = vpack.c.b16 %v2682, %v2674
    %v4507 = vpack.c.b16 %v2683, %v2675
    %v4508 = vpack.c.b16 %v2692, %v2684
    %v4509 = vpack.c.b16 %v2693, %v2685
    %v4510 = vpack.c.b16 %v2694, %v2686
    %v4511 = vpack.c.b16 %v2695, %v2687
    %v4512 = vpack.c.b16 %v2696, %v2688
    %v4513 = vpack.c.b16 %v2697, %v2689
    %v4514 = vpack.c.b16 %v2698, %v2690
    %v4515 = vpack.c.b16 %v2699, %v2691
    %v4516 = vpack.c.b16 %v2708, %v2700
    %v4517 = vpack.c.b16 %v2709, %v2701
    %v4518 = vpack.c.b16 %v2710, %v2702
    %v4519 = vpack.c.b16 %v2711, %v2703
    %v4520 = vpack.c.b16 %v2712, %v2704
    %v4521 = vpack.c.b16 %v2713, %v2705
    %v4522 = vpack.c.b16 %v2714, %v2706
    %v4523 = vpack.c.b16 %v2715, %v2707
    %v4524 = vpack.c.b16 %v2724, %v2716
    %v4525 = vpack.c.b16 %v2725, %v2717
    %v4526 = vpack.c.b16 %v2726, %v2718
    %v4527 = vpack.c.b16 %v2727, %v2719
    %v4528 = vpack.c.b16 %v2728, %v2720
    %v4529 = vpack.c.b16 %v2729, %v2721
    %v4530 = vpack.c.b16 %v2730, %v2722
    %v4531 = vpack.c.b16 %v2731, %v2723
    %v4532 = vpack.c.b16 %v2740, %v2732
    %v4533 = vpack.c.b16 %v2741, %v2733
    %v4534 = vpack.c.b16 %v2742, %v2734
    %v4535 = vpack.c.b16 %v2743, %v2735
    %v4536 = vpack.c.b16 %v2744, %v2736
    %v4537 = vpack.c.b16 %v2745, %v2737
    %v4538 = vpack.c.b16 %v2746, %v2738
    %v4539 = vpack.c.b16 %v2747, %v2739
    %v4540 = vpack.c.b16 %v2756, %v2748
    %v4541 = vpack.c.b16 %v2757, %v2749
    %v4542 = vpack.c.b16 %v2758, %v2750
    %v4543 = vpack.c.b16 %v2759, %v2751
    %v4544 = vpack.c.b16 %v2760, %v2752
    %v4545 = vpack.c.b16 %v2761, %v2753
    %v4546 = vpack.c.b16 %v2762, %v2754
    %v4547 = vpack.c.b16 %v2763, %v2755
    %v4548 = vpack.c.b16 %v2772, %v2764
    %v4549 = vpack.c.b16 %v2773, %v2765
    %v4550 = vpack.c.b16 %v2774, %v2766
    %v4551 = vpack.c.b16 %v2775, %v2767
    %v4552 = vpack.c.b16 %v2776, %v2768
    %v4553 = vpack.c.b16 %v2777, %v2769
    %v4554 = vpack.c.b16 %v2778, %v2770
    %v4555 = vpack.c.b16 %v2779, %v2771
    %v4556 = vpack.c.b16 %v2788, %v2780
    %v4557 = vpack.c.b16 %v2789, %v2781
    %v4558 = vpack.c.b16 %v2790, %v2782
    %v4559 = vpack.c.b16 %v2791, %v2783
    %v4560 = vpack.c.b16 %v2792, %v2784
    %v4561 = vpack.c.b16 %v2793, %v2785
    %v4562 = vpack.c.b16 %v2794, %v2786
    %v4563 = vpack.c.b16 %v2795, %v2787
    %v4564 = vpack.c.b16 %v2804, %v2796
    %v4565 = vpack.c.b16 %v2805, %v2797
    %v4566 = vpack.c.b16 %v2806, %v2798
    %v4567 = vpack.c.b16 %v2807, %v2799
    %v4568 = vpack.c.b16 %v2808, %v2800
    %v4569 = vpack.c.b16 %v2809, %v2801
    %v4570 = vpack.c.b16 %v2810, %v2802
    %v4571 = vpack.c.b16 %v2811, %v2803
    %v4572 = vpack.c.b16 %v2820, %v2812
    %v4573 = vpack.c.b16 %v2821, %v2813
    %v4574 = vpack.c.b16 %v2822, %v2814
    %v4575 = vpack.c.b16 %v2823, %v2815
    %v4576 = vpack.c.b16 %v2824, %v2816
    %v4577 = vpack.c.b16 %v2825, %v2817
    %v4578 = vpack.c.b16 %v2826, %v2818
    %v4579 = vpack.c.b16 %v2827, %v2819
    %v4580 = vpack.c.b16 %v2836, %v2828
    %v4581 = vpack.c.b16 %v2837, %v2829
    %v4582 = vpack.c.b16 %v2838, %v2830
    %v4583 = vpack.c.b16 %v2839, %v2831
    %v4584 = vpack.c.b16 %v2840, %v2832
    %v4585 = vpack.c.b16 %v2841, %v2833
    %v4586 = vpack.c.b16 %v2842, %v2834
    %v4587 = vpack.c.b16 %v2843, %v2835
    %v4588 = vpack.c.b16 %v2852, %v2844
    %v4589 = vpack.c.b16 %v2853, %v2845
    %v4590 = vpack.c.b16 %v2854, %v2846
    %v4591 = vpack.c.b16 %v2855, %v2847
    %v4592 = vpack.c.b16 %v2856, %v2848
    %v4593 = vpack.c.b16 %v2857, %v2849
    %v4594 = vpack.c.b16 %v2858, %v2850
    %v4595 = vpack.c.b16 %v2859, %v2851
    %v4596 = vpack.c.b16 %v2868, %v2860
    %v4597 = vpack.c.b16 %v2869, %v2861
    %v4598 = vpack.c.b16 %v2870, %v2862
    %v4599 = vpack.c.b16 %v2871, %v2863
    %v4600 = vpack.c.b16 %v2872, %v2864
    %v4601 = vpack.c.b16 %v2873, %v2865
    %v4602 = vpack.c.b16 %v2874, %v2866
    %v4603 = vpack.c.b16 %v2875, %v2867
    %v4604 = vpack.c.b16 %v2884, %v2876
    %v4605 = vpack.c.b16 %v2885, %v2877
    %v4606 = vpack.c.b16 %v2886, %v2878
    %v4607 = vpack.c.b16 %v2887, %v2879
    %v4608 = vpack.c.b16 %v2888, %v2880
    %v4609 = vpack.c.b16 %v2889, %v2881
    %v4610 = vpack.c.b16 %v2890, %v2882
    %v4611 = vpack.c.b16 %v2891, %v2883
    %v4612 = vpack.c.b16 %v2900, %v2892
    %v4613 = vpack.c.b16 %v2901, %v2893
    %v4614 = vpack.c.b16 %v2902, %v2894
    %v4615 = vpack.c.b16 %v2903, %v2895
    %v4616 = vpack.c.b16 %v2904, %v2896
    %v4617 = vpack.c.b16 %v2905, %v2897
    %v4618 = vpack.c.b16 %v2906, %v2898
    %v4619 = vpack.c.b16 %v2907, %v2899
    %v4620 = vpack.c.b16 %v2916, %v2908
    %v4621 = vpack.c.b16 %v2917, %v2909
    %v4622 = vpack.c.b16 %v2918, %v2910
    %v4623 = vpack.c.b16 %v2919, %v2911
    %v4624 = vpack.c.b16 %v2920, %v2912
    %v4625 = vpack.c.b16 %v2921, %v2913
    %v4626 = vpack.c.b16 %v2922, %v2914
    %v4627 = vpack.c.b16 %v2923, %v2915
    %v4628 = vpack.c.b16 %v2932, %v2924
    %v4629 = vpack.c.b16 %v2933, %v2925
    %v4630 = vpack.c.b16 %v2934, %v2926
    %v4631 = vpack.c.b16 %v2935, %v2927
    %v4632 = vpack.c.b16 %v2936, %v2928
    %v4633 = vpack.c.b16 %v2937, %v2929
    %v4634 = vpack.c.b16 %v2938, %v2930
    %v4635 = vpack.c.b16 %v2939, %v2931
    %v4636 = vpack.c.b16 %v2948, %v2940
    %v4637 = vpack.c.b16 %v2949, %v2941
    %v4638 = vpack.c.b16 %v2950, %v2942
    %v4639 = vpack.c.b16 %v2951, %v2943
    %v4640 = vpack.c.b16 %v2952, %v2944
    %v4641 = vpack.c.b16 %v2953, %v2945
    %v4642 = vpack.c.b16 %v2954, %v2946
    %v4643 = vpack.c.b16 %v2955, %v2947
    %v4644 = vpack.c.b16 %v2964, %v2956
    %v4645 = vpack.c.b16 %v2965, %v2957
    %v4646 = vpack.c.b16 %v2966, %v2958
    %v4647 = vpack.c.b16 %v2967, %v2959
    %v4648 = vpack.c.b16 %v2968, %v2960
    %v4649 = vpack.c.b16 %v2969, %v2961
    %v4650 = vpack.c.b16 %v2970, %v2962
    %v4651 = vpack.c.b16 %v2971, %v2963
    %v4652 = vpack.c.b16 %v2980, %v2972
    %v4653 = vpack.c.b16 %v2981, %v2973
    %v4654 = vpack.c.b16 %v2982, %v2974
    %v4655 = vpack.c.b16 %v2983, %v2975
    %v4656 = vpack.c.b16 %v2984, %v2976
    %v4657 = vpack.c.b16 %v2985, %v2977
    %v4658 = vpack.c.b16 %v2986, %v2978
    %v4659 = vpack.c.b16 %v2987, %v2979
    %v4660 = vpack.c.b16 %v2996, %v2988
    %v4661 = vpack.c.b16 %v2997, %v2989
    %v4662 = vpack.c.b16 %v2998, %v2990
    %v4663 = vpack.c.b16 %v2999, %v2991
    %v4664 = vpack.c.b16 %v3000, %v2992
    %v4665 = vpack.c.b16 %v3001, %v2993
    %v4666 = vpack.c.b16 %v3002, %v2994
    %v4667 = vpack.c.b16 %v3003, %v2995
    %v4668 = vpack.c.b16 %v3012, %v3004
    %v4669 = vpack.c.b16 %v3013, %v3005
    %v4670 = vpack.c.b16 %v3014, %v3006
    %v4671 = vpack.c.b16 %v3015, %v3007
    %v4672 = vpack.c.b16 %v3016, %v3008
    %v4673 = vpack.c.b16 %v3017, %v3009
    %v4674 = vpack.c.b16 %v3018, %v3010
    %v4675 = vpack.c.b16 %v3019, %v3011
    %v4676 = vpack.c.b16 %v3028, %v3020
    %v4677 = vpack.c.b16 %v3029, %v3021
    %v4678 = vpack.c.b16 %v3030, %v3022
    %v4679 = vpack.c.b16 %v3031, %v3023
    %v4680 = vpack.c.b16 %v3032, %v3024
    %v4681 = vpack.c.b16 %v3033, %v3025
    %v4682 = vpack.c.b16 %v3034, %v3026
    %v4683 = vpack.c.b16 %v3035, %v3027
    %v4684 = vpack.c.b16 %v3044, %v3036
    %v4685 = vpack.c.b16 %v3045, %v3037
    %v4686 = vpack.c.b16 %v3046, %v3038
    %v4687 = vpack.c.b16 %v3047, %v3039
    %v4688 = vpack.c.b16 %v3048, %v3040
    %v4689 = vpack.c.b16 %v3049, %v3041
    %v4690 = vpack.c.b16 %v3050, %v3042
    %v4691 = vpack.c.b16 %v3051, %v3043
    %v4692 = vpack.c.b16 %v3060, %v3052
    %v4693 = vpack.c.b16 %v3061, %v3053
    %v4694 = vpack.c.b16 %v3062, %v3054
    %v4695 = vpack.c.b16 %v3063, %v3055
    %v4696 = vpack.c.b16 %v3064, %v3056
    %v4697 = vpack.c.b16 %v3065, %v3057
    %v4698 = vpack.c.b16 %v3066, %v3058
    %v4699 = vpack.c.b16 %v3067, %v3059
    %v4700 = vpack.c.b16 %v3076, %v3068
    %v4701 = vpack.c.b16 %v3077, %v3069
    %v4702 = vpack.c.b16 %v3078, %v3070
    %v4703 = vpack.c.b16 %v3079, %v3071
    %v4704 = vpack.c.b16 %v3080, %v3072
    %v4705 = vpack.c.b16 %v3081, %v3073
    %v4706 = vpack.c.b16 %v3082, %v3074
    %v4707 = vpack.c.b16 %v3083, %v3075
    %v4708 = vpack.c.b16 %v3092, %v3084
    %v4709 = vpack.c.b16 %v3093, %v3085
    %v4710 = vpack.c.b16 %v3094, %v3086
    %v4711 = vpack.c.b16 %v3095, %v3087
    %v4712 = vpack.c.b16 %v3096, %v3088
    %v4713 = vpack.c.b16 %v3097, %v3089
    %v4714 = vpack.c.b16 %v3098, %v3090
    %v4715 = vpack.c.b16 %v3099, %v3091
    %v4716 = vpack.c.b16 %v3108, %v3100
    %v4717 = vpack.c.b16 %v3109, %v3101
    %v4718 = vpack.c.b16 %v3110, %v3102
    %v4719 = vpack.c.b16 %v3111, %v3103
    %v4720 = vpack.c.b16 %v3112, %v3104
    %v4721 = vpack.c.b16 %v3113, %v3105
    %v4722 = vpack.c.b16 %v3114, %v3106
    %v4723 = vpack.c.b16 %v3115, %v3107
    %v4724 = vpack.c.b16 %v3124, %v3116
    %v4725 = vpack.c.b16 %v3125, %v3117
    %v4726 = vpack.c.b16 %v3126, %v3118
    %v4727 = vpack.c.b16 %v3127, %v3119
    %v4728 = vpack.c.b16 %v3128, %v3120
    %v4729 = vpack.c.b16 %v3129, %v3121
    %v4730 = vpack.c.b16 %v3130, %v3122
    %v4731 = vpack.c.b16 %v3131, %v3123
    %v4732 = vpack.c.b16 %v3140, %v3132
    %v4733 = vpack.c.b16 %v3141, %v3133
    %v4734 = vpack.c.b16 %v3142, %v3134
    %v4735 = vpack.c.b16 %v3143, %v3135
    %v4736 = vpack.c.b16 %v3144, %v3136
    %v4737 = vpack.c.b16 %v3145, %v3137
    %v4738 = vpack.c.b16 %v3146, %v3138
    %v4739 = vpack.c.b16 %v3147, %v3139
    %v4740 = vpack.c.b16 %v3156, %v3148
    %v4741 = vpack.c.b16 %v3157, %v3149
    %v4742 = vpack.c.b16 %v3158, %v3150
    %v4743 = vpack.c.b16 %v3159, %v3151
    %v4744 = vpack.c.b16 %v3160, %v3152
    %v4745 = vpack.c.b16 %v3161, %v3153
    %v4746 = vpack.c.b16 %v3162, %v3154
    %v4747 = vpack.c.b16 %v3163, %v3155
    %v4748 = vpack.c.b16 %v3172, %v3164
    %v4749 = vpack.c.b16 %v3173, %v3165
    %v4750 = vpack.c.b16 %v3174, %v3166
    %v4751 = vpack.c.b16 %v3175, %v3167
    %v4752 = vpack.c.b16 %v3176, %v3168
    %v4753 = vpack.c.b16 %v3177, %v3169
    %v4754 = vpack.c.b16 %v3178, %v3170
    %v4755 = vpack.c.b16 %v3179, %v3171
    %v4756 = vpack.c.b16 %v3188, %v3180
    %v4757 = vpack.c.b16 %v3189, %v3181
    %v4758 = vpack.c.b16 %v3190, %v3182
    %v4759 = vpack.c.b16 %v3191, %v3183
    %v4760 = vpack.c.b16 %v3192, %v3184
    %v4761 = vpack.c.b16 %v3193, %v3185
    %v4762 = vpack.c.b16 %v3194, %v3186
    %v4763 = vpack.c.b16 %v3195, %v3187
    %v4764 = vpack.c.b16 %v3204, %v3196
    %v4765 = vpack.c.b16 %v3205, %v3197
    %v4766 = vpack.c.b16 %v3206, %v3198
    %v4767 = vpack.c.b16 %v3207, %v3199
    %v4768 = vpack.c.b16 %v3208, %v3200
    %v4769 = vpack.c.b16 %v3209, %v3201
    %v4770 = vpack.c.b16 %v3210, %v3202
    %v4771 = vpack.c.b16 %v3211, %v3203
    %v4772 = vpack.c.b16 %v3220, %v3212
    %v4773 = vpack.c.b16 %v3221, %v3213
    %v4774 = vpack.c.b16 %v3222, %v3214
    %v4775 = vpack.c.b16 %v3223, %v3215
    %v4776 = vpack.c.b16 %v3224, %v3216
    %v4777 = vpack.c.b16 %v3225, %v3217
    %v4778 = vpack.c.b16 %v3226, %v3218
    %v4779 = vpack.c.b16 %v3227, %v3219
    %v4780 = vpack.c.b16 %v3236, %v3228
    %v4781 = vpack.c.b16 %v3237, %v3229
    %v4782 = vpack.c.b16 %v3238, %v3230
    %v4783 = vpack.c.b16 %v3239, %v3231
    %v4784 = vpack.c.b16 %v3240, %v3232
    %v4785 = vpack.c.b16 %v3241, %v3233
    %v4786 = vpack.c.b16 %v3242, %v3234
    %v4787 = vpack.c.b16 %v3243, %v3235
    %v4788 = vpack.c.b16 %v3252, %v3244
    %v4789 = vpack.c.b16 %v3253, %v3245
    %v4790 = vpack.c.b16 %v3254, %v3246
    %v4791 = vpack.c.b16 %v3255, %v3247
    %v4792 = vpack.c.b16 %v3256, %v3248
    %v4793 = vpack.c.b16 %v3257, %v3249
    %v4794 = vpack.c.b16 %v3258, %v3250
    %v4795 = vpack.c.b16 %v3259, %v3251
    %v4796 = vpack.c.b16 %v3268, %v3260
    %v4797 = vpack.c.b16 %v3269, %v3261
    %v4798 = vpack.c.b16 %v3270, %v3262
    %v4799 = vpack.c.b16 %v3271, %v3263
    %v4800 = vpack.c.b16 %v3272, %v3264
    %v4801 = vpack.c.b16 %v3273, %v3265
    %v4802 = vpack.c.b16 %v3274, %v3266
    %v4803 = vpack.c.b16 %v3275, %v3267
    %v4804 = vpack.c.b16 %v3284, %v3276
    %v4805 = vpack.c.b16 %v3285, %v3277
    %v4806 = vpack.c.b16 %v3286, %v3278
    %v4807 = vpack.c.b16 %v3287, %v3279
    %v4808 = vpack.c.b16 %v3288, %v3280
    %v4809 = vpack.c.b16 %v3289, %v3281
    %v4810 = vpack.c.b16 %v3290, %v3282
    %v4811 = vpack.c.b16 %v3291, %v3283
    %v4812 = vpack.c.b16 %v3300, %v3292
    %v4813 = vpack.c.b16 %v3301, %v3293
    %v4814 = vpack.c.b16 %v3302, %v3294
    %v4815 = vpack.c.b16 %v3303, %v3295
    %v4816 = vpack.c.b16 %v3304, %v3296
    %v4817 = vpack.c.b16 %v3305, %v3297
    %v4818 = vpack.c.b16 %v3306, %v3298
    %v4819 = vpack.c.b16 %v3307, %v3299
    %v4820 = vpack.c.b16 %v3316, %v3308
    %v4821 = vpack.c.b16 %v3317, %v3309
    %v4822 = vpack.c.b16 %v3318, %v3310
    %v4823 = vpack.c.b16 %v3319, %v3311
    %v4824 = vpack.c.b16 %v3320, %v3312
    %v4825 = vpack.c.b16 %v3321, %v3313
    %v4826 = vpack.c.b16 %v3322, %v3314
    %v4827 = vpack.c.b16 %v3323, %v3315
    %v4828 = vpack.c.b16 %v3332, %v3324
    %v4829 = vpack.c.b16 %v3333, %v3325
    %v4830 = vpack.c.b16 %v3334, %v3326
    %v4831 = vpack.c.b16 %v3335, %v3327
    %v4832 = vpack.c.b16 %v3336, %v3328
    %v4833 = vpack.c.b16 %v3337, %v3329
    %v4834 = vpack.c.b16 %v3338, %v3330
    %v4835 = vpack.c.b16 %v3339, %v3331
    %v4836 = vpack.c.b16 %v3348, %v3340
    %v4837 = vpack.c.b16 %v3349, %v3341
    %v4838 = vpack.c.b16 %v3350, %v3342
    %v4839 = vpack.c.b16 %v3351, %v3343
    %v4840 = vpack.c.b16 %v3352, %v3344
    %v4841 = vpack.c.b16 %v3353, %v3345
    %v4842 = vpack.c.b16 %v3354, %v3346
    %v4843 = vpack.c.b16 %v3355, %v3347
    %v4844 = vpack.c.b16 %v3364, %v3356
    %v4845 = vpack.c.b16 %v3365, %v3357
    %v4846 = vpack.c.b16 %v3366, %v3358
    %v4847 = vpack.c.b16 %v3367, %v3359
    %v4848 = vpack.c.b16 %v3368, %v3360
    %v4849 = vpack.c.b16 %v3369, %v3361
    %v4850 = vpack.c.b16 %v3370, %v3362
    %v4851 = vpack.c.b16 %v3371, %v3363
    %v4852 = vpack.c.b16 %v3380, %v3372
    %v4853 = vpack.c.b16 %v3381, %v3373
    %v4854 = vpack.c.b16 %v3382, %v3374
    %v4855 = vpack.c.b16 %v3383, %v3375
    %v4856 = vpack.c.b16 %v3384, %v3376
    %v4857 = vpack.c.b16 %v3385, %v3377
    %v4858 = vpack.c.b16 %v3386, %v3378
    %v4859 = vpack.c.b16 %v3387, %v3379
    %v4860 = vpack.c.b16 %v3396, %v3388
    %v4861 = vpack.c.b16 %v3397, %v3389
    %v4862 = vpack.c.b16 %v3398, %v3390
    %v4863 = vpack.c.b16 %v3399, %v3391
    %v4864 = vpack.c.b16 %v3400, %v3392
    %v4865 = vpack.c.b16 %v3401, %v3393
    %v4866 = vpack.c.b16 %v3402, %v3394
    %v4867 = vpack.c.b16 %v3403, %v3395
    %v4868 = vpack.c.b16 %v3412, %v3404
    %v4869 = vpack.c.b16 %v3413, %v3405
    %v4870 = vpack.c.b16 %v3414, %v3406
    %v4871 = vpack.c.b16 %v3415, %v3407
    %v4872 = vpack.c.b16 %v3416, %v3408
    %v4873 = vpack.c.b16 %v3417, %v3409
    %v4874 = vpack.c.b16 %v3418, %v3410
    %v4875 = vpack.c.b16 %v3419, %v3411
    %v4876 = vpack.c.b16 %v3428, %v3420
    %v4877 = vpack.c.b16 %v3429, %v3421
    %v4878 = vpack.c.b16 %v3430, %v3422
    %v4879 = vpack.c.b16 %v3431, %v3423
    %v4880 = vpack.c.b16 %v3432, %v3424
    %v4881 = vpack.c.b16 %v3433, %v3425
    %v4882 = vpack.c.b16 %v3434, %v3426
    %v4883 = vpack.c.b16 %v3435, %v3427
    %v4884 = vpack.c.b16 %v3444, %v3436
    %v4885 = vpack.c.b16 %v3445, %v3437
    %v4886 = vpack.c.b16 %v3446, %v3438
    %v4887 = vpack.c.b16 %v3447, %v3439
    %v4888 = vpack.c.b16 %v3448, %v3440
    %v4889 = vpack.c.b16 %v3449, %v3441
    %v4890 = vpack.c.b16 %v3450, %v3442
    %v4891 = vpack.c.b16 %v3451, %v3443
    %v4892 = vpack.c.b16 %v3460, %v3452
    %v4893 = vpack.c.b16 %v3461, %v3453
    %v4894 = vpack.c.b16 %v3462, %v3454
    %v4895 = vpack.c.b16 %v3463, %v3455
    %v4896 = vpack.c.b16 %v3464, %v3456
    %v4897 = vpack.c.b16 %v3465, %v3457
    %v4898 = vpack.c.b16 %v3466, %v3458
    %v4899 = vpack.c.b16 %v3467, %v3459
    %v4900 = vpack.c.b16 %v3476, %v3468
    %v4901 = vpack.c.b16 %v3477, %v3469
    %v4902 = vpack.c.b16 %v3478, %v3470
    %v4903 = vpack.c.b16 %v3479, %v3471
    %v4904 = vpack.c.b16 %v3480, %v3472
    %v4905 = vpack.c.b16 %v3481, %v3473
    %v4906 = vpack.c.b16 %v3482, %v3474
    %v4907 = vpack.c.b16 %v3483, %v3475
    %v4908 = vpack.c.b16 %v3492, %v3484
    %v4909 = vpack.c.b16 %v3493, %v3485
    %v4910 = vpack.c.b16 %v3494, %v3486
    %v4911 = vpack.c.b16 %v3495, %v3487
    %v4912 = vpack.c.b16 %v3496, %v3488
    %v4913 = vpack.c.b16 %v3497, %v3489
    %v4914 = vpack.c.b16 %v3498, %v3490
    %v4915 = vpack.c.b16 %v3499, %v3491
    %v4916 = vpack.c.b16 %v3508, %v3500
    %v4917 = vpack.c.b16 %v3509, %v3501
    %v4918 = vpack.c.b16 %v3510, %v3502
    %v4919 = vpack.c.b16 %v3511, %v3503
    %v4920 = vpack.c.b16 %v3512, %v3504
    %v4921 = vpack.c.b16 %v3513, %v3505
    %v4922 = vpack.c.b16 %v3514, %v3506
    %v4923 = vpack.c.b16 %v3515, %v3507
    %v4924 = vpack.c.b16 %v3524, %v3516
    %v4925 = vpack.c.b16 %v3525, %v3517
    %v4926 = vpack.c.b16 %v3526, %v3518
    %v4927 = vpack.c.b16 %v3527, %v3519
    %v4928 = vpack.c.b16 %v3528, %v3520
    %v4929 = vpack.c.b16 %v3529, %v3521
    %v4930 = vpack.c.b16 %v3530, %v3522
    %v4931 = vpack.c.b16 %v3531, %v3523
    %v4932 = vpack.c.b16 %v3540, %v3532
    %v4933 = vpack.c.b16 %v3541, %v3533
    %v4934 = vpack.c.b16 %v3542, %v3534
    %v4935 = vpack.c.b16 %v3543, %v3535
    %v4936 = vpack.c.b16 %v3544, %v3536
    %v4937 = vpack.c.b16 %v3545, %v3537
    %v4938 = vpack.c.b16 %v3546, %v3538
    %v4939 = vpack.c.b16 %v3547, %v3539
    %v4940 = vpack.c.b16 %v3556, %v3548
    %v4941 = vpack.c.b16 %v3557, %v3549
    %v4942 = vpack.c.b16 %v3558, %v3550
    %v4943 = vpack.c.b16 %v3559, %v3551
    %v4944 = vpack.c.b16 %v3560, %v3552
    %v4945 = vpack.c.b16 %v3561, %v3553
    %v4946 = vpack.c.b16 %v3562, %v3554
    %v4947 = vpack.c.b16 %v3563, %v3555
    %v4948 = vpack.c.b16 %v3572, %v3564
    %v4949 = vpack.c.b16 %v3573, %v3565
    %v4950 = vpack.c.b16 %v3574, %v3566
    %v4951 = vpack.c.b16 %v3575, %v3567
    %v4952 = vpack.c.b16 %v3576, %v3568
    %v4953 = vpack.c.b16 %v3577, %v3569
    %v4954 = vpack.c.b16 %v3578, %v3570
    %v4955 = vpack.c.b16 %v3579, %v3571
    %v4956 = vpack.c.b16 %v3588, %v3580
    %v4957 = vpack.c.b16 %v3589, %v3581
    %v4958 = vpack.c.b16 %v3590, %v3582
    %v4959 = vpack.c.b16 %v3591, %v3583
    %v4960 = vpack.c.b16 %v3592, %v3584
    %v4961 = vpack.c.b16 %v3593, %v3585
    %v4962 = vpack.c.b16 %v3594, %v3586
    %v4963 = vpack.c.b16 %v3595, %v3587
    %v4964 = vpack.c.b16 %v3604, %v3596
    %v4965 = vpack.c.b16 %v3605, %v3597
    %v4966 = vpack.c.b16 %v3606, %v3598
    %v4967 = vpack.c.b16 %v3607, %v3599
    %v4968 = vpack.c.b16 %v3608, %v3600
    %v4969 = vpack.c.b16 %v3609, %v3601
    %v4970 = vpack.c.b16 %v3610, %v3602
    %v4971 = vpack.c.b16 %v3611, %v3603
    %v4972 = vpack.c.b16 %v3620, %v3612
    %v4973 = vpack.c.b16 %v3621, %v3613
    %v4974 = vpack.c.b16 %v3622, %v3614
    %v4975 = vpack.c.b16 %v3623, %v3615
    %v4976 = vpack.c.b16 %v3624, %v3616
    %v4977 = vpack.c.b16 %v3625, %v3617
    %v4978 = vpack.c.b16 %v3626, %v3618
    %v4979 = vpack.c.b16 %v3627, %v3619
    %v4980 = vpack.c.b16 %v3636, %v3628
    %v4981 = vpack.c.b16 %v3637, %v3629
    %v4982 = vpack.c.b16 %v3638, %v3630
    %v4983 = vpack.c.b16 %v3639, %v3631
    %v4984 = vpack.c.b16 %v3640, %v3632
    %v4985 = vpack.c.b16 %v3641, %v3633
    %v4986 = vpack.c.b16 %v3642, %v3634
    %v4987 = vpack.c.b16 %v3643, %v3635
    %v4988 = vpack.c.b16 %v3652, %v3644
    %v4989 = vpack.c.b16 %v3653, %v3645
    %v4990 = vpack.c.b16 %v3654, %v3646
    %v4991 = vpack.c.b16 %v3655, %v3647
    %v4992 = vpack.c.b16 %v3656, %v3648
    %v4993 = vpack.c.b16 %v3657, %v3649
    %v4994 = vpack.c.b16 %v3658, %v3650
    %v4995 = vpack.c.b16 %v3659, %v3651
    %v4996 = vpack.c.b16 %v3668, %v3660
    %v4997 = vpack.c.b16 %v3669, %v3661
    %v4998 = vpack.c.b16 %v3670, %v3662
    %v4999 = vpack.c.b16 %v3671, %v3663
    %v5000 = vpack.c.b16 %v3672, %v3664
    %v5001 = vpack.c.b16 %v3673, %v3665
    %v5002 = vpack.c.b16 %v3674, %v3666
    %v5003 = vpack.c.b16 %v3675, %v3667
    %v5004 = vpack.c.b16 %v3684, %v3676
    %v5005 = vpack.c.b16 %v3685, %v3677
    %v5006 = vpack.c.b16 %v3686, %v3678
    %v5007 = vpack.c.b16 %v3687, %v3679
    %v5008 = vpack.c.b16 %v3688, %v3680
    %v5009 = vpack.c.b16 %v3689, %v3681
    %v5010 = vpack.c.b16 %v3690, %v3682
    %v5011 = vpack.c.b16 %v3691, %v3683
    %v5012 = vpack.c.b16 %v3700, %v3692
    %v5013 = vpack.c.b16 %v3701, %v3693
    %v5014 = vpack.c.b16 %v3702, %v3694
    %v5015 = vpack.c.b16 %v3703, %v3695
    %v5016 = vpack.c.b16 %v3704, %v3696
    %v5017 = vpack.c.b16 %v3705, %v3697
    %v5018 = vpack.c.b16 %v3706, %v3698
    %v5019 = vpack.c.b16 %v3707, %v3699
    %v5020 = vpack.c.b16 %v3716, %v3708
    %v5021 = vpack.c.b16 %v3717, %v3709
    %v5022 = vpack.c.b16 %v3718, %v3710
    %v5023 = vpack.c.b16 %v3719, %v3711
    %v5024 = vpack.c.b16 %v3720, %v3712
    %v5025 = vpack.c.b16 %v3721, %v3713
    %v5026 = vpack.c.b16 %v3722, %v3714
    %v5027 = vpack.c.b16 %v3723, %v3715
    %v5028 = vpack.c.b16 %v3732, %v3724
    %v5029 = vpack.c.b16 %v3733, %v3725
    %v5030 = vpack.c.b16 %v3734, %v3726
    %v5031 = vpack.c.b16 %v3735, %v3727
    %v5032 = vpack.c.b16 %v3736, %v3728
    %v5033 = vpack.c.b16 %v3737, %v3729
    %v5034 = vpack.c.b16 %v3738, %v3730
    %v5035 = vpack.c.b16 %v3739, %v3731
    %v5036 = vpack.c.b16 %v3748, %v3740
    %v5037 = vpack.c.b16 %v3749, %v3741
    %v5038 = vpack.c.b16 %v3750, %v3742
    %v5039 = vpack.c.b16 %v3751, %v3743
    %v5040 = vpack.c.b16 %v3752, %v3744
    %v5041 = vpack.c.b16 %v3753, %v3745
    %v5042 = vpack.c.b16 %v3754, %v3746
    %v5043 = vpack.c.b16 %v3755, %v3747
    %v5044 = vpack.c.b16 %v3764, %v3756
    %v5045 = vpack.c.b16 %v3765, %v3757
    %v5046 = vpack.c.b16 %v3766, %v3758
    %v5047 = vpack.c.b16 %v3767, %v3759
    %v5048 = vpack.c.b16 %v3768, %v3760
    %v5049 = vpack.c.b16 %v3769, %v3761
    %v5050 = vpack.c.b16 %v3770, %v3762
    %v5051 = vpack.c.b16 %v3771, %v3763
    %v5052 = vpack.c.b16 %v3780, %v3772
    %v5053 = vpack.c.b16 %v3781, %v3773
    %v5054 = vpack.c.b16 %v3782, %v3774
    %v5055 = vpack.c.b16 %v3783, %v3775
    %v5056 = vpack.c.b16 %v3784, %v3776
    %v5057 = vpack.c.b16 %v3785, %v3777
    %v5058 = vpack.c.b16 %v3786, %v3778
    %v5059 = vpack.c.b16 %v3787, %v3779
    %v5060 = vpack.c.b16 %v3796, %v3788
    %v5061 = vpack.c.b16 %v3797, %v3789
    %v5062 = vpack.c.b16 %v3798, %v3790
    %v5063 = vpack.c.b16 %v3799, %v3791
    %v5064 = vpack.c.b16 %v3800, %v3792
    %v5065 = vpack.c.b16 %v3801, %v3793
    %v5066 = vpack.c.b16 %v3802, %v3794
    %v5067 = vpack.c.b16 %v3803, %v3795
    %v5068 = vpack.c.b16 %v3812, %v3804
    %v5069 = vpack.c.b16 %v3813, %v3805
    %v5070 = vpack.c.b16 %v3814, %v3806
    %v5071 = vpack.c.b16 %v3815, %v3807
    %v5072 = vpack.c.b16 %v3816, %v3808
    %v5073 = vpack.c.b16 %v3817, %v3809
    %v5074 = vpack.c.b16 %v3818, %v3810
    %v5075 = vpack.c.b16 %v3819, %v3811
    %v5076 = vpack.c.b16 %v3828, %v3820
    %v5077 = vpack.c.b16 %v3829, %v3821
    %v5078 = vpack.c.b16 %v3830, %v3822
    %v5079 = vpack.c.b16 %v3831, %v3823
    %v5080 = vpack.c.b16 %v3832, %v3824
    %v5081 = vpack.c.b16 %v3833, %v3825
    %v5082 = vpack.c.b16 %v3834, %v3826
    %v5083 = vpack.c.b16 %v3835, %v3827
    %v5084 = vpack.c.b16 %v3844, %v3836
    %v5085 = vpack.c.b16 %v3845, %v3837
    %v5086 = vpack.c.b16 %v3846, %v3838
    %v5087 = vpack.c.b16 %v3847, %v3839
    %v5088 = vpack.c.b16 %v3848, %v3840
    %v5089 = vpack.c.b16 %v3849, %v3841
    %v5090 = vpack.c.b16 %v3850, %v3842
    %v5091 = vpack.c.b16 %v3851, %v3843
    %v5092 = vpack.c.b16 %v3860, %v3852
    %v5093 = vpack.c.b16 %v3861, %v3853
    %v5094 = vpack.c.b16 %v3862, %v3854
    %v5095 = vpack.c.b16 %v3863, %v3855
    %v5096 = vpack.c.b16 %v3864, %v3856
    %v5097 = vpack.c.b16 %v3865, %v3857
    %v5098 = vpack.c.b16 %v3866, %v3858
    %v5099 = vpack.c.b16 %v3867, %v3859
    %v5100 = vpack.c.b16 %v3876, %v3868
    %v5101 = vpack.c.b16 %v3877, %v3869
    %v5102 = vpack.c.b16 %v3878, %v3870
    %v5103 = vpack.c.b16 %v3879, %v3871
    %v5104 = vpack.c.b16 %v3880, %v3872
    %v5105 = vpack.c.b16 %v3881, %v3873
    %v5106 = vpack.c.b16 %v3882, %v3874
    %v5107 = vpack.c.b16 %v3883, %v3875
    %v5108 = vpack.c.b16 %v3892, %v3884
    %v5109 = vpack.c.b16 %v3893, %v3885
    %v5110 = vpack.c.b16 %v3894, %v3886
    %v5111 = vpack.c.b16 %v3895, %v3887
    %v5112 = vpack.c.b16 %v3896, %v3888
    %v5113 = vpack.c.b16 %v3897, %v3889
    %v5114 = vpack.c.b16 %v3898, %v3890
    %v5115 = vpack.c.b16 %v3899, %v3891
    %v5116 = vpack.c.b16 %v3908, %v3900
    %v5117 = vpack.c.b16 %v3909, %v3901
    %v5118 = vpack.c.b16 %v3910, %v3902
    %v5119 = vpack.c.b16 %v3911, %v3903
    %v5120 = vpack.c.b16 %v3912, %v3904
    %v5121 = vpack.c.b16 %v3913, %v3905
    %v5122 = vpack.c.b16 %v3914, %v3906
    %v5123 = vpack.c.b16 %v3915, %v3907
    %v5124 = vpack.c.b16 %v3924, %v3916
    %v5125 = vpack.c.b16 %v3925, %v3917
    %v5126 = vpack.c.b16 %v3926, %v3918
    %v5127 = vpack.c.b16 %v3927, %v3919
    %v5128 = vpack.c.b16 %v3928, %v3920
    %v5129 = vpack.c.b16 %v3929, %v3921
    %v5130 = vpack.c.b16 %v3930, %v3922
    %v5131 = vpack.c.b16 %v3931, %v3923
    %v5132 = vpack.c.b16 %v3940, %v3932
    %v5133 = vpack.c.b16 %v3941, %v3933
    %v5134 = vpack.c.b16 %v3942, %v3934
    %v5135 = vpack.c.b16 %v3943, %v3935
    %v5136 = vpack.c.b16 %v3944, %v3936
    %v5137 = vpack.c.b16 %v3945, %v3937
    %v5138 = vpack.c.b16 %v3946, %v3938
    %v5139 = vpack.c.b16 %v3947, %v3939
    %v5140 = vpack.c.b16 %v3956, %v3948
    %v5141 = vpack.c.b16 %v3957, %v3949
    %v5142 = vpack.c.b16 %v3958, %v3950
    %v5143 = vpack.c.b16 %v3959, %v3951
    %v5144 = vpack.c.b16 %v3960, %v3952
    %v5145 = vpack.c.b16 %v3961, %v3953
    %v5146 = vpack.c.b16 %v3962, %v3954
    %v5147 = vpack.c.b16 %v3963, %v3955
    %v5148 = vpack.c.b16 %v3972, %v3964
    %v5149 = vpack.c.b16 %v3973, %v3965
    %v5150 = vpack.c.b16 %v3974, %v3966
    %v5151 = vpack.c.b16 %v3975, %v3967
    %v5152 = vpack.c.b16 %v3976, %v3968
    %v5153 = vpack.c.b16 %v3977, %v3969
    %v5154 = vpack.c.b16 %v3978, %v3970
    %v5155 = vpack.c.b16 %v3979, %v3971
    %v5156 = vpack.c.b16 %v3988, %v3980
    %v5157 = vpack.c.b16 %v3989, %v3981
    %v5158 = vpack.c.b16 %v3990, %v3982
    %v5159 = vpack.c.b16 %v3991, %v3983
    %v5160 = vpack.c.b16 %v3992, %v3984
    %v5161 = vpack.c.b16 %v3993, %v3985
    %v5162 = vpack.c.b16 %v3994, %v3986
    %v5163 = vpack.c.b16 %v3995, %v3987
    %v5164 = vpack.c.b16 %v4004, %v3996
    %v5165 = vpack.c.b16 %v4005, %v3997
    %v5166 = vpack.c.b16 %v4006, %v3998
    %v5167 = vpack.c.b16 %v4007, %v3999
    %v5168 = vpack.c.b16 %v4008, %v4000
    %v5169 = vpack.c.b16 %v4009, %v4001
    %v5170 = vpack.c.b16 %v4010, %v4002
    %v5171 = vpack.c.b16 %v4011, %v4003
    %v5172 = vpack.c.b16 %v4020, %v4012
    %v5173 = vpack.c.b16 %v4021, %v4013
    %v5174 = vpack.c.b16 %v4022, %v4014
    %v5175 = vpack.c.b16 %v4023, %v4015
    %v5176 = vpack.c.b16 %v4024, %v4016
    %v5177 = vpack.c.b16 %v4025, %v4017
    %v5178 = vpack.c.b16 %v4026, %v4018
    %v5179 = vpack.c.b16 %v4027, %v4019
    %v5180 = vpack.c.b16 %v4036, %v4028
    %v5181 = vpack.c.b16 %v4037, %v4029
    %v5182 = vpack.c.b16 %v4038, %v4030
    %v5183 = vpack.c.b16 %v4039, %v4031
    %v5184 = vpack.c.b16 %v4040, %v4032
    %v5185 = vpack.c.b16 %v4041, %v4033
    %v5186 = vpack.c.b16 %v4042, %v4034
    %v5187 = vpack.c.b16 %v4043, %v4035
    %v5188 = vpack.c.b16 %v4052, %v4044
    %v5189 = vpack.c.b16 %v4053, %v4045
    %v5190 = vpack.c.b16 %v4054, %v4046
    %v5191 = vpack.c.b16 %v4055, %v4047
    %v5192 = vpack.c.b16 %v4056, %v4048
    %v5193 = vpack.c.b16 %v4057, %v4049
    %v5194 = vpack.c.b16 %v4058, %v4050
    %v5195 = vpack.c.b16 %v4059, %v4051
    %v5196 = vpack.c.b16 %v4068, %v4060
    %v5197 = vpack.c.b16 %v4069, %v4061
    %v5198 = vpack.c.b16 %v4070, %v4062
    %v5199 = vpack.c.b16 %v4071, %v4063
    %v5200 = vpack.c.b16 %v4072, %v4064
    %v5201 = vpack.c.b16 %v4073, %v4065
    %v5202 = vpack.c.b16 %v4074, %v4066
    %v5203 = vpack.c.b16 %v4075, %v4067
    %v5204 = vpack.c.b16 %v4084, %v4076
    %v5205 = vpack.c.b16 %v4085, %v4077
    %v5206 = vpack.c.b16 %v4086, %v4078
    %v5207 = vpack.c.b16 %v4087, %v4079
    %v5208 = vpack.c.b16 %v4088, %v4080
    %v5209 = vpack.c.b16 %v4089, %v4081
    %v5210 = vpack.c.b16 %v4090, %v4082
    %v5211 = vpack.c.b16 %v4091, %v4083
    %v5212 = vpack.c.b16 %v4100, %v4092
    %v5213 = vpack.c.b16 %v4101, %v4093
    %v5214 = vpack.c.b16 %v4102, %v4094
    %v5215 = vpack.c.b16 %v4103, %v4095
    %v5216 = vpack.c.b16 %v4104, %v4096
    %v5217 = vpack.c.b16 %v4105, %v4097
    %v5218 = vpack.c.b16 %v4106, %v4098
    %v5219 = vpack.c.b16 %v4107, %v4099
    %v5220 = vpack.c.b16 %v4116, %v4108
    %v5221 = vpack.c.b16 %v4117, %v4109
    %v5222 = vpack.c.b16 %v4118, %v4110
    %v5223 = vpack.c.b16 %v4119, %v4111
    %v5224 = vpack.c.b16 %v4120, %v4112
    %v5225 = vpack.c.b16 %v4121, %v4113
    %v5226 = vpack.c.b16 %v4122, %v4114
    %v5227 = vpack.c.b16 %v4123, %v4115
    %v5228 = vpack.c.b16 %v4132, %v4124
    %v5229 = vpack.c.b16 %v4133, %v4125
    %v5230 = vpack.c.b16 %v4134, %v4126
    %v5231 = vpack.c.b16 %v4135, %v4127
    %v5232 = vpack.c.b16 %v4136, %v4128
    %v5233 = vpack.c.b16 %v4137, %v4129
    %v5234 = vpack.c.b16 %v4138, %v4130
    %v5235 = vpack.c.b16 %v4139, %v4131
    %v5236 = vpack.c.b16 %v4148, %v4140
    %v5237 = vpack.c.b16 %v4149, %v4141
    %v5238 = vpack.c.b16 %v4150, %v4142
    %v5239 = vpack.c.b16 %v4151, %v4143
    %v5240 = vpack.c.b16 %v4152, %v4144
    %v5241 = vpack.c.b16 %v4153, %v4145
    %v5242 = vpack.c.b16 %v4154, %v4146
    %v5243 = vpack.c.b16 %v4155, %v4147
    %v5244 = vpack.c.b16 %v4164, %v4156
    %v5245 = vpack.c.b16 %v4165, %v4157
    %v5246 = vpack.c.b16 %v4166, %v4158
    %v5247 = vpack.c.b16 %v4167, %v4159
    %v5248 = vpack.c.b16 %v4168, %v4160
    %v5249 = vpack.c.b16 %v4169, %v4161
    %v5250 = vpack.c.b16 %v4170, %v4162
    %v5251 = vpack.c.b16 %v4171, %v4163
    %v5252 = vpack.c.b16 %v4180, %v4172
    %v5253 = vpack.c.b16 %v4181, %v4173
    %v5254 = vpack.c.b16 %v4182, %v4174
    %v5255 = vpack.c.b16 %v4183, %v4175
    %v5256 = vpack.c.b16 %v4184, %v4176
    %v5257 = vpack.c.b16 %v4185, %v4177
    %v5258 = vpack.c.b16 %v4186, %v4178
    %v5259 = vpack.c.b16 %v4187, %v4179
    %v5260 = vpack.c.b16 %v4196, %v4188
    %v5261 = vpack.c.b16 %v4197, %v4189
    %v5262 = vpack.c.b16 %v4198, %v4190
    %v5263 = vpack.c.b16 %v4199, %v4191
    %v5264 = vpack.c.b16 %v4200, %v4192
    %v5265 = vpack.c.b16 %v4201, %v4193
    %v5266 = vpack.c.b16 %v4202, %v4194
    %v5267 = vpack.c.b16 %v4203, %v4195
    %v5268 = vpack.c.b16 %v4212, %v4204
    %v5269 = vpack.c.b16 %v4213, %v4205
    %v5270 = vpack.c.b16 %v4214, %v4206
    %v5271 = vpack.c.b16 %v4215, %v4207
    %v5272 = vpack.c.b16 %v4216, %v4208
    %v5273 = vpack.c.b16 %v4217, %v4209
    %v5274 = vpack.c.b16 %v4218, %v4210
    %v5275 = vpack.c.b16 %v4219, %v4211
    %v5276 = vpack.c.b16 %v4228, %v4220
    %v5277 = vpack.c.b16 %v4229, %v4221
    %v5278 = vpack.c.b16 %v4230, %v4222
    %v5279 = vpack.c.b16 %v4231, %v4223
    %v5280 = vpack.c.b16 %v4232, %v4224
    %v5281 = vpack.c.b16 %v4233, %v4225
    %v5282 = vpack.c.b16 %v4234, %v4226
    %v5283 = vpack.c.b16 %v4235, %v4227
    %v5284 = vpack.c.b16 %v4244, %v4236
    %v5285 = vpack.c.b16 %v4245, %v4237
    %v5286 = vpack.c.b16 %v4246, %v4238
    %v5287 = vpack.c.b16 %v4247, %v4239
    %v5288 = vpack.c.b16 %v4248, %v4240
    %v5289 = vpack.c.b16 %v4249, %v4241
    %v5290 = vpack.c.b16 %v4250, %v4242
    %v5291 = vpack.c.b16 %v4251, %v4243
    %v5292 = vpack.c.b16 %v4260, %v4252
    %v5293 = vpack.c.b16 %v4261, %v4253
    %v5294 = vpack.c.b16 %v4262, %v4254
    %v5295 = vpack.c.b16 %v4263, %v4255
    %v5296 = vpack.c.b16 %v4264, %v4256
    %v5297 = vpack.c.b16 %v4265, %v4257
    %v5298 = vpack.c.b16 %v4266, %v4258
    %v5299 = vpack.c.b16 %v4267, %v4259
    %v5300 = vpack.c.b16 %v4276, %v4268
    %v5301 = vpack.c.b16 %v4277, %v4269
    %v5302 = vpack.c.b16 %v4278, %v4270
    %v5303 = vpack.c.b16 %v4279, %v4271
    %v5304 = vpack.c.b16 %v4280, %v4272
    %v5305 = vpack.c.b16 %v4281, %v4273
    %v5306 = vpack.c.b16 %v4282, %v4274
    %v5307 = vpack.c.b16 %v4283, %v4275
    %6332 = vmatprep.subr.bf16.mxu0 %v4341
    %6333 = vmatpush1.bf16.msra.mxu0 %v4340
    %6334 = vmatprep.subr.bf16.mxu0 %v4333
    %6335 = vmatpush1.bf16.msra.mxu0 %v4332
    %6336 = vmatprep.subr.bf16.mxu0 %v4325
    %6337 = vmatpush1.bf16.msra.mxu0 %v4324
    %6338 = vmatprep.subr.bf16.mxu0 %v4317
    %6339 = vmatpush1.bf16.msra.mxu0 %v4316
    %6340 = vmatprep.subr.bf16.mxu0 %v4309
    %6341 = vmatpush1.bf16.msra.mxu0 %v4308
    %6342 = vmatprep.subr.bf16.mxu0 %v4301
    %6343 = vmatpush1.bf16.msra.mxu0 %v4300
    %6344 = vmatprep.subr.bf16.mxu0 %v4293
    %6345 = vmatpush1.bf16.msra.mxu0 %v4292
    %6346 = vmatprep.subr.bf16.mxu0 %v4285
    %6347 = vmatpush1.bf16.msra.mxu0 %v4284
    %6348 = vmatprep.subr.bf16.mxu0 %v4405
    %6349 = vmatpush2.bf16.msra.mxu0 %v4404
    %6350 = vmatprep.subr.bf16.mxu0 %v4397
    %6351 = vmatpush2.bf16.msra.mxu0 %v4396
    %6352 = vmatprep.subr.bf16.mxu0 %v4389
    %6353 = vmatpush2.bf16.msra.mxu0 %v4388
    %6354 = vmatprep.subr.bf16.mxu0 %v4381
    %6355 = vmatpush2.bf16.msra.mxu0 %v4380
    %6356 = vmatprep.subr.bf16.mxu0 %v4373
    %6357 = vmatpush2.bf16.msra.mxu0 %v4372
    %6358 = vmatprep.subr.bf16.mxu0 %v4365
    %6359 = vmatpush2.bf16.msra.mxu0 %v4364
    %6360 = vmatprep.subr.bf16.mxu0 %v4357
    %6361 = vmatpush2.bf16.msra.mxu0 %v4356
    %6362 = vmatprep.subr.bf16.mxu0 %v4349
    %6363 = vmatpush2.bf16.msra.mxu0 %v4348
    %6364 = vmatprep.mubr.bf16.mxu0 %v131
    %6365 = vmatmul.mubr.bf16.gmra.mxu0 %v130
    %v6366 = vpop.f32.mrf.mxu0
    %v6367 = vadd.f32 %v1175, %v6366
    %v6368 = vpop.f32.mrf.mxu0
    %v6369 = vadd.f32 %v1179, %v6368
    %v6370 = vpop.f32.mrf.mxu0
    %v6371 = vpop.f32.mrf.mxu0
    %6372 = vdwg.mxu0
    %6373 = vmatprep.subr.bf16.mxu0 %v4469
    %6374 = vmatpush1.bf16.msra.mxu0 %v4468
    %6375 = vmatprep.subr.bf16.mxu0 %v4461
    %6376 = vmatpush1.bf16.msra.mxu0 %v4460
    %6377 = vmatprep.subr.bf16.mxu0 %v4453
    %6378 = vmatpush1.bf16.msra.mxu0 %v4452
    %6379 = vmatprep.subr.bf16.mxu0 %v4445
    %6380 = vmatpush1.bf16.msra.mxu0 %v4444
    %6381 = vmatprep.subr.bf16.mxu0 %v4437
    %6382 = vmatpush1.bf16.msra.mxu0 %v4436
    %6383 = vmatprep.subr.bf16.mxu0 %v4429
    %6384 = vmatpush1.bf16.msra.mxu0 %v4428
    %6385 = vmatprep.subr.bf16.mxu0 %v4421
    %6386 = vmatpush1.bf16.msra.mxu0 %v4420
    %6387 = vmatprep.subr.bf16.mxu0 %v4413
    %6388 = vmatpush1.bf16.msra.mxu0 %v4412
    %6389 = vmatprep.subr.bf16.mxu0 %v4533
    %6390 = vmatpush2.bf16.msra.mxu0 %v4532
    %6391 = vmatprep.subr.bf16.mxu0 %v4525
    %6392 = vmatpush2.bf16.msra.mxu0 %v4524
    %6393 = vmatprep.subr.bf16.mxu0 %v4517
    %6394 = vmatpush2.bf16.msra.mxu0 %v4516
    %6395 = vmatprep.subr.bf16.mxu0 %v4509
    %6396 = vmatpush2.bf16.msra.mxu0 %v4508
    %6397 = vmatprep.subr.bf16.mxu0 %v4501
    %6398 = vmatpush2.bf16.msra.mxu0 %v4500
    %6399 = vmatprep.subr.bf16.mxu0 %v4493
    %6400 = vmatpush2.bf16.msra.mxu0 %v4492
    %6401 = vmatprep.subr.bf16.mxu0 %v4485
    %6402 = vmatpush2.bf16.msra.mxu0 %v4484
    %6403 = vmatprep.subr.bf16.mxu0 %v4477
    %6404 = vmatpush2.bf16.msra.mxu0 %v4476
    %6405 = vmatprep.mubr.bf16.mxu0 %v133
    %6406 = vmatmul.mubr.bf16.gmra.mxu0 %v132
    %v6407 = vpop.f32.mrf.mxu0
    %v6408 = vadd.f32 %v6367, %v6407
    %v6409 = vpop.f32.mrf.mxu0
    %v6410 = vadd.f32 %v6369, %v6409
    %v6411 = vpop.f32.mrf.mxu0
    %v6412 = vpop.f32.mrf.mxu0
    %6413 = vdwg.mxu0
    %6414 = vmatprep.subr.bf16.mxu0 %v4597
    %6415 = vmatpush1.bf16.msra.mxu0 %v4596
    %6416 = vmatprep.subr.bf16.mxu0 %v4589
    %6417 = vmatpush1.bf16.msra.mxu0 %v4588
    %6418 = vmatprep.subr.bf16.mxu0 %v4581
    %6419 = vmatpush1.bf16.msra.mxu0 %v4580
    %6420 = vmatprep.subr.bf16.mxu0 %v4573
    %6421 = vmatpush1.bf16.msra.mxu0 %v4572
    %6422 = vmatprep.subr.bf16.mxu0 %v4565
    %6423 = vmatpush1.bf16.msra.mxu0 %v4564
    %6424 = vmatprep.subr.bf16.mxu0 %v4557
    %6425 = vmatpush1.bf16.msra.mxu0 %v4556
    %6426 = vmatprep.subr.bf16.mxu0 %v4549
    %6427 = vmatpush1.bf16.msra.mxu0 %v4548
    %6428 = vmatprep.subr.bf16.mxu0 %v4541
    %6429 = vmatpush1.bf16.msra.mxu0 %v4540
    %6430 = vmatprep.subr.bf16.mxu0 %v4661
    %6431 = vmatpush2.bf16.msra.mxu0 %v4660
    %6432 = vmatprep.subr.bf16.mxu0 %v4653
    %6433 = vmatpush2.bf16.msra.mxu0 %v4652
    %6434 = vmatprep.subr.bf16.mxu0 %v4645
    %6435 = vmatpush2.bf16.msra.mxu0 %v4644
    %6436 = vmatprep.subr.bf16.mxu0 %v4637
    %6437 = vmatpush2.bf16.msra.mxu0 %v4636
    %6438 = vmatprep.subr.bf16.mxu0 %v4629
    %6439 = vmatpush2.bf16.msra.mxu0 %v4628
    %6440 = vmatprep.subr.bf16.mxu0 %v4621
    %6441 = vmatpush2.bf16.msra.mxu0 %v4620
    %6442 = vmatprep.subr.bf16.mxu0 %v4613
    %6443 = vmatpush2.bf16.msra.mxu0 %v4612
    %6444 = vmatprep.subr.bf16.mxu0 %v4605
    %6445 = vmatpush2.bf16.msra.mxu0 %v4604
    %6446 = vmatprep.mubr.bf16.mxu0 %v135
    %6447 = vmatmul.mubr.bf16.gmra.mxu0 %v134
    %v6448 = vpop.f32.mrf.mxu0
    %v6449 = vadd.f32 %v6408, %v6448
    %v6450 = vpop.f32.mrf.mxu0
    %v6451 = vadd.f32 %v6410, %v6450
    %v6452 = vpop.f32.mrf.mxu0
    %v6453 = vpop.f32.mrf.mxu0
    %6454 = vdwg.mxu0
    %6455 = vmatprep.subr.bf16.mxu0 %v4725
    %6456 = vmatpush1.bf16.msra.mxu0 %v4724
    %6457 = vmatprep.subr.bf16.mxu0 %v4717
    %6458 = vmatpush1.bf16.msra.mxu0 %v4716
    %6459 = vmatprep.subr.bf16.mxu0 %v4709
    %6460 = vmatpush1.bf16.msra.mxu0 %v4708
    %6461 = vmatprep.subr.bf16.mxu0 %v4701
    %6462 = vmatpush1.bf16.msra.mxu0 %v4700
    %6463 = vmatprep.subr.bf16.mxu0 %v4693
    %6464 = vmatpush1.bf16.msra.mxu0 %v4692
    %6465 = vmatprep.subr.bf16.mxu0 %v4685
    %6466 = vmatpush1.bf16.msra.mxu0 %v4684
    %6467 = vmatprep.subr.bf16.mxu0 %v4677
    %6468 = vmatpush1.bf16.msra.mxu0 %v4676
    %6469 = vmatprep.subr.bf16.mxu0 %v4669
    %6470 = vmatpush1.bf16.msra.mxu0 %v4668
    %6471 = vmatprep.subr.bf16.mxu0 %v4789
    %6472 = vmatpush2.bf16.msra.mxu0 %v4788
    %6473 = vmatprep.subr.bf16.mxu0 %v4781
    %6474 = vmatpush2.bf16.msra.mxu0 %v4780
    %6475 = vmatprep.subr.bf16.mxu0 %v4773
    %6476 = vmatpush2.bf16.msra.mxu0 %v4772
    %6477 = vmatprep.subr.bf16.mxu0 %v4765
    %6478 = vmatpush2.bf16.msra.mxu0 %v4764
    %6479 = vmatprep.subr.bf16.mxu0 %v4757
    %6480 = vmatpush2.bf16.msra.mxu0 %v4756
    %6481 = vmatprep.subr.bf16.mxu0 %v4749
    %6482 = vmatpush2.bf16.msra.mxu0 %v4748
    %6483 = vmatprep.subr.bf16.mxu0 %v4741
    %6484 = vmatpush2.bf16.msra.mxu0 %v4740
    %6485 = vmatprep.subr.bf16.mxu0 %v4733
    %6486 = vmatpush2.bf16.msra.mxu0 %v4732
    %6487 = vmatprep.mubr.bf16.mxu0 %v137
    %6488 = vmatmul.mubr.bf16.gmra.mxu0 %v136
    %v6489 = vpop.f32.mrf.mxu0
    %v6490 = vadd.f32 %v6449, %v6489
    %v6491 = vpop.f32.mrf.mxu0
    %v6492 = vadd.f32 %v6451, %v6491
    %v6493 = vpop.f32.mrf.mxu0
    %v6494 = vpop.f32.mrf.mxu0
    %6495 = vdwg.mxu0
    %6496 = vmatprep.subr.bf16.mxu0 %v4853
    %6497 = vmatpush1.bf16.msra.mxu0 %v4852
    %6498 = vmatprep.subr.bf16.mxu0 %v4845
    %6499 = vmatpush1.bf16.msra.mxu0 %v4844
    %6500 = vmatprep.subr.bf16.mxu0 %v4837
    %6501 = vmatpush1.bf16.msra.mxu0 %v4836
    %6502 = vmatprep.subr.bf16.mxu0 %v4829
    %6503 = vmatpush1.bf16.msra.mxu0 %v4828
    %6504 = vmatprep.subr.bf16.mxu0 %v4821
    %6505 = vmatpush1.bf16.msra.mxu0 %v4820
    %6506 = vmatprep.subr.bf16.mxu0 %v4813
    %6507 = vmatpush1.bf16.msra.mxu0 %v4812
    %6508 = vmatprep.subr.bf16.mxu0 %v4805
    %6509 = vmatpush1.bf16.msra.mxu0 %v4804
    %6510 = vmatprep.subr.bf16.mxu0 %v4797
    %6511 = vmatpush1.bf16.msra.mxu0 %v4796
    %6512 = vmatprep.subr.bf16.mxu0 %v4917
    %6513 = vmatpush2.bf16.msra.mxu0 %v4916
    %6514 = vmatprep.subr.bf16.mxu0 %v4909
    %6515 = vmatpush2.bf16.msra.mxu0 %v4908
    %6516 = vmatprep.subr.bf16.mxu0 %v4901
    %6517 = vmatpush2.bf16.msra.mxu0 %v4900
    %6518 = vmatprep.subr.bf16.mxu0 %v4893
    %6519 = vmatpush2.bf16.msra.mxu0 %v4892
    %6520 = vmatprep.subr.bf16.mxu0 %v4885
    %6521 = vmatpush2.bf16.msra.mxu0 %v4884
    %6522 = vmatprep.subr.bf16.mxu0 %v4877
    %6523 = vmatpush2.bf16.msra.mxu0 %v4876
    %6524 = vmatprep.subr.bf16.mxu0 %v4869
    %6525 = vmatpush2.bf16.msra.mxu0 %v4868
    %6526 = vmatprep.subr.bf16.mxu0 %v4861
    %6527 = vmatpush2.bf16.msra.mxu0 %v4860
    %6528 = vmatprep.mubr.bf16.mxu0 %v139
    %6529 = vmatmul.mubr.bf16.gmra.mxu0 %v138
    %v6530 = vpop.f32.mrf.mxu0
    %v6531 = vadd.f32 %v6490, %v6530
    %v6532 = vpop.f32.mrf.mxu0
    %v6533 = vadd.f32 %v6492, %v6532
    %v6534 = vpop.f32.mrf.mxu0
    %v6535 = vpop.f32.mrf.mxu0
    %6536 = vdwg.mxu0
    %6537 = vmatprep.subr.bf16.mxu0 %v4981
    %6538 = vmatpush1.bf16.msra.mxu0 %v4980
    %6539 = vmatprep.subr.bf16.mxu0 %v4973
    %6540 = vmatpush1.bf16.msra.mxu0 %v4972
    %6541 = vmatprep.subr.bf16.mxu0 %v4965
    %6542 = vmatpush1.bf16.msra.mxu0 %v4964
    %6543 = vmatprep.subr.bf16.mxu0 %v4957
    %6544 = vmatpush1.bf16.msra.mxu0 %v4956
    %6545 = vmatprep.subr.bf16.mxu0 %v4949
    %6546 = vmatpush1.bf16.msra.mxu0 %v4948
    %6547 = vmatprep.subr.bf16.mxu0 %v4941
    %6548 = vmatpush1.bf16.msra.mxu0 %v4940
    %6549 = vmatprep.subr.bf16.mxu0 %v4933
    %6550 = vmatpush1.bf16.msra.mxu0 %v4932
    %6551 = vmatprep.subr.bf16.mxu0 %v4925
    %6552 = vmatpush1.bf16.msra.mxu0 %v4924
    %6553 = vmatprep.subr.bf16.mxu0 %v5045
    %6554 = vmatpush2.bf16.msra.mxu0 %v5044
    %6555 = vmatprep.subr.bf16.mxu0 %v5037
    %6556 = vmatpush2.bf16.msra.mxu0 %v5036
    %6557 = vmatprep.subr.bf16.mxu0 %v5029
    %6558 = vmatpush2.bf16.msra.mxu0 %v5028
    %6559 = vmatprep.subr.bf16.mxu0 %v5021
    %6560 = vmatpush2.bf16.msra.mxu0 %v5020
    %6561 = vmatprep.subr.bf16.mxu0 %v5013
    %6562 = vmatpush2.bf16.msra.mxu0 %v5012
    %6563 = vmatprep.subr.bf16.mxu0 %v5005
    %6564 = vmatpush2.bf16.msra.mxu0 %v5004
    %6565 = vmatprep.subr.bf16.mxu0 %v4997
    %6566 = vmatpush2.bf16.msra.mxu0 %v4996
    %6567 = vmatprep.subr.bf16.mxu0 %v4989
    %6568 = vmatpush2.bf16.msra.mxu0 %v4988
    %6569 = vmatprep.mubr.bf16.mxu0 %v141
    %6570 = vmatmul.mubr.bf16.gmra.mxu0 %v140
    %v6571 = vpop.f32.mrf.mxu0
    %v6572 = vadd.f32 %v6531, %v6571
    %v6573 = vpop.f32.mrf.mxu0
    %v6574 = vadd.f32 %v6533, %v6573
    %v6575 = vpop.f32.mrf.mxu0
    %v6576 = vpop.f32.mrf.mxu0
    %6577 = vdwg.mxu0
    %6578 = vmatprep.subr.bf16.mxu0 %v5109
    %6579 = vmatpush1.bf16.msra.mxu0 %v5108
    %6580 = vmatprep.subr.bf16.mxu0 %v5101
    %6581 = vmatpush1.bf16.msra.mxu0 %v5100
    %6582 = vmatprep.subr.bf16.mxu0 %v5093
    %6583 = vmatpush1.bf16.msra.mxu0 %v5092
    %6584 = vmatprep.subr.bf16.mxu0 %v5085
    %6585 = vmatpush1.bf16.msra.mxu0 %v5084
    %6586 = vmatprep.subr.bf16.mxu0 %v5077
    %6587 = vmatpush1.bf16.msra.mxu0 %v5076
    %6588 = vmatprep.subr.bf16.mxu0 %v5069
    %6589 = vmatpush1.bf16.msra.mxu0 %v5068
    %6590 = vmatprep.subr.bf16.mxu0 %v5061
    %6591 = vmatpush1.bf16.msra.mxu0 %v5060
    %6592 = vmatprep.subr.bf16.mxu0 %v5053
    %6593 = vmatpush1.bf16.msra.mxu0 %v5052
    %6594 = vmatprep.subr.bf16.mxu0 %v5173
    %6595 = vmatpush2.bf16.msra.mxu0 %v5172
    %6596 = vmatprep.subr.bf16.mxu0 %v5165
    %6597 = vmatpush2.bf16.msra.mxu0 %v5164
    %6598 = vmatprep.subr.bf16.mxu0 %v5157
    %6599 = vmatpush2.bf16.msra.mxu0 %v5156
    %6600 = vmatprep.subr.bf16.mxu0 %v5149
    %6601 = vmatpush2.bf16.msra.mxu0 %v5148
    %6602 = vmatprep.subr.bf16.mxu0 %v5141
    %6603 = vmatpush2.bf16.msra.mxu0 %v5140
    %6604 = vmatprep.subr.bf16.mxu0 %v5133
    %6605 = vmatpush2.bf16.msra.mxu0 %v5132
    %6606 = vmatprep.subr.bf16.mxu0 %v5125
    %6607 = vmatpush2.bf16.msra.mxu0 %v5124
    %6608 = vmatprep.subr.bf16.mxu0 %v5117
    %6609 = vmatpush2.bf16.msra.mxu0 %v5116
    %6610 = vmatprep.mubr.bf16.mxu0 %v143
    %6611 = vmatmul.mubr.bf16.gmra.mxu0 %v142
    %v6612 = vpop.f32.mrf.mxu0
    %v6613 = vadd.f32 %v6572, %v6612
    %v6614 = vpop.f32.mrf.mxu0
    %v6615 = vadd.f32 %v6574, %v6614
    %v6616 = vpop.f32.mrf.mxu0
    %v6617 = vpop.f32.mrf.mxu0
    %6618 = vdwg.mxu0
    %6619 = vmatprep.subr.bf16.mxu0 %v5237
    %6620 = vmatpush1.bf16.msra.mxu0 %v5236
    %6621 = vmatprep.subr.bf16.mxu0 %v5229
    %6622 = vmatpush1.bf16.msra.mxu0 %v5228
    %6623 = vmatprep.subr.bf16.mxu0 %v5221
    %6624 = vmatpush1.bf16.msra.mxu0 %v5220
    %6625 = vmatprep.subr.bf16.mxu0 %v5213
    %6626 = vmatpush1.bf16.msra.mxu0 %v5212
    %6627 = vmatprep.subr.bf16.mxu0 %v5205
    %6628 = vmatpush1.bf16.msra.mxu0 %v5204
    %6629 = vmatprep.subr.bf16.mxu0 %v5197
    %6630 = vmatpush1.bf16.msra.mxu0 %v5196
    %6631 = vmatprep.subr.bf16.mxu0 %v5189
    %6632 = vmatpush1.bf16.msra.mxu0 %v5188
    %6633 = vmatprep.subr.bf16.mxu0 %v5181
    %6634 = vmatpush1.bf16.msra.mxu0 %v5180
    %6635 = vmatprep.subr.bf16.mxu0 %v5301
    %6636 = vmatpush2.bf16.msra.mxu0 %v5300
    %6637 = vmatprep.subr.bf16.mxu0 %v5293
    %6638 = vmatpush2.bf16.msra.mxu0 %v5292
    %6639 = vmatprep.subr.bf16.mxu0 %v5285
    %6640 = vmatpush2.bf16.msra.mxu0 %v5284
    %6641 = vmatprep.subr.bf16.mxu0 %v5277
    %6642 = vmatpush2.bf16.msra.mxu0 %v5276
    %6643 = vmatprep.subr.bf16.mxu0 %v5269
    %6644 = vmatpush2.bf16.msra.mxu0 %v5268
    %6645 = vmatprep.subr.bf16.mxu0 %v5261
    %6646 = vmatpush2.bf16.msra.mxu0 %v5260
    %6647 = vmatprep.subr.bf16.mxu0 %v5253
    %6648 = vmatpush2.bf16.msra.mxu0 %v5252
    %6649 = vmatprep.subr.bf16.mxu0 %v5245
    %6650 = vmatpush2.bf16.msra.mxu0 %v5244
    %6651 = vmatprep.mubr.bf16.mxu0 %v145
    %6652 = vmatmul.mubr.bf16.gmra.mxu0 %v144
    %v6653 = vpop.f32.mrf.mxu0
    %v6654 = vadd.f32 %v6613, %v6653
    %v6655 = vpop.f32.mrf.mxu0
    %v6656 = vadd.f32 %v6615, %v6655
    %v6657 = vpop.f32.mrf.mxu0
    %v6658 = vpop.f32.mrf.mxu0
    %6659 = vdwg.mxu0
    %6660 = vmatprep.subr.bf16.mxu0 %v4343
    %6661 = vmatpush1.bf16.msra.mxu0 %v4342
    %6662 = vmatprep.subr.bf16.mxu0 %v4335
    %6663 = vmatpush1.bf16.msra.mxu0 %v4334
    %6664 = vmatprep.subr.bf16.mxu0 %v4327
    %6665 = vmatpush1.bf16.msra.mxu0 %v4326
    %6666 = vmatprep.subr.bf16.mxu0 %v4319
    %6667 = vmatpush1.bf16.msra.mxu0 %v4318
    %6668 = vmatprep.subr.bf16.mxu0 %v4311
    %6669 = vmatpush1.bf16.msra.mxu0 %v4310
    %6670 = vmatprep.subr.bf16.mxu0 %v4303
    %6671 = vmatpush1.bf16.msra.mxu0 %v4302
    %6672 = vmatprep.subr.bf16.mxu0 %v4295
    %6673 = vmatpush1.bf16.msra.mxu0 %v4294
    %6674 = vmatprep.subr.bf16.mxu0 %v4287
    %6675 = vmatpush1.bf16.msra.mxu0 %v4286
    %6676 = vmatprep.subr.bf16.mxu0 %v4407
    %6677 = vmatpush2.bf16.msra.mxu0 %v4406
    %6678 = vmatprep.subr.bf16.mxu0 %v4399
    %6679 = vmatpush2.bf16.msra.mxu0 %v4398
    %6680 = vmatprep.subr.bf16.mxu0 %v4391
    %6681 = vmatpush2.bf16.msra.mxu0 %v4390
    %6682 = vmatprep.subr.bf16.mxu0 %v4383
    %6683 = vmatpush2.bf16.msra.mxu0 %v4382
    %6684 = vmatprep.subr.bf16.mxu0 %v4375
    %6685 = vmatpush2.bf16.msra.mxu0 %v4374
    %6686 = vmatprep.subr.bf16.mxu0 %v4367
    %6687 = vmatpush2.bf16.msra.mxu0 %v4366
    %6688 = vmatprep.subr.bf16.mxu0 %v4359
    %6689 = vmatpush2.bf16.msra.mxu0 %v4358
    %6690 = vmatprep.subr.bf16.mxu0 %v4351
    %6691 = vmatpush2.bf16.msra.mxu0 %v4350
    %6692 = vmatprep.mubr.bf16.mxu0 %v131
    %6693 = vmatmul.mubr.bf16.gmra.mxu0 %v130
    %v6694 = vpop.f32.mrf.mxu0
    %v6695 = vadd.f32 %v1183, %v6694
    %v6696 = vpop.f32.mrf.mxu0
    %v6697 = vadd.f32 %v1187, %v6696
    %v6698 = vpop.f32.mrf.mxu0
    %v6699 = vpop.f32.mrf.mxu0
    %6700 = vdwg.mxu0
    %6701 = vmatprep.subr.bf16.mxu0 %v4471
    %6702 = vmatpush1.bf16.msra.mxu0 %v4470
    %6703 = vmatprep.subr.bf16.mxu0 %v4463
    %6704 = vmatpush1.bf16.msra.mxu0 %v4462
    %6705 = vmatprep.subr.bf16.mxu0 %v4455
    %6706 = vmatpush1.bf16.msra.mxu0 %v4454
    %6707 = vmatprep.subr.bf16.mxu0 %v4447
    %6708 = vmatpush1.bf16.msra.mxu0 %v4446
    %6709 = vmatprep.subr.bf16.mxu0 %v4439
    %6710 = vmatpush1.bf16.msra.mxu0 %v4438
    %6711 = vmatprep.subr.bf16.mxu0 %v4431
    %6712 = vmatpush1.bf16.msra.mxu0 %v4430
    %6713 = vmatprep.subr.bf16.mxu0 %v4423
    %6714 = vmatpush1.bf16.msra.mxu0 %v4422
    %6715 = vmatprep.subr.bf16.mxu0 %v4415
    %6716 = vmatpush1.bf16.msra.mxu0 %v4414
    %6717 = vmatprep.subr.bf16.mxu0 %v4535
    %6718 = vmatpush2.bf16.msra.mxu0 %v4534
    %6719 = vmatprep.subr.bf16.mxu0 %v4527
    %6720 = vmatpush2.bf16.msra.mxu0 %v4526
    %6721 = vmatprep.subr.bf16.mxu0 %v4519
    %6722 = vmatpush2.bf16.msra.mxu0 %v4518
    %6723 = vmatprep.subr.bf16.mxu0 %v4511
    %6724 = vmatpush2.bf16.msra.mxu0 %v4510
    %6725 = vmatprep.subr.bf16.mxu0 %v4503
    %6726 = vmatpush2.bf16.msra.mxu0 %v4502
    %6727 = vmatprep.subr.bf16.mxu0 %v4495
    %6728 = vmatpush2.bf16.msra.mxu0 %v4494
    %6729 = vmatprep.subr.bf16.mxu0 %v4487
    %6730 = vmatpush2.bf16.msra.mxu0 %v4486
    %6731 = vmatprep.subr.bf16.mxu0 %v4479
    %6732 = vmatpush2.bf16.msra.mxu0 %v4478
    %6733 = vmatprep.mubr.bf16.mxu0 %v133
    %6734 = vmatmul.mubr.bf16.gmra.mxu0 %v132
    %v6735 = vpop.f32.mrf.mxu0
    %v6736 = vadd.f32 %v6695, %v6735
    %v6737 = vpop.f32.mrf.mxu0
    %v6738 = vadd.f32 %v6697, %v6737
    %v6739 = vpop.f32.mrf.mxu0
    %v6740 = vpop.f32.mrf.mxu0
    %6741 = vdwg.mxu0
    %6742 = vmatprep.subr.bf16.mxu0 %v4599
    %6743 = vmatpush1.bf16.msra.mxu0 %v4598
    %6744 = vmatprep.subr.bf16.mxu0 %v4591
    %6745 = vmatpush1.bf16.msra.mxu0 %v4590
    %6746 = vmatprep.subr.bf16.mxu0 %v4583
    %6747 = vmatpush1.bf16.msra.mxu0 %v4582
    %6748 = vmatprep.subr.bf16.mxu0 %v4575
    %6749 = vmatpush1.bf16.msra.mxu0 %v4574
    %6750 = vmatprep.subr.bf16.mxu0 %v4567
    %6751 = vmatpush1.bf16.msra.mxu0 %v4566
    %6752 = vmatprep.subr.bf16.mxu0 %v4559
    %6753 = vmatpush1.bf16.msra.mxu0 %v4558
    %6754 = vmatprep.subr.bf16.mxu0 %v4551
    %6755 = vmatpush1.bf16.msra.mxu0 %v4550
    %6756 = vmatprep.subr.bf16.mxu0 %v4543
    %6757 = vmatpush1.bf16.msra.mxu0 %v4542
    %6758 = vmatprep.subr.bf16.mxu0 %v4663
    %6759 = vmatpush2.bf16.msra.mxu0 %v4662
    %6760 = vmatprep.subr.bf16.mxu0 %v4655
    %6761 = vmatpush2.bf16.msra.mxu0 %v4654
    %6762 = vmatprep.subr.bf16.mxu0 %v4647
    %6763 = vmatpush2.bf16.msra.mxu0 %v4646
    %6764 = vmatprep.subr.bf16.mxu0 %v4639
    %6765 = vmatpush2.bf16.msra.mxu0 %v4638
    %6766 = vmatprep.subr.bf16.mxu0 %v4631
    %6767 = vmatpush2.bf16.msra.mxu0 %v4630
    %6768 = vmatprep.subr.bf16.mxu0 %v4623
    %6769 = vmatpush2.bf16.msra.mxu0 %v4622
    %6770 = vmatprep.subr.bf16.mxu0 %v4615
    %6771 = vmatpush2.bf16.msra.mxu0 %v4614
    %6772 = vmatprep.subr.bf16.mxu0 %v4607
    %6773 = vmatpush2.bf16.msra.mxu0 %v4606
    %6774 = vmatprep.mubr.bf16.mxu0 %v135
    %6775 = vmatmul.mubr.bf16.gmra.mxu0 %v134
    %v6776 = vpop.f32.mrf.mxu0
    %v6777 = vadd.f32 %v6736, %v6776
    %v6778 = vpop.f32.mrf.mxu0
    %v6779 = vadd.f32 %v6738, %v6778
    %v6780 = vpop.f32.mrf.mxu0
    %v6781 = vpop.f32.mrf.mxu0
    %6782 = vdwg.mxu0
    %6783 = vmatprep.subr.bf16.mxu0 %v4727
    %6784 = vmatpush1.bf16.msra.mxu0 %v4726
    %6785 = vmatprep.subr.bf16.mxu0 %v4719
    %6786 = vmatpush1.bf16.msra.mxu0 %v4718
    %6787 = vmatprep.subr.bf16.mxu0 %v4711
    %6788 = vmatpush1.bf16.msra.mxu0 %v4710
    %6789 = vmatprep.subr.bf16.mxu0 %v4703
    %6790 = vmatpush1.bf16.msra.mxu0 %v4702
    %6791 = vmatprep.subr.bf16.mxu0 %v4695
    %6792 = vmatpush1.bf16.msra.mxu0 %v4694
    %6793 = vmatprep.subr.bf16.mxu0 %v4687
    %6794 = vmatpush1.bf16.msra.mxu0 %v4686
    %6795 = vmatprep.subr.bf16.mxu0 %v4679
    %6796 = vmatpush1.bf16.msra.mxu0 %v4678
    %6797 = vmatprep.subr.bf16.mxu0 %v4671
    %6798 = vmatpush1.bf16.msra.mxu0 %v4670
    %6799 = vmatprep.subr.bf16.mxu0 %v4791
    %6800 = vmatpush2.bf16.msra.mxu0 %v4790
    %6801 = vmatprep.subr.bf16.mxu0 %v4783
    %6802 = vmatpush2.bf16.msra.mxu0 %v4782
    %6803 = vmatprep.subr.bf16.mxu0 %v4775
    %6804 = vmatpush2.bf16.msra.mxu0 %v4774
    %6805 = vmatprep.subr.bf16.mxu0 %v4767
    %6806 = vmatpush2.bf16.msra.mxu0 %v4766
    %6807 = vmatprep.subr.bf16.mxu0 %v4759
    %6808 = vmatpush2.bf16.msra.mxu0 %v4758
    %6809 = vmatprep.subr.bf16.mxu0 %v4751
    %6810 = vmatpush2.bf16.msra.mxu0 %v4750
    %6811 = vmatprep.subr.bf16.mxu0 %v4743
    %6812 = vmatpush2.bf16.msra.mxu0 %v4742
    %6813 = vmatprep.subr.bf16.mxu0 %v4735
    %6814 = vmatpush2.bf16.msra.mxu0 %v4734
    %6815 = vmatprep.mubr.bf16.mxu0 %v137
    %6816 = vmatmul.mubr.bf16.gmra.mxu0 %v136
    %v6817 = vpop.f32.mrf.mxu0
    %v6818 = vadd.f32 %v6777, %v6817
    %v6819 = vpop.f32.mrf.mxu0
    %v6820 = vadd.f32 %v6779, %v6819
    %v6821 = vpop.f32.mrf.mxu0
    %v6822 = vpop.f32.mrf.mxu0
    %6823 = vdwg.mxu0
    %6824 = vmatprep.subr.bf16.mxu0 %v4855
    %6825 = vmatpush1.bf16.msra.mxu0 %v4854
    %6826 = vmatprep.subr.bf16.mxu0 %v4847
    %6827 = vmatpush1.bf16.msra.mxu0 %v4846
    %6828 = vmatprep.subr.bf16.mxu0 %v4839
    %6829 = vmatpush1.bf16.msra.mxu0 %v4838
    %6830 = vmatprep.subr.bf16.mxu0 %v4831
    %6831 = vmatpush1.bf16.msra.mxu0 %v4830
    %6832 = vmatprep.subr.bf16.mxu0 %v4823
    %6833 = vmatpush1.bf16.msra.mxu0 %v4822
    %6834 = vmatprep.subr.bf16.mxu0 %v4815
    %6835 = vmatpush1.bf16.msra.mxu0 %v4814
    %6836 = vmatprep.subr.bf16.mxu0 %v4807
    %6837 = vmatpush1.bf16.msra.mxu0 %v4806
    %6838 = vmatprep.subr.bf16.mxu0 %v4799
    %6839 = vmatpush1.bf16.msra.mxu0 %v4798
    %6840 = vmatprep.subr.bf16.mxu0 %v4919
    %6841 = vmatpush2.bf16.msra.mxu0 %v4918
    %6842 = vmatprep.subr.bf16.mxu0 %v4911
    %6843 = vmatpush2.bf16.msra.mxu0 %v4910
    %6844 = vmatprep.subr.bf16.mxu0 %v4903
    %6845 = vmatpush2.bf16.msra.mxu0 %v4902
    %6846 = vmatprep.subr.bf16.mxu0 %v4895
    %6847 = vmatpush2.bf16.msra.mxu0 %v4894
    %6848 = vmatprep.subr.bf16.mxu0 %v4887
    %6849 = vmatpush2.bf16.msra.mxu0 %v4886
    %6850 = vmatprep.subr.bf16.mxu0 %v4879
    %6851 = vmatpush2.bf16.msra.mxu0 %v4878
    %6852 = vmatprep.subr.bf16.mxu0 %v4871
    %6853 = vmatpush2.bf16.msra.mxu0 %v4870
    %6854 = vmatprep.subr.bf16.mxu0 %v4863
    %6855 = vmatpush2.bf16.msra.mxu0 %v4862
    %6856 = vmatprep.mubr.bf16.mxu0 %v139
    %6857 = vmatmul.mubr.bf16.gmra.mxu0 %v138
    %v6858 = vpop.f32.mrf.mxu0
    %v6859 = vadd.f32 %v6818, %v6858
    %v6860 = vpop.f32.mrf.mxu0
    %v6861 = vadd.f32 %v6820, %v6860
    %v6862 = vpop.f32.mrf.mxu0
    %v6863 = vpop.f32.mrf.mxu0
    %6864 = vdwg.mxu0
    %6865 = vmatprep.subr.bf16.mxu0 %v4983
    %6866 = vmatpush1.bf16.msra.mxu0 %v4982
    %6867 = vmatprep.subr.bf16.mxu0 %v4975
    %6868 = vmatpush1.bf16.msra.mxu0 %v4974
    %6869 = vmatprep.subr.bf16.mxu0 %v4967
    %6870 = vmatpush1.bf16.msra.mxu0 %v4966
    %6871 = vmatprep.subr.bf16.mxu0 %v4959
    %6872 = vmatpush1.bf16.msra.mxu0 %v4958
    %6873 = vmatprep.subr.bf16.mxu0 %v4951
    %6874 = vmatpush1.bf16.msra.mxu0 %v4950
    %6875 = vmatprep.subr.bf16.mxu0 %v4943
    %6876 = vmatpush1.bf16.msra.mxu0 %v4942
    %6877 = vmatprep.subr.bf16.mxu0 %v4935
    %6878 = vmatpush1.bf16.msra.mxu0 %v4934
    %6879 = vmatprep.subr.bf16.mxu0 %v4927
    %6880 = vmatpush1.bf16.msra.mxu0 %v4926
    %6881 = vmatprep.subr.bf16.mxu0 %v5047
    %6882 = vmatpush2.bf16.msra.mxu0 %v5046
    %6883 = vmatprep.subr.bf16.mxu0 %v5039
    %6884 = vmatpush2.bf16.msra.mxu0 %v5038
    %6885 = vmatprep.subr.bf16.mxu0 %v5031
    %6886 = vmatpush2.bf16.msra.mxu0 %v5030
    %6887 = vmatprep.subr.bf16.mxu0 %v5023
    %6888 = vmatpush2.bf16.msra.mxu0 %v5022
    %6889 = vmatprep.subr.bf16.mxu0 %v5015
    %6890 = vmatpush2.bf16.msra.mxu0 %v5014
    %6891 = vmatprep.subr.bf16.mxu0 %v5007
    %6892 = vmatpush2.bf16.msra.mxu0 %v5006
    %6893 = vmatprep.subr.bf16.mxu0 %v4999
    %6894 = vmatpush2.bf16.msra.mxu0 %v4998
    %6895 = vmatprep.subr.bf16.mxu0 %v4991
    %6896 = vmatpush2.bf16.msra.mxu0 %v4990
    %6897 = vmatprep.mubr.bf16.mxu0 %v141
    %6898 = vmatmul.mubr.bf16.gmra.mxu0 %v140
    %v6899 = vpop.f32.mrf.mxu0
    %v6900 = vadd.f32 %v6859, %v6899
    %v6901 = vpop.f32.mrf.mxu0
    %v6902 = vadd.f32 %v6861, %v6901
    %v6903 = vpop.f32.mrf.mxu0
    %v6904 = vpop.f32.mrf.mxu0
    %6905 = vdwg.mxu0
    %6906 = vmatprep.subr.bf16.mxu0 %v5111
    %6907 = vmatpush1.bf16.msra.mxu0 %v5110
    %6908 = vmatprep.subr.bf16.mxu0 %v5103
    %6909 = vmatpush1.bf16.msra.mxu0 %v5102
    %6910 = vmatprep.subr.bf16.mxu0 %v5095
    %6911 = vmatpush1.bf16.msra.mxu0 %v5094
    %6912 = vmatprep.subr.bf16.mxu0 %v5087
    %6913 = vmatpush1.bf16.msra.mxu0 %v5086
    %6914 = vmatprep.subr.bf16.mxu0 %v5079
    %6915 = vmatpush1.bf16.msra.mxu0 %v5078
    %6916 = vmatprep.subr.bf16.mxu0 %v5071
    %6917 = vmatpush1.bf16.msra.mxu0 %v5070
    %6918 = vmatprep.subr.bf16.mxu0 %v5063
    %6919 = vmatpush1.bf16.msra.mxu0 %v5062
    %6920 = vmatprep.subr.bf16.mxu0 %v5055
    %6921 = vmatpush1.bf16.msra.mxu0 %v5054
    %6922 = vmatprep.subr.bf16.mxu0 %v5175
    %6923 = vmatpush2.bf16.msra.mxu0 %v5174
    %6924 = vmatprep.subr.bf16.mxu0 %v5167
    %6925 = vmatpush2.bf16.msra.mxu0 %v5166
    %6926 = vmatprep.subr.bf16.mxu0 %v5159
    %6927 = vmatpush2.bf16.msra.mxu0 %v5158
    %6928 = vmatprep.subr.bf16.mxu0 %v5151
    %6929 = vmatpush2.bf16.msra.mxu0 %v5150
    %6930 = vmatprep.subr.bf16.mxu0 %v5143
    %6931 = vmatpush2.bf16.msra.mxu0 %v5142
    %6932 = vmatprep.subr.bf16.mxu0 %v5135
    %6933 = vmatpush2.bf16.msra.mxu0 %v5134
    %6934 = vmatprep.subr.bf16.mxu0 %v5127
    %6935 = vmatpush2.bf16.msra.mxu0 %v5126
    %6936 = vmatprep.subr.bf16.mxu0 %v5119
    %6937 = vmatpush2.bf16.msra.mxu0 %v5118
    %6938 = vmatprep.mubr.bf16.mxu0 %v143
    %6939 = vmatmul.mubr.bf16.gmra.mxu0 %v142
    %v6940 = vpop.f32.mrf.mxu0
    %v6941 = vadd.f32 %v6900, %v6940
    %v6942 = vpop.f32.mrf.mxu0
    %v6943 = vadd.f32 %v6902, %v6942
    %v6944 = vpop.f32.mrf.mxu0
    %v6945 = vpop.f32.mrf.mxu0
    %6946 = vdwg.mxu0
    %6947 = vmatprep.subr.bf16.mxu0 %v5239
    %6948 = vmatpush1.bf16.msra.mxu0 %v5238
    %6949 = vmatprep.subr.bf16.mxu0 %v5231
    %6950 = vmatpush1.bf16.msra.mxu0 %v5230
    %6951 = vmatprep.subr.bf16.mxu0 %v5223
    %6952 = vmatpush1.bf16.msra.mxu0 %v5222
    %6953 = vmatprep.subr.bf16.mxu0 %v5215
    %6954 = vmatpush1.bf16.msra.mxu0 %v5214
    %6955 = vmatprep.subr.bf16.mxu0 %v5207
    %6956 = vmatpush1.bf16.msra.mxu0 %v5206
    %6957 = vmatprep.subr.bf16.mxu0 %v5199
    %6958 = vmatpush1.bf16.msra.mxu0 %v5198
    %6959 = vmatprep.subr.bf16.mxu0 %v5191
    %6960 = vmatpush1.bf16.msra.mxu0 %v5190
    %6961 = vmatprep.subr.bf16.mxu0 %v5183
    %6962 = vmatpush1.bf16.msra.mxu0 %v5182
    %6963 = vmatprep.subr.bf16.mxu0 %v5303
    %6964 = vmatpush2.bf16.msra.mxu0 %v5302
    %6965 = vmatprep.subr.bf16.mxu0 %v5295
    %6966 = vmatpush2.bf16.msra.mxu0 %v5294
    %6967 = vmatprep.subr.bf16.mxu0 %v5287
    %6968 = vmatpush2.bf16.msra.mxu0 %v5286
    %6969 = vmatprep.subr.bf16.mxu0 %v5279
    %6970 = vmatpush2.bf16.msra.mxu0 %v5278
    %6971 = vmatprep.subr.bf16.mxu0 %v5271
    %6972 = vmatpush2.bf16.msra.mxu0 %v5270
    %6973 = vmatprep.subr.bf16.mxu0 %v5263
    %6974 = vmatpush2.bf16.msra.mxu0 %v5262
    %6975 = vmatprep.subr.bf16.mxu0 %v5255
    %6976 = vmatpush2.bf16.msra.mxu0 %v5254
    %6977 = vmatprep.subr.bf16.mxu0 %v5247
    %6978 = vmatpush2.bf16.msra.mxu0 %v5246
    %6979 = vmatprep.mubr.bf16.mxu0 %v145
    %6980 = vmatmul.mubr.bf16.gmra.mxu0 %v144
    %v6981 = vpop.f32.mrf.mxu0
    %v6982 = vadd.f32 %v6941, %v6981
    %v6983 = vpop.f32.mrf.mxu0
    %v6984 = vadd.f32 %v6943, %v6983
    %v6985 = vpop.f32.mrf.mxu0
    %v6986 = vpop.f32.mrf.mxu0
    %6987 = vdwg.mxu0
    %6988 = vmatprep.subr.bf16.mxu0 %v4345
    %6989 = vmatpush1.bf16.msra.mxu0 %v4344
    %6990 = vmatprep.subr.bf16.mxu0 %v4337
    %6991 = vmatpush1.bf16.msra.mxu0 %v4336
    %6992 = vmatprep.subr.bf16.mxu0 %v4329
    %6993 = vmatpush1.bf16.msra.mxu0 %v4328
    %6994 = vmatprep.subr.bf16.mxu0 %v4321
    %6995 = vmatpush1.bf16.msra.mxu0 %v4320
    %6996 = vmatprep.subr.bf16.mxu0 %v4313
    %6997 = vmatpush1.bf16.msra.mxu0 %v4312
    %6998 = vmatprep.subr.bf16.mxu0 %v4305
    %6999 = vmatpush1.bf16.msra.mxu0 %v4304
    %7000 = vmatprep.subr.bf16.mxu0 %v4297
    %7001 = vmatpush1.bf16.msra.mxu0 %v4296
    %7002 = vmatprep.subr.bf16.mxu0 %v4289
    %7003 = vmatpush1.bf16.msra.mxu0 %v4288
    %7004 = vmatprep.subr.bf16.mxu0 %v4409
    %7005 = vmatpush2.bf16.msra.mxu0 %v4408
    %7006 = vmatprep.subr.bf16.mxu0 %v4401
    %7007 = vmatpush2.bf16.msra.mxu0 %v4400
    %7008 = vmatprep.subr.bf16.mxu0 %v4393
    %7009 = vmatpush2.bf16.msra.mxu0 %v4392
    %7010 = vmatprep.subr.bf16.mxu0 %v4385
    %7011 = vmatpush2.bf16.msra.mxu0 %v4384
    %7012 = vmatprep.subr.bf16.mxu0 %v4377
    %7013 = vmatpush2.bf16.msra.mxu0 %v4376
    %7014 = vmatprep.subr.bf16.mxu0 %v4369
    %7015 = vmatpush2.bf16.msra.mxu0 %v4368
    %7016 = vmatprep.subr.bf16.mxu0 %v4361
    %7017 = vmatpush2.bf16.msra.mxu0 %v4360
    %7018 = vmatprep.subr.bf16.mxu0 %v4353
    %7019 = vmatpush2.bf16.msra.mxu0 %v4352
    %7020 = vmatprep.mubr.bf16.mxu0 %v131
    %7021 = vmatmul.mubr.bf16.gmra.mxu0 %v130
    %v7022 = vpop.f32.mrf.mxu0
    %v7023 = vadd.f32 %v1191, %v7022
    %v7024 = vpop.f32.mrf.mxu0
    %v7025 = vadd.f32 %v1195, %v7024
    %v7026 = vpop.f32.mrf.mxu0
    %v7027 = vpop.f32.mrf.mxu0
    %7028 = vdwg.mxu0
    %7029 = vmatprep.subr.bf16.mxu0 %v4473
    %7030 = vmatpush1.bf16.msra.mxu0 %v4472
    %7031 = vmatprep.subr.bf16.mxu0 %v4465
    %7032 = vmatpush1.bf16.msra.mxu0 %v4464
    %7033 = vmatprep.subr.bf16.mxu0 %v4457
    %7034 = vmatpush1.bf16.msra.mxu0 %v4456
    %7035 = vmatprep.subr.bf16.mxu0 %v4449
    %7036 = vmatpush1.bf16.msra.mxu0 %v4448
    %7037 = vmatprep.subr.bf16.mxu0 %v4441
    %7038 = vmatpush1.bf16.msra.mxu0 %v4440
    %7039 = vmatprep.subr.bf16.mxu0 %v4433
    %7040 = vmatpush1.bf16.msra.mxu0 %v4432
    %7041 = vmatprep.subr.bf16.mxu0 %v4425
    %7042 = vmatpush1.bf16.msra.mxu0 %v4424
    %7043 = vmatprep.subr.bf16.mxu0 %v4417
    %7044 = vmatpush1.bf16.msra.mxu0 %v4416
    %7045 = vmatprep.subr.bf16.mxu0 %v4537
    %7046 = vmatpush2.bf16.msra.mxu0 %v4536
    %7047 = vmatprep.subr.bf16.mxu0 %v4529
    %7048 = vmatpush2.bf16.msra.mxu0 %v4528
    %7049 = vmatprep.subr.bf16.mxu0 %v4521
    %7050 = vmatpush2.bf16.msra.mxu0 %v4520
    %7051 = vmatprep.subr.bf16.mxu0 %v4513
    %7052 = vmatpush2.bf16.msra.mxu0 %v4512
    %7053 = vmatprep.subr.bf16.mxu0 %v4505
    %7054 = vmatpush2.bf16.msra.mxu0 %v4504
    %7055 = vmatprep.subr.bf16.mxu0 %v4497
    %7056 = vmatpush2.bf16.msra.mxu0 %v4496
    %7057 = vmatprep.subr.bf16.mxu0 %v4489
    %7058 = vmatpush2.bf16.msra.mxu0 %v4488
    %7059 = vmatprep.subr.bf16.mxu0 %v4481
    %7060 = vmatpush2.bf16.msra.mxu0 %v4480
    %7061 = vmatprep.mubr.bf16.mxu0 %v133
    %7062 = vmatmul.mubr.bf16.gmra.mxu0 %v132
    %v7063 = vpop.f32.mrf.mxu0
    %v7064 = vadd.f32 %v7023, %v7063
    %v7065 = vpop.f32.mrf.mxu0
    %v7066 = vadd.f32 %v7025, %v7065
    %v7067 = vpop.f32.mrf.mxu0
    %v7068 = vpop.f32.mrf.mxu0
    %7069 = vdwg.mxu0
    %7070 = vmatprep.subr.bf16.mxu0 %v4601
    %7071 = vmatpush1.bf16.msra.mxu0 %v4600
    %7072 = vmatprep.subr.bf16.mxu0 %v4593
    %7073 = vmatpush1.bf16.msra.mxu0 %v4592
    %7074 = vmatprep.subr.bf16.mxu0 %v4585
    %7075 = vmatpush1.bf16.msra.mxu0 %v4584
    %7076 = vmatprep.subr.bf16.mxu0 %v4577
    %7077 = vmatpush1.bf16.msra.mxu0 %v4576
    %7078 = vmatprep.subr.bf16.mxu0 %v4569
    %7079 = vmatpush1.bf16.msra.mxu0 %v4568
    %7080 = vmatprep.subr.bf16.mxu0 %v4561
    %7081 = vmatpush1.bf16.msra.mxu0 %v4560
    %7082 = vmatprep.subr.bf16.mxu0 %v4553
    %7083 = vmatpush1.bf16.msra.mxu0 %v4552
    %7084 = vmatprep.subr.bf16.mxu0 %v4545
    %7085 = vmatpush1.bf16.msra.mxu0 %v4544
    %7086 = vmatprep.subr.bf16.mxu0 %v4665
    %7087 = vmatpush2.bf16.msra.mxu0 %v4664
    %7088 = vmatprep.subr.bf16.mxu0 %v4657
    %7089 = vmatpush2.bf16.msra.mxu0 %v4656
    %7090 = vmatprep.subr.bf16.mxu0 %v4649
    %7091 = vmatpush2.bf16.msra.mxu0 %v4648
    %7092 = vmatprep.subr.bf16.mxu0 %v4641
    %7093 = vmatpush2.bf16.msra.mxu0 %v4640
    %7094 = vmatprep.subr.bf16.mxu0 %v4633
    %7095 = vmatpush2.bf16.msra.mxu0 %v4632
    %7096 = vmatprep.subr.bf16.mxu0 %v4625
    %7097 = vmatpush2.bf16.msra.mxu0 %v4624
    %7098 = vmatprep.subr.bf16.mxu0 %v4617
    %7099 = vmatpush2.bf16.msra.mxu0 %v4616
    %7100 = vmatprep.subr.bf16.mxu0 %v4609
    %7101 = vmatpush2.bf16.msra.mxu0 %v4608
    %7102 = vmatprep.mubr.bf16.mxu0 %v135
    %7103 = vmatmul.mubr.bf16.gmra.mxu0 %v134
    %v7104 = vpop.f32.mrf.mxu0
    %v7105 = vadd.f32 %v7064, %v7104
    %v7106 = vpop.f32.mrf.mxu0
    %v7107 = vadd.f32 %v7066, %v7106
    %v7108 = vpop.f32.mrf.mxu0
    %v7109 = vpop.f32.mrf.mxu0
    %7110 = vdwg.mxu0
    %7111 = vmatprep.subr.bf16.mxu0 %v4729
    %7112 = vmatpush1.bf16.msra.mxu0 %v4728
    %7113 = vmatprep.subr.bf16.mxu0 %v4721
    %7114 = vmatpush1.bf16.msra.mxu0 %v4720
    %7115 = vmatprep.subr.bf16.mxu0 %v4713
    %7116 = vmatpush1.bf16.msra.mxu0 %v4712
    %7117 = vmatprep.subr.bf16.mxu0 %v4705
    %7118 = vmatpush1.bf16.msra.mxu0 %v4704
    %7119 = vmatprep.subr.bf16.mxu0 %v4697
    %7120 = vmatpush1.bf16.msra.mxu0 %v4696
    %7121 = vmatprep.subr.bf16.mxu0 %v4689
    %7122 = vmatpush1.bf16.msra.mxu0 %v4688
    %7123 = vmatprep.subr.bf16.mxu0 %v4681
    %7124 = vmatpush1.bf16.msra.mxu0 %v4680
    %7125 = vmatprep.subr.bf16.mxu0 %v4673
    %7126 = vmatpush1.bf16.msra.mxu0 %v4672
    %7127 = vmatprep.subr.bf16.mxu0 %v4793
    %7128 = vmatpush2.bf16.msra.mxu0 %v4792
    %7129 = vmatprep.subr.bf16.mxu0 %v4785
    %7130 = vmatpush2.bf16.msra.mxu0 %v4784
    %7131 = vmatprep.subr.bf16.mxu0 %v4777
    %7132 = vmatpush2.bf16.msra.mxu0 %v4776
    %7133 = vmatprep.subr.bf16.mxu0 %v4769
    %7134 = vmatpush2.bf16.msra.mxu0 %v4768
    %7135 = vmatprep.subr.bf16.mxu0 %v4761
    %7136 = vmatpush2.bf16.msra.mxu0 %v4760
    %7137 = vmatprep.subr.bf16.mxu0 %v4753
    %7138 = vmatpush2.bf16.msra.mxu0 %v4752
    %7139 = vmatprep.subr.bf16.mxu0 %v4745
    %7140 = vmatpush2.bf16.msra.mxu0 %v4744
    %7141 = vmatprep.subr.bf16.mxu0 %v4737
    %7142 = vmatpush2.bf16.msra.mxu0 %v4736
    %7143 = vmatprep.mubr.bf16.mxu0 %v137
    %7144 = vmatmul.mubr.bf16.gmra.mxu0 %v136
    %v7145 = vpop.f32.mrf.mxu0
    %v7146 = vadd.f32 %v7105, %v7145
    %v7147 = vpop.f32.mrf.mxu0
    %v7148 = vadd.f32 %v7107, %v7147
    %v7149 = vpop.f32.mrf.mxu0
    %v7150 = vpop.f32.mrf.mxu0
    %7151 = vdwg.mxu0
    %7152 = vmatprep.subr.bf16.mxu0 %v4857
    %7153 = vmatpush1.bf16.msra.mxu0 %v4856
    %7154 = vmatprep.subr.bf16.mxu0 %v4849
    %7155 = vmatpush1.bf16.msra.mxu0 %v4848
    %7156 = vmatprep.subr.bf16.mxu0 %v4841
    %7157 = vmatpush1.bf16.msra.mxu0 %v4840
    %7158 = vmatprep.subr.bf16.mxu0 %v4833
    %7159 = vmatpush1.bf16.msra.mxu0 %v4832
    %7160 = vmatprep.subr.bf16.mxu0 %v4825
    %7161 = vmatpush1.bf16.msra.mxu0 %v4824
    %7162 = vmatprep.subr.bf16.mxu0 %v4817
    %7163 = vmatpush1.bf16.msra.mxu0 %v4816
    %7164 = vmatprep.subr.bf16.mxu0 %v4809
    %7165 = vmatpush1.bf16.msra.mxu0 %v4808
    %7166 = vmatprep.subr.bf16.mxu0 %v4801
    %7167 = vmatpush1.bf16.msra.mxu0 %v4800
    %7168 = vmatprep.subr.bf16.mxu0 %v4921
    %7169 = vmatpush2.bf16.msra.mxu0 %v4920
    %7170 = vmatprep.subr.bf16.mxu0 %v4913
    %7171 = vmatpush2.bf16.msra.mxu0 %v4912
    %7172 = vmatprep.subr.bf16.mxu0 %v4905
    %7173 = vmatpush2.bf16.msra.mxu0 %v4904
    %7174 = vmatprep.subr.bf16.mxu0 %v4897
    %7175 = vmatpush2.bf16.msra.mxu0 %v4896
    %7176 = vmatprep.subr.bf16.mxu0 %v4889
    %7177 = vmatpush2.bf16.msra.mxu0 %v4888
    %7178 = vmatprep.subr.bf16.mxu0 %v4881
    %7179 = vmatpush2.bf16.msra.mxu0 %v4880
    %7180 = vmatprep.subr.bf16.mxu0 %v4873
    %7181 = vmatpush2.bf16.msra.mxu0 %v4872
    %7182 = vmatprep.subr.bf16.mxu0 %v4865
    %7183 = vmatpush2.bf16.msra.mxu0 %v4864
    %7184 = vmatprep.mubr.bf16.mxu0 %v139
    %7185 = vmatmul.mubr.bf16.gmra.mxu0 %v138
    %v7186 = vpop.f32.mrf.mxu0
    %v7187 = vadd.f32 %v7146, %v7186
    %v7188 = vpop.f32.mrf.mxu0
    %v7189 = vadd.f32 %v7148, %v7188
    %v7190 = vpop.f32.mrf.mxu0
    %v7191 = vpop.f32.mrf.mxu0
    %7192 = vdwg.mxu0
    %7193 = vmatprep.subr.bf16.mxu0 %v4985
    %7194 = vmatpush1.bf16.msra.mxu0 %v4984
    %7195 = vmatprep.subr.bf16.mxu0 %v4977
    %7196 = vmatpush1.bf16.msra.mxu0 %v4976
    %7197 = vmatprep.subr.bf16.mxu0 %v4969
    %7198 = vmatpush1.bf16.msra.mxu0 %v4968
    %7199 = vmatprep.subr.bf16.mxu0 %v4961
    %7200 = vmatpush1.bf16.msra.mxu0 %v4960
    %7201 = vmatprep.subr.bf16.mxu0 %v4953
    %7202 = vmatpush1.bf16.msra.mxu0 %v4952
    %7203 = vmatprep.subr.bf16.mxu0 %v4945
    %7204 = vmatpush1.bf16.msra.mxu0 %v4944
    %7205 = vmatprep.subr.bf16.mxu0 %v4937
    %7206 = vmatpush1.bf16.msra.mxu0 %v4936
    %7207 = vmatprep.subr.bf16.mxu0 %v4929
    %7208 = vmatpush1.bf16.msra.mxu0 %v4928
    %7209 = vmatprep.subr.bf16.mxu0 %v5049
    %7210 = vmatpush2.bf16.msra.mxu0 %v5048
    %7211 = vmatprep.subr.bf16.mxu0 %v5041
    %7212 = vmatpush2.bf16.msra.mxu0 %v5040
    %7213 = vmatprep.subr.bf16.mxu0 %v5033
    %7214 = vmatpush2.bf16.msra.mxu0 %v5032
    %7215 = vmatprep.subr.bf16.mxu0 %v5025
    %7216 = vmatpush2.bf16.msra.mxu0 %v5024
    %7217 = vmatprep.subr.bf16.mxu0 %v5017
    %7218 = vmatpush2.bf16.msra.mxu0 %v5016
    %7219 = vmatprep.subr.bf16.mxu0 %v5009
    %7220 = vmatpush2.bf16.msra.mxu0 %v5008
    %7221 = vmatprep.subr.bf16.mxu0 %v5001
    %7222 = vmatpush2.bf16.msra.mxu0 %v5000
    %7223 = vmatprep.subr.bf16.mxu0 %v4993
    %7224 = vmatpush2.bf16.msra.mxu0 %v4992
    %7225 = vmatprep.mubr.bf16.mxu0 %v141
    %7226 = vmatmul.mubr.bf16.gmra.mxu0 %v140
    %v7227 = vpop.f32.mrf.mxu0
    %v7228 = vadd.f32 %v7187, %v7227
    %v7229 = vpop.f32.mrf.mxu0
    %v7230 = vadd.f32 %v7189, %v7229
    %v7231 = vpop.f32.mrf.mxu0
    %v7232 = vpop.f32.mrf.mxu0
    %7233 = vdwg.mxu0
    %7234 = vmatprep.subr.bf16.mxu0 %v5113
    %7235 = vmatpush1.bf16.msra.mxu0 %v5112
    %7236 = vmatprep.subr.bf16.mxu0 %v5105
    %7237 = vmatpush1.bf16.msra.mxu0 %v5104
    %7238 = vmatprep.subr.bf16.mxu0 %v5097
    %7239 = vmatpush1.bf16.msra.mxu0 %v5096
    %7240 = vmatprep.subr.bf16.mxu0 %v5089
    %7241 = vmatpush1.bf16.msra.mxu0 %v5088
    %7242 = vmatprep.subr.bf16.mxu0 %v5081
    %7243 = vmatpush1.bf16.msra.mxu0 %v5080
    %7244 = vmatprep.subr.bf16.mxu0 %v5073
    %7245 = vmatpush1.bf16.msra.mxu0 %v5072
    %7246 = vmatprep.subr.bf16.mxu0 %v5065
    %7247 = vmatpush1.bf16.msra.mxu0 %v5064
    %7248 = vmatprep.subr.bf16.mxu0 %v5057
    %7249 = vmatpush1.bf16.msra.mxu0 %v5056
    %7250 = vmatprep.subr.bf16.mxu0 %v5177
    %7251 = vmatpush2.bf16.msra.mxu0 %v5176
    %7252 = vmatprep.subr.bf16.mxu0 %v5169
    %7253 = vmatpush2.bf16.msra.mxu0 %v5168
    %7254 = vmatprep.subr.bf16.mxu0 %v5161
    %7255 = vmatpush2.bf16.msra.mxu0 %v5160
    %7256 = vmatprep.subr.bf16.mxu0 %v5153
    %7257 = vmatpush2.bf16.msra.mxu0 %v5152
    %7258 = vmatprep.subr.bf16.mxu0 %v5145
    %7259 = vmatpush2.bf16.msra.mxu0 %v5144
    %7260 = vmatprep.subr.bf16.mxu0 %v5137
    %7261 = vmatpush2.bf16.msra.mxu0 %v5136
    %7262 = vmatprep.subr.bf16.mxu0 %v5129
    %7263 = vmatpush2.bf16.msra.mxu0 %v5128
    %7264 = vmatprep.subr.bf16.mxu0 %v5121
    %7265 = vmatpush2.bf16.msra.mxu0 %v5120
    %7266 = vmatprep.mubr.bf16.mxu0 %v143
    %7267 = vmatmul.mubr.bf16.gmra.mxu0 %v142
    %v7268 = vpop.f32.mrf.mxu0
    %v7269 = vadd.f32 %v7228, %v7268
    %v7270 = vpop.f32.mrf.mxu0
    %v7271 = vadd.f32 %v7230, %v7270
    %v7272 = vpop.f32.mrf.mxu0
    %v7273 = vpop.f32.mrf.mxu0
    %7274 = vdwg.mxu0
    %7275 = vmatprep.subr.bf16.mxu0 %v5241
    %7276 = vmatpush1.bf16.msra.mxu0 %v5240
    %7277 = vmatprep.subr.bf16.mxu0 %v5233
    %7278 = vmatpush1.bf16.msra.mxu0 %v5232
    %7279 = vmatprep.subr.bf16.mxu0 %v5225
    %7280 = vmatpush1.bf16.msra.mxu0 %v5224
    %7281 = vmatprep.subr.bf16.mxu0 %v5217
    %7282 = vmatpush1.bf16.msra.mxu0 %v5216
    %7283 = vmatprep.subr.bf16.mxu0 %v5209
    %7284 = vmatpush1.bf16.msra.mxu0 %v5208
    %7285 = vmatprep.subr.bf16.mxu0 %v5201
    %7286 = vmatpush1.bf16.msra.mxu0 %v5200
    %7287 = vmatprep.subr.bf16.mxu0 %v5193
    %7288 = vmatpush1.bf16.msra.mxu0 %v5192
    %7289 = vmatprep.subr.bf16.mxu0 %v5185
    %7290 = vmatpush1.bf16.msra.mxu0 %v5184
    %7291 = vmatprep.subr.bf16.mxu0 %v5305
    %7292 = vmatpush2.bf16.msra.mxu0 %v5304
    %7293 = vmatprep.subr.bf16.mxu0 %v5297
    %7294 = vmatpush2.bf16.msra.mxu0 %v5296
    %7295 = vmatprep.subr.bf16.mxu0 %v5289
    %7296 = vmatpush2.bf16.msra.mxu0 %v5288
    %7297 = vmatprep.subr.bf16.mxu0 %v5281
    %7298 = vmatpush2.bf16.msra.mxu0 %v5280
    %7299 = vmatprep.subr.bf16.mxu0 %v5273
    %7300 = vmatpush2.bf16.msra.mxu0 %v5272
    %7301 = vmatprep.subr.bf16.mxu0 %v5265
    %7302 = vmatpush2.bf16.msra.mxu0 %v5264
    %7303 = vmatprep.subr.bf16.mxu0 %v5257
    %7304 = vmatpush2.bf16.msra.mxu0 %v5256
    %7305 = vmatprep.subr.bf16.mxu0 %v5249
    %7306 = vmatpush2.bf16.msra.mxu0 %v5248
    %7307 = vmatprep.mubr.bf16.mxu0 %v145
    %7308 = vmatmul.mubr.bf16.gmra.mxu0 %v144
    %v7309 = vpop.f32.mrf.mxu0
    %v7310 = vadd.f32 %v7269, %v7309
    %v7311 = vpop.f32.mrf.mxu0
    %v7312 = vadd.f32 %v7271, %v7311
    %v7313 = vpop.f32.mrf.mxu0
    %v7314 = vpop.f32.mrf.mxu0
    %7315 = vdwg.mxu0
    %7316 = vmatprep.subr.bf16.mxu0 %v4347
    %7317 = vmatpush1.bf16.msra.mxu0 %v4346
    %7318 = vmatprep.subr.bf16.mxu0 %v4339
    %7319 = vmatpush1.bf16.msra.mxu0 %v4338
    %7320 = vmatprep.subr.bf16.mxu0 %v4331
    %7321 = vmatpush1.bf16.msra.mxu0 %v4330
    %7322 = vmatprep.subr.bf16.mxu0 %v4323
    %7323 = vmatpush1.bf16.msra.mxu0 %v4322
    %7324 = vmatprep.subr.bf16.mxu0 %v4315
    %7325 = vmatpush1.bf16.msra.mxu0 %v4314
    %7326 = vmatprep.subr.bf16.mxu0 %v4307
    %7327 = vmatpush1.bf16.msra.mxu0 %v4306
    %7328 = vmatprep.subr.bf16.mxu0 %v4299
    %7329 = vmatpush1.bf16.msra.mxu0 %v4298
    %7330 = vmatprep.subr.bf16.mxu0 %v4291
    %7331 = vmatpush1.bf16.msra.mxu0 %v4290
    %7332 = vmatprep.subr.bf16.mxu0 %v4411
    %7333 = vmatpush2.bf16.msra.mxu0 %v4410
    %7334 = vmatprep.subr.bf16.mxu0 %v4403
    %7335 = vmatpush2.bf16.msra.mxu0 %v4402
    %7336 = vmatprep.subr.bf16.mxu0 %v4395
    %7337 = vmatpush2.bf16.msra.mxu0 %v4394
    %7338 = vmatprep.subr.bf16.mxu0 %v4387
    %7339 = vmatpush2.bf16.msra.mxu0 %v4386
    %7340 = vmatprep.subr.bf16.mxu0 %v4379
    %7341 = vmatpush2.bf16.msra.mxu0 %v4378
    %7342 = vmatprep.subr.bf16.mxu0 %v4371
    %7343 = vmatpush2.bf16.msra.mxu0 %v4370
    %7344 = vmatprep.subr.bf16.mxu0 %v4363
    %7345 = vmatpush2.bf16.msra.mxu0 %v4362
    %7346 = vmatprep.subr.bf16.mxu0 %v4355
    %7347 = vmatpush2.bf16.msra.mxu0 %v4354
    %7348 = vmatprep.mubr.bf16.mxu0 %v131
    %7349 = vmatmul.mubr.bf16.gmra.mxu0 %v130
    %v7350 = vpop.f32.mrf.mxu0
    %v7351 = vadd.f32 %v1199, %v7350
    %v7352 = vpop.f32.mrf.mxu0
    %v7353 = vadd.f32 %v1203, %v7352
    %v7354 = vpop.f32.mrf.mxu0
    %v7355 = vpop.f32.mrf.mxu0
    %7356 = vdwg.mxu0
    %7357 = vmatprep.subr.bf16.mxu0 %v4475
    %7358 = vmatpush1.bf16.msra.mxu0 %v4474
    %7359 = vmatprep.subr.bf16.mxu0 %v4467
    %7360 = vmatpush1.bf16.msra.mxu0 %v4466
    %7361 = vmatprep.subr.bf16.mxu0 %v4459
    %7362 = vmatpush1.bf16.msra.mxu0 %v4458
    %7363 = vmatprep.subr.bf16.mxu0 %v4451
    %7364 = vmatpush1.bf16.msra.mxu0 %v4450
    %7365 = vmatprep.subr.bf16.mxu0 %v4443
    %7366 = vmatpush1.bf16.msra.mxu0 %v4442
    %7367 = vmatprep.subr.bf16.mxu0 %v4435
    %7368 = vmatpush1.bf16.msra.mxu0 %v4434
    %7369 = vmatprep.subr.bf16.mxu0 %v4427
    %7370 = vmatpush1.bf16.msra.mxu0 %v4426
    %7371 = vmatprep.subr.bf16.mxu0 %v4419
    %7372 = vmatpush1.bf16.msra.mxu0 %v4418
    %7373 = vmatprep.subr.bf16.mxu0 %v4539
    %7374 = vmatpush2.bf16.msra.mxu0 %v4538
    %7375 = vmatprep.subr.bf16.mxu0 %v4531
    %7376 = vmatpush2.bf16.msra.mxu0 %v4530
    %7377 = vmatprep.subr.bf16.mxu0 %v4523
    %7378 = vmatpush2.bf16.msra.mxu0 %v4522
    %7379 = vmatprep.subr.bf16.mxu0 %v4515
    %7380 = vmatpush2.bf16.msra.mxu0 %v4514
    %7381 = vmatprep.subr.bf16.mxu0 %v4507
    %7382 = vmatpush2.bf16.msra.mxu0 %v4506
    %7383 = vmatprep.subr.bf16.mxu0 %v4499
    %7384 = vmatpush2.bf16.msra.mxu0 %v4498
    %7385 = vmatprep.subr.bf16.mxu0 %v4491
    %7386 = vmatpush2.bf16.msra.mxu0 %v4490
    %7387 = vmatprep.subr.bf16.mxu0 %v4483
    %7388 = vmatpush2.bf16.msra.mxu0 %v4482
    %7389 = vmatprep.mubr.bf16.mxu0 %v133
    %7390 = vmatmul.mubr.bf16.gmra.mxu0 %v132
    %v7391 = vpop.f32.mrf.mxu0
    %v7392 = vadd.f32 %v7351, %v7391
    %v7393 = vpop.f32.mrf.mxu0
    %v7394 = vadd.f32 %v7353, %v7393
    %v7395 = vpop.f32.mrf.mxu0
    %v7396 = vpop.f32.mrf.mxu0
    %7397 = vdwg.mxu0
    %7398 = vmatprep.subr.bf16.mxu0 %v4603
    %7399 = vmatpush1.bf16.msra.mxu0 %v4602
    %7400 = vmatprep.subr.bf16.mxu0 %v4595
    %7401 = vmatpush1.bf16.msra.mxu0 %v4594
    %7402 = vmatprep.subr.bf16.mxu0 %v4587
    %7403 = vmatpush1.bf16.msra.mxu0 %v4586
    %7404 = vmatprep.subr.bf16.mxu0 %v4579
    %7405 = vmatpush1.bf16.msra.mxu0 %v4578
    %7406 = vmatprep.subr.bf16.mxu0 %v4571
    %7407 = vmatpush1.bf16.msra.mxu0 %v4570
    %7408 = vmatprep.subr.bf16.mxu0 %v4563
    %7409 = vmatpush1.bf16.msra.mxu0 %v4562
    %7410 = vmatprep.subr.bf16.mxu0 %v4555
    %7411 = vmatpush1.bf16.msra.mxu0 %v4554
    %7412 = vmatprep.subr.bf16.mxu0 %v4547
    %7413 = vmatpush1.bf16.msra.mxu0 %v4546
    %7414 = vmatprep.subr.bf16.mxu0 %v4667
    %7415 = vmatpush2.bf16.msra.mxu0 %v4666
    %7416 = vmatprep.subr.bf16.mxu0 %v4659
    %7417 = vmatpush2.bf16.msra.mxu0 %v4658
    %7418 = vmatprep.subr.bf16.mxu0 %v4651
    %7419 = vmatpush2.bf16.msra.mxu0 %v4650
    %7420 = vmatprep.subr.bf16.mxu0 %v4643
    %7421 = vmatpush2.bf16.msra.mxu0 %v4642
    %7422 = vmatprep.subr.bf16.mxu0 %v4635
    %7423 = vmatpush2.bf16.msra.mxu0 %v4634
    %7424 = vmatprep.subr.bf16.mxu0 %v4627
    %7425 = vmatpush2.bf16.msra.mxu0 %v4626
    %7426 = vmatprep.subr.bf16.mxu0 %v4619
    %7427 = vmatpush2.bf16.msra.mxu0 %v4618
    %7428 = vmatprep.subr.bf16.mxu0 %v4611
    %7429 = vmatpush2.bf16.msra.mxu0 %v4610
    %7430 = vmatprep.mubr.bf16.mxu0 %v135
    %7431 = vmatmul.mubr.bf16.gmra.mxu0 %v134
    %v7432 = vpop.f32.mrf.mxu0
    %v7433 = vadd.f32 %v7392, %v7432
    %v7434 = vpop.f32.mrf.mxu0
    %v7435 = vadd.f32 %v7394, %v7434
    %v7436 = vpop.f32.mrf.mxu0
    %v7437 = vpop.f32.mrf.mxu0
    %7438 = vdwg.mxu0
    %7439 = vmatprep.subr.bf16.mxu0 %v4731
    %7440 = vmatpush1.bf16.msra.mxu0 %v4730
    %7441 = vmatprep.subr.bf16.mxu0 %v4723
    %7442 = vmatpush1.bf16.msra.mxu0 %v4722
    %7443 = vmatprep.subr.bf16.mxu0 %v4715
    %7444 = vmatpush1.bf16.msra.mxu0 %v4714
    %7445 = vmatprep.subr.bf16.mxu0 %v4707
    %7446 = vmatpush1.bf16.msra.mxu0 %v4706
    %7447 = vmatprep.subr.bf16.mxu0 %v4699
    %7448 = vmatpush1.bf16.msra.mxu0 %v4698
    %7449 = vmatprep.subr.bf16.mxu0 %v4691
    %7450 = vmatpush1.bf16.msra.mxu0 %v4690
    %7451 = vmatprep.subr.bf16.mxu0 %v4683
    %7452 = vmatpush1.bf16.msra.mxu0 %v4682
    %7453 = vmatprep.subr.bf16.mxu0 %v4675
    %7454 = vmatpush1.bf16.msra.mxu0 %v4674
    %7455 = vmatprep.subr.bf16.mxu0 %v4795
    %7456 = vmatpush2.bf16.msra.mxu0 %v4794
    %7457 = vmatprep.subr.bf16.mxu0 %v4787
    %7458 = vmatpush2.bf16.msra.mxu0 %v4786
    %7459 = vmatprep.subr.bf16.mxu0 %v4779
    %7460 = vmatpush2.bf16.msra.mxu0 %v4778
    %7461 = vmatprep.subr.bf16.mxu0 %v4771
    %7462 = vmatpush2.bf16.msra.mxu0 %v4770
    %7463 = vmatprep.subr.bf16.mxu0 %v4763
    %7464 = vmatpush2.bf16.msra.mxu0 %v4762
    %7465 = vmatprep.subr.bf16.mxu0 %v4755
    %7466 = vmatpush2.bf16.msra.mxu0 %v4754
    %7467 = vmatprep.subr.bf16.mxu0 %v4747
    %7468 = vmatpush2.bf16.msra.mxu0 %v4746
    %7469 = vmatprep.subr.bf16.mxu0 %v4739
    %7470 = vmatpush2.bf16.msra.mxu0 %v4738
    %7471 = vmatprep.mubr.bf16.mxu0 %v137
    %7472 = vmatmul.mubr.bf16.gmra.mxu0 %v136
    %v7473 = vpop.f32.mrf.mxu0
    %v7474 = vadd.f32 %v7433, %v7473
    %v7475 = vpop.f32.mrf.mxu0
    %v7476 = vadd.f32 %v7435, %v7475
    %v7477 = vpop.f32.mrf.mxu0
    %v7478 = vpop.f32.mrf.mxu0
    %7479 = vdwg.mxu0
    %7480 = vmatprep.subr.bf16.mxu0 %v4859
    %7481 = vmatpush1.bf16.msra.mxu0 %v4858
    %7482 = vmatprep.subr.bf16.mxu0 %v4851
    %7483 = vmatpush1.bf16.msra.mxu0 %v4850
    %7484 = vmatprep.subr.bf16.mxu0 %v4843
    %7485 = vmatpush1.bf16.msra.mxu0 %v4842
    %7486 = vmatprep.subr.bf16.mxu0 %v4835
    %7487 = vmatpush1.bf16.msra.mxu0 %v4834
    %7488 = vmatprep.subr.bf16.mxu0 %v4827
    %7489 = vmatpush1.bf16.msra.mxu0 %v4826
    %7490 = vmatprep.subr.bf16.mxu0 %v4819
    %7491 = vmatpush1.bf16.msra.mxu0 %v4818
    %7492 = vmatprep.subr.bf16.mxu0 %v4811
    %7493 = vmatpush1.bf16.msra.mxu0 %v4810
    %7494 = vmatprep.subr.bf16.mxu0 %v4803
    %7495 = vmatpush1.bf16.msra.mxu0 %v4802
    %7496 = vmatprep.subr.bf16.mxu0 %v4923
    %7497 = vmatpush2.bf16.msra.mxu0 %v4922
    %7498 = vmatprep.subr.bf16.mxu0 %v4915
    %7499 = vmatpush2.bf16.msra.mxu0 %v4914
    %7500 = vmatprep.subr.bf16.mxu0 %v4907
    %7501 = vmatpush2.bf16.msra.mxu0 %v4906
    %7502 = vmatprep.subr.bf16.mxu0 %v4899
    %7503 = vmatpush2.bf16.msra.mxu0 %v4898
    %7504 = vmatprep.subr.bf16.mxu0 %v4891
    %7505 = vmatpush2.bf16.msra.mxu0 %v4890
    %7506 = vmatprep.subr.bf16.mxu0 %v4883
    %7507 = vmatpush2.bf16.msra.mxu0 %v4882
    %7508 = vmatprep.subr.bf16.mxu0 %v4875
    %7509 = vmatpush2.bf16.msra.mxu0 %v4874
    %7510 = vmatprep.subr.bf16.mxu0 %v4867
    %7511 = vmatpush2.bf16.msra.mxu0 %v4866
    %7512 = vmatprep.mubr.bf16.mxu0 %v139
    %7513 = vmatmul.mubr.bf16.gmra.mxu0 %v138
    %v7514 = vpop.f32.mrf.mxu0
    %v7515 = vadd.f32 %v7474, %v7514
    %v7516 = vpop.f32.mrf.mxu0
    %v7517 = vadd.f32 %v7476, %v7516
    %v7518 = vpop.f32.mrf.mxu0
    %v7519 = vpop.f32.mrf.mxu0
    %7520 = vdwg.mxu0
    %7521 = vmatprep.subr.bf16.mxu0 %v4987
    %7522 = vmatpush1.bf16.msra.mxu0 %v4986
    %7523 = vmatprep.subr.bf16.mxu0 %v4979
    %7524 = vmatpush1.bf16.msra.mxu0 %v4978
    %7525 = vmatprep.subr.bf16.mxu0 %v4971
    %7526 = vmatpush1.bf16.msra.mxu0 %v4970
    %7527 = vmatprep.subr.bf16.mxu0 %v4963
    %7528 = vmatpush1.bf16.msra.mxu0 %v4962
    %7529 = vmatprep.subr.bf16.mxu0 %v4955
    %7530 = vmatpush1.bf16.msra.mxu0 %v4954
    %7531 = vmatprep.subr.bf16.mxu0 %v4947
    %7532 = vmatpush1.bf16.msra.mxu0 %v4946
    %7533 = vmatprep.subr.bf16.mxu0 %v4939
    %7534 = vmatpush1.bf16.msra.mxu0 %v4938
    %7535 = vmatprep.subr.bf16.mxu0 %v4931
    %7536 = vmatpush1.bf16.msra.mxu0 %v4930
    %7537 = vmatprep.subr.bf16.mxu0 %v5051
    %7538 = vmatpush2.bf16.msra.mxu0 %v5050
    %7539 = vmatprep.subr.bf16.mxu0 %v5043
    %7540 = vmatpush2.bf16.msra.mxu0 %v5042
    %7541 = vmatprep.subr.bf16.mxu0 %v5035
    %7542 = vmatpush2.bf16.msra.mxu0 %v5034
    %7543 = vmatprep.subr.bf16.mxu0 %v5027
    %7544 = vmatpush2.bf16.msra.mxu0 %v5026
    %7545 = vmatprep.subr.bf16.mxu0 %v5019
    %7546 = vmatpush2.bf16.msra.mxu0 %v5018
    %7547 = vmatprep.subr.bf16.mxu0 %v5011
    %7548 = vmatpush2.bf16.msra.mxu0 %v5010
    %7549 = vmatprep.subr.bf16.mxu0 %v5003
    %7550 = vmatpush2.bf16.msra.mxu0 %v5002
    %7551 = vmatprep.subr.bf16.mxu0 %v4995
    %7552 = vmatpush2.bf16.msra.mxu0 %v4994
    %7553 = vmatprep.mubr.bf16.mxu0 %v141
    %7554 = vmatmul.mubr.bf16.gmra.mxu0 %v140
    %v7555 = vpop.f32.mrf.mxu0
    %v7556 = vadd.f32 %v7515, %v7555
    %v7557 = vpop.f32.mrf.mxu0
    %v7558 = vadd.f32 %v7517, %v7557
    %v7559 = vpop.f32.mrf.mxu0
    %v7560 = vpop.f32.mrf.mxu0
    %7561 = vdwg.mxu0
    %7562 = vmatprep.subr.bf16.mxu0 %v5115
    %7563 = vmatpush1.bf16.msra.mxu0 %v5114
    %7564 = vmatprep.subr.bf16.mxu0 %v5107
    %7565 = vmatpush1.bf16.msra.mxu0 %v5106
    %7566 = vmatprep.subr.bf16.mxu0 %v5099
    %7567 = vmatpush1.bf16.msra.mxu0 %v5098
    %7568 = vmatprep.subr.bf16.mxu0 %v5091
    %7569 = vmatpush1.bf16.msra.mxu0 %v5090
    %7570 = vmatprep.subr.bf16.mxu0 %v5083
    %7571 = vmatpush1.bf16.msra.mxu0 %v5082
    %7572 = vmatprep.subr.bf16.mxu0 %v5075
    %7573 = vmatpush1.bf16.msra.mxu0 %v5074
    %7574 = vmatprep.subr.bf16.mxu0 %v5067
    %7575 = vmatpush1.bf16.msra.mxu0 %v5066
    %7576 = vmatprep.subr.bf16.mxu0 %v5059
    %7577 = vmatpush1.bf16.msra.mxu0 %v5058
    %7578 = vmatprep.subr.bf16.mxu0 %v5179
    %7579 = vmatpush2.bf16.msra.mxu0 %v5178
    %7580 = vmatprep.subr.bf16.mxu0 %v5171
    %7581 = vmatpush2.bf16.msra.mxu0 %v5170
    %7582 = vmatprep.subr.bf16.mxu0 %v5163
    %7583 = vmatpush2.bf16.msra.mxu0 %v5162
    %7584 = vmatprep.subr.bf16.mxu0 %v5155
    %7585 = vmatpush2.bf16.msra.mxu0 %v5154
    %7586 = vmatprep.subr.bf16.mxu0 %v5147
    %7587 = vmatpush2.bf16.msra.mxu0 %v5146
    %7588 = vmatprep.subr.bf16.mxu0 %v5139
    %7589 = vmatpush2.bf16.msra.mxu0 %v5138
    %7590 = vmatprep.subr.bf16.mxu0 %v5131
    %7591 = vmatpush2.bf16.msra.mxu0 %v5130
    %7592 = vmatprep.subr.bf16.mxu0 %v5123
    %7593 = vmatpush2.bf16.msra.mxu0 %v5122
    %7594 = vmatprep.mubr.bf16.mxu0 %v143
    %7595 = vmatmul.mubr.bf16.gmra.mxu0 %v142
    %v7596 = vpop.f32.mrf.mxu0
    %v7597 = vadd.f32 %v7556, %v7596
    %v7598 = vpop.f32.mrf.mxu0
    %v7599 = vadd.f32 %v7558, %v7598
    %v7600 = vpop.f32.mrf.mxu0
    %v7601 = vpop.f32.mrf.mxu0
    %7602 = vdwg.mxu0
    %7603 = vmatprep.subr.bf16.mxu0 %v5243
    %7604 = vmatpush1.bf16.msra.mxu0 %v5242
    %7605 = vmatprep.subr.bf16.mxu0 %v5235
    %7606 = vmatpush1.bf16.msra.mxu0 %v5234
    %7607 = vmatprep.subr.bf16.mxu0 %v5227
    %7608 = vmatpush1.bf16.msra.mxu0 %v5226
    %7609 = vmatprep.subr.bf16.mxu0 %v5219
    %7610 = vmatpush1.bf16.msra.mxu0 %v5218
    %7611 = vmatprep.subr.bf16.mxu0 %v5211
    %7612 = vmatpush1.bf16.msra.mxu0 %v5210
    %7613 = vmatprep.subr.bf16.mxu0 %v5203
    %7614 = vmatpush1.bf16.msra.mxu0 %v5202
    %7615 = vmatprep.subr.bf16.mxu0 %v5195
    %7616 = vmatpush1.bf16.msra.mxu0 %v5194
    %7617 = vmatprep.subr.bf16.mxu0 %v5187
    %7618 = vmatpush1.bf16.msra.mxu0 %v5186
    %7619 = vmatprep.subr.bf16.mxu0 %v5307
    %7620 = vmatpush2.bf16.msra.mxu0 %v5306
    %7621 = vmatprep.subr.bf16.mxu0 %v5299
    %7622 = vmatpush2.bf16.msra.mxu0 %v5298
    %7623 = vmatprep.subr.bf16.mxu0 %v5291
    %7624 = vmatpush2.bf16.msra.mxu0 %v5290
    %7625 = vmatprep.subr.bf16.mxu0 %v5283
    %7626 = vmatpush2.bf16.msra.mxu0 %v5282
    %7627 = vmatprep.subr.bf16.mxu0 %v5275
    %7628 = vmatpush2.bf16.msra.mxu0 %v5274
    %7629 = vmatprep.subr.bf16.mxu0 %v5267
    %7630 = vmatpush2.bf16.msra.mxu0 %v5266
    %7631 = vmatprep.subr.bf16.mxu0 %v5259
    %7632 = vmatpush2.bf16.msra.mxu0 %v5258
    %7633 = vmatprep.subr.bf16.mxu0 %v5251
    %7634 = vmatpush2.bf16.msra.mxu0 %v5250
    %7635 = vmatprep.mubr.bf16.mxu0 %v145
    %7636 = vmatmul.mubr.bf16.gmra.mxu0 %v144
    %v7637 = vpop.f32.mrf.mxu0
    %v7638 = vadd.f32 %v7597, %v7637
    %v7639 = vpop.f32.mrf.mxu0
    %v7640 = vadd.f32 %v7599, %v7639
    %v7641 = vpop.f32.mrf.mxu0
    %v7642 = vpop.f32.mrf.mxu0
    %7643 = vdwg.mxu0
    %v7644 = vmax.f32 %v6654, 0.0
    %v7645 = vmax.f32 %v6656, 0.0
    %v7646 = vmax.f32 %v6982, 0.0
    %v7647 = vmax.f32 %v6984, 0.0
    %v7648 = vmax.f32 %v7310, 0.0
    %v7649 = vmax.f32 %v7312, 0.0
    %v7650 = vmax.f32 %v7638, 0.0
    %v7651 = vmax.f32 %v7640, 0.0
    %v7652 = vpack.c.bf16 %v7644, %v7644
    %v7653 = vpack.c.bf16 %v7645, %v7645
    %v7654 = vpack.c.bf16 %v7646, %v7646
    %v7655 = vpack.c.bf16 %v7647, %v7647
    %v7656 = vpack.c.bf16 %v7648, %v7648
    %v7657 = vpack.c.bf16 %v7649, %v7649
    %v7658 = vpack.c.bf16 %v7650, %v7650
    %v7659 = vpack.c.bf16 %v7651, %v7651
    %v7660 = vld [vmem:[#allocation7] sm:$0xff]
    %v7661 = vld [vmem:[#allocation7 + $0x8] sm:$0xff]
    %v7662 = vld [vmem:[#allocation7 + $0x10] sm:$0xff]
    %v7663 = vld [vmem:[#allocation7 + $0x18] sm:$0xff]
    %v7664 = vld [vmem:[#allocation7 + $0x20] sm:$0xff]
    %v7665 = vld [vmem:[#allocation7 + $0x28] sm:$0xff]
    %v7666 = vld [vmem:[#allocation7 + $0x30] sm:$0xff]
    %v7667 = vld [vmem:[#allocation7 + $0x38] sm:$0xff]
    %v7668 = vld [vmem:[#allocation7 + $0x40] sm:$0xff]
    %v7669 = vld [vmem:[#allocation7 + $0x48] sm:$0xff]
    %v7670 = vld [vmem:[#allocation7 + $0x50] sm:$0xff]
    %v7671 = vld [vmem:[#allocation7 + $0x58] sm:$0xff]
    %v7672 = vld [vmem:[#allocation7 + $0x60] sm:$0xff]
    %v7673 = vld [vmem:[#allocation7 + $0x68] sm:$0xff]
    %v7674 = vld [vmem:[#allocation7 + $0x70] sm:$0xff]
    %v7675 = vld [vmem:[#allocation7 + $0x78] sm:$0xff]
    %v7676 = vld [vmem:[#allocation7 + $0x80] sm:$0xff]
    %v7677 = vld [vmem:[#allocation7 + $0x88] sm:$0xff]
    %v7678 = vld [vmem:[#allocation7 + $0x90] sm:$0xff]
    %v7679 = vld [vmem:[#allocation7 + $0x98] sm:$0xff]
    %v7680 = vld [vmem:[#allocation7 + $0xa0] sm:$0xff]
    %v7681 = vld [vmem:[#allocation7 + $0xa8] sm:$0xff]
    %v7682 = vld [vmem:[#allocation7 + $0xb0] sm:$0xff]
    %v7683 = vld [vmem:[#allocation7 + $0xb8] sm:$0xff]
    %v7684 = vld [vmem:[#allocation7 + $0xc0] sm:$0xff]
    %v7685 = vld [vmem:[#allocation7 + $0xc8] sm:$0xff]
    %v7686 = vld [vmem:[#allocation7 + $0xd0] sm:$0xff]
    %v7687 = vld [vmem:[#allocation7 + $0xd8] sm:$0xff]
    %v7688 = vld [vmem:[#allocation7 + $0xe0] sm:$0xff]
    %v7689 = vld [vmem:[#allocation7 + $0xe8] sm:$0xff]
    %v7690 = vld [vmem:[#allocation7 + $0xf0] sm:$0xff]
    %v7691 = vld [vmem:[#allocation7 + $0xf8] sm:$0xff]
    %v7692 = vld [vmem:[#allocation7 + $0x100] sm:$0xff]
    %v7693 = vld [vmem:[#allocation7 + $0x108] sm:$0xff]
    %v7694 = vld [vmem:[#allocation7 + $0x110] sm:$0xff]
    %v7695 = vld [vmem:[#allocation7 + $0x118] sm:$0xff]
    %v7696 = vld [vmem:[#allocation7 + $0x120] sm:$0xff]
    %v7697 = vld [vmem:[#allocation7 + $0x128] sm:$0xff]
    %v7698 = vld [vmem:[#allocation7 + $0x130] sm:$0xff]
    %v7699 = vld [vmem:[#allocation7 + $0x138] sm:$0xff]
    %v7700 = vld [vmem:[#allocation7 + $0x140] sm:$0xff]
    %v7701 = vld [vmem:[#allocation7 + $0x148] sm:$0xff]
    %v7702 = vld [vmem:[#allocation7 + $0x150] sm:$0xff]
    %v7703 = vld [vmem:[#allocation7 + $0x158] sm:$0xff]
    %v7704 = vld [vmem:[#allocation7 + $0x160] sm:$0xff]
    %v7705 = vld [vmem:[#allocation7 + $0x168] sm:$0xff]
    %v7706 = vld [vmem:[#allocation7 + $0x170] sm:$0xff]
    %v7707 = vld [vmem:[#allocation7 + $0x178] sm:$0xff]
    %v7708 = vld [vmem:[#allocation7 + $0x180] sm:$0xff]
    %v7709 = vld [vmem:[#allocation7 + $0x188] sm:$0xff]
    %v7710 = vld [vmem:[#allocation7 + $0x190] sm:$0xff]
    %v7711 = vld [vmem:[#allocation7 + $0x198] sm:$0xff]
    %v7712 = vld [vmem:[#allocation7 + $0x1a0] sm:$0xff]
    %v7713 = vld [vmem:[#allocation7 + $0x1a8] sm:$0xff]
    %v7714 = vld [vmem:[#allocation7 + $0x1b0] sm:$0xff]
    %v7715 = vld [vmem:[#allocation7 + $0x1b8] sm:$0xff]
    %v7716 = vld [vmem:[#allocation7 + $0x1c0] sm:$0xff]
    %v7717 = vld [vmem:[#allocation7 + $0x1c8] sm:$0xff]
    %v7718 = vld [vmem:[#allocation7 + $0x1d0] sm:$0xff]
    %v7719 = vld [vmem:[#allocation7 + $0x1d8] sm:$0xff]
    %v7720 = vld [vmem:[#allocation7 + $0x1e0] sm:$0xff]
    %v7721 = vld [vmem:[#allocation7 + $0x1e8] sm:$0xff]
    %v7722 = vld [vmem:[#allocation7 + $0x1f0] sm:$0xff]
    %v7723 = vld [vmem:[#allocation7 + $0x1f8] sm:$0xff]
    %v7724 = vld [vmem:[#allocation7 + $0x200] sm:$0xff]
    %v7725 = vld [vmem:[#allocation7 + $0x208] sm:$0xff]
    %v7726 = vld [vmem:[#allocation7 + $0x210] sm:$0xff]
    %v7727 = vld [vmem:[#allocation7 + $0x218] sm:$0xff]
    %v7728 = vld [vmem:[#allocation7 + $0x220] sm:$0xff]
    %v7729 = vld [vmem:[#allocation7 + $0x228] sm:$0xff]
    %v7730 = vld [vmem:[#allocation7 + $0x230] sm:$0xff]
    %v7731 = vld [vmem:[#allocation7 + $0x238] sm:$0xff]
    %v7732 = vld [vmem:[#allocation7 + $0x240] sm:$0xff]
    %v7733 = vld [vmem:[#allocation7 + $0x248] sm:$0xff]
    %v7734 = vld [vmem:[#allocation7 + $0x250] sm:$0xff]
    %v7735 = vld [vmem:[#allocation7 + $0x258] sm:$0xff]
    %v7736 = vld [vmem:[#allocation7 + $0x260] sm:$0xff]
    %v7737 = vld [vmem:[#allocation7 + $0x268] sm:$0xff]
    %v7738 = vld [vmem:[#allocation7 + $0x270] sm:$0xff]
    %v7739 = vld [vmem:[#allocation7 + $0x278] sm:$0xff]
    %v7740 = vld [vmem:[#allocation7 + $0x280] sm:$0xff]
    %v7741 = vld [vmem:[#allocation7 + $0x288] sm:$0xff]
    %v7742 = vld [vmem:[#allocation7 + $0x290] sm:$0xff]
    %v7743 = vld [vmem:[#allocation7 + $0x298] sm:$0xff]
    %v7744 = vld [vmem:[#allocation7 + $0x2a0] sm:$0xff]
    %v7745 = vld [vmem:[#allocation7 + $0x2a8] sm:$0xff]
    %v7746 = vld [vmem:[#allocation7 + $0x2b0] sm:$0xff]
    %v7747 = vld [vmem:[#allocation7 + $0x2b8] sm:$0xff]
    %v7748 = vld [vmem:[#allocation7 + $0x2c0] sm:$0xff]
    %v7749 = vld [vmem:[#allocation7 + $0x2c8] sm:$0xff]
    %v7750 = vld [vmem:[#allocation7 + $0x2d0] sm:$0xff]
    %v7751 = vld [vmem:[#allocation7 + $0x2d8] sm:$0xff]
    %v7752 = vld [vmem:[#allocation7 + $0x2e0] sm:$0xff]
    %v7753 = vld [vmem:[#allocation7 + $0x2e8] sm:$0xff]
    %v7754 = vld [vmem:[#allocation7 + $0x2f0] sm:$0xff]
    %v7755 = vld [vmem:[#allocation7 + $0x2f8] sm:$0xff]
    %v7756 = vld [vmem:[#allocation7 + $0x300] sm:$0xff]
    %v7757 = vld [vmem:[#allocation7 + $0x308] sm:$0xff]
    %v7758 = vld [vmem:[#allocation7 + $0x310] sm:$0xff]
    %v7759 = vld [vmem:[#allocation7 + $0x318] sm:$0xff]
    %v7760 = vld [vmem:[#allocation7 + $0x320] sm:$0xff]
    %v7761 = vld [vmem:[#allocation7 + $0x328] sm:$0xff]
    %v7762 = vld [vmem:[#allocation7 + $0x330] sm:$0xff]
    %v7763 = vld [vmem:[#allocation7 + $0x338] sm:$0xff]
    %v7764 = vld [vmem:[#allocation7 + $0x340] sm:$0xff]
    %v7765 = vld [vmem:[#allocation7 + $0x348] sm:$0xff]
    %v7766 = vld [vmem:[#allocation7 + $0x350] sm:$0xff]
    %v7767 = vld [vmem:[#allocation7 + $0x358] sm:$0xff]
    %v7768 = vld [vmem:[#allocation7 + $0x360] sm:$0xff]
    %v7769 = vld [vmem:[#allocation7 + $0x368] sm:$0xff]
    %v7770 = vld [vmem:[#allocation7 + $0x370] sm:$0xff]
    %v7771 = vld [vmem:[#allocation7 + $0x378] sm:$0xff]
    %v7772 = vld [vmem:[#allocation7 + $0x380] sm:$0xff]
    %v7773 = vld [vmem:[#allocation7 + $0x388] sm:$0xff]
    %v7774 = vld [vmem:[#allocation7 + $0x390] sm:$0xff]
    %v7775 = vld [vmem:[#allocation7 + $0x398] sm:$0xff]
    %v7776 = vld [vmem:[#allocation7 + $0x3a0] sm:$0xff]
    %v7777 = vld [vmem:[#allocation7 + $0x3a8] sm:$0xff]
    %v7778 = vld [vmem:[#allocation7 + $0x3b0] sm:$0xff]
    %v7779 = vld [vmem:[#allocation7 + $0x3b8] sm:$0xff]
    %v7780 = vld [vmem:[#allocation7 + $0x3c0] sm:$0xff]
    %v7781 = vld [vmem:[#allocation7 + $0x3c8] sm:$0xff]
    %v7782 = vld [vmem:[#allocation7 + $0x3d0] sm:$0xff]
    %v7783 = vld [vmem:[#allocation7 + $0x3d8] sm:$0xff]
    %v7784 = vld [vmem:[#allocation7 + $0x3e0] sm:$0xff]
    %v7785 = vld [vmem:[#allocation7 + $0x3e8] sm:$0xff]
    %v7786 = vld [vmem:[#allocation7 + $0x3f0] sm:$0xff]
    %v7787 = vld [vmem:[#allocation7 + $0x3f8] sm:$0xff]
    %v7788 = vld [vmem:[#allocation7 + $0x400] sm:$0xff]
    %v7789 = vld [vmem:[#allocation7 + $0x408] sm:$0xff]
    %v7790 = vld [vmem:[#allocation7 + $0x410] sm:$0xff]
    %v7791 = vld [vmem:[#allocation7 + $0x418] sm:$0xff]
    %v7792 = vld [vmem:[#allocation7 + $0x420] sm:$0xff]
    %v7793 = vld [vmem:[#allocation7 + $0x428] sm:$0xff]
    %v7794 = vld [vmem:[#allocation7 + $0x430] sm:$0xff]
    %v7795 = vld [vmem:[#allocation7 + $0x438] sm:$0xff]
    %v7796 = vld [vmem:[#allocation7 + $0x440] sm:$0xff]
    %v7797 = vld [vmem:[#allocation7 + $0x448] sm:$0xff]
    %v7798 = vld [vmem:[#allocation7 + $0x450] sm:$0xff]
    %v7799 = vld [vmem:[#allocation7 + $0x458] sm:$0xff]
    %v7800 = vld [vmem:[#allocation7 + $0x460] sm:$0xff]
    %v7801 = vld [vmem:[#allocation7 + $0x468] sm:$0xff]
    %v7802 = vld [vmem:[#allocation7 + $0x470] sm:$0xff]
    %v7803 = vld [vmem:[#allocation7 + $0x478] sm:$0xff]
    %v7804 = vld [vmem:[#allocation7 + $0x480] sm:$0xff]
    %v7805 = vld [vmem:[#allocation7 + $0x488] sm:$0xff]
    %v7806 = vld [vmem:[#allocation7 + $0x490] sm:$0xff]
    %v7807 = vld [vmem:[#allocation7 + $0x498] sm:$0xff]
    %v7808 = vld [vmem:[#allocation7 + $0x4a0] sm:$0xff]
    %v7809 = vld [vmem:[#allocation7 + $0x4a8] sm:$0xff]
    %v7810 = vld [vmem:[#allocation7 + $0x4b0] sm:$0xff]
    %v7811 = vld [vmem:[#allocation7 + $0x4b8] sm:$0xff]
    %v7812 = vld [vmem:[#allocation7 + $0x4c0] sm:$0xff]
    %v7813 = vld [vmem:[#allocation7 + $0x4c8] sm:$0xff]
    %v7814 = vld [vmem:[#allocation7 + $0x4d0] sm:$0xff]
    %v7815 = vld [vmem:[#allocation7 + $0x4d8] sm:$0xff]
    %v7816 = vld [vmem:[#allocation7 + $0x4e0] sm:$0xff]
    %v7817 = vld [vmem:[#allocation7 + $0x4e8] sm:$0xff]
    %v7818 = vld [vmem:[#allocation7 + $0x4f0] sm:$0xff]
    %v7819 = vld [vmem:[#allocation7 + $0x4f8] sm:$0xff]
    %v7820 = vld [vmem:[#allocation7 + $0x500] sm:$0xff]
    %v7821 = vld [vmem:[#allocation7 + $0x508] sm:$0xff]
    %v7822 = vld [vmem:[#allocation7 + $0x510] sm:$0xff]
    %v7823 = vld [vmem:[#allocation7 + $0x518] sm:$0xff]
    %v7824 = vld [vmem:[#allocation7 + $0x520] sm:$0xff]
    %v7825 = vld [vmem:[#allocation7 + $0x528] sm:$0xff]
    %v7826 = vld [vmem:[#allocation7 + $0x530] sm:$0xff]
    %v7827 = vld [vmem:[#allocation7 + $0x538] sm:$0xff]
    %v7828 = vld [vmem:[#allocation7 + $0x540] sm:$0xff]
    %v7829 = vld [vmem:[#allocation7 + $0x548] sm:$0xff]
    %v7830 = vld [vmem:[#allocation7 + $0x550] sm:$0xff]
    %v7831 = vld [vmem:[#allocation7 + $0x558] sm:$0xff]
    %v7832 = vld [vmem:[#allocation7 + $0x560] sm:$0xff]
    %v7833 = vld [vmem:[#allocation7 + $0x568] sm:$0xff]
    %v7834 = vld [vmem:[#allocation7 + $0x570] sm:$0xff]
    %v7835 = vld [vmem:[#allocation7 + $0x578] sm:$0xff]
    %v7836 = vld [vmem:[#allocation7 + $0x580] sm:$0xff]
    %v7837 = vld [vmem:[#allocation7 + $0x588] sm:$0xff]
    %v7838 = vld [vmem:[#allocation7 + $0x590] sm:$0xff]
    %v7839 = vld [vmem:[#allocation7 + $0x598] sm:$0xff]
    %v7840 = vld [vmem:[#allocation7 + $0x5a0] sm:$0xff]
    %v7841 = vld [vmem:[#allocation7 + $0x5a8] sm:$0xff]
    %v7842 = vld [vmem:[#allocation7 + $0x5b0] sm:$0xff]
    %v7843 = vld [vmem:[#allocation7 + $0x5b8] sm:$0xff]
    %v7844 = vld [vmem:[#allocation7 + $0x5c0] sm:$0xff]
    %v7845 = vld [vmem:[#allocation7 + $0x5c8] sm:$0xff]
    %v7846 = vld [vmem:[#allocation7 + $0x5d0] sm:$0xff]
    %v7847 = vld [vmem:[#allocation7 + $0x5d8] sm:$0xff]
    %v7848 = vld [vmem:[#allocation7 + $0x5e0] sm:$0xff]
    %v7849 = vld [vmem:[#allocation7 + $0x5e8] sm:$0xff]
    %v7850 = vld [vmem:[#allocation7 + $0x5f0] sm:$0xff]
    %v7851 = vld [vmem:[#allocation7 + $0x5f8] sm:$0xff]
    %v7852 = vld [vmem:[#allocation7 + $0x600] sm:$0xff]
    %v7853 = vld [vmem:[#allocation7 + $0x608] sm:$0xff]
    %v7854 = vld [vmem:[#allocation7 + $0x610] sm:$0xff]
    %v7855 = vld [vmem:[#allocation7 + $0x618] sm:$0xff]
    %v7856 = vld [vmem:[#allocation7 + $0x620] sm:$0xff]
    %v7857 = vld [vmem:[#allocation7 + $0x628] sm:$0xff]
    %v7858 = vld [vmem:[#allocation7 + $0x630] sm:$0xff]
    %v7859 = vld [vmem:[#allocation7 + $0x638] sm:$0xff]
    %v7860 = vld [vmem:[#allocation7 + $0x640] sm:$0xff]
    %v7861 = vld [vmem:[#allocation7 + $0x648] sm:$0xff]
    %v7862 = vld [vmem:[#allocation7 + $0x650] sm:$0xff]
    %v7863 = vld [vmem:[#allocation7 + $0x658] sm:$0xff]
    %v7864 = vld [vmem:[#allocation7 + $0x660] sm:$0xff]
    %v7865 = vld [vmem:[#allocation7 + $0x668] sm:$0xff]
    %v7866 = vld [vmem:[#allocation7 + $0x670] sm:$0xff]
    %v7867 = vld [vmem:[#allocation7 + $0x678] sm:$0xff]
    %v7868 = vld [vmem:[#allocation7 + $0x680] sm:$0xff]
    %v7869 = vld [vmem:[#allocation7 + $0x688] sm:$0xff]
    %v7870 = vld [vmem:[#allocation7 + $0x690] sm:$0xff]
    %v7871 = vld [vmem:[#allocation7 + $0x698] sm:$0xff]
    %v7872 = vld [vmem:[#allocation7 + $0x6a0] sm:$0xff]
    %v7873 = vld [vmem:[#allocation7 + $0x6a8] sm:$0xff]
    %v7874 = vld [vmem:[#allocation7 + $0x6b0] sm:$0xff]
    %v7875 = vld [vmem:[#allocation7 + $0x6b8] sm:$0xff]
    %v7876 = vld [vmem:[#allocation7 + $0x6c0] sm:$0xff]
    %v7877 = vld [vmem:[#allocation7 + $0x6c8] sm:$0xff]
    %v7878 = vld [vmem:[#allocation7 + $0x6d0] sm:$0xff]
    %v7879 = vld [vmem:[#allocation7 + $0x6d8] sm:$0xff]
    %v7880 = vld [vmem:[#allocation7 + $0x6e0] sm:$0xff]
    %v7881 = vld [vmem:[#allocation7 + $0x6e8] sm:$0xff]
    %v7882 = vld [vmem:[#allocation7 + $0x6f0] sm:$0xff]
    %v7883 = vld [vmem:[#allocation7 + $0x6f8] sm:$0xff]
    %v7884 = vld [vmem:[#allocation7 + $0x700] sm:$0xff]
    %v7885 = vld [vmem:[#allocation7 + $0x708] sm:$0xff]
    %v7886 = vld [vmem:[#allocation7 + $0x710] sm:$0xff]
    %v7887 = vld [vmem:[#allocation7 + $0x718] sm:$0xff]
    %v7888 = vld [vmem:[#allocation7 + $0x720] sm:$0xff]
    %v7889 = vld [vmem:[#allocation7 + $0x728] sm:$0xff]
    %v7890 = vld [vmem:[#allocation7 + $0x730] sm:$0xff]
    %v7891 = vld [vmem:[#allocation7 + $0x738] sm:$0xff]
    %v7892 = vld [vmem:[#allocation7 + $0x740] sm:$0xff]
    %v7893 = vld [vmem:[#allocation7 + $0x748] sm:$0xff]
    %v7894 = vld [vmem:[#allocation7 + $0x750] sm:$0xff]
    %v7895 = vld [vmem:[#allocation7 + $0x758] sm:$0xff]
    %v7896 = vld [vmem:[#allocation7 + $0x760] sm:$0xff]
    %v7897 = vld [vmem:[#allocation7 + $0x768] sm:$0xff]
    %v7898 = vld [vmem:[#allocation7 + $0x770] sm:$0xff]
    %v7899 = vld [vmem:[#allocation7 + $0x778] sm:$0xff]
    %v7900 = vld [vmem:[#allocation7 + $0x780] sm:$0xff]
    %v7901 = vld [vmem:[#allocation7 + $0x788] sm:$0xff]
    %v7902 = vld [vmem:[#allocation7 + $0x790] sm:$0xff]
    %v7903 = vld [vmem:[#allocation7 + $0x798] sm:$0xff]
    %v7904 = vld [vmem:[#allocation7 + $0x7a0] sm:$0xff]
    %v7905 = vld [vmem:[#allocation7 + $0x7a8] sm:$0xff]
    %v7906 = vld [vmem:[#allocation7 + $0x7b0] sm:$0xff]
    %v7907 = vld [vmem:[#allocation7 + $0x7b8] sm:$0xff]
    %v7908 = vld [vmem:[#allocation7 + $0x7c0] sm:$0xff]
    %v7909 = vld [vmem:[#allocation7 + $0x7c8] sm:$0xff]
    %v7910 = vld [vmem:[#allocation7 + $0x7d0] sm:$0xff]
    %v7911 = vld [vmem:[#allocation7 + $0x7d8] sm:$0xff]
    %v7912 = vld [vmem:[#allocation7 + $0x7e0] sm:$0xff]
    %v7913 = vld [vmem:[#allocation7 + $0x7e8] sm:$0xff]
    %v7914 = vld [vmem:[#allocation7 + $0x7f0] sm:$0xff]
    %v7915 = vld [vmem:[#allocation7 + $0x7f8] sm:$0xff]
    %v7916 = vld [vmem:[#allocation9] sm:$0xf]
    %v7918 = vlaneseq
    %v7919 = vshrl.u32 %v7918, 7
    %v7920 = vsub.s32 0, %v7919
    %v7921 = vrot.slane %v7916, %v7920
    %v7922 = vlaneseq
    %v7923 = vshrl.u32 %v7922, 7
    %v7924 = vsub.s32 1, %v7923
    %v7925 = vrot.slane %v7916, %v7924
    %v7926 = vlaneseq
    %v7927 = vshrl.u32 %v7926, 7
    %v7928 = vsub.s32 2, %v7927
    %v7929 = vrot.slane %v7916, %v7928
    %v7930 = vlaneseq
    %v7931 = vshrl.u32 %v7930, 7
    %v7932 = vsub.s32 3, %v7931
    %v7933 = vrot.slane %v7916, %v7932
    %v8194 = vunpack.c.l.b16 %v7660
    %v8195 = vunpack.c.h.b16 %v7660
    %v8196 = vunpack.c.l.b16 %v7661
    %v8197 = vunpack.c.h.b16 %v7661
    %v8198 = vunpack.c.l.b16 %v7662
    %v8199 = vunpack.c.h.b16 %v7662
    %v8200 = vunpack.c.l.b16 %v7663
    %v8201 = vunpack.c.h.b16 %v7663
    %v8202 = vunpack.c.l.b16 %v7664
    %v8203 = vunpack.c.h.b16 %v7664
    %v8204 = vunpack.c.l.b16 %v7665
    %v8205 = vunpack.c.h.b16 %v7665
    %v8206 = vunpack.c.l.b16 %v7666
    %v8207 = vunpack.c.h.b16 %v7666
    %v8208 = vunpack.c.l.b16 %v7667
    %v8209 = vunpack.c.h.b16 %v7667
    %v8210 = vunpack.c.l.b16 %v7668
    %v8211 = vunpack.c.h.b16 %v7668
    %v8212 = vunpack.c.l.b16 %v7669
    %v8213 = vunpack.c.h.b16 %v7669
    %v8214 = vunpack.c.l.b16 %v7670
    %v8215 = vunpack.c.h.b16 %v7670
    %v8216 = vunpack.c.l.b16 %v7671
    %v8217 = vunpack.c.h.b16 %v7671
    %v8218 = vunpack.c.l.b16 %v7672
    %v8219 = vunpack.c.h.b16 %v7672
    %v8220 = vunpack.c.l.b16 %v7673
    %v8221 = vunpack.c.h.b16 %v7673
    %v8222 = vunpack.c.l.b16 %v7674
    %v8223 = vunpack.c.h.b16 %v7674
    %v8224 = vunpack.c.l.b16 %v7675
    %v8225 = vunpack.c.h.b16 %v7675
    %v8226 = vunpack.c.l.b16 %v7676
    %v8227 = vunpack.c.h.b16 %v7676
    %v8228 = vunpack.c.l.b16 %v7677
    %v8229 = vunpack.c.h.b16 %v7677
    %v8230 = vunpack.c.l.b16 %v7678
    %v8231 = vunpack.c.h.b16 %v7678
    %v8232 = vunpack.c.l.b16 %v7679
    %v8233 = vunpack.c.h.b16 %v7679
    %v8234 = vunpack.c.l.b16 %v7680
    %v8235 = vunpack.c.h.b16 %v7680
    %v8236 = vunpack.c.l.b16 %v7681
    %v8237 = vunpack.c.h.b16 %v7681
    %v8238 = vunpack.c.l.b16 %v7682
    %v8239 = vunpack.c.h.b16 %v7682
    %v8240 = vunpack.c.l.b16 %v7683
    %v8241 = vunpack.c.h.b16 %v7683
    %v8242 = vunpack.c.l.b16 %v7684
    %v8243 = vunpack.c.h.b16 %v7684
    %v8244 = vunpack.c.l.b16 %v7685
    %v8245 = vunpack.c.h.b16 %v7685
    %v8246 = vunpack.c.l.b16 %v7686
    %v8247 = vunpack.c.h.b16 %v7686
    %v8248 = vunpack.c.l.b16 %v7687
    %v8249 = vunpack.c.h.b16 %v7687
    %v8250 = vunpack.c.l.b16 %v7688
    %v8251 = vunpack.c.h.b16 %v7688
    %v8252 = vunpack.c.l.b16 %v7689
    %v8253 = vunpack.c.h.b16 %v7689
    %v8254 = vunpack.c.l.b16 %v7690
    %v8255 = vunpack.c.h.b16 %v7690
    %v8256 = vunpack.c.l.b16 %v7691
    %v8257 = vunpack.c.h.b16 %v7691
    %v8258 = vunpack.c.l.b16 %v7692
    %v8259 = vunpack.c.h.b16 %v7692
    %v8260 = vunpack.c.l.b16 %v7693
    %v8261 = vunpack.c.h.b16 %v7693
    %v8262 = vunpack.c.l.b16 %v7694
    %v8263 = vunpack.c.h.b16 %v7694
    %v8264 = vunpack.c.l.b16 %v7695
    %v8265 = vunpack.c.h.b16 %v7695
    %v8266 = vunpack.c.l.b16 %v7696
    %v8267 = vunpack.c.h.b16 %v7696
    %v8268 = vunpack.c.l.b16 %v7697
    %v8269 = vunpack.c.h.b16 %v7697
    %v8270 = vunpack.c.l.b16 %v7698
    %v8271 = vunpack.c.h.b16 %v7698
    %v8272 = vunpack.c.l.b16 %v7699
    %v8273 = vunpack.c.h.b16 %v7699
    %v8274 = vunpack.c.l.b16 %v7700
    %v8275 = vunpack.c.h.b16 %v7700
    %v8276 = vunpack.c.l.b16 %v7701
    %v8277 = vunpack.c.h.b16 %v7701
    %v8278 = vunpack.c.l.b16 %v7702
    %v8279 = vunpack.c.h.b16 %v7702
    %v8280 = vunpack.c.l.b16 %v7703
    %v8281 = vunpack.c.h.b16 %v7703
    %v8282 = vunpack.c.l.b16 %v7704
    %v8283 = vunpack.c.h.b16 %v7704
    %v8284 = vunpack.c.l.b16 %v7705
    %v8285 = vunpack.c.h.b16 %v7705
    %v8286 = vunpack.c.l.b16 %v7706
    %v8287 = vunpack.c.h.b16 %v7706
    %v8288 = vunpack.c.l.b16 %v7707
    %v8289 = vunpack.c.h.b16 %v7707
    %v8290 = vunpack.c.l.b16 %v7708
    %v8291 = vunpack.c.h.b16 %v7708
    %v8292 = vunpack.c.l.b16 %v7709
    %v8293 = vunpack.c.h.b16 %v7709
    %v8294 = vunpack.c.l.b16 %v7710
    %v8295 = vunpack.c.h.b16 %v7710
    %v8296 = vunpack.c.l.b16 %v7711
    %v8297 = vunpack.c.h.b16 %v7711
    %v8298 = vunpack.c.l.b16 %v7712
    %v8299 = vunpack.c.h.b16 %v7712
    %v8300 = vunpack.c.l.b16 %v7713
    %v8301 = vunpack.c.h.b16 %v7713
    %v8302 = vunpack.c.l.b16 %v7714
    %v8303 = vunpack.c.h.b16 %v7714
    %v8304 = vunpack.c.l.b16 %v7715
    %v8305 = vunpack.c.h.b16 %v7715
    %v8306 = vunpack.c.l.b16 %v7716
    %v8307 = vunpack.c.h.b16 %v7716
    %v8308 = vunpack.c.l.b16 %v7717
    %v8309 = vunpack.c.h.b16 %v7717
    %v8310 = vunpack.c.l.b16 %v7718
    %v8311 = vunpack.c.h.b16 %v7718
    %v8312 = vunpack.c.l.b16 %v7719
    %v8313 = vunpack.c.h.b16 %v7719
    %v8314 = vunpack.c.l.b16 %v7720
    %v8315 = vunpack.c.h.b16 %v7720
    %v8316 = vunpack.c.l.b16 %v7721
    %v8317 = vunpack.c.h.b16 %v7721
    %v8318 = vunpack.c.l.b16 %v7722
    %v8319 = vunpack.c.h.b16 %v7722
    %v8320 = vunpack.c.l.b16 %v7723
    %v8321 = vunpack.c.h.b16 %v7723
    %v8322 = vunpack.c.l.b16 %v7724
    %v8323 = vunpack.c.h.b16 %v7724
    %v8324 = vunpack.c.l.b16 %v7725
    %v8325 = vunpack.c.h.b16 %v7725
    %v8326 = vunpack.c.l.b16 %v7726
    %v8327 = vunpack.c.h.b16 %v7726
    %v8328 = vunpack.c.l.b16 %v7727
    %v8329 = vunpack.c.h.b16 %v7727
    %v8330 = vunpack.c.l.b16 %v7728
    %v8331 = vunpack.c.h.b16 %v7728
    %v8332 = vunpack.c.l.b16 %v7729
    %v8333 = vunpack.c.h.b16 %v7729
    %v8334 = vunpack.c.l.b16 %v7730
    %v8335 = vunpack.c.h.b16 %v7730
    %v8336 = vunpack.c.l.b16 %v7731
    %v8337 = vunpack.c.h.b16 %v7731
    %v8338 = vunpack.c.l.b16 %v7732
    %v8339 = vunpack.c.h.b16 %v7732
    %v8340 = vunpack.c.l.b16 %v7733
    %v8341 = vunpack.c.h.b16 %v7733
    %v8342 = vunpack.c.l.b16 %v7734
    %v8343 = vunpack.c.h.b16 %v7734
    %v8344 = vunpack.c.l.b16 %v7735
    %v8345 = vunpack.c.h.b16 %v7735
    %v8346 = vunpack.c.l.b16 %v7736
    %v8347 = vunpack.c.h.b16 %v7736
    %v8348 = vunpack.c.l.b16 %v7737
    %v8349 = vunpack.c.h.b16 %v7737
    %v8350 = vunpack.c.l.b16 %v7738
    %v8351 = vunpack.c.h.b16 %v7738
    %v8352 = vunpack.c.l.b16 %v7739
    %v8353 = vunpack.c.h.b16 %v7739
    %v8354 = vunpack.c.l.b16 %v7740
    %v8355 = vunpack.c.h.b16 %v7740
    %v8356 = vunpack.c.l.b16 %v7741
    %v8357 = vunpack.c.h.b16 %v7741
    %v8358 = vunpack.c.l.b16 %v7742
    %v8359 = vunpack.c.h.b16 %v7742
    %v8360 = vunpack.c.l.b16 %v7743
    %v8361 = vunpack.c.h.b16 %v7743
    %v8362 = vunpack.c.l.b16 %v7744
    %v8363 = vunpack.c.h.b16 %v7744
    %v8364 = vunpack.c.l.b16 %v7745
    %v8365 = vunpack.c.h.b16 %v7745
    %v8366 = vunpack.c.l.b16 %v7746
    %v8367 = vunpack.c.h.b16 %v7746
    %v8368 = vunpack.c.l.b16 %v7747
    %v8369 = vunpack.c.h.b16 %v7747
    %v8370 = vunpack.c.l.b16 %v7748
    %v8371 = vunpack.c.h.b16 %v7748
    %v8372 = vunpack.c.l.b16 %v7749
    %v8373 = vunpack.c.h.b16 %v7749
    %v8374 = vunpack.c.l.b16 %v7750
    %v8375 = vunpack.c.h.b16 %v7750
    %v8376 = vunpack.c.l.b16 %v7751
    %v8377 = vunpack.c.h.b16 %v7751
    %v8378 = vunpack.c.l.b16 %v7752
    %v8379 = vunpack.c.h.b16 %v7752
    %v8380 = vunpack.c.l.b16 %v7753
    %v8381 = vunpack.c.h.b16 %v7753
    %v8382 = vunpack.c.l.b16 %v7754
    %v8383 = vunpack.c.h.b16 %v7754
    %v8384 = vunpack.c.l.b16 %v7755
    %v8385 = vunpack.c.h.b16 %v7755
    %v8386 = vunpack.c.l.b16 %v7756
    %v8387 = vunpack.c.h.b16 %v7756
    %v8388 = vunpack.c.l.b16 %v7757
    %v8389 = vunpack.c.h.b16 %v7757
    %v8390 = vunpack.c.l.b16 %v7758
    %v8391 = vunpack.c.h.b16 %v7758
    %v8392 = vunpack.c.l.b16 %v7759
    %v8393 = vunpack.c.h.b16 %v7759
    %v8394 = vunpack.c.l.b16 %v7760
    %v8395 = vunpack.c.h.b16 %v7760
    %v8396 = vunpack.c.l.b16 %v7761
    %v8397 = vunpack.c.h.b16 %v7761
    %v8398 = vunpack.c.l.b16 %v7762
    %v8399 = vunpack.c.h.b16 %v7762
    %v8400 = vunpack.c.l.b16 %v7763
    %v8401 = vunpack.c.h.b16 %v7763
    %v8402 = vunpack.c.l.b16 %v7764
    %v8403 = vunpack.c.h.b16 %v7764
    %v8404 = vunpack.c.l.b16 %v7765
    %v8405 = vunpack.c.h.b16 %v7765
    %v8406 = vunpack.c.l.b16 %v7766
    %v8407 = vunpack.c.h.b16 %v7766
    %v8408 = vunpack.c.l.b16 %v7767
    %v8409 = vunpack.c.h.b16 %v7767
    %v8410 = vunpack.c.l.b16 %v7768
    %v8411 = vunpack.c.h.b16 %v7768
    %v8412 = vunpack.c.l.b16 %v7769
    %v8413 = vunpack.c.h.b16 %v7769
    %v8414 = vunpack.c.l.b16 %v7770
    %v8415 = vunpack.c.h.b16 %v7770
    %v8416 = vunpack.c.l.b16 %v7771
    %v8417 = vunpack.c.h.b16 %v7771
    %v8418 = vunpack.c.l.b16 %v7772
    %v8419 = vunpack.c.h.b16 %v7772
    %v8420 = vunpack.c.l.b16 %v7773
    %v8421 = vunpack.c.h.b16 %v7773
    %v8422 = vunpack.c.l.b16 %v7774
    %v8423 = vunpack.c.h.b16 %v7774
    %v8424 = vunpack.c.l.b16 %v7775
    %v8425 = vunpack.c.h.b16 %v7775
    %v8426 = vunpack.c.l.b16 %v7776
    %v8427 = vunpack.c.h.b16 %v7776
    %v8428 = vunpack.c.l.b16 %v7777
    %v8429 = vunpack.c.h.b16 %v7777
    %v8430 = vunpack.c.l.b16 %v7778
    %v8431 = vunpack.c.h.b16 %v7778
    %v8432 = vunpack.c.l.b16 %v7779
    %v8433 = vunpack.c.h.b16 %v7779
    %v8434 = vunpack.c.l.b16 %v7780
    %v8435 = vunpack.c.h.b16 %v7780
    %v8436 = vunpack.c.l.b16 %v7781
    %v8437 = vunpack.c.h.b16 %v7781
    %v8438 = vunpack.c.l.b16 %v7782
    %v8439 = vunpack.c.h.b16 %v7782
    %v8440 = vunpack.c.l.b16 %v7783
    %v8441 = vunpack.c.h.b16 %v7783
    %v8442 = vunpack.c.l.b16 %v7784
    %v8443 = vunpack.c.h.b16 %v7784
    %v8444 = vunpack.c.l.b16 %v7785
    %v8445 = vunpack.c.h.b16 %v7785
    %v8446 = vunpack.c.l.b16 %v7786
    %v8447 = vunpack.c.h.b16 %v7786
    %v8448 = vunpack.c.l.b16 %v7787
    %v8449 = vunpack.c.h.b16 %v7787
    %v8450 = vunpack.c.l.b16 %v7788
    %v8451 = vunpack.c.h.b16 %v7788
    %v8452 = vunpack.c.l.b16 %v7789
    %v8453 = vunpack.c.h.b16 %v7789
    %v8454 = vunpack.c.l.b16 %v7790
    %v8455 = vunpack.c.h.b16 %v7790
    %v8456 = vunpack.c.l.b16 %v7791
    %v8457 = vunpack.c.h.b16 %v7791
    %v8458 = vunpack.c.l.b16 %v7792
    %v8459 = vunpack.c.h.b16 %v7792
    %v8460 = vunpack.c.l.b16 %v7793
    %v8461 = vunpack.c.h.b16 %v7793
    %v8462 = vunpack.c.l.b16 %v7794
    %v8463 = vunpack.c.h.b16 %v7794
    %v8464 = vunpack.c.l.b16 %v7795
    %v8465 = vunpack.c.h.b16 %v7795
    %v8466 = vunpack.c.l.b16 %v7796
    %v8467 = vunpack.c.h.b16 %v7796
    %v8468 = vunpack.c.l.b16 %v7797
    %v8469 = vunpack.c.h.b16 %v7797
    %v8470 = vunpack.c.l.b16 %v7798
    %v8471 = vunpack.c.h.b16 %v7798
    %v8472 = vunpack.c.l.b16 %v7799
    %v8473 = vunpack.c.h.b16 %v7799
    %v8474 = vunpack.c.l.b16 %v7800
    %v8475 = vunpack.c.h.b16 %v7800
    %v8476 = vunpack.c.l.b16 %v7801
    %v8477 = vunpack.c.h.b16 %v7801
    %v8478 = vunpack.c.l.b16 %v7802
    %v8479 = vunpack.c.h.b16 %v7802
    %v8480 = vunpack.c.l.b16 %v7803
    %v8481 = vunpack.c.h.b16 %v7803
    %v8482 = vunpack.c.l.b16 %v7804
    %v8483 = vunpack.c.h.b16 %v7804
    %v8484 = vunpack.c.l.b16 %v7805
    %v8485 = vunpack.c.h.b16 %v7805
    %v8486 = vunpack.c.l.b16 %v7806
    %v8487 = vunpack.c.h.b16 %v7806
    %v8488 = vunpack.c.l.b16 %v7807
    %v8489 = vunpack.c.h.b16 %v7807
    %v8490 = vunpack.c.l.b16 %v7808
    %v8491 = vunpack.c.h.b16 %v7808
    %v8492 = vunpack.c.l.b16 %v7809
    %v8493 = vunpack.c.h.b16 %v7809
    %v8494 = vunpack.c.l.b16 %v7810
    %v8495 = vunpack.c.h.b16 %v7810
    %v8496 = vunpack.c.l.b16 %v7811
    %v8497 = vunpack.c.h.b16 %v7811
    %v8498 = vunpack.c.l.b16 %v7812
    %v8499 = vunpack.c.h.b16 %v7812
    %v8500 = vunpack.c.l.b16 %v7813
    %v8501 = vunpack.c.h.b16 %v7813
    %v8502 = vunpack.c.l.b16 %v7814
    %v8503 = vunpack.c.h.b16 %v7814
    %v8504 = vunpack.c.l.b16 %v7815
    %v8505 = vunpack.c.h.b16 %v7815
    %v8506 = vunpack.c.l.b16 %v7816
    %v8507 = vunpack.c.h.b16 %v7816
    %v8508 = vunpack.c.l.b16 %v7817
    %v8509 = vunpack.c.h.b16 %v7817
    %v8510 = vunpack.c.l.b16 %v7818
    %v8511 = vunpack.c.h.b16 %v7818
    %v8512 = vunpack.c.l.b16 %v7819
    %v8513 = vunpack.c.h.b16 %v7819
    %v8514 = vunpack.c.l.b16 %v7820
    %v8515 = vunpack.c.h.b16 %v7820
    %v8516 = vunpack.c.l.b16 %v7821
    %v8517 = vunpack.c.h.b16 %v7821
    %v8518 = vunpack.c.l.b16 %v7822
    %v8519 = vunpack.c.h.b16 %v7822
    %v8520 = vunpack.c.l.b16 %v7823
    %v8521 = vunpack.c.h.b16 %v7823
    %v8522 = vunpack.c.l.b16 %v7824
    %v8523 = vunpack.c.h.b16 %v7824
    %v8524 = vunpack.c.l.b16 %v7825
    %v8525 = vunpack.c.h.b16 %v7825
    %v8526 = vunpack.c.l.b16 %v7826
    %v8527 = vunpack.c.h.b16 %v7826
    %v8528 = vunpack.c.l.b16 %v7827
    %v8529 = vunpack.c.h.b16 %v7827
    %v8530 = vunpack.c.l.b16 %v7828
    %v8531 = vunpack.c.h.b16 %v7828
    %v8532 = vunpack.c.l.b16 %v7829
    %v8533 = vunpack.c.h.b16 %v7829
    %v8534 = vunpack.c.l.b16 %v7830
    %v8535 = vunpack.c.h.b16 %v7830
    %v8536 = vunpack.c.l.b16 %v7831
    %v8537 = vunpack.c.h.b16 %v7831
    %v8538 = vunpack.c.l.b16 %v7832
    %v8539 = vunpack.c.h.b16 %v7832
    %v8540 = vunpack.c.l.b16 %v7833
    %v8541 = vunpack.c.h.b16 %v7833
    %v8542 = vunpack.c.l.b16 %v7834
    %v8543 = vunpack.c.h.b16 %v7834
    %v8544 = vunpack.c.l.b16 %v7835
    %v8545 = vunpack.c.h.b16 %v7835
    %v8546 = vunpack.c.l.b16 %v7836
    %v8547 = vunpack.c.h.b16 %v7836
    %v8548 = vunpack.c.l.b16 %v7837
    %v8549 = vunpack.c.h.b16 %v7837
    %v8550 = vunpack.c.l.b16 %v7838
    %v8551 = vunpack.c.h.b16 %v7838
    %v8552 = vunpack.c.l.b16 %v7839
    %v8553 = vunpack.c.h.b16 %v7839
    %v8554 = vunpack.c.l.b16 %v7840
    %v8555 = vunpack.c.h.b16 %v7840
    %v8556 = vunpack.c.l.b16 %v7841
    %v8557 = vunpack.c.h.b16 %v7841
    %v8558 = vunpack.c.l.b16 %v7842
    %v8559 = vunpack.c.h.b16 %v7842
    %v8560 = vunpack.c.l.b16 %v7843
    %v8561 = vunpack.c.h.b16 %v7843
    %v8562 = vunpack.c.l.b16 %v7844
    %v8563 = vunpack.c.h.b16 %v7844
    %v8564 = vunpack.c.l.b16 %v7845
    %v8565 = vunpack.c.h.b16 %v7845
    %v8566 = vunpack.c.l.b16 %v7846
    %v8567 = vunpack.c.h.b16 %v7846
    %v8568 = vunpack.c.l.b16 %v7847
    %v8569 = vunpack.c.h.b16 %v7847
    %v8570 = vunpack.c.l.b16 %v7848
    %v8571 = vunpack.c.h.b16 %v7848
    %v8572 = vunpack.c.l.b16 %v7849
    %v8573 = vunpack.c.h.b16 %v7849
    %v8574 = vunpack.c.l.b16 %v7850
    %v8575 = vunpack.c.h.b16 %v7850
    %v8576 = vunpack.c.l.b16 %v7851
    %v8577 = vunpack.c.h.b16 %v7851
    %v8578 = vunpack.c.l.b16 %v7852
    %v8579 = vunpack.c.h.b16 %v7852
    %v8580 = vunpack.c.l.b16 %v7853
    %v8581 = vunpack.c.h.b16 %v7853
    %v8582 = vunpack.c.l.b16 %v7854
    %v8583 = vunpack.c.h.b16 %v7854
    %v8584 = vunpack.c.l.b16 %v7855
    %v8585 = vunpack.c.h.b16 %v7855
    %v8586 = vunpack.c.l.b16 %v7856
    %v8587 = vunpack.c.h.b16 %v7856
    %v8588 = vunpack.c.l.b16 %v7857
    %v8589 = vunpack.c.h.b16 %v7857
    %v8590 = vunpack.c.l.b16 %v7858
    %v8591 = vunpack.c.h.b16 %v7858
    %v8592 = vunpack.c.l.b16 %v7859
    %v8593 = vunpack.c.h.b16 %v7859
    %v8594 = vunpack.c.l.b16 %v7860
    %v8595 = vunpack.c.h.b16 %v7860
    %v8596 = vunpack.c.l.b16 %v7861
    %v8597 = vunpack.c.h.b16 %v7861
    %v8598 = vunpack.c.l.b16 %v7862
    %v8599 = vunpack.c.h.b16 %v7862
    %v8600 = vunpack.c.l.b16 %v7863
    %v8601 = vunpack.c.h.b16 %v7863
    %v8602 = vunpack.c.l.b16 %v7864
    %v8603 = vunpack.c.h.b16 %v7864
    %v8604 = vunpack.c.l.b16 %v7865
    %v8605 = vunpack.c.h.b16 %v7865
    %v8606 = vunpack.c.l.b16 %v7866
    %v8607 = vunpack.c.h.b16 %v7866
    %v8608 = vunpack.c.l.b16 %v7867
    %v8609 = vunpack.c.h.b16 %v7867
    %v8610 = vunpack.c.l.b16 %v7868
    %v8611 = vunpack.c.h.b16 %v7868
    %v8612 = vunpack.c.l.b16 %v7869
    %v8613 = vunpack.c.h.b16 %v7869
    %v8614 = vunpack.c.l.b16 %v7870
    %v8615 = vunpack.c.h.b16 %v7870
    %v8616 = vunpack.c.l.b16 %v7871
    %v8617 = vunpack.c.h.b16 %v7871
    %v8618 = vunpack.c.l.b16 %v7872
    %v8619 = vunpack.c.h.b16 %v7872
    %v8620 = vunpack.c.l.b16 %v7873
    %v8621 = vunpack.c.h.b16 %v7873
    %v8622 = vunpack.c.l.b16 %v7874
    %v8623 = vunpack.c.h.b16 %v7874
    %v8624 = vunpack.c.l.b16 %v7875
    %v8625 = vunpack.c.h.b16 %v7875
    %v8626 = vunpack.c.l.b16 %v7876
    %v8627 = vunpack.c.h.b16 %v7876
    %v8628 = vunpack.c.l.b16 %v7877
    %v8629 = vunpack.c.h.b16 %v7877
    %v8630 = vunpack.c.l.b16 %v7878
    %v8631 = vunpack.c.h.b16 %v7878
    %v8632 = vunpack.c.l.b16 %v7879
    %v8633 = vunpack.c.h.b16 %v7879
    %v8634 = vunpack.c.l.b16 %v7880
    %v8635 = vunpack.c.h.b16 %v7880
    %v8636 = vunpack.c.l.b16 %v7881
    %v8637 = vunpack.c.h.b16 %v7881
    %v8638 = vunpack.c.l.b16 %v7882
    %v8639 = vunpack.c.h.b16 %v7882
    %v8640 = vunpack.c.l.b16 %v7883
    %v8641 = vunpack.c.h.b16 %v7883
    %v8642 = vunpack.c.l.b16 %v7884
    %v8643 = vunpack.c.h.b16 %v7884
    %v8644 = vunpack.c.l.b16 %v7885
    %v8645 = vunpack.c.h.b16 %v7885
    %v8646 = vunpack.c.l.b16 %v7886
    %v8647 = vunpack.c.h.b16 %v7886
    %v8648 = vunpack.c.l.b16 %v7887
    %v8649 = vunpack.c.h.b16 %v7887
    %v8650 = vunpack.c.l.b16 %v7888
    %v8651 = vunpack.c.h.b16 %v7888
    %v8652 = vunpack.c.l.b16 %v7889
    %v8653 = vunpack.c.h.b16 %v7889
    %v8654 = vunpack.c.l.b16 %v7890
    %v8655 = vunpack.c.h.b16 %v7890
    %v8656 = vunpack.c.l.b16 %v7891
    %v8657 = vunpack.c.h.b16 %v7891
    %v8658 = vunpack.c.l.b16 %v7892
    %v8659 = vunpack.c.h.b16 %v7892
    %v8660 = vunpack.c.l.b16 %v7893
    %v8661 = vunpack.c.h.b16 %v7893
    %v8662 = vunpack.c.l.b16 %v7894
    %v8663 = vunpack.c.h.b16 %v7894
    %v8664 = vunpack.c.l.b16 %v7895
    %v8665 = vunpack.c.h.b16 %v7895
    %v8666 = vunpack.c.l.b16 %v7896
    %v8667 = vunpack.c.h.b16 %v7896
    %v8668 = vunpack.c.l.b16 %v7897
    %v8669 = vunpack.c.h.b16 %v7897
    %v8670 = vunpack.c.l.b16 %v7898
    %v8671 = vunpack.c.h.b16 %v7898
    %v8672 = vunpack.c.l.b16 %v7899
    %v8673 = vunpack.c.h.b16 %v7899
    %v8674 = vunpack.c.l.b16 %v7900
    %v8675 = vunpack.c.h.b16 %v7900
    %v8676 = vunpack.c.l.b16 %v7901
    %v8677 = vunpack.c.h.b16 %v7901
    %v8678 = vunpack.c.l.b16 %v7902
    %v8679 = vunpack.c.h.b16 %v7902
    %v8680 = vunpack.c.l.b16 %v7903
    %v8681 = vunpack.c.h.b16 %v7903
    %v8682 = vunpack.c.l.b16 %v7904
    %v8683 = vunpack.c.h.b16 %v7904
    %v8684 = vunpack.c.l.b16 %v7905
    %v8685 = vunpack.c.h.b16 %v7905
    %v8686 = vunpack.c.l.b16 %v7906
    %v8687 = vunpack.c.h.b16 %v7906
    %v8688 = vunpack.c.l.b16 %v7907
    %v8689 = vunpack.c.h.b16 %v7907
    %v8690 = vunpack.c.l.b16 %v7908
    %v8691 = vunpack.c.h.b16 %v7908
    %v8692 = vunpack.c.l.b16 %v7909
    %v8693 = vunpack.c.h.b16 %v7909
    %v8694 = vunpack.c.l.b16 %v7910
    %v8695 = vunpack.c.h.b16 %v7910
    %v8696 = vunpack.c.l.b16 %v7911
    %v8697 = vunpack.c.h.b16 %v7911
    %v8698 = vunpack.c.l.b16 %v7912
    %v8699 = vunpack.c.h.b16 %v7912
    %v8700 = vunpack.c.l.b16 %v7913
    %v8701 = vunpack.c.h.b16 %v7913
    %v8702 = vunpack.c.l.b16 %v7914
    %v8703 = vunpack.c.h.b16 %v7914
    %v8704 = vunpack.c.l.b16 %v7915
    %v8705 = vunpack.c.h.b16 %v7915
    %v8706 = vpack.c.b16 %v8198, %v8194
    %v8707 = vpack.c.b16 %v8199, %v8195
    %v8708 = vpack.c.b16 %v8200, %v8196
    %v8709 = vpack.c.b16 %v8201, %v8197
    %v8710 = vpack.c.b16 %v8206, %v8202
    %v8711 = vpack.c.b16 %v8207, %v8203
    %v8712 = vpack.c.b16 %v8208, %v8204
    %v8713 = vpack.c.b16 %v8209, %v8205
    %v8714 = vpack.c.b16 %v8214, %v8210
    %v8715 = vpack.c.b16 %v8215, %v8211
    %v8716 = vpack.c.b16 %v8216, %v8212
    %v8717 = vpack.c.b16 %v8217, %v8213
    %v8718 = vpack.c.b16 %v8222, %v8218
    %v8719 = vpack.c.b16 %v8223, %v8219
    %v8720 = vpack.c.b16 %v8224, %v8220
    %v8721 = vpack.c.b16 %v8225, %v8221
    %v8722 = vpack.c.b16 %v8230, %v8226
    %v8723 = vpack.c.b16 %v8231, %v8227
    %v8724 = vpack.c.b16 %v8232, %v8228
    %v8725 = vpack.c.b16 %v8233, %v8229
    %v8726 = vpack.c.b16 %v8238, %v8234
    %v8727 = vpack.c.b16 %v8239, %v8235
    %v8728 = vpack.c.b16 %v8240, %v8236
    %v8729 = vpack.c.b16 %v8241, %v8237
    %v8730 = vpack.c.b16 %v8246, %v8242
    %v8731 = vpack.c.b16 %v8247, %v8243
    %v8732 = vpack.c.b16 %v8248, %v8244
    %v8733 = vpack.c.b16 %v8249, %v8245
    %v8734 = vpack.c.b16 %v8254, %v8250
    %v8735 = vpack.c.b16 %v8255, %v8251
    %v8736 = vpack.c.b16 %v8256, %v8252
    %v8737 = vpack.c.b16 %v8257, %v8253
    %v8738 = vpack.c.b16 %v8262, %v8258
    %v8739 = vpack.c.b16 %v8263, %v8259
    %v8740 = vpack.c.b16 %v8264, %v8260
    %v8741 = vpack.c.b16 %v8265, %v8261
    %v8742 = vpack.c.b16 %v8270, %v8266
    %v8743 = vpack.c.b16 %v8271, %v8267
    %v8744 = vpack.c.b16 %v8272, %v8268
    %v8745 = vpack.c.b16 %v8273, %v8269
    %v8746 = vpack.c.b16 %v8278, %v8274
    %v8747 = vpack.c.b16 %v8279, %v8275
    %v8748 = vpack.c.b16 %v8280, %v8276
    %v8749 = vpack.c.b16 %v8281, %v8277
    %v8750 = vpack.c.b16 %v8286, %v8282
    %v8751 = vpack.c.b16 %v8287, %v8283
    %v8752 = vpack.c.b16 %v8288, %v8284
    %v8753 = vpack.c.b16 %v8289, %v8285
    %v8754 = vpack.c.b16 %v8294, %v8290
    %v8755 = vpack.c.b16 %v8295, %v8291
    %v8756 = vpack.c.b16 %v8296, %v8292
    %v8757 = vpack.c.b16 %v8297, %v8293
    %v8758 = vpack.c.b16 %v8302, %v8298
    %v8759 = vpack.c.b16 %v8303, %v8299
    %v8760 = vpack.c.b16 %v8304, %v8300
    %v8761 = vpack.c.b16 %v8305, %v8301
    %v8762 = vpack.c.b16 %v8310, %v8306
    %v8763 = vpack.c.b16 %v8311, %v8307
    %v8764 = vpack.c.b16 %v8312, %v8308
    %v8765 = vpack.c.b16 %v8313, %v8309
    %v8766 = vpack.c.b16 %v8318, %v8314
    %v8767 = vpack.c.b16 %v8319, %v8315
    %v8768 = vpack.c.b16 %v8320, %v8316
    %v8769 = vpack.c.b16 %v8321, %v8317
    %v8770 = vpack.c.b16 %v8326, %v8322
    %v8771 = vpack.c.b16 %v8327, %v8323
    %v8772 = vpack.c.b16 %v8328, %v8324
    %v8773 = vpack.c.b16 %v8329, %v8325
    %v8774 = vpack.c.b16 %v8334, %v8330
    %v8775 = vpack.c.b16 %v8335, %v8331
    %v8776 = vpack.c.b16 %v8336, %v8332
    %v8777 = vpack.c.b16 %v8337, %v8333
    %v8778 = vpack.c.b16 %v8342, %v8338
    %v8779 = vpack.c.b16 %v8343, %v8339
    %v8780 = vpack.c.b16 %v8344, %v8340
    %v8781 = vpack.c.b16 %v8345, %v8341
    %v8782 = vpack.c.b16 %v8350, %v8346
    %v8783 = vpack.c.b16 %v8351, %v8347
    %v8784 = vpack.c.b16 %v8352, %v8348
    %v8785 = vpack.c.b16 %v8353, %v8349
    %v8786 = vpack.c.b16 %v8358, %v8354
    %v8787 = vpack.c.b16 %v8359, %v8355
    %v8788 = vpack.c.b16 %v8360, %v8356
    %v8789 = vpack.c.b16 %v8361, %v8357
    %v8790 = vpack.c.b16 %v8366, %v8362
    %v8791 = vpack.c.b16 %v8367, %v8363
    %v8792 = vpack.c.b16 %v8368, %v8364
    %v8793 = vpack.c.b16 %v8369, %v8365
    %v8794 = vpack.c.b16 %v8374, %v8370
    %v8795 = vpack.c.b16 %v8375, %v8371
    %v8796 = vpack.c.b16 %v8376, %v8372
    %v8797 = vpack.c.b16 %v8377, %v8373
    %v8798 = vpack.c.b16 %v8382, %v8378
    %v8799 = vpack.c.b16 %v8383, %v8379
    %v8800 = vpack.c.b16 %v8384, %v8380
    %v8801 = vpack.c.b16 %v8385, %v8381
    %v8802 = vpack.c.b16 %v8390, %v8386
    %v8803 = vpack.c.b16 %v8391, %v8387
    %v8804 = vpack.c.b16 %v8392, %v8388
    %v8805 = vpack.c.b16 %v8393, %v8389
    %v8806 = vpack.c.b16 %v8398, %v8394
    %v8807 = vpack.c.b16 %v8399, %v8395
    %v8808 = vpack.c.b16 %v8400, %v8396
    %v8809 = vpack.c.b16 %v8401, %v8397
    %v8810 = vpack.c.b16 %v8406, %v8402
    %v8811 = vpack.c.b16 %v8407, %v8403
    %v8812 = vpack.c.b16 %v8408, %v8404
    %v8813 = vpack.c.b16 %v8409, %v8405
    %v8814 = vpack.c.b16 %v8414, %v8410
    %v8815 = vpack.c.b16 %v8415, %v8411
    %v8816 = vpack.c.b16 %v8416, %v8412
    %v8817 = vpack.c.b16 %v8417, %v8413
    %v8818 = vpack.c.b16 %v8422, %v8418
    %v8819 = vpack.c.b16 %v8423, %v8419
    %v8820 = vpack.c.b16 %v8424, %v8420
    %v8821 = vpack.c.b16 %v8425, %v8421
    %v8822 = vpack.c.b16 %v8430, %v8426
    %v8823 = vpack.c.b16 %v8431, %v8427
    %v8824 = vpack.c.b16 %v8432, %v8428
    %v8825 = vpack.c.b16 %v8433, %v8429
    %v8826 = vpack.c.b16 %v8438, %v8434
    %v8827 = vpack.c.b16 %v8439, %v8435
    %v8828 = vpack.c.b16 %v8440, %v8436
    %v8829 = vpack.c.b16 %v8441, %v8437
    %v8830 = vpack.c.b16 %v8446, %v8442
    %v8831 = vpack.c.b16 %v8447, %v8443
    %v8832 = vpack.c.b16 %v8448, %v8444
    %v8833 = vpack.c.b16 %v8449, %v8445
    %v8834 = vpack.c.b16 %v8454, %v8450
    %v8835 = vpack.c.b16 %v8455, %v8451
    %v8836 = vpack.c.b16 %v8456, %v8452
    %v8837 = vpack.c.b16 %v8457, %v8453
    %v8838 = vpack.c.b16 %v8462, %v8458
    %v8839 = vpack.c.b16 %v8463, %v8459
    %v8840 = vpack.c.b16 %v8464, %v8460
    %v8841 = vpack.c.b16 %v8465, %v8461
    %v8842 = vpack.c.b16 %v8470, %v8466
    %v8843 = vpack.c.b16 %v8471, %v8467
    %v8844 = vpack.c.b16 %v8472, %v8468
    %v8845 = vpack.c.b16 %v8473, %v8469
    %v8846 = vpack.c.b16 %v8478, %v8474
    %v8847 = vpack.c.b16 %v8479, %v8475
    %v8848 = vpack.c.b16 %v8480, %v8476
    %v8849 = vpack.c.b16 %v8481, %v8477
    %v8850 = vpack.c.b16 %v8486, %v8482
    %v8851 = vpack.c.b16 %v8487, %v8483
    %v8852 = vpack.c.b16 %v8488, %v8484
    %v8853 = vpack.c.b16 %v8489, %v8485
    %v8854 = vpack.c.b16 %v8494, %v8490
    %v8855 = vpack.c.b16 %v8495, %v8491
    %v8856 = vpack.c.b16 %v8496, %v8492
    %v8857 = vpack.c.b16 %v8497, %v8493
    %v8858 = vpack.c.b16 %v8502, %v8498
    %v8859 = vpack.c.b16 %v8503, %v8499
    %v8860 = vpack.c.b16 %v8504, %v8500
    %v8861 = vpack.c.b16 %v8505, %v8501
    %v8862 = vpack.c.b16 %v8510, %v8506
    %v8863 = vpack.c.b16 %v8511, %v8507
    %v8864 = vpack.c.b16 %v8512, %v8508
    %v8865 = vpack.c.b16 %v8513, %v8509
    %v8866 = vpack.c.b16 %v8518, %v8514
    %v8867 = vpack.c.b16 %v8519, %v8515
    %v8868 = vpack.c.b16 %v8520, %v8516
    %v8869 = vpack.c.b16 %v8521, %v8517
    %v8870 = vpack.c.b16 %v8526, %v8522
    %v8871 = vpack.c.b16 %v8527, %v8523
    %v8872 = vpack.c.b16 %v8528, %v8524
    %v8873 = vpack.c.b16 %v8529, %v8525
    %v8874 = vpack.c.b16 %v8534, %v8530
    %v8875 = vpack.c.b16 %v8535, %v8531
    %v8876 = vpack.c.b16 %v8536, %v8532
    %v8877 = vpack.c.b16 %v8537, %v8533
    %v8878 = vpack.c.b16 %v8542, %v8538
    %v8879 = vpack.c.b16 %v8543, %v8539
    %v8880 = vpack.c.b16 %v8544, %v8540
    %v8881 = vpack.c.b16 %v8545, %v8541
    %v8882 = vpack.c.b16 %v8550, %v8546
    %v8883 = vpack.c.b16 %v8551, %v8547
    %v8884 = vpack.c.b16 %v8552, %v8548
    %v8885 = vpack.c.b16 %v8553, %v8549
    %v8886 = vpack.c.b16 %v8558, %v8554
    %v8887 = vpack.c.b16 %v8559, %v8555
    %v8888 = vpack.c.b16 %v8560, %v8556
    %v8889 = vpack.c.b16 %v8561, %v8557
    %v8890 = vpack.c.b16 %v8566, %v8562
    %v8891 = vpack.c.b16 %v8567, %v8563
    %v8892 = vpack.c.b16 %v8568, %v8564
    %v8893 = vpack.c.b16 %v8569, %v8565
    %v8894 = vpack.c.b16 %v8574, %v8570
    %v8895 = vpack.c.b16 %v8575, %v8571
    %v8896 = vpack.c.b16 %v8576, %v8572
    %v8897 = vpack.c.b16 %v8577, %v8573
    %v8898 = vpack.c.b16 %v8582, %v8578
    %v8899 = vpack.c.b16 %v8583, %v8579
    %v8900 = vpack.c.b16 %v8584, %v8580
    %v8901 = vpack.c.b16 %v8585, %v8581
    %v8902 = vpack.c.b16 %v8590, %v8586
    %v8903 = vpack.c.b16 %v8591, %v8587
    %v8904 = vpack.c.b16 %v8592, %v8588
    %v8905 = vpack.c.b16 %v8593, %v8589
    %v8906 = vpack.c.b16 %v8598, %v8594
    %v8907 = vpack.c.b16 %v8599, %v8595
    %v8908 = vpack.c.b16 %v8600, %v8596
    %v8909 = vpack.c.b16 %v8601, %v8597
    %v8910 = vpack.c.b16 %v8606, %v8602
    %v8911 = vpack.c.b16 %v8607, %v8603
    %v8912 = vpack.c.b16 %v8608, %v8604
    %v8913 = vpack.c.b16 %v8609, %v8605
    %v8914 = vpack.c.b16 %v8614, %v8610
    %v8915 = vpack.c.b16 %v8615, %v8611
    %v8916 = vpack.c.b16 %v8616, %v8612
    %v8917 = vpack.c.b16 %v8617, %v8613
    %v8918 = vpack.c.b16 %v8622, %v8618
    %v8919 = vpack.c.b16 %v8623, %v8619
    %v8920 = vpack.c.b16 %v8624, %v8620
    %v8921 = vpack.c.b16 %v8625, %v8621
    %v8922 = vpack.c.b16 %v8630, %v8626
    %v8923 = vpack.c.b16 %v8631, %v8627
    %v8924 = vpack.c.b16 %v8632, %v8628
    %v8925 = vpack.c.b16 %v8633, %v8629
    %v8926 = vpack.c.b16 %v8638, %v8634
    %v8927 = vpack.c.b16 %v8639, %v8635
    %v8928 = vpack.c.b16 %v8640, %v8636
    %v8929 = vpack.c.b16 %v8641, %v8637
    %v8930 = vpack.c.b16 %v8646, %v8642
    %v8931 = vpack.c.b16 %v8647, %v8643
    %v8932 = vpack.c.b16 %v8648, %v8644
    %v8933 = vpack.c.b16 %v8649, %v8645
    %v8934 = vpack.c.b16 %v8654, %v8650
    %v8935 = vpack.c.b16 %v8655, %v8651
    %v8936 = vpack.c.b16 %v8656, %v8652
    %v8937 = vpack.c.b16 %v8657, %v8653
    %v8938 = vpack.c.b16 %v8662, %v8658
    %v8939 = vpack.c.b16 %v8663, %v8659
    %v8940 = vpack.c.b16 %v8664, %v8660
    %v8941 = vpack.c.b16 %v8665, %v8661
    %v8942 = vpack.c.b16 %v8670, %v8666
    %v8943 = vpack.c.b16 %v8671, %v8667
    %v8944 = vpack.c.b16 %v8672, %v8668
    %v8945 = vpack.c.b16 %v8673, %v8669
    %v8946 = vpack.c.b16 %v8678, %v8674
    %v8947 = vpack.c.b16 %v8679, %v8675
    %v8948 = vpack.c.b16 %v8680, %v8676
    %v8949 = vpack.c.b16 %v8681, %v8677
    %v8950 = vpack.c.b16 %v8686, %v8682
    %v8951 = vpack.c.b16 %v8687, %v8683
    %v8952 = vpack.c.b16 %v8688, %v8684
    %v8953 = vpack.c.b16 %v8689, %v8685
    %v8954 = vpack.c.b16 %v8694, %v8690
    %v8955 = vpack.c.b16 %v8695, %v8691
    %v8956 = vpack.c.b16 %v8696, %v8692
    %v8957 = vpack.c.b16 %v8697, %v8693
    %v8958 = vpack.c.b16 %v8702, %v8698
    %v8959 = vpack.c.b16 %v8703, %v8699
    %v8960 = vpack.c.b16 %v8704, %v8700
    %v8961 = vpack.c.b16 %v8705, %v8701
    %9218 = vmatprep.subr.bf16.mxu0 %v8735
    %9219 = vmatpush1.bf16.msra.mxu0 %v8734
    %9220 = vmatprep.subr.bf16.mxu0 %v8731
    %9221 = vmatpush1.bf16.msra.mxu0 %v8730
    %9222 = vmatprep.subr.bf16.mxu0 %v8727
    %9223 = vmatpush1.bf16.msra.mxu0 %v8726
    %9224 = vmatprep.subr.bf16.mxu0 %v8723
    %9225 = vmatpush1.bf16.msra.mxu0 %v8722
    %9226 = vmatprep.subr.bf16.mxu0 %v8719
    %9227 = vmatpush1.bf16.msra.mxu0 %v8718
    %9228 = vmatprep.subr.bf16.mxu0 %v8715
    %9229 = vmatpush1.bf16.msra.mxu0 %v8714
    %9230 = vmatprep.subr.bf16.mxu0 %v8711
    %9231 = vmatpush1.bf16.msra.mxu0 %v8710
    %9232 = vmatprep.subr.bf16.mxu0 %v8707
    %9233 = vmatpush1.bf16.msra.mxu0 %v8706
    %9234 = vmatprep.subr.bf16.mxu0 %v8767
    %9235 = vmatpush2.bf16.msra.mxu0 %v8766
    %9236 = vmatprep.subr.bf16.mxu0 %v8763
    %9237 = vmatpush2.bf16.msra.mxu0 %v8762
    %9238 = vmatprep.subr.bf16.mxu0 %v8759
    %9239 = vmatpush2.bf16.msra.mxu0 %v8758
    %9240 = vmatprep.subr.bf16.mxu0 %v8755
    %9241 = vmatpush2.bf16.msra.mxu0 %v8754
    %9242 = vmatprep.subr.bf16.mxu0 %v8751
    %9243 = vmatpush2.bf16.msra.mxu0 %v8750
    %9244 = vmatprep.subr.bf16.mxu0 %v8747
    %9245 = vmatpush2.bf16.msra.mxu0 %v8746
    %9246 = vmatprep.subr.bf16.mxu0 %v8743
    %9247 = vmatpush2.bf16.msra.mxu0 %v8742
    %9248 = vmatprep.subr.bf16.mxu0 %v8739
    %9249 = vmatpush2.bf16.msra.mxu0 %v8738
    %9250 = vmatprep.mubr.bf16.mxu0 %v7653
    %9251 = vmatmul.mubr.bf16.gmra.mxu0 %v7652
    %v9252 = vpop.f32.mrf.mxu0
    %v9253 = vadd.f32 %v7921, %v9252
    %v9254 = vpop.f32.mrf.mxu0
    %v9255 = vadd.f32 %v7925, %v9254
    %v9256 = vpop.f32.mrf.mxu0
    %v9257 = vpop.f32.mrf.mxu0
    %9258 = vdwg.mxu0
    %9259 = vmatprep.subr.bf16.mxu0 %v8799
    %9260 = vmatpush1.bf16.msra.mxu0 %v8798
    %9261 = vmatprep.subr.bf16.mxu0 %v8795
    %9262 = vmatpush1.bf16.msra.mxu0 %v8794
    %9263 = vmatprep.subr.bf16.mxu0 %v8791
    %9264 = vmatpush1.bf16.msra.mxu0 %v8790
    %9265 = vmatprep.subr.bf16.mxu0 %v8787
    %9266 = vmatpush1.bf16.msra.mxu0 %v8786
    %9267 = vmatprep.subr.bf16.mxu0 %v8783
    %9268 = vmatpush1.bf16.msra.mxu0 %v8782
    %9269 = vmatprep.subr.bf16.mxu0 %v8779
    %9270 = vmatpush1.bf16.msra.mxu0 %v8778
    %9271 = vmatprep.subr.bf16.mxu0 %v8775
    %9272 = vmatpush1.bf16.msra.mxu0 %v8774
    %9273 = vmatprep.subr.bf16.mxu0 %v8771
    %9274 = vmatpush1.bf16.msra.mxu0 %v8770
    %9275 = vmatprep.subr.bf16.mxu0 %v8831
    %9276 = vmatpush2.bf16.msra.mxu0 %v8830
    %9277 = vmatprep.subr.bf16.mxu0 %v8827
    %9278 = vmatpush2.bf16.msra.mxu0 %v8826
    %9279 = vmatprep.subr.bf16.mxu0 %v8823
    %9280 = vmatpush2.bf16.msra.mxu0 %v8822
    %9281 = vmatprep.subr.bf16.mxu0 %v8819
    %9282 = vmatpush2.bf16.msra.mxu0 %v8818
    %9283 = vmatprep.subr.bf16.mxu0 %v8815
    %9284 = vmatpush2.bf16.msra.mxu0 %v8814
    %9285 = vmatprep.subr.bf16.mxu0 %v8811
    %9286 = vmatpush2.bf16.msra.mxu0 %v8810
    %9287 = vmatprep.subr.bf16.mxu0 %v8807
    %9288 = vmatpush2.bf16.msra.mxu0 %v8806
    %9289 = vmatprep.subr.bf16.mxu0 %v8803
    %9290 = vmatpush2.bf16.msra.mxu0 %v8802
    %9291 = vmatprep.mubr.bf16.mxu0 %v7655
    %9292 = vmatmul.mubr.bf16.gmra.mxu0 %v7654
    %v9293 = vpop.f32.mrf.mxu0
    %v9294 = vadd.f32 %v9253, %v9293
    %v9295 = vpop.f32.mrf.mxu0
    %v9296 = vadd.f32 %v9255, %v9295
    %v9297 = vpop.f32.mrf.mxu0
    %v9298 = vpop.f32.mrf.mxu0
    %9299 = vdwg.mxu0
    %9300 = vmatprep.subr.bf16.mxu0 %v8863
    %9301 = vmatpush1.bf16.msra.mxu0 %v8862
    %9302 = vmatprep.subr.bf16.mxu0 %v8859
    %9303 = vmatpush1.bf16.msra.mxu0 %v8858
    %9304 = vmatprep.subr.bf16.mxu0 %v8855
    %9305 = vmatpush1.bf16.msra.mxu0 %v8854
    %9306 = vmatprep.subr.bf16.mxu0 %v8851
    %9307 = vmatpush1.bf16.msra.mxu0 %v8850
    %9308 = vmatprep.subr.bf16.mxu0 %v8847
    %9309 = vmatpush1.bf16.msra.mxu0 %v8846
    %9310 = vmatprep.subr.bf16.mxu0 %v8843
    %9311 = vmatpush1.bf16.msra.mxu0 %v8842
    %9312 = vmatprep.subr.bf16.mxu0 %v8839
    %9313 = vmatpush1.bf16.msra.mxu0 %v8838
    %9314 = vmatprep.subr.bf16.mxu0 %v8835
    %9315 = vmatpush1.bf16.msra.mxu0 %v8834
    %9316 = vmatprep.subr.bf16.mxu0 %v8895
    %9317 = vmatpush2.bf16.msra.mxu0 %v8894
    %9318 = vmatprep.subr.bf16.mxu0 %v8891
    %9319 = vmatpush2.bf16.msra.mxu0 %v8890
    %9320 = vmatprep.subr.bf16.mxu0 %v8887
    %9321 = vmatpush2.bf16.msra.mxu0 %v8886
    %9322 = vmatprep.subr.bf16.mxu0 %v8883
    %9323 = vmatpush2.bf16.msra.mxu0 %v8882
    %9324 = vmatprep.subr.bf16.mxu0 %v8879
    %9325 = vmatpush2.bf16.msra.mxu0 %v8878
    %9326 = vmatprep.subr.bf16.mxu0 %v8875
    %9327 = vmatpush2.bf16.msra.mxu0 %v8874
    %9328 = vmatprep.subr.bf16.mxu0 %v8871
    %9329 = vmatpush2.bf16.msra.mxu0 %v8870
    %9330 = vmatprep.subr.bf16.mxu0 %v8867
    %9331 = vmatpush2.bf16.msra.mxu0 %v8866
    %9332 = vmatprep.mubr.bf16.mxu0 %v7657
    %9333 = vmatmul.mubr.bf16.gmra.mxu0 %v7656
    %v9334 = vpop.f32.mrf.mxu0
    %v9335 = vadd.f32 %v9294, %v9334
    %v9336 = vpop.f32.mrf.mxu0
    %v9337 = vadd.f32 %v9296, %v9336
    %v9338 = vpop.f32.mrf.mxu0
    %v9339 = vpop.f32.mrf.mxu0
    %9340 = vdwg.mxu0
    %9341 = vmatprep.subr.bf16.mxu0 %v8927
    %9342 = vmatpush1.bf16.msra.mxu0 %v8926
    %9343 = vmatprep.subr.bf16.mxu0 %v8923
    %9344 = vmatpush1.bf16.msra.mxu0 %v8922
    %9345 = vmatprep.subr.bf16.mxu0 %v8919
    %9346 = vmatpush1.bf16.msra.mxu0 %v8918
    %9347 = vmatprep.subr.bf16.mxu0 %v8915
    %9348 = vmatpush1.bf16.msra.mxu0 %v8914
    %9349 = vmatprep.subr.bf16.mxu0 %v8911
    %9350 = vmatpush1.bf16.msra.mxu0 %v8910
    %9351 = vmatprep.subr.bf16.mxu0 %v8907
    %9352 = vmatpush1.bf16.msra.mxu0 %v8906
    %9353 = vmatprep.subr.bf16.mxu0 %v8903
    %9354 = vmatpush1.bf16.msra.mxu0 %v8902
    %9355 = vmatprep.subr.bf16.mxu0 %v8899
    %9356 = vmatpush1.bf16.msra.mxu0 %v8898
    %9357 = vmatprep.subr.bf16.mxu0 %v8959
    %9358 = vmatpush2.bf16.msra.mxu0 %v8958
    %9359 = vmatprep.subr.bf16.mxu0 %v8955
    %9360 = vmatpush2.bf16.msra.mxu0 %v8954
    %9361 = vmatprep.subr.bf16.mxu0 %v8951
    %9362 = vmatpush2.bf16.msra.mxu0 %v8950
    %9363 = vmatprep.subr.bf16.mxu0 %v8947
    %9364 = vmatpush2.bf16.msra.mxu0 %v8946
    %9365 = vmatprep.subr.bf16.mxu0 %v8943
    %9366 = vmatpush2.bf16.msra.mxu0 %v8942
    %9367 = vmatprep.subr.bf16.mxu0 %v8939
    %9368 = vmatpush2.bf16.msra.mxu0 %v8938
    %9369 = vmatprep.subr.bf16.mxu0 %v8935
    %9370 = vmatpush2.bf16.msra.mxu0 %v8934
    %9371 = vmatprep.subr.bf16.mxu0 %v8931
    %9372 = vmatpush2.bf16.msra.mxu0 %v8930
    %9373 = vmatprep.mubr.bf16.mxu0 %v7659
    %9374 = vmatmul.mubr.bf16.gmra.mxu0 %v7658
    %v9375 = vpop.f32.mrf.mxu0
    %v9376 = vadd.f32 %v9335, %v9375
    %v9377 = vpop.f32.mrf.mxu0
    %v9378 = vadd.f32 %v9337, %v9377
    %v9379 = vpop.f32.mrf.mxu0
    %v9380 = vpop.f32.mrf.mxu0
    %9381 = vdwg.mxu0
    %9382 = vmatprep.subr.bf16.mxu0 %v8737
    %9383 = vmatpush1.bf16.msra.mxu0 %v8736
    %9384 = vmatprep.subr.bf16.mxu0 %v8733
    %9385 = vmatpush1.bf16.msra.mxu0 %v8732
    %9386 = vmatprep.subr.bf16.mxu0 %v8729
    %9387 = vmatpush1.bf16.msra.mxu0 %v8728
    %9388 = vmatprep.subr.bf16.mxu0 %v8725
    %9389 = vmatpush1.bf16.msra.mxu0 %v8724
    %9390 = vmatprep.subr.bf16.mxu0 %v8721
    %9391 = vmatpush1.bf16.msra.mxu0 %v8720
    %9392 = vmatprep.subr.bf16.mxu0 %v8717
    %9393 = vmatpush1.bf16.msra.mxu0 %v8716
    %9394 = vmatprep.subr.bf16.mxu0 %v8713
    %9395 = vmatpush1.bf16.msra.mxu0 %v8712
    %9396 = vmatprep.subr.bf16.mxu0 %v8709
    %9397 = vmatpush1.bf16.msra.mxu0 %v8708
    %9398 = vmatprep.subr.bf16.mxu0 %v8769
    %9399 = vmatpush2.bf16.msra.mxu0 %v8768
    %9400 = vmatprep.subr.bf16.mxu0 %v8765
    %9401 = vmatpush2.bf16.msra.mxu0 %v8764
    %9402 = vmatprep.subr.bf16.mxu0 %v8761
    %9403 = vmatpush2.bf16.msra.mxu0 %v8760
    %9404 = vmatprep.subr.bf16.mxu0 %v8757
    %9405 = vmatpush2.bf16.msra.mxu0 %v8756
    %9406 = vmatprep.subr.bf16.mxu0 %v8753
    %9407 = vmatpush2.bf16.msra.mxu0 %v8752
    %9408 = vmatprep.subr.bf16.mxu0 %v8749
    %9409 = vmatpush2.bf16.msra.mxu0 %v8748
    %9410 = vmatprep.subr.bf16.mxu0 %v8745
    %9411 = vmatpush2.bf16.msra.mxu0 %v8744
    %9412 = vmatprep.subr.bf16.mxu0 %v8741
    %9413 = vmatpush2.bf16.msra.mxu0 %v8740
    %9414 = vmatprep.mubr.bf16.mxu0 %v7653
    %9415 = vmatmul.mubr.bf16.gmra.mxu0 %v7652
    %v9416 = vpop.f32.mrf.mxu0
    %v9417 = vadd.f32 %v7929, %v9416
    %v9418 = vpop.f32.mrf.mxu0
    %v9419 = vadd.f32 %v7933, %v9418
    %v9420 = vpop.f32.mrf.mxu0
    %v9421 = vpop.f32.mrf.mxu0
    %9422 = vdwg.mxu0
    %9423 = vmatprep.subr.bf16.mxu0 %v8801
    %9424 = vmatpush1.bf16.msra.mxu0 %v8800
    %9425 = vmatprep.subr.bf16.mxu0 %v8797
    %9426 = vmatpush1.bf16.msra.mxu0 %v8796
    %9427 = vmatprep.subr.bf16.mxu0 %v8793
    %9428 = vmatpush1.bf16.msra.mxu0 %v8792
    %9429 = vmatprep.subr.bf16.mxu0 %v8789
    %9430 = vmatpush1.bf16.msra.mxu0 %v8788
    %9431 = vmatprep.subr.bf16.mxu0 %v8785
    %9432 = vmatpush1.bf16.msra.mxu0 %v8784
    %9433 = vmatprep.subr.bf16.mxu0 %v8781
    %9434 = vmatpush1.bf16.msra.mxu0 %v8780
    %9435 = vmatprep.subr.bf16.mxu0 %v8777
    %9436 = vmatpush1.bf16.msra.mxu0 %v8776
    %9437 = vmatprep.subr.bf16.mxu0 %v8773
    %9438 = vmatpush1.bf16.msra.mxu0 %v8772
    %9439 = vmatprep.subr.bf16.mxu0 %v8833
    %9440 = vmatpush2.bf16.msra.mxu0 %v8832
    %9441 = vmatprep.subr.bf16.mxu0 %v8829
    %9442 = vmatpush2.bf16.msra.mxu0 %v8828
    %9443 = vmatprep.subr.bf16.mxu0 %v8825
    %9444 = vmatpush2.bf16.msra.mxu0 %v8824
    %9445 = vmatprep.subr.bf16.mxu0 %v8821
    %9446 = vmatpush2.bf16.msra.mxu0 %v8820
    %9447 = vmatprep.subr.bf16.mxu0 %v8817
    %9448 = vmatpush2.bf16.msra.mxu0 %v8816
    %9449 = vmatprep.subr.bf16.mxu0 %v8813
    %9450 = vmatpush2.bf16.msra.mxu0 %v8812
    %9451 = vmatprep.subr.bf16.mxu0 %v8809
    %9452 = vmatpush2.bf16.msra.mxu0 %v8808
    %9453 = vmatprep.subr.bf16.mxu0 %v8805
    %9454 = vmatpush2.bf16.msra.mxu0 %v8804
    %9455 = vmatprep.mubr.bf16.mxu0 %v7655
    %9456 = vmatmul.mubr.bf16.gmra.mxu0 %v7654
    %v9457 = vpop.f32.mrf.mxu0
    %v9458 = vadd.f32 %v9417, %v9457
    %v9459 = vpop.f32.mrf.mxu0
    %v9460 = vadd.f32 %v9419, %v9459
    %v9461 = vpop.f32.mrf.mxu0
    %v9462 = vpop.f32.mrf.mxu0
    %9463 = vdwg.mxu0
    %9464 = vmatprep.subr.bf16.mxu0 %v8865
    %9465 = vmatpush1.bf16.msra.mxu0 %v8864
    %9466 = vmatprep.subr.bf16.mxu0 %v8861
    %9467 = vmatpush1.bf16.msra.mxu0 %v8860
    %9468 = vmatprep.subr.bf16.mxu0 %v8857
    %9469 = vmatpush1.bf16.msra.mxu0 %v8856
    %9470 = vmatprep.subr.bf16.mxu0 %v8853
    %9471 = vmatpush1.bf16.msra.mxu0 %v8852
    %9472 = vmatprep.subr.bf16.mxu0 %v8849
    %9473 = vmatpush1.bf16.msra.mxu0 %v8848
    %9474 = vmatprep.subr.bf16.mxu0 %v8845
    %9475 = vmatpush1.bf16.msra.mxu0 %v8844
    %9476 = vmatprep.subr.bf16.mxu0 %v8841
    %9477 = vmatpush1.bf16.msra.mxu0 %v8840
    %9478 = vmatprep.subr.bf16.mxu0 %v8837
    %9479 = vmatpush1.bf16.msra.mxu0 %v8836
    %9480 = vmatprep.subr.bf16.mxu0 %v8897
    %9481 = vmatpush2.bf16.msra.mxu0 %v8896
    %9482 = vmatprep.subr.bf16.mxu0 %v8893
    %9483 = vmatpush2.bf16.msra.mxu0 %v8892
    %9484 = vmatprep.subr.bf16.mxu0 %v8889
    %9485 = vmatpush2.bf16.msra.mxu0 %v8888
    %9486 = vmatprep.subr.bf16.mxu0 %v8885
    %9487 = vmatpush2.bf16.msra.mxu0 %v8884
    %9488 = vmatprep.subr.bf16.mxu0 %v8881
    %9489 = vmatpush2.bf16.msra.mxu0 %v8880
    %9490 = vmatprep.subr.bf16.mxu0 %v8877
    %9491 = vmatpush2.bf16.msra.mxu0 %v8876
    %9492 = vmatprep.subr.bf16.mxu0 %v8873
    %9493 = vmatpush2.bf16.msra.mxu0 %v8872
    %9494 = vmatprep.subr.bf16.mxu0 %v8869
    %9495 = vmatpush2.bf16.msra.mxu0 %v8868
    %9496 = vmatprep.mubr.bf16.mxu0 %v7657
    %9497 = vmatmul.mubr.bf16.gmra.mxu0 %v7656
    %v9498 = vpop.f32.mrf.mxu0
    %v9499 = vadd.f32 %v9458, %v9498
    %v9500 = vpop.f32.mrf.mxu0
    %v9501 = vadd.f32 %v9460, %v9500
    %v9502 = vpop.f32.mrf.mxu0
    %v9503 = vpop.f32.mrf.mxu0
    %9504 = vdwg.mxu0
    %9505 = vmatprep.subr.bf16.mxu0 %v8929
    %9506 = vmatpush1.bf16.msra.mxu0 %v8928
    %9507 = vmatprep.subr.bf16.mxu0 %v8925
    %9508 = vmatpush1.bf16.msra.mxu0 %v8924
    %9509 = vmatprep.subr.bf16.mxu0 %v8921
    %9510 = vmatpush1.bf16.msra.mxu0 %v8920
    %9511 = vmatprep.subr.bf16.mxu0 %v8917
    %9512 = vmatpush1.bf16.msra.mxu0 %v8916
    %9513 = vmatprep.subr.bf16.mxu0 %v8913
    %9514 = vmatpush1.bf16.msra.mxu0 %v8912
    %9515 = vmatprep.subr.bf16.mxu0 %v8909
    %9516 = vmatpush1.bf16.msra.mxu0 %v8908
    %9517 = vmatprep.subr.bf16.mxu0 %v8905
    %9518 = vmatpush1.bf16.msra.mxu0 %v8904
    %9519 = vmatprep.subr.bf16.mxu0 %v8901
    %9520 = vmatpush1.bf16.msra.mxu0 %v8900
    %9521 = vmatprep.subr.bf16.mxu0 %v8961
    %9522 = vmatpush2.bf16.msra.mxu0 %v8960
    %9523 = vmatprep.subr.bf16.mxu0 %v8957
    %9524 = vmatpush2.bf16.msra.mxu0 %v8956
    %9525 = vmatprep.subr.bf16.mxu0 %v8953
    %9526 = vmatpush2.bf16.msra.mxu0 %v8952
    %9527 = vmatprep.subr.bf16.mxu0 %v8949
    %9528 = vmatpush2.bf16.msra.mxu0 %v8948
    %9529 = vmatprep.subr.bf16.mxu0 %v8945
    %9530 = vmatpush2.bf16.msra.mxu0 %v8944
    %9531 = vmatprep.subr.bf16.mxu0 %v8941
    %9532 = vmatpush2.bf16.msra.mxu0 %v8940
    %9533 = vmatprep.subr.bf16.mxu0 %v8937
    %9534 = vmatpush2.bf16.msra.mxu0 %v8936
    %9535 = vmatprep.subr.bf16.mxu0 %v8933
    %9536 = vmatpush2.bf16.msra.mxu0 %v8932
    %9537 = vmatprep.mubr.bf16.mxu0 %v7659
    %9538 = vmatmul.mubr.bf16.gmra.mxu0 %v7658
    %v9539 = vpop.f32.mrf.mxu0
    %v9540 = vadd.f32 %v9499, %v9539
    %v9541 = vpop.f32.mrf.mxu0
    %v9542 = vadd.f32 %v9501, %v9541
    %v9543 = vpop.f32.mrf.mxu0
    %v9544 = vpop.f32.mrf.mxu0
    %9545 = vdwg.mxu0
    %v9546 = vmax.f32 %v9376, 0.0
    %v9547 = vmax.f32 %v9378, 0.0
    %v9548 = vmax.f32 %v9540, 0.0
    %v9549 = vmax.f32 %v9542, 0.0
    %v9550 = vpack.c.bf16 %v9546, %v9546
    %v9551 = vpack.c.bf16 %v9547, %v9547
    %v9552 = vpack.c.bf16 %v9548, %v9548
    %v9553 = vpack.c.bf16 %v9549, %v9549
    %v9554 = vld [vmem:[#allocation10] sm:$0xf]
    %v9555 = vld [vmem:[#allocation10 + $0x4] sm:$0xf]
    %v9556 = vld [vmem:[#allocation10 + $0x8] sm:$0xf]
    %v9557 = vld [vmem:[#allocation10 + $0xc] sm:$0xf]
    %v9558 = vld [vmem:[#allocation10 + $0x10] sm:$0xf]
    %v9559 = vld [vmem:[#allocation10 + $0x14] sm:$0xf]
    %v9560 = vld [vmem:[#allocation10 + $0x18] sm:$0xf]
    %v9561 = vld [vmem:[#allocation10 + $0x1c] sm:$0xf]
    %v9562 = vld [vmem:[#allocation10 + $0x20] sm:$0xf]
    %v9563 = vld [vmem:[#allocation10 + $0x24] sm:$0xf]
    %v9564 = vld [vmem:[#allocation10 + $0x28] sm:$0xf]
    %v9565 = vld [vmem:[#allocation10 + $0x2c] sm:$0xf]
    %v9566 = vld [vmem:[#allocation10 + $0x30] sm:$0xf]
    %v9567 = vld [vmem:[#allocation10 + $0x34] sm:$0xf]
    %v9568 = vld [vmem:[#allocation10 + $0x38] sm:$0xf]
    %v9569 = vld [vmem:[#allocation10 + $0x3c] sm:$0xf]
    %v9570 = vld [vmem:[#allocation10 + $0x40] sm:$0xf]
    %v9571 = vld [vmem:[#allocation10 + $0x44] sm:$0xf]
    %v9572 = vld [vmem:[#allocation10 + $0x48] sm:$0xf]
    %v9573 = vld [vmem:[#allocation10 + $0x4c] sm:$0xf]
    %v9574 = vld [vmem:[#allocation10 + $0x50] sm:$0xf]
    %v9575 = vld [vmem:[#allocation10 + $0x54] sm:$0xf]
    %v9576 = vld [vmem:[#allocation10 + $0x58] sm:$0xf]
    %v9577 = vld [vmem:[#allocation10 + $0x5c] sm:$0xf]
    %v9578 = vld [vmem:[#allocation10 + $0x60] sm:$0xf]
    %v9579 = vld [vmem:[#allocation10 + $0x64] sm:$0xf]
    %v9580 = vld [vmem:[#allocation10 + $0x68] sm:$0xf]
    %v9581 = vld [vmem:[#allocation10 + $0x6c] sm:$0xf]
    %v9582 = vld [vmem:[#allocation10 + $0x70] sm:$0xf]
    %v9583 = vld [vmem:[#allocation10 + $0x74] sm:$0xf]
    %v9584 = vld [vmem:[#allocation10 + $0x78] sm:$0xf]
    %v9585 = vld [vmem:[#allocation10 + $0x7c] sm:$0xf]
    %v9586 = vld [vmem:[#allocation10 + $0x80] sm:$0xf]
    %v9587 = vld [vmem:[#allocation10 + $0x84] sm:$0xf]
    %v9588 = vld [vmem:[#allocation10 + $0x88] sm:$0xf]
    %v9589 = vld [vmem:[#allocation10 + $0x8c] sm:$0xf]
    %v9590 = vld [vmem:[#allocation10 + $0x90] sm:$0xf]
    %v9591 = vld [vmem:[#allocation10 + $0x94] sm:$0xf]
    %v9592 = vld [vmem:[#allocation10 + $0x98] sm:$0xf]
    %v9593 = vld [vmem:[#allocation10 + $0x9c] sm:$0xf]
    %v9594 = vld [vmem:[#allocation10 + $0xa0] sm:$0xf]
    %v9595 = vld [vmem:[#allocation10 + $0xa4] sm:$0xf]
    %v9596 = vld [vmem:[#allocation10 + $0xa8] sm:$0xf]
    %v9597 = vld [vmem:[#allocation10 + $0xac] sm:$0xf]
    %v9598 = vld [vmem:[#allocation10 + $0xb0] sm:$0xf]
    %v9599 = vld [vmem:[#allocation10 + $0xb4] sm:$0xf]
    %v9600 = vld [vmem:[#allocation10 + $0xb8] sm:$0xf]
    %v9601 = vld [vmem:[#allocation10 + $0xbc] sm:$0xf]
    %v9602 = vld [vmem:[#allocation10 + $0xc0] sm:$0xf]
    %v9603 = vld [vmem:[#allocation10 + $0xc4] sm:$0xf]
    %v9604 = vld [vmem:[#allocation10 + $0xc8] sm:$0xf]
    %v9605 = vld [vmem:[#allocation10 + $0xcc] sm:$0xf]
    %v9606 = vld [vmem:[#allocation10 + $0xd0] sm:$0xf]
    %v9607 = vld [vmem:[#allocation10 + $0xd4] sm:$0xf]
    %v9608 = vld [vmem:[#allocation10 + $0xd8] sm:$0xf]
    %v9609 = vld [vmem:[#allocation10 + $0xdc] sm:$0xf]
    %v9610 = vld [vmem:[#allocation10 + $0xe0] sm:$0xf]
    %v9611 = vld [vmem:[#allocation10 + $0xe4] sm:$0xf]
    %v9612 = vld [vmem:[#allocation10 + $0xe8] sm:$0xf]
    %v9613 = vld [vmem:[#allocation10 + $0xec] sm:$0xf]
    %v9614 = vld [vmem:[#allocation10 + $0xf0] sm:$0xf]
    %v9615 = vld [vmem:[#allocation10 + $0xf4] sm:$0xf]
    %v9616 = vld [vmem:[#allocation10 + $0xf8] sm:$0xf]
    %v9617 = vld [vmem:[#allocation10 + $0xfc] sm:$0xf]
    %v9618 = vld [vmem:[#allocation12] sm:$0x1]
    %v9620 = vlaneseq
    %v9621 = vshrl.u32 %v9620, 7
    %v9622 = vsub.s32 0, %v9621
    %v9623 = vrot.slane %v9618, %v9622
    %v9689 = vunpack.c.l.b16 %v9554
    %v9690 = vunpack.c.l.b16 %v9555
    %v9691 = vunpack.c.l.b16 %v9556
    %v9692 = vunpack.c.l.b16 %v9557
    %v9693 = vunpack.c.l.b16 %v9558
    %v9694 = vunpack.c.l.b16 %v9559
    %v9695 = vunpack.c.l.b16 %v9560
    %v9696 = vunpack.c.l.b16 %v9561
    %v9697 = vunpack.c.l.b16 %v9562
    %v9698 = vunpack.c.l.b16 %v9563
    %v9699 = vunpack.c.l.b16 %v9564
    %v9700 = vunpack.c.l.b16 %v9565
    %v9701 = vunpack.c.l.b16 %v9566
    %v9702 = vunpack.c.l.b16 %v9567
    %v9703 = vunpack.c.l.b16 %v9568
    %v9704 = vunpack.c.l.b16 %v9569
    %v9705 = vunpack.c.l.b16 %v9570
    %v9706 = vunpack.c.l.b16 %v9571
    %v9707 = vunpack.c.l.b16 %v9572
    %v9708 = vunpack.c.l.b16 %v9573
    %v9709 = vunpack.c.l.b16 %v9574
    %v9710 = vunpack.c.l.b16 %v9575
    %v9711 = vunpack.c.l.b16 %v9576
    %v9712 = vunpack.c.l.b16 %v9577
    %v9713 = vunpack.c.l.b16 %v9578
    %v9714 = vunpack.c.l.b16 %v9579
    %v9715 = vunpack.c.l.b16 %v9580
    %v9716 = vunpack.c.l.b16 %v9581
    %v9717 = vunpack.c.l.b16 %v9582
    %v9718 = vunpack.c.l.b16 %v9583
    %v9719 = vunpack.c.l.b16 %v9584
    %v9720 = vunpack.c.l.b16 %v9585
    %v9721 = vunpack.c.l.b16 %v9586
    %v9722 = vunpack.c.l.b16 %v9587
    %v9723 = vunpack.c.l.b16 %v9588
    %v9724 = vunpack.c.l.b16 %v9589
    %v9725 = vunpack.c.l.b16 %v9590
    %v9726 = vunpack.c.l.b16 %v9591
    %v9727 = vunpack.c.l.b16 %v9592
    %v9728 = vunpack.c.l.b16 %v9593
    %v9729 = vunpack.c.l.b16 %v9594
    %v9730 = vunpack.c.l.b16 %v9595
    %v9731 = vunpack.c.l.b16 %v9596
    %v9732 = vunpack.c.l.b16 %v9597
    %v9733 = vunpack.c.l.b16 %v9598
    %v9734 = vunpack.c.l.b16 %v9599
    %v9735 = vunpack.c.l.b16 %v9600
    %v9736 = vunpack.c.l.b16 %v9601
    %v9737 = vunpack.c.l.b16 %v9602
    %v9738 = vunpack.c.l.b16 %v9603
    %v9739 = vunpack.c.l.b16 %v9604
    %v9740 = vunpack.c.l.b16 %v9605
    %v9741 = vunpack.c.l.b16 %v9606
    %v9742 = vunpack.c.l.b16 %v9607
    %v9743 = vunpack.c.l.b16 %v9608
    %v9744 = vunpack.c.l.b16 %v9609
    %v9745 = vunpack.c.l.b16 %v9610
    %v9746 = vunpack.c.l.b16 %v9611
    %v9747 = vunpack.c.l.b16 %v9612
    %v9748 = vunpack.c.l.b16 %v9613
    %v9749 = vunpack.c.l.b16 %v9614
    %v9750 = vunpack.c.l.b16 %v9615
    %v9751 = vunpack.c.l.b16 %v9616
    %v9752 = vunpack.c.l.b16 %v9617
    %v9753 = vpack.c.b16 %v9690, %v9689
    %v9754 = vpack.c.b16 %v9692, %v9691
    %v9755 = vpack.c.b16 %v9694, %v9693
    %v9756 = vpack.c.b16 %v9696, %v9695
    %v9757 = vpack.c.b16 %v9698, %v9697
    %v9758 = vpack.c.b16 %v9700, %v9699
    %v9759 = vpack.c.b16 %v9702, %v9701
    %v9760 = vpack.c.b16 %v9704, %v9703
    %v9761 = vpack.c.b16 %v9706, %v9705
    %v9762 = vpack.c.b16 %v9708, %v9707
    %v9763 = vpack.c.b16 %v9710, %v9709
    %v9764 = vpack.c.b16 %v9712, %v9711
    %v9765 = vpack.c.b16 %v9714, %v9713
    %v9766 = vpack.c.b16 %v9716, %v9715
    %v9767 = vpack.c.b16 %v9718, %v9717
    %v9768 = vpack.c.b16 %v9720, %v9719
    %v9769 = vpack.c.b16 %v9722, %v9721
    %v9770 = vpack.c.b16 %v9724, %v9723
    %v9771 = vpack.c.b16 %v9726, %v9725
    %v9772 = vpack.c.b16 %v9728, %v9727
    %v9773 = vpack.c.b16 %v9730, %v9729
    %v9774 = vpack.c.b16 %v9732, %v9731
    %v9775 = vpack.c.b16 %v9734, %v9733
    %v9776 = vpack.c.b16 %v9736, %v9735
    %v9777 = vpack.c.b16 %v9738, %v9737
    %v9778 = vpack.c.b16 %v9740, %v9739
    %v9779 = vpack.c.b16 %v9742, %v9741
    %v9780 = vpack.c.b16 %v9744, %v9743
    %v9781 = vpack.c.b16 %v9746, %v9745
    %v9782 = vpack.c.b16 %v9748, %v9747
    %v9783 = vpack.c.b16 %v9750, %v9749
    %v9784 = vpack.c.b16 %v9752, %v9751
    %9817 = vmatprep.subr.bf16.mxu0 0
    %9818 = vmatpush1.bf16.msra.mxu0 %v9760
    %9819 = vmatprep.subr.bf16.mxu0 0
    %9820 = vmatpush1.bf16.msra.mxu0 %v9759
    %9821 = vmatprep.subr.bf16.mxu0 0
    %9822 = vmatpush1.bf16.msra.mxu0 %v9758
    %9823 = vmatprep.subr.bf16.mxu0 0
    %9824 = vmatpush1.bf16.msra.mxu0 %v9757
    %9825 = vmatprep.subr.bf16.mxu0 0
    %9826 = vmatpush1.bf16.msra.mxu0 %v9756
    %9827 = vmatprep.subr.bf16.mxu0 0
    %9828 = vmatpush1.bf16.msra.mxu0 %v9755
    %9829 = vmatprep.subr.bf16.mxu0 0
    %9830 = vmatpush1.bf16.msra.mxu0 %v9754
    %9831 = vmatprep.subr.bf16.mxu0 0
    %9832 = vmatpush1.bf16.msra.mxu0 %v9753
    %9833 = vmatprep.subr.bf16.mxu0 0
    %9834 = vmatpush2.bf16.msra.mxu0 %v9768
    %9835 = vmatprep.subr.bf16.mxu0 0
    %9836 = vmatpush2.bf16.msra.mxu0 %v9767
    %9837 = vmatprep.subr.bf16.mxu0 0
    %9838 = vmatpush2.bf16.msra.mxu0 %v9766
    %9839 = vmatprep.subr.bf16.mxu0 0
    %9840 = vmatpush2.bf16.msra.mxu0 %v9765
    %9841 = vmatprep.subr.bf16.mxu0 0
    %9842 = vmatpush2.bf16.msra.mxu0 %v9764
    %9843 = vmatprep.subr.bf16.mxu0 0
    %9844 = vmatpush2.bf16.msra.mxu0 %v9763
    %9845 = vmatprep.subr.bf16.mxu0 0
    %9846 = vmatpush2.bf16.msra.mxu0 %v9762
    %9847 = vmatprep.subr.bf16.mxu0 0
    %9848 = vmatpush2.bf16.msra.mxu0 %v9761
    %9849 = vmatprep.mubr.bf16.mxu0 %v9551
    %9850 = vmatmul.mubr.bf16.gmra.mxu0 %v9550
    %v9851 = vpop.f32.mrf.mxu0
    %v9852 = vadd.f32 %v9623, %v9851
    %v9853 = vpop.f32.mrf.mxu0
    %v9854 = vpop.f32.mrf.mxu0
    %v9855 = vpop.f32.mrf.mxu0
    %9856 = vdwg.mxu0
    %9857 = vmatprep.subr.bf16.mxu0 0
    %9858 = vmatpush1.bf16.msra.mxu0 %v9776
    %9859 = vmatprep.subr.bf16.mxu0 0
    %9860 = vmatpush1.bf16.msra.mxu0 %v9775
    %9861 = vmatprep.subr.bf16.mxu0 0
    %9862 = vmatpush1.bf16.msra.mxu0 %v9774
    %9863 = vmatprep.subr.bf16.mxu0 0
    %9864 = vmatpush1.bf16.msra.mxu0 %v9773
    %9865 = vmatprep.subr.bf16.mxu0 0
    %9866 = vmatpush1.bf16.msra.mxu0 %v9772
    %9867 = vmatprep.subr.bf16.mxu0 0
    %9868 = vmatpush1.bf16.msra.mxu0 %v9771
    %9869 = vmatprep.subr.bf16.mxu0 0
    %9870 = vmatpush1.bf16.msra.mxu0 %v9770
    %9871 = vmatprep.subr.bf16.mxu0 0
    %9872 = vmatpush1.bf16.msra.mxu0 %v9769
    %9873 = vmatprep.subr.bf16.mxu0 0
    %9874 = vmatpush2.bf16.msra.mxu0 %v9784
    %9875 = vmatprep.subr.bf16.mxu0 0
    %9876 = vmatpush2.bf16.msra.mxu0 %v9783
    %9877 = vmatprep.subr.bf16.mxu0 0
    %9878 = vmatpush2.bf16.msra.mxu0 %v9782
    %9879 = vmatprep.subr.bf16.mxu0 0
    %9880 = vmatpush2.bf16.msra.mxu0 %v9781
    %9881 = vmatprep.subr.bf16.mxu0 0
    %9882 = vmatpush2.bf16.msra.mxu0 %v9780
    %9883 = vmatprep.subr.bf16.mxu0 0
    %9884 = vmatpush2.bf16.msra.mxu0 %v9779
    %9885 = vmatprep.subr.bf16.mxu0 0
    %9886 = vmatpush2.bf16.msra.mxu0 %v9778
    %9887 = vmatprep.subr.bf16.mxu0 0
    %9888 = vmatpush2.bf16.msra.mxu0 %v9777
    %9889 = vmatprep.mubr.bf16.mxu0 %v9553
    %9890 = vmatmul.mubr.bf16.gmra.mxu0 %v9552
    %v9891 = vpop.f32.mrf.mxu0
    %v9892 = vadd.f32 %v9852, %v9891
    %v9893 = vpop.f32.mrf.mxu0
    %v9894 = vpop.f32.mrf.mxu0
    %v9895 = vpop.f32.mrf.mxu0
    %9896 = vdwg.mxu0
    %9897 = vmax.xlane.f32.xlu0 %v9892
    %v9898 = vpop.xlane.xlu0 %9897
    %v9899 = vsub.f32 %v9892, %v9898
    %v9900 = vmul.f32 %v9899, 1.442695
    %v9901 = vpow.pop %v9900
    %9902 = vadd.xlane.f32.xlu0 %v9901
    %v9903 = vpop.xlane.xlu0 %9902
    %v9904 = vlog2.pop %v9903
    %v9905 = vmul.f32 %v9904, 0.6931472
    %v9906 = vsub.f32 %v9899, %v9905
    %9907 = vst [vmem:[%s7] sm:$0xff] %v9906
    // Predicated region
    $region58: #{domain_classifier.1} parent=1 // pred_check
      _
    $region59: #{domain_classifier.1} parent=1 // pred_check_branch
      %9909 = sbr.rel (0) target = $region61
    $region60: #{domain_classifier.1} parent=1 // pred_region
      _
    $region61: #{domain_classifier.1} parent=1 // pred_fallthru
      _
    // Predicated region
    $region62: #{domain_classifier.1} parent=1 // pred_check
      _
    $region63: #{domain_classifier.1} parent=1 // pred_check_branch
      %9911 = sbr.rel (0) target = $region65
    $region64: #{domain_classifier.1} parent=1 // pred_region
      _
    $region65: #{domain_classifier.1} parent=1 // pred_fallthru
      _
    %9912 = vsyncpa [#allocation3], 1
    %9913 = vsyncpa [#allocation5], 1
    %9914 = vsyncpa [#allocation8], 1
    %9915 = vsyncpa [#allocation11], 1

</llo_original>
